<compile_context>
chip_gen: v7x
topology: tpu7x:2x2x1
jax: 0.10.0
libtpu: 0.0.40
codegen_flags: <defaults>
</compile_context>

<pallas_src>
import jax
import jax.numpy as jnp
from jax import lax
from jax.experimental import pallas as pl
from jax.experimental.pallas import tpu as pltpu


# ----------------------------------------------------------------------------
# In-kernel helpers
# ----------------------------------------------------------------------------

def _fill_im2col(x_bf16, xpad_ref, cols_ref, H, W, C):
    """Write x into the zero-halo scratch and scatter the 9 shifted 3x3 taps into
    the im2col scratch, so the conv becomes ONE (H*W, 9*C) @ (9*C, Cout) MXU matmul.

    Caller must have zeroed xpad_ref (border stays zero; interior is overwritten).
    Tap order is (kh, kw, cin) to match w.reshape(9*Cin, Cout).
    """
    xpad_ref[1:H + 1, 1:W + 1, :] = x_bf16
    for kh in range(3):
        for kw in range(3):
            tap = kh * 3 + kw
            cols_ref[:, tap * C:(tap + 1) * C] = (
                xpad_ref[kh:kh + H, kw:kw + W, :].reshape(H * W, C))


# ----------------------------------------------------------------------------
# Pallas kernels
# ----------------------------------------------------------------------------

def _stem_conv_pool_kernel(x_ref, w_ref, b_ref, o_ref, xpad_ref, cols_ref):
    """Fused stem: 3x3 'same' conv (BN folded into w/b) + ReLU + 2x2/2 maxpool.

    One batch item per grid step.
      x_ref (1,H,W,Cin) f32 | w_ref (9*Cin,Cout) bf16 | b_ref (1,Cout) f32
      o_ref (1,H/2,W/2,Cout) f32
      xpad_ref VMEM (H+2,W+2,Cin) bf16 | cols_ref VMEM (H*W,9*Cin) bf16
    """
    _, H, W, Cin = x_ref.shape
    Cout = w_ref.shape[-1]

    xpad_ref[...] = jnp.zeros_like(xpad_ref)          # zero halo, VMEM only
    _fill_im2col(x_ref[0].astype(jnp.bfloat16), xpad_ref, cols_ref, H, W, Cin)

    # Single MXU matmul: (H*W, 9*Cin) x (9*Cin, Cout), bf16 in, f32 accumulate.
    y = jnp.dot(cols_ref[...], w_ref[...], preferred_element_type=jnp.float32)
    y = jnp.maximum(y + b_ref[...], 0.0)              # folded-BN bias + ReLU (f32)

    # Fused 2x2 stride-2 maxpool (no extra HBM round trip for the pool).
    y = y.reshape(H, W, Cout)
    p = jnp.max(y.reshape(H // 2, 2, W, Cout), axis=1)         # pool rows
    p = jnp.max(p.reshape(H // 2, W // 2, 2, Cout), axis=2)    # pool cols
    o_ref[0] = p.astype(o_ref.dtype)


def _block_gap_kernel(x_ref, wa_ref, ba_ref, wb_ref, bb_ref, o_ref,
                      xpad_ref, cols_ref):
    """Fused BasicBlock + global average pool, one batch item per grid step:
         y = relu(conv(x) + ba);  z = relu(conv(y) + bb + x);  out = mean_{h,w}(z)

      x_ref (1,Hp,Wp,C) f32 | wa/wb (9*C,C) bf16 (BN folded) | ba/bb (1,C) f32
      o_ref (1,1,C) f32 (global-avg-pooled features == flatten of (C,1,1))
      xpad_ref VMEM (Hp+2,Wp+2,C) bf16 | cols_ref VMEM (Hp*Wp,9*C) bf16 (reused)
    """
    _, Hp, Wp, C = x_ref.shape
    x = x_ref[0]                                      # f32: conv-a input AND residual

    xpad_ref[...] = jnp.zeros_like(xpad_ref)          # halo stays zero for both convs

    def conv_bias(v_f32, w_ref, b_ref):
        _fill_im2col(v_f32.astype(jnp.bfloat16), xpad_ref, cols_ref, Hp, Wp, C)
        acc = jnp.dot(cols_ref[...], w_ref[...],
                      preferred_element_type=jnp.float32)      # (Hp*Wp, C) f32
        return acc + b_ref[...]

    y = jnp.maximum(conv_bias(x, wa_ref, ba_ref), 0.0).reshape(Hp, Wp, C)
    z = conv_bias(y, wb_ref, bb_ref).reshape(Hp, Wp, C) + x    # residual before ReLU
    z = jnp.maximum(z, 0.0)

    # Fused global average pool (adaptive avgpool to 1x1) + flatten.
    o_ref[0] = jnp.mean(z.reshape(Hp * Wp, C), axis=0,
                        keepdims=True).astype(o_ref.dtype)


# ----------------------------------------------------------------------------
# Wrappers (grid, BlockSpecs, BN folding)
# ----------------------------------------------------------------------------

def _compiler_params():
    return pltpu.CompilerParams(
        dimension_semantics=("parallel",),            # batch axis -> 2 TCs on v7x
        vmem_limit_bytes=48 * 1024 * 1024)            # headroom for v7x's 64 MiB VMEM


def fold_bn_into_conv(w, bn, eps=1e-5):
    """Inference-time BN fold: scale into weights (bf16 MXU feed), bias separate."""
    gamma, beta, mean, var = bn
    scale = gamma / jnp.sqrt(var + eps)               # (Cout,)
    bias = beta - mean * scale
    kh, kw, cin, cout = w.shape
    w_folded = (w * scale).reshape(kh * kw * cin, cout).astype(jnp.bfloat16)
    return w_folded, bias.reshape(1, cout).astype(jnp.float32)


def stem_conv_bn_relu_maxpool(x_nhwc, w_folded, bias):
    N, H, W, Cin = x_nhwc.shape
    Cout = w_folded.shape[-1]
    assert H % 2 == 0 and W % 2 == 0
    Hp, Wp = H // 2, W // 2
    return pl.pallas_call(
        _stem_conv_pool_kernel,
        out_shape=jax.ShapeDtypeStruct((N, Hp, Wp, Cout), jnp.float32),
        grid=(N,),
        in_specs=[
            pl.BlockSpec((1, H, W, Cin), lambda n: (n, 0, 0, 0)),
            pl.BlockSpec((9 * Cin, Cout), lambda n: (0, 0)),   # resident across grid
            pl.BlockSpec((1, Cout), lambda n: (0, 0)),
        ],
        out_specs=pl.BlockSpec((1, Hp, Wp, Cout), lambda n: (n, 0, 0, 0)),
        scratch_shapes=[
            pltpu.VMEM((H + 2, W + 2, Cin), jnp.bfloat16),     # zero-halo scratch
            pltpu.VMEM((H * W, 9 * Cin), jnp.bfloat16),        # im2col scratch
        ],
        compiler_params=_compiler_params(),
    )(x_nhwc, w_folded, bias)


def block_residual_gap(x_nhwc, wa, ba, wb, bb):
    N, Hp, Wp, C = x_nhwc.shape
    out = pl.pallas_call(
        _block_gap_kernel,
        out_shape=jax.ShapeDtypeStruct((N, 1, C), jnp.float32),
        grid=(N,),
        in_specs=[
            pl.BlockSpec((1, Hp, Wp, C), lambda n: (n, 0, 0, 0)),
            pl.BlockSpec((9 * C, C), lambda n: (0, 0)),
            pl.BlockSpec((1, C), lambda n: (0, 0)),
            pl.BlockSpec((9 * C, C), lambda n: (0, 0)),
            pl.BlockSpec((1, C), lambda n: (0, 0)),
        ],
        out_specs=pl.BlockSpec((1, 1, C), lambda n: (n, 0, 0)),
        scratch_shapes=[
            pltpu.VMEM((Hp + 2, Wp + 2, C), jnp.bfloat16),
            pltpu.VMEM((Hp * Wp, 9 * C), jnp.bfloat16),
        ],
        compiler_params=_compiler_params(),
    )(x_nhwc, wa, ba, wb, bb)
    return out.reshape(N, C)                          # flatten: x.view(N, -1)


# ----------------------------------------------------------------------------
# ResNetBottom forward (features -> flatten)
# ----------------------------------------------------------------------------

def resnet_bottom_forward(x_nchw, params):
    """x_nchw (N, Cin, H, W) f32 -> (N, num_feats) f32."""
    x = jnp.transpose(x_nchw, (0, 2, 3, 1))           # NCHW -> NHWC (C on lanes)
    w1, b1 = fold_bn_into_conv(params["w1"], params["bn1"])
    wa, ba = fold_bn_into_conv(params["w_a"], params["bn_a"])
    wb, bb = fold_bn_into_conv(params["w_b"], params["bn_b"])
    pooled = stem_conv_bn_relu_maxpool(x, w1, b1)     # stem + maxpool fused
    return block_residual_gap(pooled, wa, ba, wb, bb)  # block + residual + GAP fused


# ----------------------------------------------------------------------------
# Pure-JAX f32 reference (numerical check)
# ----------------------------------------------------------------------------

def _conv_ref(x_nhwc, w):
    return lax.conv_general_dilated(
        x_nhwc, w, window_strides=(1, 1), padding="SAME",
        dimension_numbers=("NHWC", "HWIO", "NHWC"))


def _fold_bn_ref(bn, eps=1e-5):
    gamma, beta, mean, var = bn
    scale = gamma / jnp.sqrt(var + eps)
    return scale, beta - mean * scale


def resnet_bottom_ref(x_nchw, params):
    x = jnp.transpose(x_nchw, (0, 2, 3, 1))
    s, b = _fold_bn_ref(params["bn1"])
    x = jax.nn.relu(_conv_ref(x, params["w1"]) * s + b)
    x = lax.reduce_window(x, -jnp.inf, lax.max, (1, 2, 2, 1), (1, 2, 2, 1), "VALID")
    identity = x
    sa, ba = _fold_bn_ref(params["bn_a"])
    y = jax.nn.relu(_conv_ref(x, params["w_a"]) * sa + ba)
    sb, bb = _fold_bn_ref(params["bn_b"])
    x = jax.nn.relu(_conv_ref(y, params["w_b"]) * sb + bb + identity)
    return jnp.mean(x, axis=(1, 2))


# ----------------------------------------------------------------------------
# Deterministic parameter init + demo
# ----------------------------------------------------------------------------

def make_params(key, cin=4, c=32):
    ks = jax.random.split(key, 6)

    def bn(k, ch):
        k1, k2, k3, k4 = jax.random.split(k, 4)
        gamma = 1.0 + 0.1 * jax.random.normal(k1, (ch,), jnp.float32)
        beta = 0.1 * jax.random.normal(k2, (ch,), jnp.float32)
        mean = 0.1 * jax.random.normal(k3, (ch,), jnp.float32)
        var = jnp.abs(jax.random.normal(k4, (ch,), jnp.float32)) + 0.5
        return (gamma, beta, mean, var)

    s1 = 1.0 / (9 * cin) ** 0.5
    s2 = 1.0 / (9 * c) ** 0.5
    return {
        "w1": s1 * jax.random.normal(ks[0], (3, 3, cin, c), jnp.float32),
        "bn1": bn(ks[1], c),
        "w_a": s2 * jax.random.normal(ks[2], (3, 3, c, c), jnp.float32),
        "bn_a": bn(ks[3], c),
        "w_b": s2 * jax.random.normal(ks[4], (3, 3, c, c), jnp.float32),
        "bn_b": bn(ks[5], c),
        # the original model's final fc is stripped by ResNetBottom -> not created
    }


if __name__ == "__main__":
    key = jax.random.PRNGKey(0)
    k_x, k_p = jax.random.split(key)

    N, Cin, H, W, C = 2, 4, 16, 16, 32                # small demo shapes (NCHW input)
    x = jax.random.normal(k_x, (N, Cin, H, W), jnp.float32)
    params = make_params(k_p, cin=Cin, c=C)

    fwd = jax.jit(resnet_bottom_forward)
    out = jax.block_until_ready(fwd(x, params))
    assert out.shape == (N, C), out.shape             # (batch, num_feats) after flatten

    ref = resnet_bottom_ref(x, params)
    max_err = float(jnp.max(jnp.abs(out - ref)))
    # bf16 MXU operands vs f32 reference -> loose-ish tolerance
    assert jnp.allclose(out, ref, atol=5e-2, rtol=5e-2), f"max abs err {max_err}"

    print("KERNEL_OK")
</pallas_src>

<mosaic_0001>
module attributes {stable_mosaic.version = 11 : i64} {
  func.func @_stem_conv_pool_kernel(%arg0: i32, %arg1: memref<1x16x16x4xf32, #tpu.memory_space<vmem>>, %arg2: memref<36x32xbf16, #tpu.memory_space<vmem>>, %arg3: memref<1x32xf32, #tpu.memory_space<vmem>>, %arg4: memref<1x8x8x32xf32, #tpu.memory_space<vmem>>, %arg5: memref<18x18x4xbf16, #tpu.memory_space<vmem>>, %arg6: memref<256x36xbf16, #tpu.memory_space<vmem>>) attributes {dimension_semantics = [#tpu.dimension_semantics<parallel>], iteration_bounds = array<i64: 2>, scalar_prefetch = 0 : i64, scratch_operands = 2 : i64, tpu.core_type = #tpu.core_type<tc>, window_params = [{transform_indices = @transform_0, window_bounds = array<i64: 1, 16, 16, 4>}, {pipeline_mode = #tpu.pipeline_mode<synchronous>, transform_indices = @transform_1, window_bounds = array<i64: 36, 32>}, {pipeline_mode = #tpu.pipeline_mode<synchronous>, transform_indices = @transform_2, window_bounds = array<i64: 1, 32>}, {transform_indices = @transform_3, window_bounds = array<i64: 1, 8, 8, 32>}]} {
    %cst = arith.constant 0.000000e+00 : bf16
    %0 = vector.broadcast %cst : bf16 to vector<18x18x4xbf16>
    %c0 = arith.constant 0 : index
    %c0_0 = arith.constant 0 : index
    %c0_1 = arith.constant 0 : index
    %1 = vector.load %arg5[%c0, %c0_0, %c0_1] : memref<18x18x4xbf16, #tpu.memory_space<vmem>>, vector<18x18x4xbf16>
    tpu.vector_store %arg5[%c0, %c0_0, %c0_1], %0 {strides = array<i32>} : memref<18x18x4xbf16, #tpu.memory_space<vmem>>, vector<18x18x4xbf16>,
    %c0_2 = arith.constant 0 : index
    %c0_3 = arith.constant 0 : index
    %c0_4 = arith.constant 0 : index
    %c0_5 = arith.constant 0 : index
    %2 = vector.load %arg1[%c0_2, %c0_3, %c0_4, %c0_5] : memref<1x16x16x4xf32, #tpu.memory_space<vmem>>, vector<1x16x16x4xf32>
    %3 = vector.shape_cast %2 : vector<1x16x16x4xf32> to vector<16x16x4xf32>
    %4 = arith.truncf %3 : vector<16x16x4xf32> to vector<16x16x4xbf16>
    %c1 = arith.constant 1 : index
    %c1_6 = arith.constant 1 : index
    %c0_7 = arith.constant 0 : index
    %5 = vector.load %arg5[%c1, %c1_6, %c0_7] : memref<18x18x4xbf16, #tpu.memory_space<vmem>>, vector<16x16x4xbf16>
    tpu.vector_store %arg5[%c1, %c1_6, %c0_7], %4 {strides = array<i32>} : memref<18x18x4xbf16, #tpu.memory_space<vmem>>, vector<16x16x4xbf16>,
    %c0_8 = arith.constant 0 : index
    %c0_9 = arith.constant 0 : index
    %c0_10 = arith.constant 0 : index
    %6 = vector.load %arg5[%c0_8, %c0_9, %c0_10] : memref<18x18x4xbf16, #tpu.memory_space<vmem>>, vector<16x16x4xbf16>
    %7 = vector.shape_cast %6 : vector<16x16x4xbf16> to vector<256x4xbf16>
    %c0_11 = arith.constant 0 : index
    %c0_12 = arith.constant 0 : index
    %8 = vector.load %arg6[%c0_11, %c0_12] : memref<256x36xbf16, #tpu.memory_space<vmem>>, vector<256x4xbf16>
    tpu.vector_store %arg6[%c0_11, %c0_12], %7 {strides = array<i32>} : memref<256x36xbf16, #tpu.memory_space<vmem>>, vector<256x4xbf16>,
    %c0_13 = arith.constant 0 : index
    %c1_14 = arith.constant 1 : index
    %c0_15 = arith.constant 0 : index
    %9 = vector.load %arg5[%c0_13, %c1_14, %c0_15] : memref<18x18x4xbf16, #tpu.memory_space<vmem>>, vector<16x16x4xbf16>
    %10 = vector.shape_cast %9 : vector<16x16x4xbf16> to vector<256x4xbf16>
    %c0_16 = arith.constant 0 : index
    %c4 = arith.constant 4 : index
    %11 = vector.load %arg6[%c0_16, %c4] : memref<256x36xbf16, #tpu.memory_space<vmem>>, vector<256x4xbf16>
    tpu.vector_store %arg6[%c0_16, %c4], %10 {strides = array<i32>} : memref<256x36xbf16, #tpu.memory_space<vmem>>, vector<256x4xbf16>,
    %c0_17 = arith.constant 0 : index
    %c2 = arith.constant 2 : index
    %c0_18 = arith.constant 0 : index
    %12 = vector.load %arg5[%c0_17, %c2, %c0_18] : memref<18x18x4xbf16, #tpu.memory_space<vmem>>, vector<16x16x4xbf16>
    %13 = vector.shape_cast %12 : vector<16x16x4xbf16> to vector<256x4xbf16>
    %c0_19 = arith.constant 0 : index
    %c8 = arith.constant 8 : index
    %14 = vector.load %arg6[%c0_19, %c8] : memref<256x36xbf16, #tpu.memory_space<vmem>>, vector<256x4xbf16>
    tpu.vector_store %arg6[%c0_19, %c8], %13 {strides = array<i32>} : memref<256x36xbf16, #tpu.memory_space<vmem>>, vector<256x4xbf16>,
    %c1_20 = arith.constant 1 : index
    %c0_21 = arith.constant 0 : index
    %c0_22 = arith.constant 0 : index
    %15 = vector.load %arg5[%c1_20, %c0_21, %c0_22] : memref<18x18x4xbf16, #tpu.memory_space<vmem>>, vector<16x16x4xbf16>
    %16 = vector.shape_cast %15 : vector<16x16x4xbf16> to vector<256x4xbf16>
    %c0_23 = arith.constant 0 : index
    %c12 = arith.constant 12 : index
    %17 = vector.load %arg6[%c0_23, %c12] : memref<256x36xbf16, #tpu.memory_space<vmem>>, vector<256x4xbf16>
    tpu.vector_store %arg6[%c0_23, %c12], %16 {strides = array<i32>} : memref<256x36xbf16, #tpu.memory_space<vmem>>, vector<256x4xbf16>,
    %c1_24 = arith.constant 1 : index
    %c1_25 = arith.constant 1 : index
    %c0_26 = arith.constant 0 : index
    %18 = vector.load %arg5[%c1_24, %c1_25, %c0_26] : memref<18x18x4xbf16, #tpu.memory_space<vmem>>, vector<16x16x4xbf16>
    %19 = vector.shape_cast %18 : vector<16x16x4xbf16> to vector<256x4xbf16>
    %c0_27 = arith.constant 0 : index
    %c16 = arith.constant 16 : index
    %20 = vector.load %arg6[%c0_27, %c16] : memref<256x36xbf16, #tpu.memory_space<vmem>>, vector<256x4xbf16>
    tpu.vector_store %arg6[%c0_27, %c16], %19 {strides = array<i32>} : memref<256x36xbf16, #tpu.memory_space<vmem>>, vector<256x4xbf16>,
    %c1_28 = arith.constant 1 : index
    %c2_29 = arith.constant 2 : index
    %c0_30 = arith.constant 0 : index
    %21 = vector.load %arg5[%c1_28, %c2_29, %c0_30] : memref<18x18x4xbf16, #tpu.memory_space<vmem>>, vector<16x16x4xbf16>
    %22 = vector.shape_cast %21 : vector<16x16x4xbf16> to vector<256x4xbf16>
    %c0_31 = arith.constant 0 : index
    %c20 = arith.constant 20 : index
    %23 = vector.load %arg6[%c0_31, %c20] : memref<256x36xbf16, #tpu.memory_space<vmem>>, vector<256x4xbf16>
    tpu.vector_store %arg6[%c0_31, %c20], %22 {strides = array<i32>} : memref<256x36xbf16, #tpu.memory_space<vmem>>, vector<256x4xbf16>,
    %c2_32 = arith.constant 2 : index
    %c0_33 = arith.constant 0 : index
    %c0_34 = arith.constant 0 : index
    %24 = vector.load %arg5[%c2_32, %c0_33, %c0_34] : memref<18x18x4xbf16, #tpu.memory_space<vmem>>, vector<16x16x4xbf16>
    %25 = vector.shape_cast %24 : vector<16x16x4xbf16> to vector<256x4xbf16>
    %c0_35 = arith.constant 0 : index
    %c24 = arith.constant 24 : index
    %26 = vector.load %arg6[%c0_35, %c24] : memref<256x36xbf16, #tpu.memory_space<vmem>>, vector<256x4xbf16>
    tpu.vector_store %arg6[%c0_35, %c24], %25 {strides = array<i32>} : memref<256x36xbf16, #tpu.memory_space<vmem>>, vector<256x4xbf16>,
    %c2_36 = arith.constant 2 : index
    %c1_37 = arith.constant 1 : index
    %c0_38 = arith.constant 0 : index
    %27 = vector.load %arg5[%c2_36, %c1_37, %c0_38] : memref<18x18x4xbf16, #tpu.memory_space<vmem>>, vector<16x16x4xbf16>
    %28 = vector.shape_cast %27 : vector<16x16x4xbf16> to vector<256x4xbf16>
    %c0_39 = arith.constant 0 : index
    %c28 = arith.constant 28 : index
    %29 = vector.load %arg6[%c0_39, %c28] : memref<256x36xbf16, #tpu.memory_space<vmem>>, vector<256x4xbf16>
    tpu.vector_store %arg6[%c0_39, %c28], %28 {strides = array<i32>} : memref<256x36xbf16, #tpu.memory_space<vmem>>, vector<256x4xbf16>,
    %c2_40 = arith.constant 2 : index
    %c2_41 = arith.constant 2 : index
    %c0_42 = arith.constant 0 : index
    %30 = vector.load %arg5[%c2_40, %c2_41, %c0_42] : memref<18x18x4xbf16, #tpu.memory_space<vmem>>, vector<16x16x4xbf16>
    %31 = vector.shape_cast %30 : vector<16x16x4xbf16> to vector<256x4xbf16>
    %c0_43 = arith.constant 0 : index
    %c32 = arith.constant 32 : index
    %32 = vector.load %arg6[%c0_43, %c32] : memref<256x36xbf16, #tpu.memory_space<vmem>>, vector<256x4xbf16>
    tpu.vector_store %arg6[%c0_43, %c32], %31 {strides = array<i32>} : memref<256x36xbf16, #tpu.memory_space<vmem>>, vector<256x4xbf16>,
    %c0_44 = arith.constant 0 : index
    %c0_45 = arith.constant 0 : index
    %33 = vector.load %arg6[%c0_44, %c0_45] : memref<256x36xbf16, #tpu.memory_space<vmem>>, vector<256x36xbf16>
    %c0_46 = arith.constant 0 : index
    %c0_47 = arith.constant 0 : index
    %34 = vector.load %arg2[%c0_46, %c0_47] : memref<36x32xbf16, #tpu.memory_space<vmem>>, vector<36x32xbf16>
    %cst_48 = arith.constant dense<0.000000e+00> : vector<256x32xf32>
    %35 = tpu.matmul %33, %34, %cst_48 {dimension_numbers = #tpu.dot_dimension_numbers<[1], [0], [0], [1], [0, 0, 1, 1], [], []>} : vector<256x36xbf16>, vector<36x32xbf16>, vector<256x32xf32> -> vector<256x32xf32>
    %c0_49 = arith.constant 0 : index
    %c0_50 = arith.constant 0 : index
    %36 = vector.load %arg3[%c0_49, %c0_50] : memref<1x32xf32, #tpu.memory_space<vmem>>, vector<1x32xf32>
    %37 = vector.broadcast %36 : vector<1x32xf32> to vector<256x32xf32>
    %38 = arith.addf %35, %37 : vector<256x32xf32>
    %cst_51 = arith.constant 0.000000e+00 : f32
    %39 = vector.broadcast %cst_51 : f32 to vector<256x32xf32>
    %40 = arith.maximumf %38, %39 : vector<256x32xf32>
    %41 = vector.shape_cast %40 : vector<256x32xf32> to vector<16x16x32xf32>
    %42 = vector.shape_cast %41 : vector<16x16x32xf32> to vector<8x2x16x32xf32>
    %cst_52 = arith.constant dense<0xFF800000> : vector<8x16x32xf32>
    %43 = vector.multi_reduction <maximumf>, %42, %cst_52 [1] : vector<8x2x16x32xf32> to vector<8x16x32xf32>
    %44 = vector.shape_cast %43 : vector<8x16x32xf32> to vector<8x8x2x32xf32>
    %cst_53 = arith.constant dense<0xFF800000> : vector<8x8x32xf32>
    %45 = vector.multi_reduction <maximumf>, %44, %cst_53 [2] : vector<8x8x2x32xf32> to vector<8x8x32xf32>
    %c0_54 = arith.constant 0 : index
    %c0_55 = arith.constant 0 : index
    %c0_56 = arith.constant 0 : index
    %c0_57 = arith.constant 0 : index
    %46 = vector.load %arg4[%c0_54, %c0_55, %c0_56, %c0_57] : memref<1x8x8x32xf32, #tpu.memory_space<vmem>>, vector<1x8x8x32xf32>
    %47 = vector.shape_cast %46 : vector<1x8x8x32xf32> to vector<8x8x32xf32>
    %48 = vector.shape_cast %45 : vector<8x8x32xf32> to vector<1x8x8x32xf32>
    tpu.vector_store %arg4[%c0_54, %c0_55, %c0_56, %c0_57], %48 {strides = array<i32>} : memref<1x8x8x32xf32, #tpu.memory_space<vmem>>, vector<1x8x8x32xf32>,
    return
  }
  func.func @transform_0(%arg0: i32) -> (i32, i32, i32, i32) {
    %c0_i32 = arith.constant 0 : i32
    %c0_i32_0 = arith.constant 0 : i32
    %c0_i32_1 = arith.constant 0 : i32
    %c0_i32_2 = arith.constant 0 : i32
    return %arg0, %c0_i32, %c0_i32_0, %c0_i32_1 : i32, i32, i32, i32
  }
  func.func @transform_1(%arg0: i32) -> (i32, i32) {
    %c0_i32 = arith.constant 0 : i32
    %c0_i32_0 = arith.constant 0 : i32
    %c0_i32_1 = arith.constant 0 : i32
    return %c0_i32, %c0_i32_0 : i32, i32
  }
  func.func @transform_2(%arg0: i32) -> (i32, i32) {
    %c0_i32 = arith.constant 0 : i32
    %c0_i32_0 = arith.constant 0 : i32
    %c0_i32_1 = arith.constant 0 : i32
    return %c0_i32, %c0_i32_0 : i32, i32
  }
  func.func @transform_3(%arg0: i32) -> (i32, i32, i32, i32) {
    %c0_i32 = arith.constant 0 : i32
    %c0_i32_0 = arith.constant 0 : i32
    %c0_i32_1 = arith.constant 0 : i32
    %c0_i32_2 = arith.constant 0 : i32
    return %arg0, %c0_i32, %c0_i32_0, %c0_i32_1 : i32, i32, i32, i32
  }
}

module attributes {stable_mosaic.version = 11 : i64} {
  func.func @_block_gap_kernel(%arg0: i32, %arg1: memref<1x8x8x32xf32, #tpu.memory_space<vmem>>, %arg2: memref<288x32xbf16, #tpu.memory_space<vmem>>, %arg3: memref<1x32xf32, #tpu.memory_space<vmem>>, %arg4: memref<288x32xbf16, #tpu.memory_space<vmem>>, %arg5: memref<1x32xf32, #tpu.memory_space<vmem>>, %arg6: memref<1x1x32xf32, #tpu.memory_space<vmem>>, %arg7: memref<10x10x32xbf16, #tpu.memory_space<vmem>>, %arg8: memref<64x288xbf16, #tpu.memory_space<vmem>>) attributes {dimension_semantics = [#tpu.dimension_semantics<parallel>], iteration_bounds = array<i64: 2>, scalar_prefetch = 0 : i64, scratch_operands = 2 : i64, tpu.core_type = #tpu.core_type<tc>, window_params = [{transform_indices = @transform_0, window_bounds = array<i64: 1, 8, 8, 32>}, {pipeline_mode = #tpu.pipeline_mode<synchronous>, transform_indices = @transform_1, window_bounds = array<i64: 288, 32>}, {pipeline_mode = #tpu.pipeline_mode<synchronous>, transform_indices = @transform_2, window_bounds = array<i64: 1, 32>}, {pipeline_mode = #tpu.pipeline_mode<synchronous>, transform_indices = @transform_3, window_bounds = array<i64: 288, 32>}, {pipeline_mode = #tpu.pipeline_mode<synchronous>, transform_indices = @transform_4, window_bounds = array<i64: 1, 32>}, {transform_indices = @transform_5, window_bounds = array<i64: 1, 1, 32>}]} {
    %c0 = arith.constant 0 : index
    %c0_0 = arith.constant 0 : index
    %c0_1 = arith.constant 0 : index
    %c0_2 = arith.constant 0 : index
    %0 = vector.load %arg1[%c0, %c0_0, %c0_1, %c0_2] : memref<1x8x8x32xf32, #tpu.memory_space<vmem>>, vector<1x8x8x32xf32>
    %1 = vector.shape_cast %0 : vector<1x8x8x32xf32> to vector<8x8x32xf32>
    %cst = arith.constant 0.000000e+00 : bf16
    %2 = vector.broadcast %cst : bf16 to vector<10x10x32xbf16>
    %c0_3 = arith.constant 0 : index
    %c0_4 = arith.constant 0 : index
    %c0_5 = arith.constant 0 : index
    %3 = vector.load %arg7[%c0_3, %c0_4, %c0_5] : memref<10x10x32xbf16, #tpu.memory_space<vmem>>, vector<10x10x32xbf16>
    tpu.vector_store %arg7[%c0_3, %c0_4, %c0_5], %2 {strides = array<i32>} : memref<10x10x32xbf16, #tpu.memory_space<vmem>>, vector<10x10x32xbf16>,
    %4 = arith.truncf %1 : vector<8x8x32xf32> to vector<8x8x32xbf16>
    %c1 = arith.constant 1 : index
    %c1_6 = arith.constant 1 : index
    %c0_7 = arith.constant 0 : index
    %5 = vector.load %arg7[%c1, %c1_6, %c0_7] : memref<10x10x32xbf16, #tpu.memory_space<vmem>>, vector<8x8x32xbf16>
    tpu.vector_store %arg7[%c1, %c1_6, %c0_7], %4 {strides = array<i32>} : memref<10x10x32xbf16, #tpu.memory_space<vmem>>, vector<8x8x32xbf16>,
    %c0_8 = arith.constant 0 : index
    %c0_9 = arith.constant 0 : index
    %c0_10 = arith.constant 0 : index
    %6 = vector.load %arg7[%c0_8, %c0_9, %c0_10] : memref<10x10x32xbf16, #tpu.memory_space<vmem>>, vector<8x8x32xbf16>
    %7 = vector.shape_cast %6 : vector<8x8x32xbf16> to vector<64x32xbf16>
    %c0_11 = arith.constant 0 : index
    %c0_12 = arith.constant 0 : index
    %8 = vector.load %arg8[%c0_11, %c0_12] : memref<64x288xbf16, #tpu.memory_space<vmem>>, vector<64x32xbf16>
    tpu.vector_store %arg8[%c0_11, %c0_12], %7 {strides = array<i32>} : memref<64x288xbf16, #tpu.memory_space<vmem>>, vector<64x32xbf16>,
    %c0_13 = arith.constant 0 : index
    %c1_14 = arith.constant 1 : index
    %c0_15 = arith.constant 0 : index
    %9 = vector.load %arg7[%c0_13, %c1_14, %c0_15] : memref<10x10x32xbf16, #tpu.memory_space<vmem>>, vector<8x8x32xbf16>
    %10 = vector.shape_cast %9 : vector<8x8x32xbf16> to vector<64x32xbf16>
    %c0_16 = arith.constant 0 : index
    %c32 = arith.constant 32 : index
    %11 = vector.load %arg8[%c0_16, %c32] : memref<64x288xbf16, #tpu.memory_space<vmem>>, vector<64x32xbf16>
    tpu.vector_store %arg8[%c0_16, %c32], %10 {strides = array<i32>} : memref<64x288xbf16, #tpu.memory_space<vmem>>, vector<64x32xbf16>,
    %c0_17 = arith.constant 0 : index
    %c2 = arith.constant 2 : index
    %c0_18 = arith.constant 0 : index
    %12 = vector.load %arg7[%c0_17, %c2, %c0_18] : memref<10x10x32xbf16, #tpu.memory_space<vmem>>, vector<8x8x32xbf16>
    %13 = vector.shape_cast %12 : vector<8x8x32xbf16> to vector<64x32xbf16>
    %c0_19 = arith.constant 0 : index
    %c64 = arith.constant 64 : index
    %14 = vector.load %arg8[%c0_19, %c64] : memref<64x288xbf16, #tpu.memory_space<vmem>>, vector<64x32xbf16>
    tpu.vector_store %arg8[%c0_19, %c64], %13 {strides = array<i32>} : memref<64x288xbf16, #tpu.memory_space<vmem>>, vector<64x32xbf16>,
    %c1_20 = arith.constant 1 : index
    %c0_21 = arith.constant 0 : index
    %c0_22 = arith.constant 0 : index
    %15 = vector.load %arg7[%c1_20, %c0_21, %c0_22] : memref<10x10x32xbf16, #tpu.memory_space<vmem>>, vector<8x8x32xbf16>
    %16 = vector.shape_cast %15 : vector<8x8x32xbf16> to vector<64x32xbf16>
    %c0_23 = arith.constant 0 : index
    %c96 = arith.constant 96 : index
    %17 = vector.load %arg8[%c0_23, %c96] : memref<64x288xbf16, #tpu.memory_space<vmem>>, vector<64x32xbf16>
    tpu.vector_store %arg8[%c0_23, %c96], %16 {strides = array<i32>} : memref<64x288xbf16, #tpu.memory_space<vmem>>, vector<64x32xbf16>,
    %c1_24 = arith.constant 1 : index
    %c1_25 = arith.constant 1 : index
    %c0_26 = arith.constant 0 : index
    %18 = vector.load %arg7[%c1_24, %c1_25, %c0_26] : memref<10x10x32xbf16, #tpu.memory_space<vmem>>, vector<8x8x32xbf16>
    %19 = vector.shape_cast %18 : vector<8x8x32xbf16> to vector<64x32xbf16>
    %c0_27 = arith.constant 0 : index
    %c128 = arith.constant 128 : index
    %20 = vector.load %arg8[%c0_27, %c128] : memref<64x288xbf16, #tpu.memory_space<vmem>>, vector<64x32xbf16>
    tpu.vector_store %arg8[%c0_27, %c128], %19 {strides = array<i32>} : memref<64x288xbf16, #tpu.memory_space<vmem>>, vector<64x32xbf16>,
    %c1_28 = arith.constant 1 : index
    %c2_29 = arith.constant 2 : index
    %c0_30 = arith.constant 0 : index
    %21 = vector.load %arg7[%c1_28, %c2_29, %c0_30] : memref<10x10x32xbf16, #tpu.memory_space<vmem>>, vector<8x8x32xbf16>
    %22 = vector.shape_cast %21 : vector<8x8x32xbf16> to vector<64x32xbf16>
    %c0_31 = arith.constant 0 : index
    %c160 = arith.constant 160 : index
    %23 = vector.load %arg8[%c0_31, %c160] : memref<64x288xbf16, #tpu.memory_space<vmem>>, vector<64x32xbf16>
    tpu.vector_store %arg8[%c0_31, %c160], %22 {strides = array<i32>} : memref<64x288xbf16, #tpu.memory_space<vmem>>, vector<64x32xbf16>,
    %c2_32 = arith.constant 2 : index
    %c0_33 = arith.constant 0 : index
    %c0_34 = arith.constant 0 : index
    %24 = vector.load %arg7[%c2_32, %c0_33, %c0_34] : memref<10x10x32xbf16, #tpu.memory_space<vmem>>, vector<8x8x32xbf16>
    %25 = vector.shape_cast %24 : vector<8x8x32xbf16> to vector<64x32xbf16>
    %c0_35 = arith.constant 0 : index
    %c192 = arith.constant 192 : index
    %26 = vector.load %arg8[%c0_35, %c192] : memref<64x288xbf16, #tpu.memory_space<vmem>>, vector<64x32xbf16>
    tpu.vector_store %arg8[%c0_35, %c192], %25 {strides = array<i32>} : memref<64x288xbf16, #tpu.memory_space<vmem>>, vector<64x32xbf16>,
    %c2_36 = arith.constant 2 : index
    %c1_37 = arith.constant 1 : index
    %c0_38 = arith.constant 0 : index
    %27 = vector.load %arg7[%c2_36, %c1_37, %c0_38] : memref<10x10x32xbf16, #tpu.memory_space<vmem>>, vector<8x8x32xbf16>
    %28 = vector.shape_cast %27 : vector<8x8x32xbf16> to vector<64x32xbf16>
    %c0_39 = arith.constant 0 : index
    %c224 = arith.constant 224 : index
    %29 = vector.load %arg8[%c0_39, %c224] : memref<64x288xbf16, #tpu.memory_space<vmem>>, vector<64x32xbf16>
    tpu.vector_store %arg8[%c0_39, %c224], %28 {strides = array<i32>} : memref<64x288xbf16, #tpu.memory_space<vmem>>, vector<64x32xbf16>,
    %c2_40 = arith.constant 2 : index
    %c2_41 = arith.constant 2 : index
    %c0_42 = arith.constant 0 : index
    %30 = vector.load %arg7[%c2_40, %c2_41, %c0_42] : memref<10x10x32xbf16, #tpu.memory_space<vmem>>, vector<8x8x32xbf16>
    %31 = vector.shape_cast %30 : vector<8x8x32xbf16> to vector<64x32xbf16>
    %c0_43 = arith.constant 0 : index
    %c256 = arith.constant 256 : index
    %32 = vector.load %arg8[%c0_43, %c256] : memref<64x288xbf16, #tpu.memory_space<vmem>>, vector<64x32xbf16>
    tpu.vector_store %arg8[%c0_43, %c256], %31 {strides = array<i32>} : memref<64x288xbf16, #tpu.memory_space<vmem>>, vector<64x32xbf16>,
    %c0_44 = arith.constant 0 : index
    %c0_45 = arith.constant 0 : index
    %33 = vector.load %arg8[%c0_44, %c0_45] : memref<64x288xbf16, #tpu.memory_space<vmem>>, vector<64x288xbf16>
    %c0_46 = arith.constant 0 : index
    %c0_47 = arith.constant 0 : index
    %34 = vector.load %arg2[%c0_46, %c0_47] : memref<288x32xbf16, #tpu.memory_space<vmem>>, vector<288x32xbf16>
    %cst_48 = arith.constant dense<0.000000e+00> : vector<64x32xf32>
    %35 = tpu.matmul %33, %34, %cst_48 {dimension_numbers = #tpu.dot_dimension_numbers<[1], [0], [0], [1], [0, 0, 1, 1], [], []>} : vector<64x288xbf16>, vector<288x32xbf16>, vector<64x32xf32> -> vector<64x32xf32>
    %c0_49 = arith.constant 0 : index
    %c0_50 = arith.constant 0 : index
    %36 = vector.load %arg3[%c0_49, %c0_50] : memref<1x32xf32, #tpu.memory_space<vmem>>, vector<1x32xf32>
    %37 = vector.broadcast %36 : vector<1x32xf32> to vector<64x32xf32>
    %38 = arith.addf %35, %37 : vector<64x32xf32>
    %cst_51 = arith.constant 0.000000e+00 : f32
    %39 = vector.broadcast %cst_51 : f32 to vector<64x32xf32>
    %40 = arith.maximumf %38, %39 : vector<64x32xf32>
    %41 = vector.shape_cast %40 : vector<64x32xf32> to vector<8x8x32xf32>
    %42 = arith.truncf %41 : vector<8x8x32xf32> to vector<8x8x32xbf16>
    %c1_52 = arith.constant 1 : index
    %c1_53 = arith.constant 1 : index
    %c0_54 = arith.constant 0 : index
    %43 = vector.load %arg7[%c1_52, %c1_53, %c0_54] : memref<10x10x32xbf16, #tpu.memory_space<vmem>>, vector<8x8x32xbf16>
    tpu.vector_store %arg7[%c1_52, %c1_53, %c0_54], %42 {strides = array<i32>} : memref<10x10x32xbf16, #tpu.memory_space<vmem>>, vector<8x8x32xbf16>,
    %c0_55 = arith.constant 0 : index
    %c0_56 = arith.constant 0 : index
    %c0_57 = arith.constant 0 : index
    %44 = vector.load %arg7[%c0_55, %c0_56, %c0_57] : memref<10x10x32xbf16, #tpu.memory_space<vmem>>, vector<8x8x32xbf16>
    %45 = vector.shape_cast %44 : vector<8x8x32xbf16> to vector<64x32xbf16>
    %c0_58 = arith.constant 0 : index
    %c0_59 = arith.constant 0 : index
    %46 = vector.load %arg8[%c0_58, %c0_59] : memref<64x288xbf16, #tpu.memory_space<vmem>>, vector<64x32xbf16>
    tpu.vector_store %arg8[%c0_58, %c0_59], %45 {strides = array<i32>} : memref<64x288xbf16, #tpu.memory_space<vmem>>, vector<64x32xbf16>,
    %c0_60 = arith.constant 0 : index
    %c1_61 = arith.constant 1 : index
    %c0_62 = arith.constant 0 : index
    %47 = vector.load %arg7[%c0_60, %c1_61, %c0_62] : memref<10x10x32xbf16, #tpu.memory_space<vmem>>, vector<8x8x32xbf16>
    %48 = vector.shape_cast %47 : vector<8x8x32xbf16> to vector<64x32xbf16>
    %c0_63 = arith.constant 0 : index
    %c32_64 = arith.constant 32 : index
    %49 = vector.load %arg8[%c0_63, %c32_64] : memref<64x288xbf16, #tpu.memory_space<vmem>>, vector<64x32xbf16>
    tpu.vector_store %arg8[%c0_63, %c32_64], %48 {strides = array<i32>} : memref<64x288xbf16, #tpu.memory_space<vmem>>, vector<64x32xbf16>,
    %c0_65 = arith.constant 0 : index
    %c2_66 = arith.constant 2 : index
    %c0_67 = arith.constant 0 : index
    %50 = vector.load %arg7[%c0_65, %c2_66, %c0_67] : memref<10x10x32xbf16, #tpu.memory_space<vmem>>, vector<8x8x32xbf16>
    %51 = vector.shape_cast %50 : vector<8x8x32xbf16> to vector<64x32xbf16>
    %c0_68 = arith.constant 0 : index
    %c64_69 = arith.constant 64 : index
    %52 = vector.load %arg8[%c0_68, %c64_69] : memref<64x288xbf16, #tpu.memory_space<vmem>>, vector<64x32xbf16>
    tpu.vector_store %arg8[%c0_68, %c64_69], %51 {strides = array<i32>} : memref<64x288xbf16, #tpu.memory_space<vmem>>, vector<64x32xbf16>,
    %c1_70 = arith.constant 1 : index
    %c0_71 = arith.constant 0 : index
    %c0_72 = arith.constant 0 : index
    %53 = vector.load %arg7[%c1_70, %c0_71, %c0_72] : memref<10x10x32xbf16, #tpu.memory_space<vmem>>, vector<8x8x32xbf16>
    %54 = vector.shape_cast %53 : vector<8x8x32xbf16> to vector<64x32xbf16>
    %c0_73 = arith.constant 0 : index
    %c96_74 = arith.constant 96 : index
    %55 = vector.load %arg8[%c0_73, %c96_74] : memref<64x288xbf16, #tpu.memory_space<vmem>>, vector<64x32xbf16>
    tpu.vector_store %arg8[%c0_73, %c96_74], %54 {strides = array<i32>} : memref<64x288xbf16, #tpu.memory_space<vmem>>, vector<64x32xbf16>,
    %c1_75 = arith.constant 1 : index
    %c1_76 = arith.constant 1 : index
    %c0_77 = arith.constant 0 : index
    %56 = vector.load %arg7[%c1_75, %c1_76, %c0_77] : memref<10x10x32xbf16, #tpu.memory_space<vmem>>, vector<8x8x32xbf16>
    %57 = vector.shape_cast %56 : vector<8x8x32xbf16> to vector<64x32xbf16>
    %c0_78 = arith.constant 0 : index
    %c128_79 = arith.constant 128 : index
    %58 = vector.load %arg8[%c0_78, %c128_79] : memref<64x288xbf16, #tpu.memory_space<vmem>>, vector<64x32xbf16>
    tpu.vector_store %arg8[%c0_78, %c128_79], %57 {strides = array<i32>} : memref<64x288xbf16, #tpu.memory_space<vmem>>, vector<64x32xbf16>,
    %c1_80 = arith.constant 1 : index
    %c2_81 = arith.constant 2 : index
    %c0_82 = arith.constant 0 : index
    %59 = vector.load %arg7[%c1_80, %c2_81, %c0_82] : memref<10x10x32xbf16, #tpu.memory_space<vmem>>, vector<8x8x32xbf16>
    %60 = vector.shape_cast %59 : vector<8x8x32xbf16> to vector<64x32xbf16>
    %c0_83 = arith.constant 0 : index
    %c160_84 = arith.constant 160 : index
    %61 = vector.load %arg8[%c0_83, %c160_84] : memref<64x288xbf16, #tpu.memory_space<vmem>>, vector<64x32xbf16>
    tpu.vector_store %arg8[%c0_83, %c160_84], %60 {strides = array<i32>} : memref<64x288xbf16, #tpu.memory_space<vmem>>, vector<64x32xbf16>,
    %c2_85 = arith.constant 2 : index
    %c0_86 = arith.constant 0 : index
    %c0_87 = arith.constant 0 : index
    %62 = vector.load %arg7[%c2_85, %c0_86, %c0_87] : memref<10x10x32xbf16, #tpu.memory_space<vmem>>, vector<8x8x32xbf16>
    %63 = vector.shape_cast %62 : vector<8x8x32xbf16> to vector<64x32xbf16>
    %c0_88 = arith.constant 0 : index
    %c192_89 = arith.constant 192 : index
    %64 = vector.load %arg8[%c0_88, %c192_89] : memref<64x288xbf16, #tpu.memory_space<vmem>>, vector<64x32xbf16>
    tpu.vector_store %arg8[%c0_88, %c192_89], %63 {strides = array<i32>} : memref<64x288xbf16, #tpu.memory_space<vmem>>, vector<64x32xbf16>,
    %c2_90 = arith.constant 2 : index
    %c1_91 = arith.constant 1 : index
    %c0_92 = arith.constant 0 : index
    %65 = vector.load %arg7[%c2_90, %c1_91, %c0_92] : memref<10x10x32xbf16, #tpu.memory_space<vmem>>, vector<8x8x32xbf16>
    %66 = vector.shape_cast %65 : vector<8x8x32xbf16> to vector<64x32xbf16>
    %c0_93 = arith.constant 0 : index
    %c224_94 = arith.constant 224 : index
    %67 = vector.load %arg8[%c0_93, %c224_94] : memref<64x288xbf16, #tpu.memory_space<vmem>>, vector<64x32xbf16>
    tpu.vector_store %arg8[%c0_93, %c224_94], %66 {strides = array<i32>} : memref<64x288xbf16, #tpu.memory_space<vmem>>, vector<64x32xbf16>,
    %c2_95 = arith.constant 2 : index
    %c2_96 = arith.constant 2 : index
    %c0_97 = arith.constant 0 : index
    %68 = vector.load %arg7[%c2_95, %c2_96, %c0_97] : memref<10x10x32xbf16, #tpu.memory_space<vmem>>, vector<8x8x32xbf16>
    %69 = vector.shape_cast %68 : vector<8x8x32xbf16> to vector<64x32xbf16>
    %c0_98 = arith.constant 0 : index
    %c256_99 = arith.constant 256 : index
    %70 = vector.load %arg8[%c0_98, %c256_99] : memref<64x288xbf16, #tpu.memory_space<vmem>>, vector<64x32xbf16>
    tpu.vector_store %arg8[%c0_98, %c256_99], %69 {strides = array<i32>} : memref<64x288xbf16, #tpu.memory_space<vmem>>, vector<64x32xbf16>,
    %c0_100 = arith.constant 0 : index
    %c0_101 = arith.constant 0 : index
    %71 = vector.load %arg8[%c0_100, %c0_101] : memref<64x288xbf16, #tpu.memory_space<vmem>>, vector<64x288xbf16>
    %c0_102 = arith.constant 0 : index
    %c0_103 = arith.constant 0 : index
    %72 = vector.load %arg4[%c0_102, %c0_103] : memref<288x32xbf16, #tpu.memory_space<vmem>>, vector<288x32xbf16>
    %cst_104 = arith.constant dense<0.000000e+00> : vector<64x32xf32>
    %73 = tpu.matmul %71, %72, %cst_104 {dimension_numbers = #tpu.dot_dimension_numbers<[1], [0], [0], [1], [0, 0, 1, 1], [], []>} : vector<64x288xbf16>, vector<288x32xbf16>, vector<64x32xf32> -> vector<64x32xf32>
    %c0_105 = arith.constant 0 : index
    %c0_106 = arith.constant 0 : index
    %74 = vector.load %arg5[%c0_105, %c0_106] : memref<1x32xf32, #tpu.memory_space<vmem>>, vector<1x32xf32>
    %75 = vector.broadcast %74 : vector<1x32xf32> to vector<64x32xf32>
    %76 = arith.addf %73, %75 : vector<64x32xf32>
    %77 = vector.shape_cast %76 : vector<64x32xf32> to vector<8x8x32xf32>
    %78 = arith.addf %77, %1 : vector<8x8x32xf32>
    %cst_107 = arith.constant 0.000000e+00 : f32
    %79 = vector.broadcast %cst_107 : f32 to vector<8x8x32xf32>
    %80 = arith.maximumf %78, %79 : vector<8x8x32xf32>
    %81 = vector.shape_cast %80 : vector<8x8x32xf32> to vector<64x32xf32>
    %cst_108 = arith.constant dense<0.000000e+00> : vector<32xf32>
    %82 = vector.multi_reduction <add>, %81, %cst_108 [0] : vector<64x32xf32> to vector<32xf32>
    %83 = vector.shape_cast %82 : vector<32xf32> to vector<1x32xf32>
    %cst_109 = arith.constant 6.400000e+01 : f32
    %84 = vector.broadcast %cst_109 : f32 to vector<1x32xf32>
    %85 = arith.divf %83, %84 : vector<1x32xf32>
    %c0_110 = arith.constant 0 : index
    %c0_111 = arith.constant 0 : index
    %c0_112 = arith.constant 0 : index
    %86 = vector.load %arg6[%c0_110, %c0_111, %c0_112] : memref<1x1x32xf32, #tpu.memory_space<vmem>>, vector<1x1x32xf32>
    %87 = vector.shape_cast %86 : vector<1x1x32xf32> to vector<1x32xf32>
    %88 = vector.shape_cast %85 : vector<1x32xf32> to vector<1x1x32xf32>
    tpu.vector_store %arg6[%c0_110, %c0_111, %c0_112], %88 {strides = array<i32>} : memref<1x1x32xf32, #tpu.memory_space<vmem>>, vector<1x1x32xf32>,
    return
  }
  func.func @transform_0(%arg0: i32) -> (i32, i32, i32, i32) {
    %c0_i32 = arith.constant 0 : i32
    %c0_i32_0 = arith.constant 0 : i32
    %c0_i32_1 = arith.constant 0 : i32
    %c0_i32_2 = arith.constant 0 : i32
    return %arg0, %c0_i32, %c0_i32_0, %c0_i32_1 : i32, i32, i32, i32
  }
  func.func @transform_1(%arg0: i32) -> (i32, i32) {
    %c0_i32 = arith.constant 0 : i32
    %c0_i32_0 = arith.constant 0 : i32
    %c0_i32_1 = arith.constant 0 : i32
    return %c0_i32, %c0_i32_0 : i32, i32
  }
  func.func @transform_2(%arg0: i32) -> (i32, i32) {
    %c0_i32 = arith.constant 0 : i32
    %c0_i32_0 = arith.constant 0 : i32
    %c0_i32_1 = arith.constant 0 : i32
    return %c0_i32, %c0_i32_0 : i32, i32
  }
  func.func @transform_3(%arg0: i32) -> (i32, i32) {
    %c0_i32 = arith.constant 0 : i32
    %c0_i32_0 = arith.constant 0 : i32
    %c0_i32_1 = arith.constant 0 : i32
    return %c0_i32, %c0_i32_0 : i32, i32
  }
  func.func @transform_4(%arg0: i32) -> (i32, i32) {
    %c0_i32 = arith.constant 0 : i32
    %c0_i32_0 = arith.constant 0 : i32
    %c0_i32_1 = arith.constant 0 : i32
    return %c0_i32, %c0_i32_0 : i32, i32
  }
  func.func @transform_5(%arg0: i32) -> (i32, i32, i32) {
    %c0_i32 = arith.constant 0 : i32
    %c0_i32_0 = arith.constant 0 : i32
    %c0_i32_1 = arith.constant 0 : i32
    return %arg0, %c0_i32, %c0_i32_0 : i32, i32, i32
  }
}

</mosaic_0001>

<llo_original>
// kernel: resnet_bottom_forward.3
$region0: #{resnet_bottom_forward.3}
  #allocation0 [shape = 'u32[]', space=smem, size = 0x4, offset = 0x4, fixed_abs, tag = 'smem constant byte address 0x4 - core index']
  #allocation1 [shape = 'u32[144,128]{1,0:T(1,128)}', space=vmem, size = 0x12000, scoped, tag = 'internal scratch']
  #allocation2 [shape = 'bf16[10,10,32]{2,1,0:T(8,128)(2,1)}', space=vmem, size = 0xa000, scoped, tag = 'scratch operand']
  #allocation3 [shape = 'bf16[64,288]{1,0:T(16,128)(2,1)}', space=vmem, size = 0xc000, scoped, tag = 'scratch operand']
  %s0 = inlined_call_operand.vmem [shape: f32[2,8,8,32], index: 0, kind: input, shape index: {}]
  %s1 = inlined_call_operand.vmem [shape: bf16[288,32], index: 1, kind: input, shape index: {}]
  %s2 = inlined_call_operand.vmem [shape: f32[1,32], index: 2, kind: input, shape index: {}]
  %s3 = inlined_call_operand.vmem [shape: bf16[288,32], index: 3, kind: input, shape index: {}]
  %s4 = inlined_call_operand.vmem [shape: f32[1,32], index: 4, kind: input, shape index: {}]
  %s5 = inlined_call_operand.hbm [shape: f32[2,1,32], index: 5, kind: output, shape index: {}]
  %s6 = sld [smem:[#allocation0]]
  $region53: #{resnet_bottom_forward.3} parent=0
    _
  %s8 = ssub.s32 1, %s6
  %s9 = scalar_select 0, %s8, %s6
  $region1: #{resnet_bottom_forward.3} parent=0
    #allocation4 [shape = 'u8[1024]{0}', space=vmem, size = 0x400, scoped, tag = 'output window, operand 0']
    #allocation5 [shape = 's32[2]{0}', space=sflag, size = 0x8, scoped, tag = 'scoped memory for resnet_bottom_forward.3']
    %10 = vsyncpa [#allocation5], 0
    %s11 = scalar_lea.sflag [#allocation5], 1
    %12 = vsyncpa %s11, 0
    loop: start=0, step=1, limit=4
    $region2: #{resnet_bottom_forward.3} parent=1 // loop_pre_header
      _
    $region3: #{resnet_bottom_forward.3} parent=1 // loop_header
      %s14 = sphi 0, %s18
      %p15 = scmp.ge.s32.totalorder %s14, 4
      %s24 = sphi 0, %s26
      %s27 = sphi 0, %s24
      %s28 = sphi 0, %s27
      %s44 = sphi 0, %s28
      %s48 = sphi 0, %s48
      %s50 = sphi 0, %s48
      %s51 = sphi 0, %s50
      %s65 = sphi 0, %s51
      %s69 = sphi 0, %s69
      %s71 = sphi 0, %s69
      %s72 = sphi 0, %s71
      %s86 = sphi 0, %s72
      %s90 = sphi 0, %s90
      %s92 = sphi 0, %s90
      %s93 = sphi 0, %s92
      %s107 = sphi 0, %s93
      %s111 = sphi 0, %s111
      %s113 = sphi 0, %s111
      %s114 = sphi 0, %s113
      %s128 = sphi 0, %s114
      %s134 = sphi 0, %s136
      %s137 = sphi 0, %s134
      %s138 = sphi 0, %s137
      %s154 = sphi 0, %s138
    $region4: #{resnet_bottom_forward.3} parent=1 // loop_header_branch
      %17 = sbr.rel (%p15) target = $region8
    $region5: #{resnet_bottom_forward.3} parent=1 // loop_body
      %s19 = ssub.s32 %s14, 1
      %s20 = ssub.s32 %s14, 2
      %s21 = sadd.s32 %s14, 1
      %s22 = ssub.s32 %s14, %s21
      %p23 = scmp.eq.s32.totalorder %s22, 0
      %s25 = sadd.s32 %s24, 1
      %s26 = scalar_select %p23, %s24, %s25
      %p29 = pneg %p23
      %p30 = scmp.eq.s32.totalorder %s14, 1
      %p31 = por %p29, %p30
      %p32 = scmp.ne.s32.totalorder %s24, %s27
      %p33 = scmp.eq.s32.totalorder %s14, 0
      %p34 = por %p32, %p33
      %p35 = scmp.ne.s32.totalorder %s24, %s27
      %p36 = scmp.eq.s32.totalorder %s19, 1
      %p37 = por %p35, %p36
      %p38 = scmp.ne.s32.totalorder %s27, %s28
      %p39 = scmp.eq.s32.totalorder %s19, 0
      %p40 = por %p38, %p39
      %p41 = scmp.ne.s32.totalorder %s27, %s28
      %p42 = scmp.eq.s32.totalorder %s20, 1
      %p43 = por %p41, %p42
      %p45 = scmp.ne.s32.totalorder %s28, %s44
      %p46 = scmp.eq.s32.totalorder %s20, 0
      %p47 = por %p45, %p46
      %s49 = sadd.s32 %s48, 1
      %p52 = scmp.eq.s32.totalorder %s14, 1
      %p53 = scmp.ne.s32.totalorder %s48, %s50
      %p54 = scmp.eq.s32.totalorder %s14, 0
      %p55 = por %p53, %p54
      %p56 = scmp.ne.s32.totalorder %s48, %s50
      %p57 = scmp.eq.s32.totalorder %s19, 1
      %p58 = por %p56, %p57
      %p59 = scmp.ne.s32.totalorder %s50, %s51
      %p60 = scmp.eq.s32.totalorder %s19, 0
      %p61 = por %p59, %p60
      %p62 = scmp.ne.s32.totalorder %s50, %s51
      %p63 = scmp.eq.s32.totalorder %s20, 1
      %p64 = por %p62, %p63
      %p66 = scmp.ne.s32.totalorder %s51, %s65
      %p67 = scmp.eq.s32.totalorder %s20, 0
      %p68 = por %p66, %p67
      %s70 = sadd.s32 %s69, 1
      %p73 = scmp.eq.s32.totalorder %s14, 1
      %p74 = scmp.ne.s32.totalorder %s69, %s71
      %p75 = scmp.eq.s32.totalorder %s14, 0
      %p76 = por %p74, %p75
      %p77 = scmp.ne.s32.totalorder %s69, %s71
      %p78 = scmp.eq.s32.totalorder %s19, 1
      %p79 = por %p77, %p78
      %p80 = scmp.ne.s32.totalorder %s71, %s72
      %p81 = scmp.eq.s32.totalorder %s19, 0
      %p82 = por %p80, %p81
      %p83 = scmp.ne.s32.totalorder %s71, %s72
      %p84 = scmp.eq.s32.totalorder %s20, 1
      %p85 = por %p83, %p84
      %p87 = scmp.ne.s32.totalorder %s72, %s86
      %p88 = scmp.eq.s32.totalorder %s20, 0
      %p89 = por %p87, %p88
      %s91 = sadd.s32 %s90, 1
      %p94 = scmp.eq.s32.totalorder %s14, 1
      %p95 = scmp.ne.s32.totalorder %s90, %s92
      %p96 = scmp.eq.s32.totalorder %s14, 0
      %p97 = por %p95, %p96
      %p98 = scmp.ne.s32.totalorder %s90, %s92
      %p99 = scmp.eq.s32.totalorder %s19, 1
      %p100 = por %p98, %p99
      %p101 = scmp.ne.s32.totalorder %s92, %s93
      %p102 = scmp.eq.s32.totalorder %s19, 0
      %p103 = por %p101, %p102
      %p104 = scmp.ne.s32.totalorder %s92, %s93
      %p105 = scmp.eq.s32.totalorder %s20, 1
      %p106 = por %p104, %p105
      %p108 = scmp.ne.s32.totalorder %s93, %s107
      %p109 = scmp.eq.s32.totalorder %s20, 0
      %p110 = por %p108, %p109
      %s112 = sadd.s32 %s111, 1
      %p115 = scmp.eq.s32.totalorder %s14, 1
      %p116 = scmp.ne.s32.totalorder %s111, %s113
      %p117 = scmp.eq.s32.totalorder %s14, 0
      %p118 = por %p116, %p117
      %p119 = scmp.ne.s32.totalorder %s111, %s113
      %p120 = scmp.eq.s32.totalorder %s19, 1
      %p121 = por %p119, %p120
      %p122 = scmp.ne.s32.totalorder %s113, %s114
      %p123 = scmp.eq.s32.totalorder %s19, 0
      %p124 = por %p122, %p123
      %p125 = scmp.ne.s32.totalorder %s113, %s114
      %p126 = scmp.eq.s32.totalorder %s20, 1
      %p127 = por %p125, %p126
      %p129 = scmp.ne.s32.totalorder %s114, %s128
      %p130 = scmp.eq.s32.totalorder %s20, 0
      %p131 = por %p129, %p130
      %s132 = ssub.s32 %s14, %s21
      %p133 = scmp.eq.s32.totalorder %s132, 0
      %s135 = sadd.s32 %s134, 1
      %s136 = scalar_select %p133, %s134, %s135
      %p139 = pneg %p133
      %p140 = scmp.eq.s32.totalorder %s14, 1
      %p141 = por %p139, %p140
      %p142 = scmp.ne.s32.totalorder %s134, %s137
      %p143 = scmp.eq.s32.totalorder %s14, 0
      %p144 = por %p142, %p143
      %p145 = scmp.ne.s32.totalorder %s134, %s137
      %p146 = scmp.eq.s32.totalorder %s19, 1
      %p147 = por %p145, %p146
      %p148 = scmp.ne.s32.totalorder %s137, %s138
      %p149 = scmp.eq.s32.totalorder %s19, 0
      %p150 = por %p148, %p149
      %p151 = scmp.ne.s32.totalorder %s137, %s138
      %p152 = scmp.eq.s32.totalorder %s20, 1
      %p153 = por %p151, %p152
      %p155 = scmp.ne.s32.totalorder %s138, %s154
      %p156 = scmp.eq.s32.totalorder %s20, 0
      %p157 = por %p155, %p156
      %p158 = scmp.le.s32.totalorder 1, %s14
      %p159 = scmp.lt.s32.totalorder %s14, 3
      %p160 = pnand %p158, %p159
      %p161 = pneg %p160
      // Predicated region
      $region9: #{resnet_bottom_forward.3} parent=5 // pred_check
        _
      $region10: #{resnet_bottom_forward.3} parent=5 // pred_check_branch
        %163 = sbr.rel (%p160) target = $region12
      $region11: #{resnet_bottom_forward.3} parent=5 // pred_region
        %s164 = ssub.s32 %s14, 1
        // Predicated region
        $region13: #{resnet_bottom_forward.3} parent=11 // pred_check
          %p165 = pneg %p61
        $region14: #{resnet_bottom_forward.3} parent=11 // pred_check_branch
          %167 = sbr.rel (%p165) target = $region16
        $region15: #{resnet_bottom_forward.3} parent=11 // pred_region
          _
        $region16: #{resnet_bottom_forward.3} parent=11 // pred_fallthru
          _
        // Predicated region
        $region17: #{resnet_bottom_forward.3} parent=11 // pred_check
          %p168 = pneg %p82
        $region18: #{resnet_bottom_forward.3} parent=11 // pred_check_branch
          %170 = sbr.rel (%p168) target = $region20
        $region19: #{resnet_bottom_forward.3} parent=11 // pred_region
          _
        $region20: #{resnet_bottom_forward.3} parent=11 // pred_fallthru
          _
        // Predicated region
        $region21: #{resnet_bottom_forward.3} parent=11 // pred_check
          %p171 = pneg %p103
        $region22: #{resnet_bottom_forward.3} parent=11 // pred_check_branch
          %173 = sbr.rel (%p171) target = $region24
        $region23: #{resnet_bottom_forward.3} parent=11 // pred_region
          _
        $region24: #{resnet_bottom_forward.3} parent=11 // pred_fallthru
          _
        // Predicated region
        $region25: #{resnet_bottom_forward.3} parent=11 // pred_check
          %p174 = pneg %p124
        $region26: #{resnet_bottom_forward.3} parent=11 // pred_check_branch
          %176 = sbr.rel (%p174) target = $region28
        $region27: #{resnet_bottom_forward.3} parent=11 // pred_region
          _
        $region28: #{resnet_bottom_forward.3} parent=11 // pred_fallthru
          _
      $region12: #{resnet_bottom_forward.3} parent=5 // pred_fallthru
        _
      %p177 = scmp.lt.s32.totalorder %s14, 2
      // Predicated region
      $region29: #{resnet_bottom_forward.3} parent=5 // pred_check
        %p178 = pneg %p177
      $region30: #{resnet_bottom_forward.3} parent=5 // pred_check_branch
        %180 = sbr.rel (%p178) target = $region32
      $region31: #{resnet_bottom_forward.3} parent=5 // pred_region
        // Predicated region
        $region33: #{resnet_bottom_forward.3} parent=31 // pred_check
          %p181 = pneg %p34
        $region34: #{resnet_bottom_forward.3} parent=31 // pred_check_branch
          %183 = sbr.rel (%p181) target = $region36
        $region35: #{resnet_bottom_forward.3} parent=31 // pred_region
          %p184 = scmp.lt.s32.totalorder %s14, 1
          %s185 = scalar_select %p184, %s14, 1
          %s186 = smul.addr %s185, 8
          %s187 = smul.addr %s186, 8
          %s188 = scalar_lea.vmem %s0, %s187
        $region36: #{resnet_bottom_forward.3} parent=31 // pred_fallthru
          _
      $region32: #{resnet_bottom_forward.3} parent=5 // pred_fallthru
        _
      %p189 = scmp.le.s32.totalorder 1, %s14
      %p190 = scmp.lt.s32.totalorder %s14, 3
      %p191 = pnand %p189, %p190
      %p192 = pneg %p191
      // Predicated region
      $region37: #{resnet_bottom_forward.3} parent=5 // pred_check
        _
      $region38: #{resnet_bottom_forward.3} parent=5 // pred_check_branch
        %194 = sbr.rel (%p191) target = $region40
      $region39: #{resnet_bottom_forward.3} parent=5 // pred_region
        %s195 = ssub.s32 %s14, 1
        %p196 = scmp.lt.s32.totalorder %s19, 1
        %s197 = scalar_select %p196, %s19, 1
        %s198 = smul.addr %s197, 8
        %s199 = smul.addr %s198, 8
        %s200 = scalar_lea.vmem %s0, %s199
        %p201 = pneg %p40
        %p202 = pneg %p37
        %p203 = pneg %p61
        %p204 = pneg %p58
        %p205 = pneg %p82
        %p206 = pneg %p79
        %p207 = pneg %p103
        %p208 = pneg %p100
        %p209 = pneg %p124
        %p210 = pneg %p121
        %p211 = pneg %p150
        %p212 = pneg %p147
        %s213 = sand.u32 %s137, 1
        %s214 = scalar_lea.sflag [#allocation5], %s213
        %s215 = sand.u32 %s137, 1
        %s216 = scalar_lea.vmem [#allocation4], %s215
        %p217 = scmp.lt.s32.totalorder %s19, 1
        %s218 = scalar_select %p217, %s19, 1
        %s219 = smul.addr %s218, 8
        %s220 = smul.addr %s219, 8
        %s221 = scalar_lea.vmem %s0, %s220
        %v223 = vld [vmem:[%s221] sm:$0xff]
        %v224 = vld [vmem:[%s221 + $0x8] sm:$0xff]
        %v225 = vld [vmem:[%s221 + $0x10] sm:$0xff]
        %v226 = vld [vmem:[%s221 + $0x18] sm:$0xff]
        %v227 = vld [vmem:[%s221 + $0x20] sm:$0xff]
        %v228 = vld [vmem:[%s221 + $0x28] sm:$0xff]
        %v229 = vld [vmem:[%s221 + $0x30] sm:$0xff]
        %v230 = vld [vmem:[%s221 + $0x38] sm:$0xff]
        %vm231 = vcmask 257024
        %232 = vst.msk [vmem:[#allocation2] sm:$0xf] %vm231, 0
        %vm233 = vcmask 253952
        %234 = vst.msk [vmem:[#allocation2 + $0x4] sm:$0x1] %vm233, 0
        %235 = vst.msk [vmem:[#allocation2 + $0x8] sm:$0xf] %vm231, 0
        %236 = vst.msk [vmem:[#allocation2 + $0xc] sm:$0x1] %vm233, 0
        %237 = vst.msk [vmem:[#allocation2 + $0x10] sm:$0xf] %vm231, 0
        %238 = vst.msk [vmem:[#allocation2 + $0x14] sm:$0x1] %vm233, 0
        %239 = vst.msk [vmem:[#allocation2 + $0x18] sm:$0xf] %vm231, 0
        %240 = vst.msk [vmem:[#allocation2 + $0x1c] sm:$0x1] %vm233, 0
        %241 = vst.msk [vmem:[#allocation2 + $0x20] sm:$0xf] %vm231, 0
        %242 = vst.msk [vmem:[#allocation2 + $0x24] sm:$0x1] %vm233, 0
        %243 = vst.msk [vmem:[#allocation2 + $0x28] sm:$0xf] %vm231, 0
        %244 = vst.msk [vmem:[#allocation2 + $0x2c] sm:$0x1] %vm233, 0
        %245 = vst.msk [vmem:[#allocation2 + $0x30] sm:$0xf] %vm231, 0
        %246 = vst.msk [vmem:[#allocation2 + $0x34] sm:$0x1] %vm233, 0
        %247 = vst.msk [vmem:[#allocation2 + $0x38] sm:$0xf] %vm231, 0
        %248 = vst.msk [vmem:[#allocation2 + $0x3c] sm:$0x1] %vm233, 0
        %249 = vst.msk [vmem:[#allocation2 + $0x40] sm:$0xf] %vm231, 0
        %250 = vst.msk [vmem:[#allocation2 + $0x44] sm:$0x1] %vm233, 0
        %251 = vst.msk [vmem:[#allocation2 + $0x48] sm:$0xf] %vm231, 0
        %252 = vst.msk [vmem:[#allocation2 + $0x4c] sm:$0x1] %vm233, 0
        %v253 = vpack.c.bf16 %v223, %v223
        %v254 = vpack.c.bf16 %v224, %v224
        %v255 = vpack.c.bf16 %v225, %v225
        %v256 = vpack.c.bf16 %v226, %v226
        %v257 = vpack.c.bf16 %v227, %v227
        %v258 = vpack.c.bf16 %v228, %v228
        %v259 = vpack.c.bf16 %v229, %v229
        %v260 = vpack.c.bf16 %v230, %v230
        %v269 = vunpack.c.l.b16 %v253
        %v270 = vunpack.c.l.b16 %v254
        %v271 = vunpack.c.l.b16 %v255
        %v272 = vunpack.c.l.b16 %v256
        %v273 = vunpack.c.l.b16 %v257
        %v274 = vunpack.c.l.b16 %v258
        %v275 = vunpack.c.l.b16 %v259
        %v276 = vunpack.c.l.b16 %v260
        %v277 = vpack.c.b16 %v269, %v269
        %v278 = vpack.c.b16 %v270, %v270
        %v279 = vpack.c.b16 %v271, %v271
        %v280 = vpack.c.b16 %v272, %v272
        %v281 = vpack.c.b16 %v273, %v273
        %v282 = vpack.c.b16 %v274, %v274
        %v283 = vpack.c.b16 %v275, %v275
        %v284 = vpack.c.b16 %v276, %v276
        %v286 = vshrl.u32 %v277, 16
        %v288 = vrot.slane %v286, 7
        %v289 = vshll.u32 %v277, 16
        %v291 = vor.u32 %v288, %v289
        %v292 = vrot.slane %v288, 4
        %v294 = vshrl.u32 %v278, 16
        %v296 = vrot.slane %v294, 7
        %v297 = vshll.u32 %v278, 16
        %v299 = vor.u32 %v296, %v297
        %v300 = vrot.slane %v296, 4
        %v302 = vshrl.u32 %v279, 16
        %v304 = vrot.slane %v302, 7
        %v305 = vshll.u32 %v279, 16
        %v307 = vor.u32 %v304, %v305
        %v308 = vrot.slane %v304, 4
        %v310 = vshrl.u32 %v280, 16
        %v312 = vrot.slane %v310, 7
        %v313 = vshll.u32 %v280, 16
        %v315 = vor.u32 %v312, %v313
        %v316 = vrot.slane %v312, 4
        %v318 = vshrl.u32 %v281, 16
        %v320 = vrot.slane %v318, 7
        %v321 = vshll.u32 %v281, 16
        %v323 = vor.u32 %v320, %v321
        %v324 = vrot.slane %v320, 4
        %v326 = vshrl.u32 %v282, 16
        %v328 = vrot.slane %v326, 7
        %v329 = vshll.u32 %v282, 16
        %v331 = vor.u32 %v328, %v329
        %v332 = vrot.slane %v328, 4
        %v334 = vshrl.u32 %v283, 16
        %v336 = vrot.slane %v334, 7
        %v337 = vshll.u32 %v283, 16
        %v339 = vor.u32 %v336, %v337
        %v340 = vrot.slane %v336, 4
        %v342 = vshrl.u32 %v284, 16
        %v344 = vrot.slane %v342, 7
        %v345 = vshll.u32 %v284, 16
        %v347 = vor.u32 %v344, %v345
        %v348 = vrot.slane %v344, 4
        %s365 = scalar_lea.vmem [#allocation2], 8
        %vm366 = vcmask 257024
        %vm367 = vsmask.f32 7938
        %vm368 = vmand %vm366, %vm367
        %v369 = vld [vmem:[%s365] sm:$0xf]
        %v370 = vsel %vm368, %v291, %v369
        %371 = vst [vmem:[%s365] sm:$0xf] %v370
        %vm372 = vcmask 253952
        %vm373 = vsmask.f32 256
        %vm374 = vmand %vm372, %vm373
        %v375 = vld [vmem:[%s365 + $0x4] sm:$0x1]
        %v376 = vsel %vm374, %v292, %v375
        %377 = vst [vmem:[%s365 + $0x4] sm:$0x1] %v376
        %v378 = vld [vmem:[%s365 + $0x8] sm:$0xf]
        %v379 = vsel %vm368, %v299, %v378
        %380 = vst [vmem:[%s365 + $0x8] sm:$0xf] %v379
        %v381 = vld [vmem:[%s365 + $0xc] sm:$0x1]
        %v382 = vsel %vm374, %v300, %v381
        %383 = vst [vmem:[%s365 + $0xc] sm:$0x1] %v382
        %v384 = vld [vmem:[%s365 + $0x10] sm:$0xf]
        %v385 = vsel %vm368, %v307, %v384
        %386 = vst [vmem:[%s365 + $0x10] sm:$0xf] %v385
        %v387 = vld [vmem:[%s365 + $0x14] sm:$0x1]
        %v388 = vsel %vm374, %v308, %v387
        %389 = vst [vmem:[%s365 + $0x14] sm:$0x1] %v388
        %v390 = vld [vmem:[%s365 + $0x18] sm:$0xf]
        %v391 = vsel %vm368, %v315, %v390
        %392 = vst [vmem:[%s365 + $0x18] sm:$0xf] %v391
        %v393 = vld [vmem:[%s365 + $0x1c] sm:$0x1]
        %v394 = vsel %vm374, %v316, %v393
        %395 = vst [vmem:[%s365 + $0x1c] sm:$0x1] %v394
        %v396 = vld [vmem:[%s365 + $0x20] sm:$0xf]
        %v397 = vsel %vm368, %v323, %v396
        %398 = vst [vmem:[%s365 + $0x20] sm:$0xf] %v397
        %v399 = vld [vmem:[%s365 + $0x24] sm:$0x1]
        %v400 = vsel %vm374, %v324, %v399
        %401 = vst [vmem:[%s365 + $0x24] sm:$0x1] %v400
        %v402 = vld [vmem:[%s365 + $0x28] sm:$0xf]
        %v403 = vsel %vm368, %v331, %v402
        %404 = vst [vmem:[%s365 + $0x28] sm:$0xf] %v403
        %v405 = vld [vmem:[%s365 + $0x2c] sm:$0x1]
        %v406 = vsel %vm374, %v332, %v405
        %407 = vst [vmem:[%s365 + $0x2c] sm:$0x1] %v406
        %v408 = vld [vmem:[%s365 + $0x30] sm:$0xf]
        %v409 = vsel %vm368, %v339, %v408
        %410 = vst [vmem:[%s365 + $0x30] sm:$0xf] %v409
        %v411 = vld [vmem:[%s365 + $0x34] sm:$0x1]
        %v412 = vsel %vm374, %v340, %v411
        %413 = vst [vmem:[%s365 + $0x34] sm:$0x1] %v412
        %v414 = vld [vmem:[%s365 + $0x38] sm:$0xf]
        %v415 = vsel %vm368, %v347, %v414
        %416 = vst [vmem:[%s365 + $0x38] sm:$0xf] %v415
        %v417 = vld [vmem:[%s365 + $0x3c] sm:$0x1]
        %v418 = vsel %vm374, %v348, %v417
        %419 = vst [vmem:[%s365 + $0x3c] sm:$0x1] %v418
        %v420 = vld [vmem:[#allocation2] sm:$0xf]
        %v421 = vld [vmem:[#allocation2 + $0x8] sm:$0xf]
        %v422 = vld [vmem:[#allocation2 + $0x10] sm:$0xf]
        %v423 = vld [vmem:[#allocation2 + $0x18] sm:$0xf]
        %v424 = vld [vmem:[#allocation2 + $0x20] sm:$0xf]
        %v425 = vld [vmem:[#allocation2 + $0x28] sm:$0xf]
        %v426 = vld [vmem:[#allocation2 + $0x30] sm:$0xf]
        %v427 = vld [vmem:[#allocation2 + $0x38] sm:$0xf]
        %v436 = vunpack.c.l.b16 %v420
        %v437 = vunpack.c.l.b16 %v421
        %v438 = vunpack.c.l.b16 %v422
        %v439 = vunpack.c.l.b16 %v423
        %v440 = vunpack.c.l.b16 %v424
        %v441 = vunpack.c.l.b16 %v425
        %v442 = vunpack.c.l.b16 %v426
        %v443 = vunpack.c.l.b16 %v427
        %v444 = vpack.c.b16 %v437, %v436
        %v445 = vpack.c.b16 %v439, %v438
        %v446 = vpack.c.b16 %v441, %v440
        %v447 = vpack.c.b16 %v443, %v442
        %vm452 = vcmask 261120
        %453 = vst.msk [vmem:[#allocation3] sm:$0xff] %vm452, %v444
        %454 = vst.msk [vmem:[#allocation3 + $0x18] sm:$0xff] %vm452, %v445
        %455 = vst.msk [vmem:[#allocation3 + $0x30] sm:$0xff] %vm452, %v446
        %456 = vst.msk [vmem:[#allocation3 + $0x48] sm:$0xff] %vm452, %v447
        %v457 = vld [vmem:[#allocation2] sm:$0xf]
        %v458 = vld [vmem:[#allocation2 + $0x4] sm:$0x1]
        %v459 = vld [vmem:[#allocation2 + $0x8] sm:$0xf]
        %v460 = vld [vmem:[#allocation2 + $0xc] sm:$0x1]
        %v461 = vld [vmem:[#allocation2 + $0x10] sm:$0xf]
        %v462 = vld [vmem:[#allocation2 + $0x14] sm:$0x1]
        %v463 = vld [vmem:[#allocation2 + $0x18] sm:$0xf]
        %v464 = vld [vmem:[#allocation2 + $0x1c] sm:$0x1]
        %v465 = vld [vmem:[#allocation2 + $0x20] sm:$0xf]
        %v466 = vld [vmem:[#allocation2 + $0x24] sm:$0x1]
        %v467 = vld [vmem:[#allocation2 + $0x28] sm:$0xf]
        %v468 = vld [vmem:[#allocation2 + $0x2c] sm:$0x1]
        %v469 = vld [vmem:[#allocation2 + $0x30] sm:$0xf]
        %v470 = vld [vmem:[#allocation2 + $0x34] sm:$0x1]
        %v471 = vld [vmem:[#allocation2 + $0x38] sm:$0xf]
        %v472 = vld [vmem:[#allocation2 + $0x3c] sm:$0x1]
        %vm473 = vsmask.f32 3328
        %vm474 = vsmask.f32 7440
        %vm475 = vmor %vm473, %vm474
        %v477 = vshrl.u32 %v457, 16
        %v479 = vrot.slane %v477, 4
        %v480 = vshll.u32 %v457, 16
        %v482 = vrot.slane %v480, 5
        %v483 = vor.u32 %v479, %v482
        %v484 = vrot.slane %v483, 4
        %v486 = vshll.u32 %v458, 16
        %v488 = vrot.slane %v486, 5
        %v489 = vsel %vm475, %v484, %v488
        %v491 = vshrl.u32 %v459, 16
        %v493 = vrot.slane %v491, 4
        %v494 = vshll.u32 %v459, 16
        %v496 = vrot.slane %v494, 5
        %v497 = vor.u32 %v493, %v496
        %v498 = vrot.slane %v497, 4
        %v500 = vshll.u32 %v460, 16
        %v502 = vrot.slane %v500, 5
        %v503 = vsel %vm475, %v498, %v502
        %v505 = vshrl.u32 %v461, 16
        %v507 = vrot.slane %v505, 4
        %v508 = vshll.u32 %v461, 16
        %v510 = vrot.slane %v508, 5
        %v511 = vor.u32 %v507, %v510
        %v512 = vrot.slane %v511, 4
        %v514 = vshll.u32 %v462, 16
        %v516 = vrot.slane %v514, 5
        %v517 = vsel %vm475, %v512, %v516
        %v519 = vshrl.u32 %v463, 16
        %v521 = vrot.slane %v519, 4
        %v522 = vshll.u32 %v463, 16
        %v524 = vrot.slane %v522, 5
        %v525 = vor.u32 %v521, %v524
        %v526 = vrot.slane %v525, 4
        %v528 = vshll.u32 %v464, 16
        %v530 = vrot.slane %v528, 5
        %v531 = vsel %vm475, %v526, %v530
        %v533 = vshrl.u32 %v465, 16
        %v535 = vrot.slane %v533, 4
        %v536 = vshll.u32 %v465, 16
        %v538 = vrot.slane %v536, 5
        %v539 = vor.u32 %v535, %v538
        %v540 = vrot.slane %v539, 4
        %v542 = vshll.u32 %v466, 16
        %v544 = vrot.slane %v542, 5
        %v545 = vsel %vm475, %v540, %v544
        %v547 = vshrl.u32 %v467, 16
        %v549 = vrot.slane %v547, 4
        %v550 = vshll.u32 %v467, 16
        %v552 = vrot.slane %v550, 5
        %v553 = vor.u32 %v549, %v552
        %v554 = vrot.slane %v553, 4
        %v556 = vshll.u32 %v468, 16
        %v558 = vrot.slane %v556, 5
        %v559 = vsel %vm475, %v554, %v558
        %v561 = vshrl.u32 %v469, 16
        %v563 = vrot.slane %v561, 4
        %v564 = vshll.u32 %v469, 16
        %v566 = vrot.slane %v564, 5
        %v567 = vor.u32 %v563, %v566
        %v568 = vrot.slane %v567, 4
        %v570 = vshll.u32 %v470, 16
        %v572 = vrot.slane %v570, 5
        %v573 = vsel %vm475, %v568, %v572
        %v575 = vshrl.u32 %v471, 16
        %v577 = vrot.slane %v575, 4
        %v578 = vshll.u32 %v471, 16
        %v580 = vrot.slane %v578, 5
        %v581 = vor.u32 %v577, %v580
        %v582 = vrot.slane %v581, 4
        %v584 = vshll.u32 %v472, 16
        %v586 = vrot.slane %v584, 5
        %v587 = vsel %vm475, %v582, %v586
        %v588 = vunpack.c.l.b16 %v489
        %v589 = vunpack.c.l.b16 %v503
        %v590 = vunpack.c.l.b16 %v517
        %v591 = vunpack.c.l.b16 %v531
        %v592 = vunpack.c.l.b16 %v545
        %v593 = vunpack.c.l.b16 %v559
        %v594 = vunpack.c.l.b16 %v573
        %v595 = vunpack.c.l.b16 %v587
        %v596 = vpack.c.b16 %v589, %v588
        %v597 = vpack.c.b16 %v591, %v590
        %v598 = vpack.c.b16 %v593, %v592
        %v599 = vpack.c.b16 %v595, %v594
        %600 = vrot.lane.b32.xlu0 %v596, 32
        %v601 = vpop.permute.xlu0 %600
        %602 = vrot.lane.b32.xlu0 %v597, 32
        %v603 = vpop.permute.xlu0 %602
        %604 = vrot.lane.b32.xlu0 %v598, 32
        %v605 = vpop.permute.xlu0 %604
        %606 = vrot.lane.b32.xlu0 %v599, 32
        %v607 = vpop.permute.xlu0 %606
        %vm612 = vcmask 523520
        %613 = vst.msk [vmem:[#allocation3] sm:$0xff] %vm612, %v601
        %614 = vst.msk [vmem:[#allocation3 + $0x18] sm:$0xff] %vm612, %v603
        %615 = vst.msk [vmem:[#allocation3 + $0x30] sm:$0xff] %vm612, %v605
        %616 = vst.msk [vmem:[#allocation3 + $0x48] sm:$0xff] %vm612, %v607
        %v617 = vld [vmem:[#allocation2] sm:$0xe]
        %v618 = vld [vmem:[#allocation2 + $0x4] sm:$0x1]
        %v619 = vld [vmem:[#allocation2 + $0x8] sm:$0xe]
        %v620 = vld [vmem:[#allocation2 + $0xc] sm:$0x1]
        %v621 = vld [vmem:[#allocation2 + $0x10] sm:$0xe]
        %v622 = vld [vmem:[#allocation2 + $0x14] sm:$0x1]
        %v623 = vld [vmem:[#allocation2 + $0x18] sm:$0xe]
        %v624 = vld [vmem:[#allocation2 + $0x1c] sm:$0x1]
        %v625 = vld [vmem:[#allocation2 + $0x20] sm:$0xe]
        %v626 = vld [vmem:[#allocation2 + $0x24] sm:$0x1]
        %v627 = vld [vmem:[#allocation2 + $0x28] sm:$0xe]
        %v628 = vld [vmem:[#allocation2 + $0x2c] sm:$0x1]
        %v629 = vld [vmem:[#allocation2 + $0x30] sm:$0xe]
        %v630 = vld [vmem:[#allocation2 + $0x34] sm:$0x1]
        %v631 = vld [vmem:[#allocation2 + $0x38] sm:$0xe]
        %v632 = vld [vmem:[#allocation2 + $0x3c] sm:$0x1]
        %vm649 = vcmask 1042432
        %vm650 = vcmask 1046532
        %vm651 = vmor %vm649, %vm650
        %v652 = vrot.slane %v617, 5
        %v653 = vrot.slane %v652, 4
        %v654 = vrot.slane %v618, 5
        %v655 = vsel %vm651, %v653, %v654
        %v656 = vrot.slane %v619, 5
        %v657 = vrot.slane %v656, 4
        %v658 = vrot.slane %v620, 5
        %v659 = vsel %vm651, %v657, %v658
        %v660 = vrot.slane %v621, 5
        %v661 = vrot.slane %v660, 4
        %v662 = vrot.slane %v622, 5
        %v663 = vsel %vm651, %v661, %v662
        %v664 = vrot.slane %v623, 5
        %v665 = vrot.slane %v664, 4
        %v666 = vrot.slane %v624, 5
        %v667 = vsel %vm651, %v665, %v666
        %v668 = vrot.slane %v625, 5
        %v669 = vrot.slane %v668, 4
        %v670 = vrot.slane %v626, 5
        %v671 = vsel %vm651, %v669, %v670
        %v672 = vrot.slane %v627, 5
        %v673 = vrot.slane %v672, 4
        %v674 = vrot.slane %v628, 5
        %v675 = vsel %vm651, %v673, %v674
        %v676 = vrot.slane %v629, 5
        %v677 = vrot.slane %v676, 4
        %v678 = vrot.slane %v630, 5
        %v679 = vsel %vm651, %v677, %v678
        %v680 = vrot.slane %v631, 5
        %v681 = vrot.slane %v680, 4
        %v682 = vrot.slane %v632, 5
        %v683 = vsel %vm651, %v681, %v682
        %v684 = vunpack.c.l.b16 %v655
        %v685 = vunpack.c.l.b16 %v659
        %v686 = vunpack.c.l.b16 %v663
        %v687 = vunpack.c.l.b16 %v667
        %v688 = vunpack.c.l.b16 %v671
        %v689 = vunpack.c.l.b16 %v675
        %v690 = vunpack.c.l.b16 %v679
        %v691 = vunpack.c.l.b16 %v683
        %v692 = vpack.c.b16 %v685, %v684
        %v693 = vpack.c.b16 %v687, %v686
        %v694 = vpack.c.b16 %v689, %v688
        %v695 = vpack.c.b16 %v691, %v690
        %696 = vrot.lane.b32.xlu0 %v692, 64
        %v697 = vpop.permute.xlu0 %696
        %698 = vrot.lane.b32.xlu0 %v693, 64
        %v699 = vpop.permute.xlu0 %698
        %700 = vrot.lane.b32.xlu0 %v694, 64
        %v701 = vpop.permute.xlu0 %700
        %702 = vrot.lane.b32.xlu0 %v695, 64
        %v703 = vpop.permute.xlu0 %702
        %vm708 = vcmask 785920
        %709 = vst.msk [vmem:[#allocation3] sm:$0xff] %vm708, %v697
        %710 = vst.msk [vmem:[#allocation3 + $0x18] sm:$0xff] %vm708, %v699
        %711 = vst.msk [vmem:[#allocation3 + $0x30] sm:$0xff] %vm708, %v701
        %712 = vst.msk [vmem:[#allocation3 + $0x48] sm:$0xff] %vm708, %v703
        %v713 = vld [vmem:[%s365] sm:$0xf]
        %v714 = vld [vmem:[%s365 + $0x8] sm:$0xf]
        %v715 = vld [vmem:[%s365 + $0x10] sm:$0xf]
        %v716 = vld [vmem:[%s365 + $0x18] sm:$0xf]
        %v717 = vld [vmem:[%s365 + $0x20] sm:$0xf]
        %v718 = vld [vmem:[%s365 + $0x28] sm:$0xf]
        %v719 = vld [vmem:[%s365 + $0x30] sm:$0xf]
        %v720 = vld [vmem:[%s365 + $0x38] sm:$0xf]
        %v729 = vunpack.c.l.b16 %v713
        %v730 = vunpack.c.l.b16 %v714
        %v731 = vunpack.c.l.b16 %v715
        %v732 = vunpack.c.l.b16 %v716
        %v733 = vunpack.c.l.b16 %v717
        %v734 = vunpack.c.l.b16 %v718
        %v735 = vunpack.c.l.b16 %v719
        %v736 = vunpack.c.l.b16 %v720
        %v737 = vpack.c.b16 %v730, %v729
        %v738 = vpack.c.b16 %v732, %v731
        %v739 = vpack.c.b16 %v734, %v733
        %v740 = vpack.c.b16 %v736, %v735
        %741 = vrot.lane.b32.xlu0 %v737, 96
        %v742 = vpop.permute.xlu0 %741
        %743 = vrot.lane.b32.xlu0 %v738, 96
        %v744 = vpop.permute.xlu0 %743
        %745 = vrot.lane.b32.xlu0 %v739, 96
        %v746 = vpop.permute.xlu0 %745
        %747 = vrot.lane.b32.xlu0 %v740, 96
        %v748 = vpop.permute.xlu0 %747
        %vm753 = vcmask 1048320
        %754 = vst.msk [vmem:[#allocation3] sm:$0xff] %vm753, %v742
        %755 = vst.msk [vmem:[#allocation3 + $0x18] sm:$0xff] %vm753, %v744
        %756 = vst.msk [vmem:[#allocation3 + $0x30] sm:$0xff] %vm753, %v746
        %757 = vst.msk [vmem:[#allocation3 + $0x48] sm:$0xff] %vm753, %v748
        %v758 = vld [vmem:[%s365] sm:$0xf]
        %v759 = vld [vmem:[%s365 + $0x4] sm:$0x1]
        %v760 = vld [vmem:[%s365 + $0x8] sm:$0xf]
        %v761 = vld [vmem:[%s365 + $0xc] sm:$0x1]
        %v762 = vld [vmem:[%s365 + $0x10] sm:$0xf]
        %v763 = vld [vmem:[%s365 + $0x14] sm:$0x1]
        %v764 = vld [vmem:[%s365 + $0x18] sm:$0xf]
        %v765 = vld [vmem:[%s365 + $0x1c] sm:$0x1]
        %v766 = vld [vmem:[%s365 + $0x20] sm:$0xf]
        %v767 = vld [vmem:[%s365 + $0x24] sm:$0x1]
        %v768 = vld [vmem:[%s365 + $0x28] sm:$0xf]
        %v769 = vld [vmem:[%s365 + $0x2c] sm:$0x1]
        %v770 = vld [vmem:[%s365 + $0x30] sm:$0xf]
        %v771 = vld [vmem:[%s365 + $0x34] sm:$0x1]
        %v772 = vld [vmem:[%s365 + $0x38] sm:$0xf]
        %v773 = vld [vmem:[%s365 + $0x3c] sm:$0x1]
        %v775 = vshrl.u32 %v758, 16
        %v777 = vrot.slane %v775, 4
        %v778 = vshll.u32 %v758, 16
        %v780 = vrot.slane %v778, 5
        %v781 = vor.u32 %v777, %v780
        %v782 = vrot.slane %v781, 4
        %v784 = vshll.u32 %v759, 16
        %v786 = vrot.slane %v784, 5
        %v787 = vsel %vm475, %v782, %v786
        %v789 = vshrl.u32 %v760, 16
        %v791 = vrot.slane %v789, 4
        %v792 = vshll.u32 %v760, 16
        %v794 = vrot.slane %v792, 5
        %v795 = vor.u32 %v791, %v794
        %v796 = vrot.slane %v795, 4
        %v798 = vshll.u32 %v761, 16
        %v800 = vrot.slane %v798, 5
        %v801 = vsel %vm475, %v796, %v800
        %v803 = vshrl.u32 %v762, 16
        %v805 = vrot.slane %v803, 4
        %v806 = vshll.u32 %v762, 16
        %v808 = vrot.slane %v806, 5
        %v809 = vor.u32 %v805, %v808
        %v810 = vrot.slane %v809, 4
        %v812 = vshll.u32 %v763, 16
        %v814 = vrot.slane %v812, 5
        %v815 = vsel %vm475, %v810, %v814
        %v817 = vshrl.u32 %v764, 16
        %v819 = vrot.slane %v817, 4
        %v820 = vshll.u32 %v764, 16
        %v822 = vrot.slane %v820, 5
        %v823 = vor.u32 %v819, %v822
        %v824 = vrot.slane %v823, 4
        %v826 = vshll.u32 %v765, 16
        %v828 = vrot.slane %v826, 5
        %v829 = vsel %vm475, %v824, %v828
        %v831 = vshrl.u32 %v766, 16
        %v833 = vrot.slane %v831, 4
        %v834 = vshll.u32 %v766, 16
        %v836 = vrot.slane %v834, 5
        %v837 = vor.u32 %v833, %v836
        %v838 = vrot.slane %v837, 4
        %v840 = vshll.u32 %v767, 16
        %v842 = vrot.slane %v840, 5
        %v843 = vsel %vm475, %v838, %v842
        %v845 = vshrl.u32 %v768, 16
        %v847 = vrot.slane %v845, 4
        %v848 = vshll.u32 %v768, 16
        %v850 = vrot.slane %v848, 5
        %v851 = vor.u32 %v847, %v850
        %v852 = vrot.slane %v851, 4
        %v854 = vshll.u32 %v769, 16
        %v856 = vrot.slane %v854, 5
        %v857 = vsel %vm475, %v852, %v856
        %v859 = vshrl.u32 %v770, 16
        %v861 = vrot.slane %v859, 4
        %v862 = vshll.u32 %v770, 16
        %v864 = vrot.slane %v862, 5
        %v865 = vor.u32 %v861, %v864
        %v866 = vrot.slane %v865, 4
        %v868 = vshll.u32 %v771, 16
        %v870 = vrot.slane %v868, 5
        %v871 = vsel %vm475, %v866, %v870
        %v873 = vshrl.u32 %v772, 16
        %v875 = vrot.slane %v873, 4
        %v876 = vshll.u32 %v772, 16
        %v878 = vrot.slane %v876, 5
        %v879 = vor.u32 %v875, %v878
        %v880 = vrot.slane %v879, 4
        %v882 = vshll.u32 %v773, 16
        %v884 = vrot.slane %v882, 5
        %v885 = vsel %vm475, %v880, %v884
        %v886 = vunpack.c.l.b16 %v787
        %v887 = vunpack.c.l.b16 %v801
        %v888 = vunpack.c.l.b16 %v815
        %v889 = vunpack.c.l.b16 %v829
        %v890 = vunpack.c.l.b16 %v843
        %v891 = vunpack.c.l.b16 %v857
        %v892 = vunpack.c.l.b16 %v871
        %v893 = vunpack.c.l.b16 %v885
        %v894 = vpack.c.b16 %v887, %v886
        %v895 = vpack.c.b16 %v889, %v888
        %v896 = vpack.c.b16 %v891, %v890
        %v897 = vpack.c.b16 %v893, %v892
        %902 = vst.msk [vmem:[#allocation3 + $0x8] sm:$0xff] %vm452, %v894
        %903 = vst.msk [vmem:[#allocation3 + $0x20] sm:$0xff] %vm452, %v895
        %904 = vst.msk [vmem:[#allocation3 + $0x38] sm:$0xff] %vm452, %v896
        %905 = vst.msk [vmem:[#allocation3 + $0x50] sm:$0xff] %vm452, %v897
        %v906 = vld [vmem:[%s365] sm:$0xe]
        %v907 = vld [vmem:[%s365 + $0x4] sm:$0x1]
        %v908 = vld [vmem:[%s365 + $0x8] sm:$0xe]
        %v909 = vld [vmem:[%s365 + $0xc] sm:$0x1]
        %v910 = vld [vmem:[%s365 + $0x10] sm:$0xe]
        %v911 = vld [vmem:[%s365 + $0x14] sm:$0x1]
        %v912 = vld [vmem:[%s365 + $0x18] sm:$0xe]
        %v913 = vld [vmem:[%s365 + $0x1c] sm:$0x1]
        %v914 = vld [vmem:[%s365 + $0x20] sm:$0xe]
        %v915 = vld [vmem:[%s365 + $0x24] sm:$0x1]
        %v916 = vld [vmem:[%s365 + $0x28] sm:$0xe]
        %v917 = vld [vmem:[%s365 + $0x2c] sm:$0x1]
        %v918 = vld [vmem:[%s365 + $0x30] sm:$0xe]
        %v919 = vld [vmem:[%s365 + $0x34] sm:$0x1]
        %v920 = vld [vmem:[%s365 + $0x38] sm:$0xe]
        %v921 = vld [vmem:[%s365 + $0x3c] sm:$0x1]
        %v938 = vrot.slane %v906, 5
        %v939 = vrot.slane %v938, 4
        %v940 = vrot.slane %v907, 5
        %v941 = vsel %vm651, %v939, %v940
        %v942 = vrot.slane %v908, 5
        %v943 = vrot.slane %v942, 4
        %v944 = vrot.slane %v909, 5
        %v945 = vsel %vm651, %v943, %v944
        %v946 = vrot.slane %v910, 5
        %v947 = vrot.slane %v946, 4
        %v948 = vrot.slane %v911, 5
        %v949 = vsel %vm651, %v947, %v948
        %v950 = vrot.slane %v912, 5
        %v951 = vrot.slane %v950, 4
        %v952 = vrot.slane %v913, 5
        %v953 = vsel %vm651, %v951, %v952
        %v954 = vrot.slane %v914, 5
        %v955 = vrot.slane %v954, 4
        %v956 = vrot.slane %v915, 5
        %v957 = vsel %vm651, %v955, %v956
        %v958 = vrot.slane %v916, 5
        %v959 = vrot.slane %v958, 4
        %v960 = vrot.slane %v917, 5
        %v961 = vsel %vm651, %v959, %v960
        %v962 = vrot.slane %v918, 5
        %v963 = vrot.slane %v962, 4
        %v964 = vrot.slane %v919, 5
        %v965 = vsel %vm651, %v963, %v964
        %v966 = vrot.slane %v920, 5
        %v967 = vrot.slane %v966, 4
        %v968 = vrot.slane %v921, 5
        %v969 = vsel %vm651, %v967, %v968
        %v970 = vunpack.c.l.b16 %v941
        %v971 = vunpack.c.l.b16 %v945
        %v972 = vunpack.c.l.b16 %v949
        %v973 = vunpack.c.l.b16 %v953
        %v974 = vunpack.c.l.b16 %v957
        %v975 = vunpack.c.l.b16 %v961
        %v976 = vunpack.c.l.b16 %v965
        %v977 = vunpack.c.l.b16 %v969
        %v978 = vpack.c.b16 %v971, %v970
        %v979 = vpack.c.b16 %v973, %v972
        %v980 = vpack.c.b16 %v975, %v974
        %v981 = vpack.c.b16 %v977, %v976
        %982 = vrot.lane.b32.xlu0 %v978, 32
        %v983 = vpop.permute.xlu0 %982
        %984 = vrot.lane.b32.xlu0 %v979, 32
        %v985 = vpop.permute.xlu0 %984
        %986 = vrot.lane.b32.xlu0 %v980, 32
        %v987 = vpop.permute.xlu0 %986
        %988 = vrot.lane.b32.xlu0 %v981, 32
        %v989 = vpop.permute.xlu0 %988
        %994 = vst.msk [vmem:[#allocation3 + $0x8] sm:$0xff] %vm612, %v983
        %995 = vst.msk [vmem:[#allocation3 + $0x20] sm:$0xff] %vm612, %v985
        %996 = vst.msk [vmem:[#allocation3 + $0x38] sm:$0xff] %vm612, %v987
        %997 = vst.msk [vmem:[#allocation3 + $0x50] sm:$0xff] %vm612, %v989
        %s998 = scalar_lea.vmem [#allocation2], 16
        %v999 = vld [vmem:[%s998] sm:$0xf]
        %v1000 = vld [vmem:[%s998 + $0x8] sm:$0xf]
        %v1001 = vld [vmem:[%s998 + $0x10] sm:$0xf]
        %v1002 = vld [vmem:[%s998 + $0x18] sm:$0xf]
        %v1003 = vld [vmem:[%s998 + $0x20] sm:$0xf]
        %v1004 = vld [vmem:[%s998 + $0x28] sm:$0xf]
        %v1005 = vld [vmem:[%s998 + $0x30] sm:$0xf]
        %v1006 = vld [vmem:[%s998 + $0x38] sm:$0xf]
        %v1015 = vunpack.c.l.b16 %v999
        %v1016 = vunpack.c.l.b16 %v1000
        %v1017 = vunpack.c.l.b16 %v1001
        %v1018 = vunpack.c.l.b16 %v1002
        %v1019 = vunpack.c.l.b16 %v1003
        %v1020 = vunpack.c.l.b16 %v1004
        %v1021 = vunpack.c.l.b16 %v1005
        %v1022 = vunpack.c.l.b16 %v1006
        %v1023 = vpack.c.b16 %v1016, %v1015
        %v1024 = vpack.c.b16 %v1018, %v1017
        %v1025 = vpack.c.b16 %v1020, %v1019
        %v1026 = vpack.c.b16 %v1022, %v1021
        %1027 = vrot.lane.b32.xlu0 %v1023, 64
        %v1028 = vpop.permute.xlu0 %1027
        %1029 = vrot.lane.b32.xlu0 %v1024, 64
        %v1030 = vpop.permute.xlu0 %1029
        %1031 = vrot.lane.b32.xlu0 %v1025, 64
        %v1032 = vpop.permute.xlu0 %1031
        %1033 = vrot.lane.b32.xlu0 %v1026, 64
        %v1034 = vpop.permute.xlu0 %1033
        %1039 = vst.msk [vmem:[#allocation3 + $0x8] sm:$0xff] %vm708, %v1028
        %1040 = vst.msk [vmem:[#allocation3 + $0x20] sm:$0xff] %vm708, %v1030
        %1041 = vst.msk [vmem:[#allocation3 + $0x38] sm:$0xff] %vm708, %v1032
        %1042 = vst.msk [vmem:[#allocation3 + $0x50] sm:$0xff] %vm708, %v1034
        %v1043 = vld [vmem:[%s998] sm:$0xf]
        %v1044 = vld [vmem:[%s998 + $0x4] sm:$0x1]
        %v1045 = vld [vmem:[%s998 + $0x8] sm:$0xf]
        %v1046 = vld [vmem:[%s998 + $0xc] sm:$0x1]
        %v1047 = vld [vmem:[%s998 + $0x10] sm:$0xf]
        %v1048 = vld [vmem:[%s998 + $0x14] sm:$0x1]
        %v1049 = vld [vmem:[%s998 + $0x18] sm:$0xf]
        %v1050 = vld [vmem:[%s998 + $0x1c] sm:$0x1]
        %v1051 = vld [vmem:[%s998 + $0x20] sm:$0xf]
        %v1052 = vld [vmem:[%s998 + $0x24] sm:$0x1]
        %v1053 = vld [vmem:[%s998 + $0x28] sm:$0xf]
        %v1054 = vld [vmem:[%s998 + $0x2c] sm:$0x1]
        %v1055 = vld [vmem:[%s998 + $0x30] sm:$0xf]
        %v1056 = vld [vmem:[%s998 + $0x34] sm:$0x1]
        %v1057 = vld [vmem:[%s998 + $0x38] sm:$0xf]
        %v1058 = vld [vmem:[%s998 + $0x3c] sm:$0x1]
        %v1060 = vshrl.u32 %v1043, 16
        %v1062 = vrot.slane %v1060, 4
        %v1063 = vshll.u32 %v1043, 16
        %v1065 = vrot.slane %v1063, 5
        %v1066 = vor.u32 %v1062, %v1065
        %v1067 = vrot.slane %v1066, 4
        %v1069 = vshll.u32 %v1044, 16
        %v1071 = vrot.slane %v1069, 5
        %v1072 = vsel %vm475, %v1067, %v1071
        %v1074 = vshrl.u32 %v1045, 16
        %v1076 = vrot.slane %v1074, 4
        %v1077 = vshll.u32 %v1045, 16
        %v1079 = vrot.slane %v1077, 5
        %v1080 = vor.u32 %v1076, %v1079
        %v1081 = vrot.slane %v1080, 4
        %v1083 = vshll.u32 %v1046, 16
        %v1085 = vrot.slane %v1083, 5
        %v1086 = vsel %vm475, %v1081, %v1085
        %v1088 = vshrl.u32 %v1047, 16
        %v1090 = vrot.slane %v1088, 4
        %v1091 = vshll.u32 %v1047, 16
        %v1093 = vrot.slane %v1091, 5
        %v1094 = vor.u32 %v1090, %v1093
        %v1095 = vrot.slane %v1094, 4
        %v1097 = vshll.u32 %v1048, 16
        %v1099 = vrot.slane %v1097, 5
        %v1100 = vsel %vm475, %v1095, %v1099
        %v1102 = vshrl.u32 %v1049, 16
        %v1104 = vrot.slane %v1102, 4
        %v1105 = vshll.u32 %v1049, 16
        %v1107 = vrot.slane %v1105, 5
        %v1108 = vor.u32 %v1104, %v1107
        %v1109 = vrot.slane %v1108, 4
        %v1111 = vshll.u32 %v1050, 16
        %v1113 = vrot.slane %v1111, 5
        %v1114 = vsel %vm475, %v1109, %v1113
        %v1116 = vshrl.u32 %v1051, 16
        %v1118 = vrot.slane %v1116, 4
        %v1119 = vshll.u32 %v1051, 16
        %v1121 = vrot.slane %v1119, 5
        %v1122 = vor.u32 %v1118, %v1121
        %v1123 = vrot.slane %v1122, 4
        %v1125 = vshll.u32 %v1052, 16
        %v1127 = vrot.slane %v1125, 5
        %v1128 = vsel %vm475, %v1123, %v1127
        %v1130 = vshrl.u32 %v1053, 16
        %v1132 = vrot.slane %v1130, 4
        %v1133 = vshll.u32 %v1053, 16
        %v1135 = vrot.slane %v1133, 5
        %v1136 = vor.u32 %v1132, %v1135
        %v1137 = vrot.slane %v1136, 4
        %v1139 = vshll.u32 %v1054, 16
        %v1141 = vrot.slane %v1139, 5
        %v1142 = vsel %vm475, %v1137, %v1141
        %v1144 = vshrl.u32 %v1055, 16
        %v1146 = vrot.slane %v1144, 4
        %v1147 = vshll.u32 %v1055, 16
        %v1149 = vrot.slane %v1147, 5
        %v1150 = vor.u32 %v1146, %v1149
        %v1151 = vrot.slane %v1150, 4
        %v1153 = vshll.u32 %v1056, 16
        %v1155 = vrot.slane %v1153, 5
        %v1156 = vsel %vm475, %v1151, %v1155
        %v1158 = vshrl.u32 %v1057, 16
        %v1160 = vrot.slane %v1158, 4
        %v1161 = vshll.u32 %v1057, 16
        %v1163 = vrot.slane %v1161, 5
        %v1164 = vor.u32 %v1160, %v1163
        %v1165 = vrot.slane %v1164, 4
        %v1167 = vshll.u32 %v1058, 16
        %v1169 = vrot.slane %v1167, 5
        %v1170 = vsel %vm475, %v1165, %v1169
        %v1171 = vunpack.c.l.b16 %v1072
        %v1172 = vunpack.c.l.b16 %v1086
        %v1173 = vunpack.c.l.b16 %v1100
        %v1174 = vunpack.c.l.b16 %v1114
        %v1175 = vunpack.c.l.b16 %v1128
        %v1176 = vunpack.c.l.b16 %v1142
        %v1177 = vunpack.c.l.b16 %v1156
        %v1178 = vunpack.c.l.b16 %v1170
        %v1179 = vpack.c.b16 %v1172, %v1171
        %v1180 = vpack.c.b16 %v1174, %v1173
        %v1181 = vpack.c.b16 %v1176, %v1175
        %v1182 = vpack.c.b16 %v1178, %v1177
        %1183 = vrot.lane.b32.xlu0 %v1179, 96
        %v1184 = vpop.permute.xlu0 %1183
        %1185 = vrot.lane.b32.xlu0 %v1180, 96
        %v1186 = vpop.permute.xlu0 %1185
        %1187 = vrot.lane.b32.xlu0 %v1181, 96
        %v1188 = vpop.permute.xlu0 %1187
        %1189 = vrot.lane.b32.xlu0 %v1182, 96
        %v1190 = vpop.permute.xlu0 %1189
        %1195 = vst.msk [vmem:[#allocation3 + $0x8] sm:$0xff] %vm753, %v1184
        %1196 = vst.msk [vmem:[#allocation3 + $0x20] sm:$0xff] %vm753, %v1186
        %1197 = vst.msk [vmem:[#allocation3 + $0x38] sm:$0xff] %vm753, %v1188
        %1198 = vst.msk [vmem:[#allocation3 + $0x50] sm:$0xff] %vm753, %v1190
        %v1199 = vld [vmem:[%s998] sm:$0xe]
        %v1200 = vld [vmem:[%s998 + $0x4] sm:$0x1]
        %v1201 = vld [vmem:[%s998 + $0x8] sm:$0xe]
        %v1202 = vld [vmem:[%s998 + $0xc] sm:$0x1]
        %v1203 = vld [vmem:[%s998 + $0x10] sm:$0xe]
        %v1204 = vld [vmem:[%s998 + $0x14] sm:$0x1]
        %v1205 = vld [vmem:[%s998 + $0x18] sm:$0xe]
        %v1206 = vld [vmem:[%s998 + $0x1c] sm:$0x1]
        %v1207 = vld [vmem:[%s998 + $0x20] sm:$0xe]
        %v1208 = vld [vmem:[%s998 + $0x24] sm:$0x1]
        %v1209 = vld [vmem:[%s998 + $0x28] sm:$0xe]
        %v1210 = vld [vmem:[%s998 + $0x2c] sm:$0x1]
        %v1211 = vld [vmem:[%s998 + $0x30] sm:$0xe]
        %v1212 = vld [vmem:[%s998 + $0x34] sm:$0x1]
        %v1213 = vld [vmem:[%s998 + $0x38] sm:$0xe]
        %v1214 = vld [vmem:[%s998 + $0x3c] sm:$0x1]
        %v1231 = vrot.slane %v1199, 5
        %v1232 = vrot.slane %v1231, 4
        %v1233 = vrot.slane %v1200, 5
        %v1234 = vsel %vm651, %v1232, %v1233
        %v1235 = vrot.slane %v1201, 5
        %v1236 = vrot.slane %v1235, 4
        %v1237 = vrot.slane %v1202, 5
        %v1238 = vsel %vm651, %v1236, %v1237
        %v1239 = vrot.slane %v1203, 5
        %v1240 = vrot.slane %v1239, 4
        %v1241 = vrot.slane %v1204, 5
        %v1242 = vsel %vm651, %v1240, %v1241
        %v1243 = vrot.slane %v1205, 5
        %v1244 = vrot.slane %v1243, 4
        %v1245 = vrot.slane %v1206, 5
        %v1246 = vsel %vm651, %v1244, %v1245
        %v1247 = vrot.slane %v1207, 5
        %v1248 = vrot.slane %v1247, 4
        %v1249 = vrot.slane %v1208, 5
        %v1250 = vsel %vm651, %v1248, %v1249
        %v1251 = vrot.slane %v1209, 5
        %v1252 = vrot.slane %v1251, 4
        %v1253 = vrot.slane %v1210, 5
        %v1254 = vsel %vm651, %v1252, %v1253
        %v1255 = vrot.slane %v1211, 5
        %v1256 = vrot.slane %v1255, 4
        %v1257 = vrot.slane %v1212, 5
        %v1258 = vsel %vm651, %v1256, %v1257
        %v1259 = vrot.slane %v1213, 5
        %v1260 = vrot.slane %v1259, 4
        %v1261 = vrot.slane %v1214, 5
        %v1262 = vsel %vm651, %v1260, %v1261
        %v1263 = vunpack.c.l.b16 %v1234
        %v1264 = vunpack.c.l.b16 %v1238
        %v1265 = vunpack.c.l.b16 %v1242
        %v1266 = vunpack.c.l.b16 %v1246
        %v1267 = vunpack.c.l.b16 %v1250
        %v1268 = vunpack.c.l.b16 %v1254
        %v1269 = vunpack.c.l.b16 %v1258
        %v1270 = vunpack.c.l.b16 %v1262
        %v1271 = vpack.c.b16 %v1264, %v1263
        %v1272 = vpack.c.b16 %v1266, %v1265
        %v1273 = vpack.c.b16 %v1268, %v1267
        %v1274 = vpack.c.b16 %v1270, %v1269
        %1279 = vst.msk [vmem:[#allocation3 + $0x10] sm:$0xff] %vm452, %v1271
        %1280 = vst.msk [vmem:[#allocation3 + $0x28] sm:$0xff] %vm452, %v1272
        %1281 = vst.msk [vmem:[#allocation3 + $0x40] sm:$0xff] %vm452, %v1273
        %1282 = vst.msk [vmem:[#allocation3 + $0x58] sm:$0xff] %vm452, %v1274
        %v1283 = vld [vmem:[#allocation3] sm:$0xff]
        %v1284 = vld [vmem:[#allocation3 + $0x8] sm:$0xff]
        %v1285 = vld [vmem:[#allocation3 + $0x10] sm:$0xff]
        %v1286 = vld [vmem:[#allocation3 + $0x18] sm:$0xff]
        %v1287 = vld [vmem:[#allocation3 + $0x20] sm:$0xff]
        %v1288 = vld [vmem:[#allocation3 + $0x28] sm:$0xff]
        %v1289 = vld [vmem:[#allocation3 + $0x30] sm:$0xff]
        %v1290 = vld [vmem:[#allocation3 + $0x38] sm:$0xff]
        %v1291 = vld [vmem:[#allocation3 + $0x40] sm:$0xff]
        %v1292 = vld [vmem:[#allocation3 + $0x48] sm:$0xff]
        %v1293 = vld [vmem:[#allocation3 + $0x50] sm:$0xff]
        %v1294 = vld [vmem:[#allocation3 + $0x58] sm:$0xff]
        %v1295 = vld [vmem:[%s1] sm:$0xf]
        %v1296 = vld [vmem:[%s1 + $0x4] sm:$0xf]
        %v1297 = vld [vmem:[%s1 + $0x8] sm:$0xf]
        %v1298 = vld [vmem:[%s1 + $0xc] sm:$0xf]
        %v1299 = vld [vmem:[%s1 + $0x10] sm:$0xf]
        %v1300 = vld [vmem:[%s1 + $0x14] sm:$0xf]
        %v1301 = vld [vmem:[%s1 + $0x18] sm:$0xf]
        %v1302 = vld [vmem:[%s1 + $0x1c] sm:$0xf]
        %v1303 = vld [vmem:[%s1 + $0x20] sm:$0xf]
        %v1304 = vld [vmem:[%s1 + $0x24] sm:$0xf]
        %v1305 = vld [vmem:[%s1 + $0x28] sm:$0xf]
        %v1306 = vld [vmem:[%s1 + $0x2c] sm:$0xf]
        %v1307 = vld [vmem:[%s1 + $0x30] sm:$0xf]
        %v1308 = vld [vmem:[%s1 + $0x34] sm:$0xf]
        %v1309 = vld [vmem:[%s1 + $0x38] sm:$0xf]
        %v1310 = vld [vmem:[%s1 + $0x3c] sm:$0xf]
        %v1311 = vld [vmem:[%s1 + $0x40] sm:$0xf]
        %v1312 = vld [vmem:[%s1 + $0x44] sm:$0xf]
        %v1313 = vld [vmem:[%s1 + $0x48] sm:$0xf]
        %v1314 = vld [vmem:[%s1 + $0x4c] sm:$0xf]
        %v1315 = vld [vmem:[%s1 + $0x50] sm:$0xf]
        %v1316 = vld [vmem:[%s1 + $0x54] sm:$0xf]
        %v1317 = vld [vmem:[%s1 + $0x58] sm:$0xf]
        %v1318 = vld [vmem:[%s1 + $0x5c] sm:$0xf]
        %v1319 = vld [vmem:[%s1 + $0x60] sm:$0xf]
        %v1320 = vld [vmem:[%s1 + $0x64] sm:$0xf]
        %v1321 = vld [vmem:[%s1 + $0x68] sm:$0xf]
        %v1322 = vld [vmem:[%s1 + $0x6c] sm:$0xf]
        %v1323 = vld [vmem:[%s1 + $0x70] sm:$0xf]
        %v1324 = vld [vmem:[%s1 + $0x74] sm:$0xf]
        %v1325 = vld [vmem:[%s1 + $0x78] sm:$0xf]
        %v1326 = vld [vmem:[%s1 + $0x7c] sm:$0xf]
        %v1327 = vld [vmem:[%s1 + $0x80] sm:$0xf]
        %v1328 = vld [vmem:[%s1 + $0x84] sm:$0xf]
        %v1329 = vld [vmem:[%s1 + $0x88] sm:$0xf]
        %v1330 = vld [vmem:[%s1 + $0x8c] sm:$0xf]
        %v1331 = vld [vmem:[%s2] sm:$0x1]
        %v1333 = vlaneseq
        %v1334 = vshrl.u32 %v1333, 7
        %v1335 = vsub.s32 0, %v1334
        %v1336 = vrot.slane %v1331, %v1335
        %v1374 = vunpack.c.l.b16 %v1295
        %v1375 = vunpack.c.l.b16 %v1296
        %v1376 = vunpack.c.l.b16 %v1297
        %v1377 = vunpack.c.l.b16 %v1298
        %v1378 = vunpack.c.l.b16 %v1299
        %v1379 = vunpack.c.l.b16 %v1300
        %v1380 = vunpack.c.l.b16 %v1301
        %v1381 = vunpack.c.l.b16 %v1302
        %v1382 = vunpack.c.l.b16 %v1303
        %v1383 = vunpack.c.l.b16 %v1304
        %v1384 = vunpack.c.l.b16 %v1305
        %v1385 = vunpack.c.l.b16 %v1306
        %v1386 = vunpack.c.l.b16 %v1307
        %v1387 = vunpack.c.l.b16 %v1308
        %v1388 = vunpack.c.l.b16 %v1309
        %v1389 = vunpack.c.l.b16 %v1310
        %v1390 = vunpack.c.l.b16 %v1311
        %v1391 = vunpack.c.l.b16 %v1312
        %v1392 = vunpack.c.l.b16 %v1313
        %v1393 = vunpack.c.l.b16 %v1314
        %v1394 = vunpack.c.l.b16 %v1315
        %v1395 = vunpack.c.l.b16 %v1316
        %v1396 = vunpack.c.l.b16 %v1317
        %v1397 = vunpack.c.l.b16 %v1318
        %v1398 = vunpack.c.l.b16 %v1319
        %v1399 = vunpack.c.l.b16 %v1320
        %v1400 = vunpack.c.l.b16 %v1321
        %v1401 = vunpack.c.l.b16 %v1322
        %v1402 = vunpack.c.l.b16 %v1323
        %v1403 = vunpack.c.l.b16 %v1324
        %v1404 = vunpack.c.l.b16 %v1325
        %v1405 = vunpack.c.l.b16 %v1326
        %v1406 = vunpack.c.l.b16 %v1327
        %v1407 = vunpack.c.l.b16 %v1328
        %v1408 = vunpack.c.l.b16 %v1329
        %v1409 = vunpack.c.l.b16 %v1330
        %v1410 = vpack.c.b16 %v1375, %v1374
        %v1411 = vpack.c.b16 %v1377, %v1376
        %v1412 = vpack.c.b16 %v1379, %v1378
        %v1413 = vpack.c.b16 %v1381, %v1380
        %v1414 = vpack.c.b16 %v1383, %v1382
        %v1415 = vpack.c.b16 %v1385, %v1384
        %v1416 = vpack.c.b16 %v1387, %v1386
        %v1417 = vpack.c.b16 %v1389, %v1388
        %v1418 = vpack.c.b16 %v1391, %v1390
        %v1419 = vpack.c.b16 %v1393, %v1392
        %v1420 = vpack.c.b16 %v1395, %v1394
        %v1421 = vpack.c.b16 %v1397, %v1396
        %v1422 = vpack.c.b16 %v1399, %v1398
        %v1423 = vpack.c.b16 %v1401, %v1400
        %v1424 = vpack.c.b16 %v1403, %v1402
        %v1425 = vpack.c.b16 %v1405, %v1404
        %v1426 = vpack.c.b16 %v1407, %v1406
        %v1427 = vpack.c.b16 %v1409, %v1408
        %v1447 = vsel %vm452, %v1285, 0
        %v1450 = vsel %vm452, %v1288, 0
        %v1453 = vsel %vm452, %v1291, 0
        %v1456 = vsel %vm452, %v1294, 0
        %1458 = vmatprep.subr.bf16.mxu0 0
        %1459 = vmatpush1.bf16.msra.mxu0 %v1410
        %1460 = vmatprep.subr.bf16.mxu0 0
        %1461 = vmatpush1.bf16.msra.mxu0 %v1411
        %1462 = vmatprep.subr.bf16.mxu0 0
        %1463 = vmatpush1.bf16.msra.mxu0 %v1412
        %1464 = vmatprep.subr.bf16.mxu0 0
        %1465 = vmatpush1.bf16.msra.mxu0 %v1413
        %1466 = vmatprep.subr.bf16.mxu0 0
        %1467 = vmatpush1.bf16.msra.mxu0 %v1414
        %1468 = vmatprep.subr.bf16.mxu0 0
        %1469 = vmatpush1.bf16.msra.mxu0 %v1415
        %1470 = vmatprep.subr.bf16.mxu0 0
        %1471 = vmatpush1.bf16.msra.mxu0 %v1416
        %1472 = vmatprep.subr.bf16.mxu0 0
        %1473 = vmatpush1.bf16.msra.mxu0 %v1417
        %1474 = vmatprep.subr.bf16.mxu0 0
        %1475 = vmatpush1.bf16.msra.mxu0 %v1418
        %1476 = vmatprep.subr.bf16.mxu0 0
        %1477 = vmatpush1.bf16.msra.mxu0 %v1419
        %1478 = vmatprep.subr.bf16.mxu0 0
        %1479 = vmatpush1.bf16.msra.mxu0 %v1420
        %1480 = vmatprep.subr.bf16.mxu0 0
        %1481 = vmatpush1.bf16.msra.mxu0 %v1421
        %1482 = vmatprep.subr.bf16.mxu0 0
        %1483 = vmatpush1.bf16.msra.mxu0 %v1422
        %1484 = vmatprep.subr.bf16.mxu0 0
        %1485 = vmatpush1.bf16.msra.mxu0 %v1423
        %1486 = vmatprep.subr.bf16.mxu0 0
        %1487 = vmatpush1.bf16.msra.mxu0 %v1424
        %1488 = vmatprep.subr.bf16.mxu0 0
        %1489 = vmatpush1.bf16.msra.mxu0 %v1425
        %1490 = vmatprep.mubr.bf16.mxu0 %v1284
        %1491 = vmatmul.mubr.bf16.gmra.mrb[0].mxu0 %v1283
        %v1492 = vpop.f32.mrb[0].mxu0
        %v1493 = vadd.f32 %v1336, %v1492
        %v1494 = vpop.f32.mrb[0].mxu0
        %v1495 = vpop.f32.mrb[0].mxu0
        %v1496 = vadd.f32 %v1336, %v1495
        %v1497 = vpop.f32.mrb[0].mxu0
        %1498 = vmatprep.mubr.bf16.mxu0 %v1287
        %1499 = vmatmul.mubr.bf16.gmra.mrb[0].mxu0 %v1286
        %v1500 = vpop.f32.mrb[0].mxu0
        %v1501 = vadd.f32 %v1336, %v1500
        %v1502 = vpop.f32.mrb[0].mxu0
        %v1503 = vpop.f32.mrb[0].mxu0
        %v1504 = vadd.f32 %v1336, %v1503
        %v1505 = vpop.f32.mrb[0].mxu0
        %1506 = vmatprep.mubr.bf16.mxu0 %v1290
        %1507 = vmatmul.mubr.bf16.gmra.mrb[0].mxu0 %v1289
        %v1508 = vpop.f32.mrb[0].mxu0
        %v1509 = vadd.f32 %v1336, %v1508
        %v1510 = vpop.f32.mrb[0].mxu0
        %v1511 = vpop.f32.mrb[0].mxu0
        %v1512 = vadd.f32 %v1336, %v1511
        %v1513 = vpop.f32.mrb[0].mxu0
        %1514 = vmatprep.mubr.bf16.mxu0 %v1293
        %1515 = vmatmul.mubr.bf16.gmra.mrb[0].mxu0 %v1292
        %v1516 = vpop.f32.mrb[0].mxu0
        %v1517 = vadd.f32 %v1336, %v1516
        %v1518 = vpop.f32.mrb[0].mxu0
        %v1519 = vpop.f32.mrb[0].mxu0
        %v1520 = vadd.f32 %v1336, %v1519
        %v1521 = vpop.f32.mrb[0].mxu0
        %1522 = vdwg.mxu0
        %1523 = vmatprep.subr.bf16.mxu0 0
        %1524 = vmatpush1.bf16.msra.mxu0 %v1426
        %1525 = vmatprep.subr.bf16.mxu0 0
        %1526 = vmatpush1.bf16.msra.mxu0 %v1427
        %1527 = vmatprep.subr.bf16.mxu0 0
        %1528 = vmatpush1.bf16.msra.mxu0 0
        %1529 = vmatprep.subr.bf16.mxu0 0
        %1530 = vmatpush1.bf16.msra.mxu0 0
        %1531 = vmatprep.subr.bf16.mxu0 0
        %1532 = vmatpush1.bf16.msra.mxu0 0
        %1533 = vmatprep.subr.bf16.mxu0 0
        %1534 = vmatpush1.bf16.msra.mxu0 0
        %1535 = vmatprep.subr.bf16.mxu0 0
        %1536 = vmatpush1.bf16.msra.mxu0 0
        %1537 = vmatprep.subr.bf16.mxu0 0
        %1538 = vmatpush1.bf16.msra.mxu0 0
        %1539 = vmatprep.subr.bf16.mxu0 0
        %1540 = vmatpush1.bf16.msra.mxu0 0
        %1541 = vmatprep.subr.bf16.mxu0 0
        %1542 = vmatpush1.bf16.msra.mxu0 0
        %1543 = vmatprep.subr.bf16.mxu0 0
        %1544 = vmatpush1.bf16.msra.mxu0 0
        %1545 = vmatprep.subr.bf16.mxu0 0
        %1546 = vmatpush1.bf16.msra.mxu0 0
        %1547 = vmatprep.subr.bf16.mxu0 0
        %1548 = vmatpush1.bf16.msra.mxu0 0
        %1549 = vmatprep.subr.bf16.mxu0 0
        %1550 = vmatpush1.bf16.msra.mxu0 0
        %1551 = vmatprep.subr.bf16.mxu0 0
        %1552 = vmatpush1.bf16.msra.mxu0 0
        %1553 = vmatprep.subr.bf16.mxu0 0
        %1554 = vmatpush1.bf16.msra.mxu0 0
        %1555 = vmatprep.mubr.bf16.mxu0 0
        %1556 = vmatmul.mubr.bf16.gmra.mrb[0].mxu0 %v1447
        %v1557 = vpop.f32.mrb[0].mxu0
        %v1558 = vadd.f32 %v1493, %v1557
        %v1559 = vpop.f32.mrb[0].mxu0
        %v1560 = vpop.f32.mrb[0].mxu0
        %v1561 = vadd.f32 %v1496, %v1560
        %v1562 = vpop.f32.mrb[0].mxu0
        %1563 = vmatprep.mubr.bf16.mxu0 0
        %1564 = vmatmul.mubr.bf16.gmra.mrb[0].mxu0 %v1450
        %v1565 = vpop.f32.mrb[0].mxu0
        %v1566 = vadd.f32 %v1501, %v1565
        %v1567 = vpop.f32.mrb[0].mxu0
        %v1568 = vpop.f32.mrb[0].mxu0
        %v1569 = vadd.f32 %v1504, %v1568
        %v1570 = vpop.f32.mrb[0].mxu0
        %1571 = vmatprep.mubr.bf16.mxu0 0
        %1572 = vmatmul.mubr.bf16.gmra.mrb[0].mxu0 %v1453
        %v1573 = vpop.f32.mrb[0].mxu0
        %v1574 = vadd.f32 %v1509, %v1573
        %v1575 = vpop.f32.mrb[0].mxu0
        %v1576 = vpop.f32.mrb[0].mxu0
        %v1577 = vadd.f32 %v1512, %v1576
        %v1578 = vpop.f32.mrb[0].mxu0
        %1579 = vmatprep.mubr.bf16.mxu0 0
        %1580 = vmatmul.mubr.bf16.gmra.mrb[0].mxu0 %v1456
        %v1581 = vpop.f32.mrb[0].mxu0
        %v1582 = vadd.f32 %v1517, %v1581
        %v1583 = vpop.f32.mrb[0].mxu0
        %v1584 = vpop.f32.mrb[0].mxu0
        %v1585 = vadd.f32 %v1520, %v1584
        %v1586 = vpop.f32.mrb[0].mxu0
        %1587 = vdwg.mxu0
        %v1588 = vmax.f32 %v1558, 0.0
        %v1589 = vmax.f32 %v1561, 0.0
        %v1590 = vmax.f32 %v1566, 0.0
        %v1591 = vmax.f32 %v1569, 0.0
        %v1592 = vmax.f32 %v1574, 0.0
        %v1593 = vmax.f32 %v1577, 0.0
        %v1594 = vmax.f32 %v1582, 0.0
        %v1595 = vmax.f32 %v1585, 0.0
        %v1596 = vpack.c.bf16 %v1588, %v1588
        %v1597 = vpack.c.bf16 %v1589, %v1589
        %v1598 = vpack.c.bf16 %v1590, %v1590
        %v1599 = vpack.c.bf16 %v1591, %v1591
        %v1600 = vpack.c.bf16 %v1592, %v1592
        %v1601 = vpack.c.bf16 %v1593, %v1593
        %v1602 = vpack.c.bf16 %v1594, %v1594
        %v1603 = vpack.c.bf16 %v1595, %v1595
        %v1612 = vunpack.c.l.b16 %v1596
        %v1613 = vunpack.c.l.b16 %v1597
        %v1614 = vunpack.c.l.b16 %v1598
        %v1615 = vunpack.c.l.b16 %v1599
        %v1616 = vunpack.c.l.b16 %v1600
        %v1617 = vunpack.c.l.b16 %v1601
        %v1618 = vunpack.c.l.b16 %v1602
        %v1619 = vunpack.c.l.b16 %v1603
        %v1620 = vpack.c.b16 %v1612, %v1612
        %v1621 = vpack.c.b16 %v1613, %v1613
        %v1622 = vpack.c.b16 %v1614, %v1614
        %v1623 = vpack.c.b16 %v1615, %v1615
        %v1624 = vpack.c.b16 %v1616, %v1616
        %v1625 = vpack.c.b16 %v1617, %v1617
        %v1626 = vpack.c.b16 %v1618, %v1618
        %v1627 = vpack.c.b16 %v1619, %v1619
        %v1629 = vshrl.u32 %v1620, 16
        %v1631 = vrot.slane %v1629, 7
        %v1632 = vshll.u32 %v1620, 16
        %v1634 = vor.u32 %v1631, %v1632
        %v1635 = vrot.slane %v1631, 4
        %v1637 = vshrl.u32 %v1621, 16
        %v1639 = vrot.slane %v1637, 7
        %v1640 = vshll.u32 %v1621, 16
        %v1642 = vor.u32 %v1639, %v1640
        %v1643 = vrot.slane %v1639, 4
        %v1645 = vshrl.u32 %v1622, 16
        %v1647 = vrot.slane %v1645, 7
        %v1648 = vshll.u32 %v1622, 16
        %v1650 = vor.u32 %v1647, %v1648
        %v1651 = vrot.slane %v1647, 4
        %v1653 = vshrl.u32 %v1623, 16
        %v1655 = vrot.slane %v1653, 7
        %v1656 = vshll.u32 %v1623, 16
        %v1658 = vor.u32 %v1655, %v1656
        %v1659 = vrot.slane %v1655, 4
        %v1661 = vshrl.u32 %v1624, 16
        %v1663 = vrot.slane %v1661, 7
        %v1664 = vshll.u32 %v1624, 16
        %v1666 = vor.u32 %v1663, %v1664
        %v1667 = vrot.slane %v1663, 4
        %v1669 = vshrl.u32 %v1625, 16
        %v1671 = vrot.slane %v1669, 7
        %v1672 = vshll.u32 %v1625, 16
        %v1674 = vor.u32 %v1671, %v1672
        %v1675 = vrot.slane %v1671, 4
        %v1677 = vshrl.u32 %v1626, 16
        %v1679 = vrot.slane %v1677, 7
        %v1680 = vshll.u32 %v1626, 16
        %v1682 = vor.u32 %v1679, %v1680
        %v1683 = vrot.slane %v1679, 4
        %v1685 = vshrl.u32 %v1627, 16
        %v1687 = vrot.slane %v1685, 7
        %v1688 = vshll.u32 %v1627, 16
        %v1690 = vor.u32 %v1687, %v1688
        %v1691 = vrot.slane %v1687, 4
        %v1708 = vld [vmem:[%s365] sm:$0xf]
        %v1709 = vsel %vm368, %v1634, %v1708
        %1710 = vst [vmem:[%s365] sm:$0xf] %v1709
        %v1711 = vld [vmem:[%s365 + $0x4] sm:$0x1]
        %v1712 = vsel %vm374, %v1635, %v1711
        %1713 = vst [vmem:[%s365 + $0x4] sm:$0x1] %v1712
        %v1714 = vld [vmem:[%s365 + $0x8] sm:$0xf]
        %v1715 = vsel %vm368, %v1642, %v1714
        %1716 = vst [vmem:[%s365 + $0x8] sm:$0xf] %v1715
        %v1717 = vld [vmem:[%s365 + $0xc] sm:$0x1]
        %v1718 = vsel %vm374, %v1643, %v1717
        %1719 = vst [vmem:[%s365 + $0xc] sm:$0x1] %v1718
        %v1720 = vld [vmem:[%s365 + $0x10] sm:$0xf]
        %v1721 = vsel %vm368, %v1650, %v1720
        %1722 = vst [vmem:[%s365 + $0x10] sm:$0xf] %v1721
        %v1723 = vld [vmem:[%s365 + $0x14] sm:$0x1]
        %v1724 = vsel %vm374, %v1651, %v1723
        %1725 = vst [vmem:[%s365 + $0x14] sm:$0x1] %v1724
        %v1726 = vld [vmem:[%s365 + $0x18] sm:$0xf]
        %v1727 = vsel %vm368, %v1658, %v1726
        %1728 = vst [vmem:[%s365 + $0x18] sm:$0xf] %v1727
        %v1729 = vld [vmem:[%s365 + $0x1c] sm:$0x1]
        %v1730 = vsel %vm374, %v1659, %v1729
        %1731 = vst [vmem:[%s365 + $0x1c] sm:$0x1] %v1730
        %v1732 = vld [vmem:[%s365 + $0x20] sm:$0xf]
        %v1733 = vsel %vm368, %v1666, %v1732
        %1734 = vst [vmem:[%s365 + $0x20] sm:$0xf] %v1733
        %v1735 = vld [vmem:[%s365 + $0x24] sm:$0x1]
        %v1736 = vsel %vm374, %v1667, %v1735
        %1737 = vst [vmem:[%s365 + $0x24] sm:$0x1] %v1736
        %v1738 = vld [vmem:[%s365 + $0x28] sm:$0xf]
        %v1739 = vsel %vm368, %v1674, %v1738
        %1740 = vst [vmem:[%s365 + $0x28] sm:$0xf] %v1739
        %v1741 = vld [vmem:[%s365 + $0x2c] sm:$0x1]
        %v1742 = vsel %vm374, %v1675, %v1741
        %1743 = vst [vmem:[%s365 + $0x2c] sm:$0x1] %v1742
        %v1744 = vld [vmem:[%s365 + $0x30] sm:$0xf]
        %v1745 = vsel %vm368, %v1682, %v1744
        %1746 = vst [vmem:[%s365 + $0x30] sm:$0xf] %v1745
        %v1747 = vld [vmem:[%s365 + $0x34] sm:$0x1]
        %v1748 = vsel %vm374, %v1683, %v1747
        %1749 = vst [vmem:[%s365 + $0x34] sm:$0x1] %v1748
        %v1750 = vld [vmem:[%s365 + $0x38] sm:$0xf]
        %v1751 = vsel %vm368, %v1690, %v1750
        %1752 = vst [vmem:[%s365 + $0x38] sm:$0xf] %v1751
        %v1753 = vld [vmem:[%s365 + $0x3c] sm:$0x1]
        %v1754 = vsel %vm374, %v1691, %v1753
        %1755 = vst [vmem:[%s365 + $0x3c] sm:$0x1] %v1754
        %v1756 = vld [vmem:[#allocation2] sm:$0xf]
        %v1757 = vld [vmem:[#allocation2 + $0x8] sm:$0xf]
        %v1758 = vld [vmem:[#allocation2 + $0x10] sm:$0xf]
        %v1759 = vld [vmem:[#allocation2 + $0x18] sm:$0xf]
        %v1760 = vld [vmem:[#allocation2 + $0x20] sm:$0xf]
        %v1761 = vld [vmem:[#allocation2 + $0x28] sm:$0xf]
        %v1762 = vld [vmem:[#allocation2 + $0x30] sm:$0xf]
        %v1763 = vld [vmem:[#allocation2 + $0x38] sm:$0xf]
        %v1772 = vunpack.c.l.b16 %v1756
        %v1773 = vunpack.c.l.b16 %v1757
        %v1774 = vunpack.c.l.b16 %v1758
        %v1775 = vunpack.c.l.b16 %v1759
        %v1776 = vunpack.c.l.b16 %v1760
        %v1777 = vunpack.c.l.b16 %v1761
        %v1778 = vunpack.c.l.b16 %v1762
        %v1779 = vunpack.c.l.b16 %v1763
        %v1780 = vpack.c.b16 %v1773, %v1772
        %v1781 = vpack.c.b16 %v1775, %v1774
        %v1782 = vpack.c.b16 %v1777, %v1776
        %v1783 = vpack.c.b16 %v1779, %v1778
        %1788 = vst.msk [vmem:[#allocation3] sm:$0xff] %vm452, %v1780
        %1789 = vst.msk [vmem:[#allocation3 + $0x18] sm:$0xff] %vm452, %v1781
        %1790 = vst.msk [vmem:[#allocation3 + $0x30] sm:$0xff] %vm452, %v1782
        %1791 = vst.msk [vmem:[#allocation3 + $0x48] sm:$0xff] %vm452, %v1783
        %v1792 = vld [vmem:[#allocation2] sm:$0xf]
        %v1793 = vld [vmem:[#allocation2 + $0x4] sm:$0x1]
        %v1794 = vld [vmem:[#allocation2 + $0x8] sm:$0xf]
        %v1795 = vld [vmem:[#allocation2 + $0xc] sm:$0x1]
        %v1796 = vld [vmem:[#allocation2 + $0x10] sm:$0xf]
        %v1797 = vld [vmem:[#allocation2 + $0x14] sm:$0x1]
        %v1798 = vld [vmem:[#allocation2 + $0x18] sm:$0xf]
        %v1799 = vld [vmem:[#allocation2 + $0x1c] sm:$0x1]
        %v1800 = vld [vmem:[#allocation2 + $0x20] sm:$0xf]
        %v1801 = vld [vmem:[#allocation2 + $0x24] sm:$0x1]
        %v1802 = vld [vmem:[#allocation2 + $0x28] sm:$0xf]
        %v1803 = vld [vmem:[#allocation2 + $0x2c] sm:$0x1]
        %v1804 = vld [vmem:[#allocation2 + $0x30] sm:$0xf]
        %v1805 = vld [vmem:[#allocation2 + $0x34] sm:$0x1]
        %v1806 = vld [vmem:[#allocation2 + $0x38] sm:$0xf]
        %v1807 = vld [vmem:[#allocation2 + $0x3c] sm:$0x1]
        %v1809 = vshrl.u32 %v1792, 16
        %v1811 = vrot.slane %v1809, 4
        %v1812 = vshll.u32 %v1792, 16
        %v1814 = vrot.slane %v1812, 5
        %v1815 = vor.u32 %v1811, %v1814
        %v1816 = vrot.slane %v1815, 4
        %v1818 = vshll.u32 %v1793, 16
        %v1820 = vrot.slane %v1818, 5
        %v1821 = vsel %vm475, %v1816, %v1820
        %v1823 = vshrl.u32 %v1794, 16
        %v1825 = vrot.slane %v1823, 4
        %v1826 = vshll.u32 %v1794, 16
        %v1828 = vrot.slane %v1826, 5
        %v1829 = vor.u32 %v1825, %v1828
        %v1830 = vrot.slane %v1829, 4
        %v1832 = vshll.u32 %v1795, 16
        %v1834 = vrot.slane %v1832, 5
        %v1835 = vsel %vm475, %v1830, %v1834
        %v1837 = vshrl.u32 %v1796, 16
        %v1839 = vrot.slane %v1837, 4
        %v1840 = vshll.u32 %v1796, 16
        %v1842 = vrot.slane %v1840, 5
        %v1843 = vor.u32 %v1839, %v1842
        %v1844 = vrot.slane %v1843, 4
        %v1846 = vshll.u32 %v1797, 16
        %v1848 = vrot.slane %v1846, 5
        %v1849 = vsel %vm475, %v1844, %v1848
        %v1851 = vshrl.u32 %v1798, 16
        %v1853 = vrot.slane %v1851, 4
        %v1854 = vshll.u32 %v1798, 16
        %v1856 = vrot.slane %v1854, 5
        %v1857 = vor.u32 %v1853, %v1856
        %v1858 = vrot.slane %v1857, 4
        %v1860 = vshll.u32 %v1799, 16
        %v1862 = vrot.slane %v1860, 5
        %v1863 = vsel %vm475, %v1858, %v1862
        %v1865 = vshrl.u32 %v1800, 16
        %v1867 = vrot.slane %v1865, 4
        %v1868 = vshll.u32 %v1800, 16
        %v1870 = vrot.slane %v1868, 5
        %v1871 = vor.u32 %v1867, %v1870
        %v1872 = vrot.slane %v1871, 4
        %v1874 = vshll.u32 %v1801, 16
        %v1876 = vrot.slane %v1874, 5
        %v1877 = vsel %vm475, %v1872, %v1876
        %v1879 = vshrl.u32 %v1802, 16
        %v1881 = vrot.slane %v1879, 4
        %v1882 = vshll.u32 %v1802, 16
        %v1884 = vrot.slane %v1882, 5
        %v1885 = vor.u32 %v1881, %v1884
        %v1886 = vrot.slane %v1885, 4
        %v1888 = vshll.u32 %v1803, 16
        %v1890 = vrot.slane %v1888, 5
        %v1891 = vsel %vm475, %v1886, %v1890
        %v1893 = vshrl.u32 %v1804, 16
        %v1895 = vrot.slane %v1893, 4
        %v1896 = vshll.u32 %v1804, 16
        %v1898 = vrot.slane %v1896, 5
        %v1899 = vor.u32 %v1895, %v1898
        %v1900 = vrot.slane %v1899, 4
        %v1902 = vshll.u32 %v1805, 16
        %v1904 = vrot.slane %v1902, 5
        %v1905 = vsel %vm475, %v1900, %v1904
        %v1907 = vshrl.u32 %v1806, 16
        %v1909 = vrot.slane %v1907, 4
        %v1910 = vshll.u32 %v1806, 16
        %v1912 = vrot.slane %v1910, 5
        %v1913 = vor.u32 %v1909, %v1912
        %v1914 = vrot.slane %v1913, 4
        %v1916 = vshll.u32 %v1807, 16
        %v1918 = vrot.slane %v1916, 5
        %v1919 = vsel %vm475, %v1914, %v1918
        %v1920 = vunpack.c.l.b16 %v1821
        %v1921 = vunpack.c.l.b16 %v1835
        %v1922 = vunpack.c.l.b16 %v1849
        %v1923 = vunpack.c.l.b16 %v1863
        %v1924 = vunpack.c.l.b16 %v1877
        %v1925 = vunpack.c.l.b16 %v1891
        %v1926 = vunpack.c.l.b16 %v1905
        %v1927 = vunpack.c.l.b16 %v1919
        %v1928 = vpack.c.b16 %v1921, %v1920
        %v1929 = vpack.c.b16 %v1923, %v1922
        %v1930 = vpack.c.b16 %v1925, %v1924
        %v1931 = vpack.c.b16 %v1927, %v1926
        %1932 = vrot.lane.b32.xlu0 %v1928, 32
        %v1933 = vpop.permute.xlu0 %1932
        %1934 = vrot.lane.b32.xlu0 %v1929, 32
        %v1935 = vpop.permute.xlu0 %1934
        %1936 = vrot.lane.b32.xlu0 %v1930, 32
        %v1937 = vpop.permute.xlu0 %1936
        %1938 = vrot.lane.b32.xlu0 %v1931, 32
        %v1939 = vpop.permute.xlu0 %1938
        %1944 = vst.msk [vmem:[#allocation3] sm:$0xff] %vm612, %v1933
        %1945 = vst.msk [vmem:[#allocation3 + $0x18] sm:$0xff] %vm612, %v1935
        %1946 = vst.msk [vmem:[#allocation3 + $0x30] sm:$0xff] %vm612, %v1937
        %1947 = vst.msk [vmem:[#allocation3 + $0x48] sm:$0xff] %vm612, %v1939
        %v1948 = vld [vmem:[#allocation2] sm:$0xe]
        %v1949 = vld [vmem:[#allocation2 + $0x4] sm:$0x1]
        %v1950 = vld [vmem:[#allocation2 + $0x8] sm:$0xe]
        %v1951 = vld [vmem:[#allocation2 + $0xc] sm:$0x1]
        %v1952 = vld [vmem:[#allocation2 + $0x10] sm:$0xe]
        %v1953 = vld [vmem:[#allocation2 + $0x14] sm:$0x1]
        %v1954 = vld [vmem:[#allocation2 + $0x18] sm:$0xe]
        %v1955 = vld [vmem:[#allocation2 + $0x1c] sm:$0x1]
        %v1956 = vld [vmem:[#allocation2 + $0x20] sm:$0xe]
        %v1957 = vld [vmem:[#allocation2 + $0x24] sm:$0x1]
        %v1958 = vld [vmem:[#allocation2 + $0x28] sm:$0xe]
        %v1959 = vld [vmem:[#allocation2 + $0x2c] sm:$0x1]
        %v1960 = vld [vmem:[#allocation2 + $0x30] sm:$0xe]
        %v1961 = vld [vmem:[#allocation2 + $0x34] sm:$0x1]
        %v1962 = vld [vmem:[#allocation2 + $0x38] sm:$0xe]
        %v1963 = vld [vmem:[#allocation2 + $0x3c] sm:$0x1]
        %v1980 = vrot.slane %v1948, 5
        %v1981 = vrot.slane %v1980, 4
        %v1982 = vrot.slane %v1949, 5
        %v1983 = vsel %vm651, %v1981, %v1982
        %v1984 = vrot.slane %v1950, 5
        %v1985 = vrot.slane %v1984, 4
        %v1986 = vrot.slane %v1951, 5
        %v1987 = vsel %vm651, %v1985, %v1986
        %v1988 = vrot.slane %v1952, 5
        %v1989 = vrot.slane %v1988, 4
        %v1990 = vrot.slane %v1953, 5
        %v1991 = vsel %vm651, %v1989, %v1990
        %v1992 = vrot.slane %v1954, 5
        %v1993 = vrot.slane %v1992, 4
        %v1994 = vrot.slane %v1955, 5
        %v1995 = vsel %vm651, %v1993, %v1994
        %v1996 = vrot.slane %v1956, 5
        %v1997 = vrot.slane %v1996, 4
        %v1998 = vrot.slane %v1957, 5
        %v1999 = vsel %vm651, %v1997, %v1998
        %v2000 = vrot.slane %v1958, 5
        %v2001 = vrot.slane %v2000, 4
        %v2002 = vrot.slane %v1959, 5
        %v2003 = vsel %vm651, %v2001, %v2002
        %v2004 = vrot.slane %v1960, 5
        %v2005 = vrot.slane %v2004, 4
        %v2006 = vrot.slane %v1961, 5
        %v2007 = vsel %vm651, %v2005, %v2006
        %v2008 = vrot.slane %v1962, 5
        %v2009 = vrot.slane %v2008, 4
        %v2010 = vrot.slane %v1963, 5
        %v2011 = vsel %vm651, %v2009, %v2010
        %v2012 = vunpack.c.l.b16 %v1983
        %v2013 = vunpack.c.l.b16 %v1987
        %v2014 = vunpack.c.l.b16 %v1991
        %v2015 = vunpack.c.l.b16 %v1995
        %v2016 = vunpack.c.l.b16 %v1999
        %v2017 = vunpack.c.l.b16 %v2003
        %v2018 = vunpack.c.l.b16 %v2007
        %v2019 = vunpack.c.l.b16 %v2011
        %v2020 = vpack.c.b16 %v2013, %v2012
        %v2021 = vpack.c.b16 %v2015, %v2014
        %v2022 = vpack.c.b16 %v2017, %v2016
        %v2023 = vpack.c.b16 %v2019, %v2018
        %2024 = vrot.lane.b32.xlu0 %v2020, 64
        %v2025 = vpop.permute.xlu0 %2024
        %2026 = vrot.lane.b32.xlu0 %v2021, 64
        %v2027 = vpop.permute.xlu0 %2026
        %2028 = vrot.lane.b32.xlu0 %v2022, 64
        %v2029 = vpop.permute.xlu0 %2028
        %2030 = vrot.lane.b32.xlu0 %v2023, 64
        %v2031 = vpop.permute.xlu0 %2030
        %2036 = vst.msk [vmem:[#allocation3] sm:$0xff] %vm708, %v2025
        %2037 = vst.msk [vmem:[#allocation3 + $0x18] sm:$0xff] %vm708, %v2027
        %2038 = vst.msk [vmem:[#allocation3 + $0x30] sm:$0xff] %vm708, %v2029
        %2039 = vst.msk [vmem:[#allocation3 + $0x48] sm:$0xff] %vm708, %v2031
        %v2040 = vld [vmem:[%s365] sm:$0xf]
        %v2041 = vld [vmem:[%s365 + $0x8] sm:$0xf]
        %v2042 = vld [vmem:[%s365 + $0x10] sm:$0xf]
        %v2043 = vld [vmem:[%s365 + $0x18] sm:$0xf]
        %v2044 = vld [vmem:[%s365 + $0x20] sm:$0xf]
        %v2045 = vld [vmem:[%s365 + $0x28] sm:$0xf]
        %v2046 = vld [vmem:[%s365 + $0x30] sm:$0xf]
        %v2047 = vld [vmem:[%s365 + $0x38] sm:$0xf]
        %v2056 = vunpack.c.l.b16 %v2040
        %v2057 = vunpack.c.l.b16 %v2041
        %v2058 = vunpack.c.l.b16 %v2042
        %v2059 = vunpack.c.l.b16 %v2043
        %v2060 = vunpack.c.l.b16 %v2044
        %v2061 = vunpack.c.l.b16 %v2045
        %v2062 = vunpack.c.l.b16 %v2046
        %v2063 = vunpack.c.l.b16 %v2047
        %v2064 = vpack.c.b16 %v2057, %v2056
        %v2065 = vpack.c.b16 %v2059, %v2058
        %v2066 = vpack.c.b16 %v2061, %v2060
        %v2067 = vpack.c.b16 %v2063, %v2062
        %2068 = vrot.lane.b32.xlu0 %v2064, 96
        %v2069 = vpop.permute.xlu0 %2068
        %2070 = vrot.lane.b32.xlu0 %v2065, 96
        %v2071 = vpop.permute.xlu0 %2070
        %2072 = vrot.lane.b32.xlu0 %v2066, 96
        %v2073 = vpop.permute.xlu0 %2072
        %2074 = vrot.lane.b32.xlu0 %v2067, 96
        %v2075 = vpop.permute.xlu0 %2074
        %2080 = vst.msk [vmem:[#allocation3] sm:$0xff] %vm753, %v2069
        %2081 = vst.msk [vmem:[#allocation3 + $0x18] sm:$0xff] %vm753, %v2071
        %2082 = vst.msk [vmem:[#allocation3 + $0x30] sm:$0xff] %vm753, %v2073
        %2083 = vst.msk [vmem:[#allocation3 + $0x48] sm:$0xff] %vm753, %v2075
        %v2084 = vld [vmem:[%s365] sm:$0xf]
        %v2085 = vld [vmem:[%s365 + $0x4] sm:$0x1]
        %v2086 = vld [vmem:[%s365 + $0x8] sm:$0xf]
        %v2087 = vld [vmem:[%s365 + $0xc] sm:$0x1]
        %v2088 = vld [vmem:[%s365 + $0x10] sm:$0xf]
        %v2089 = vld [vmem:[%s365 + $0x14] sm:$0x1]
        %v2090 = vld [vmem:[%s365 + $0x18] sm:$0xf]
        %v2091 = vld [vmem:[%s365 + $0x1c] sm:$0x1]
        %v2092 = vld [vmem:[%s365 + $0x20] sm:$0xf]
        %v2093 = vld [vmem:[%s365 + $0x24] sm:$0x1]
        %v2094 = vld [vmem:[%s365 + $0x28] sm:$0xf]
        %v2095 = vld [vmem:[%s365 + $0x2c] sm:$0x1]
        %v2096 = vld [vmem:[%s365 + $0x30] sm:$0xf]
        %v2097 = vld [vmem:[%s365 + $0x34] sm:$0x1]
        %v2098 = vld [vmem:[%s365 + $0x38] sm:$0xf]
        %v2099 = vld [vmem:[%s365 + $0x3c] sm:$0x1]
        %v2101 = vshrl.u32 %v2084, 16
        %v2103 = vrot.slane %v2101, 4
        %v2104 = vshll.u32 %v2084, 16
        %v2106 = vrot.slane %v2104, 5
        %v2107 = vor.u32 %v2103, %v2106
        %v2108 = vrot.slane %v2107, 4
        %v2110 = vshll.u32 %v2085, 16
        %v2112 = vrot.slane %v2110, 5
        %v2113 = vsel %vm475, %v2108, %v2112
        %v2115 = vshrl.u32 %v2086, 16
        %v2117 = vrot.slane %v2115, 4
        %v2118 = vshll.u32 %v2086, 16
        %v2120 = vrot.slane %v2118, 5
        %v2121 = vor.u32 %v2117, %v2120
        %v2122 = vrot.slane %v2121, 4
        %v2124 = vshll.u32 %v2087, 16
        %v2126 = vrot.slane %v2124, 5
        %v2127 = vsel %vm475, %v2122, %v2126
        %v2129 = vshrl.u32 %v2088, 16
        %v2131 = vrot.slane %v2129, 4
        %v2132 = vshll.u32 %v2088, 16
        %v2134 = vrot.slane %v2132, 5
        %v2135 = vor.u32 %v2131, %v2134
        %v2136 = vrot.slane %v2135, 4
        %v2138 = vshll.u32 %v2089, 16
        %v2140 = vrot.slane %v2138, 5
        %v2141 = vsel %vm475, %v2136, %v2140
        %v2143 = vshrl.u32 %v2090, 16
        %v2145 = vrot.slane %v2143, 4
        %v2146 = vshll.u32 %v2090, 16
        %v2148 = vrot.slane %v2146, 5
        %v2149 = vor.u32 %v2145, %v2148
        %v2150 = vrot.slane %v2149, 4
        %v2152 = vshll.u32 %v2091, 16
        %v2154 = vrot.slane %v2152, 5
        %v2155 = vsel %vm475, %v2150, %v2154
        %v2157 = vshrl.u32 %v2092, 16
        %v2159 = vrot.slane %v2157, 4
        %v2160 = vshll.u32 %v2092, 16
        %v2162 = vrot.slane %v2160, 5
        %v2163 = vor.u32 %v2159, %v2162
        %v2164 = vrot.slane %v2163, 4
        %v2166 = vshll.u32 %v2093, 16
        %v2168 = vrot.slane %v2166, 5
        %v2169 = vsel %vm475, %v2164, %v2168
        %v2171 = vshrl.u32 %v2094, 16
        %v2173 = vrot.slane %v2171, 4
        %v2174 = vshll.u32 %v2094, 16
        %v2176 = vrot.slane %v2174, 5
        %v2177 = vor.u32 %v2173, %v2176
        %v2178 = vrot.slane %v2177, 4
        %v2180 = vshll.u32 %v2095, 16
        %v2182 = vrot.slane %v2180, 5
        %v2183 = vsel %vm475, %v2178, %v2182
        %v2185 = vshrl.u32 %v2096, 16
        %v2187 = vrot.slane %v2185, 4
        %v2188 = vshll.u32 %v2096, 16
        %v2190 = vrot.slane %v2188, 5
        %v2191 = vor.u32 %v2187, %v2190
        %v2192 = vrot.slane %v2191, 4
        %v2194 = vshll.u32 %v2097, 16
        %v2196 = vrot.slane %v2194, 5
        %v2197 = vsel %vm475, %v2192, %v2196
        %v2199 = vshrl.u32 %v2098, 16
        %v2201 = vrot.slane %v2199, 4
        %v2202 = vshll.u32 %v2098, 16
        %v2204 = vrot.slane %v2202, 5
        %v2205 = vor.u32 %v2201, %v2204
        %v2206 = vrot.slane %v2205, 4
        %v2208 = vshll.u32 %v2099, 16
        %v2210 = vrot.slane %v2208, 5
        %v2211 = vsel %vm475, %v2206, %v2210
        %v2212 = vunpack.c.l.b16 %v2113
        %v2213 = vunpack.c.l.b16 %v2127
        %v2214 = vunpack.c.l.b16 %v2141
        %v2215 = vunpack.c.l.b16 %v2155
        %v2216 = vunpack.c.l.b16 %v2169
        %v2217 = vunpack.c.l.b16 %v2183
        %v2218 = vunpack.c.l.b16 %v2197
        %v2219 = vunpack.c.l.b16 %v2211
        %v2220 = vpack.c.b16 %v2213, %v2212
        %v2221 = vpack.c.b16 %v2215, %v2214
        %v2222 = vpack.c.b16 %v2217, %v2216
        %v2223 = vpack.c.b16 %v2219, %v2218
        %2228 = vst.msk [vmem:[#allocation3 + $0x8] sm:$0xff] %vm452, %v2220
        %2229 = vst.msk [vmem:[#allocation3 + $0x20] sm:$0xff] %vm452, %v2221
        %2230 = vst.msk [vmem:[#allocation3 + $0x38] sm:$0xff] %vm452, %v2222
        %2231 = vst.msk [vmem:[#allocation3 + $0x50] sm:$0xff] %vm452, %v2223
        %v2232 = vld [vmem:[%s365] sm:$0xe]
        %v2233 = vld [vmem:[%s365 + $0x4] sm:$0x1]
        %v2234 = vld [vmem:[%s365 + $0x8] sm:$0xe]
        %v2235 = vld [vmem:[%s365 + $0xc] sm:$0x1]
        %v2236 = vld [vmem:[%s365 + $0x10] sm:$0xe]
        %v2237 = vld [vmem:[%s365 + $0x14] sm:$0x1]
        %v2238 = vld [vmem:[%s365 + $0x18] sm:$0xe]
        %v2239 = vld [vmem:[%s365 + $0x1c] sm:$0x1]
        %v2240 = vld [vmem:[%s365 + $0x20] sm:$0xe]
        %v2241 = vld [vmem:[%s365 + $0x24] sm:$0x1]
        %v2242 = vld [vmem:[%s365 + $0x28] sm:$0xe]
        %v2243 = vld [vmem:[%s365 + $0x2c] sm:$0x1]
        %v2244 = vld [vmem:[%s365 + $0x30] sm:$0xe]
        %v2245 = vld [vmem:[%s365 + $0x34] sm:$0x1]
        %v2246 = vld [vmem:[%s365 + $0x38] sm:$0xe]
        %v2247 = vld [vmem:[%s365 + $0x3c] sm:$0x1]
        %v2264 = vrot.slane %v2232, 5
        %v2265 = vrot.slane %v2264, 4
        %v2266 = vrot.slane %v2233, 5
        %v2267 = vsel %vm651, %v2265, %v2266
        %v2268 = vrot.slane %v2234, 5
        %v2269 = vrot.slane %v2268, 4
        %v2270 = vrot.slane %v2235, 5
        %v2271 = vsel %vm651, %v2269, %v2270
        %v2272 = vrot.slane %v2236, 5
        %v2273 = vrot.slane %v2272, 4
        %v2274 = vrot.slane %v2237, 5
        %v2275 = vsel %vm651, %v2273, %v2274
        %v2276 = vrot.slane %v2238, 5
        %v2277 = vrot.slane %v2276, 4
        %v2278 = vrot.slane %v2239, 5
        %v2279 = vsel %vm651, %v2277, %v2278
        %v2280 = vrot.slane %v2240, 5
        %v2281 = vrot.slane %v2280, 4
        %v2282 = vrot.slane %v2241, 5
        %v2283 = vsel %vm651, %v2281, %v2282
        %v2284 = vrot.slane %v2242, 5
        %v2285 = vrot.slane %v2284, 4
        %v2286 = vrot.slane %v2243, 5
        %v2287 = vsel %vm651, %v2285, %v2286
        %v2288 = vrot.slane %v2244, 5
        %v2289 = vrot.slane %v2288, 4
        %v2290 = vrot.slane %v2245, 5
        %v2291 = vsel %vm651, %v2289, %v2290
        %v2292 = vrot.slane %v2246, 5
        %v2293 = vrot.slane %v2292, 4
        %v2294 = vrot.slane %v2247, 5
        %v2295 = vsel %vm651, %v2293, %v2294
        %v2296 = vunpack.c.l.b16 %v2267
        %v2297 = vunpack.c.l.b16 %v2271
        %v2298 = vunpack.c.l.b16 %v2275
        %v2299 = vunpack.c.l.b16 %v2279
        %v2300 = vunpack.c.l.b16 %v2283
        %v2301 = vunpack.c.l.b16 %v2287
        %v2302 = vunpack.c.l.b16 %v2291
        %v2303 = vunpack.c.l.b16 %v2295
        %v2304 = vpack.c.b16 %v2297, %v2296
        %v2305 = vpack.c.b16 %v2299, %v2298
        %v2306 = vpack.c.b16 %v2301, %v2300
        %v2307 = vpack.c.b16 %v2303, %v2302
        %2308 = vrot.lane.b32.xlu0 %v2304, 32
        %v2309 = vpop.permute.xlu0 %2308
        %2310 = vrot.lane.b32.xlu0 %v2305, 32
        %v2311 = vpop.permute.xlu0 %2310
        %2312 = vrot.lane.b32.xlu0 %v2306, 32
        %v2313 = vpop.permute.xlu0 %2312
        %2314 = vrot.lane.b32.xlu0 %v2307, 32
        %v2315 = vpop.permute.xlu0 %2314
        %2320 = vst.msk [vmem:[#allocation3 + $0x8] sm:$0xff] %vm612, %v2309
        %2321 = vst.msk [vmem:[#allocation3 + $0x20] sm:$0xff] %vm612, %v2311
        %2322 = vst.msk [vmem:[#allocation3 + $0x38] sm:$0xff] %vm612, %v2313
        %2323 = vst.msk [vmem:[#allocation3 + $0x50] sm:$0xff] %vm612, %v2315
        %v2324 = vld [vmem:[%s998] sm:$0xf]
        %v2325 = vld [vmem:[%s998 + $0x8] sm:$0xf]
        %v2326 = vld [vmem:[%s998 + $0x10] sm:$0xf]
        %v2327 = vld [vmem:[%s998 + $0x18] sm:$0xf]
        %v2328 = vld [vmem:[%s998 + $0x20] sm:$0xf]
        %v2329 = vld [vmem:[%s998 + $0x28] sm:$0xf]
        %v2330 = vld [vmem:[%s998 + $0x30] sm:$0xf]
        %v2331 = vld [vmem:[%s998 + $0x38] sm:$0xf]
        %v2340 = vunpack.c.l.b16 %v2324
        %v2341 = vunpack.c.l.b16 %v2325
        %v2342 = vunpack.c.l.b16 %v2326
        %v2343 = vunpack.c.l.b16 %v2327
        %v2344 = vunpack.c.l.b16 %v2328
        %v2345 = vunpack.c.l.b16 %v2329
        %v2346 = vunpack.c.l.b16 %v2330
        %v2347 = vunpack.c.l.b16 %v2331
        %v2348 = vpack.c.b16 %v2341, %v2340
        %v2349 = vpack.c.b16 %v2343, %v2342
        %v2350 = vpack.c.b16 %v2345, %v2344
        %v2351 = vpack.c.b16 %v2347, %v2346
        %2352 = vrot.lane.b32.xlu0 %v2348, 64
        %v2353 = vpop.permute.xlu0 %2352
        %2354 = vrot.lane.b32.xlu0 %v2349, 64
        %v2355 = vpop.permute.xlu0 %2354
        %2356 = vrot.lane.b32.xlu0 %v2350, 64
        %v2357 = vpop.permute.xlu0 %2356
        %2358 = vrot.lane.b32.xlu0 %v2351, 64
        %v2359 = vpop.permute.xlu0 %2358
        %2364 = vst.msk [vmem:[#allocation3 + $0x8] sm:$0xff] %vm708, %v2353
        %2365 = vst.msk [vmem:[#allocation3 + $0x20] sm:$0xff] %vm708, %v2355
        %2366 = vst.msk [vmem:[#allocation3 + $0x38] sm:$0xff] %vm708, %v2357
        %2367 = vst.msk [vmem:[#allocation3 + $0x50] sm:$0xff] %vm708, %v2359
        %v2368 = vld [vmem:[%s998] sm:$0xf]
        %v2369 = vld [vmem:[%s998 + $0x4] sm:$0x1]
        %v2370 = vld [vmem:[%s998 + $0x8] sm:$0xf]
        %v2371 = vld [vmem:[%s998 + $0xc] sm:$0x1]
        %v2372 = vld [vmem:[%s998 + $0x10] sm:$0xf]
        %v2373 = vld [vmem:[%s998 + $0x14] sm:$0x1]
        %v2374 = vld [vmem:[%s998 + $0x18] sm:$0xf]
        %v2375 = vld [vmem:[%s998 + $0x1c] sm:$0x1]
        %v2376 = vld [vmem:[%s998 + $0x20] sm:$0xf]
        %v2377 = vld [vmem:[%s998 + $0x24] sm:$0x1]
        %v2378 = vld [vmem:[%s998 + $0x28] sm:$0xf]
        %v2379 = vld [vmem:[%s998 + $0x2c] sm:$0x1]
        %v2380 = vld [vmem:[%s998 + $0x30] sm:$0xf]
        %v2381 = vld [vmem:[%s998 + $0x34] sm:$0x1]
        %v2382 = vld [vmem:[%s998 + $0x38] sm:$0xf]
        %v2383 = vld [vmem:[%s998 + $0x3c] sm:$0x1]
        %v2385 = vshrl.u32 %v2368, 16
        %v2387 = vrot.slane %v2385, 4
        %v2388 = vshll.u32 %v2368, 16
        %v2390 = vrot.slane %v2388, 5
        %v2391 = vor.u32 %v2387, %v2390
        %v2392 = vrot.slane %v2391, 4
        %v2394 = vshll.u32 %v2369, 16
        %v2396 = vrot.slane %v2394, 5
        %v2397 = vsel %vm475, %v2392, %v2396
        %v2399 = vshrl.u32 %v2370, 16
        %v2401 = vrot.slane %v2399, 4
        %v2402 = vshll.u32 %v2370, 16
        %v2404 = vrot.slane %v2402, 5
        %v2405 = vor.u32 %v2401, %v2404
        %v2406 = vrot.slane %v2405, 4
        %v2408 = vshll.u32 %v2371, 16
        %v2410 = vrot.slane %v2408, 5
        %v2411 = vsel %vm475, %v2406, %v2410
        %v2413 = vshrl.u32 %v2372, 16
        %v2415 = vrot.slane %v2413, 4
        %v2416 = vshll.u32 %v2372, 16
        %v2418 = vrot.slane %v2416, 5
        %v2419 = vor.u32 %v2415, %v2418
        %v2420 = vrot.slane %v2419, 4
        %v2422 = vshll.u32 %v2373, 16
        %v2424 = vrot.slane %v2422, 5
        %v2425 = vsel %vm475, %v2420, %v2424
        %v2427 = vshrl.u32 %v2374, 16
        %v2429 = vrot.slane %v2427, 4
        %v2430 = vshll.u32 %v2374, 16
        %v2432 = vrot.slane %v2430, 5
        %v2433 = vor.u32 %v2429, %v2432
        %v2434 = vrot.slane %v2433, 4
        %v2436 = vshll.u32 %v2375, 16
        %v2438 = vrot.slane %v2436, 5
        %v2439 = vsel %vm475, %v2434, %v2438
        %v2441 = vshrl.u32 %v2376, 16
        %v2443 = vrot.slane %v2441, 4
        %v2444 = vshll.u32 %v2376, 16
        %v2446 = vrot.slane %v2444, 5
        %v2447 = vor.u32 %v2443, %v2446
        %v2448 = vrot.slane %v2447, 4
        %v2450 = vshll.u32 %v2377, 16
        %v2452 = vrot.slane %v2450, 5
        %v2453 = vsel %vm475, %v2448, %v2452
        %v2455 = vshrl.u32 %v2378, 16
        %v2457 = vrot.slane %v2455, 4
        %v2458 = vshll.u32 %v2378, 16
        %v2460 = vrot.slane %v2458, 5
        %v2461 = vor.u32 %v2457, %v2460
        %v2462 = vrot.slane %v2461, 4
        %v2464 = vshll.u32 %v2379, 16
        %v2466 = vrot.slane %v2464, 5
        %v2467 = vsel %vm475, %v2462, %v2466
        %v2469 = vshrl.u32 %v2380, 16
        %v2471 = vrot.slane %v2469, 4
        %v2472 = vshll.u32 %v2380, 16
        %v2474 = vrot.slane %v2472, 5
        %v2475 = vor.u32 %v2471, %v2474
        %v2476 = vrot.slane %v2475, 4
        %v2478 = vshll.u32 %v2381, 16
        %v2480 = vrot.slane %v2478, 5
        %v2481 = vsel %vm475, %v2476, %v2480
        %v2483 = vshrl.u32 %v2382, 16
        %v2485 = vrot.slane %v2483, 4
        %v2486 = vshll.u32 %v2382, 16
        %v2488 = vrot.slane %v2486, 5
        %v2489 = vor.u32 %v2485, %v2488
        %v2490 = vrot.slane %v2489, 4
        %v2492 = vshll.u32 %v2383, 16
        %v2494 = vrot.slane %v2492, 5
        %v2495 = vsel %vm475, %v2490, %v2494
        %v2496 = vunpack.c.l.b16 %v2397
        %v2497 = vunpack.c.l.b16 %v2411
        %v2498 = vunpack.c.l.b16 %v2425
        %v2499 = vunpack.c.l.b16 %v2439
        %v2500 = vunpack.c.l.b16 %v2453
        %v2501 = vunpack.c.l.b16 %v2467
        %v2502 = vunpack.c.l.b16 %v2481
        %v2503 = vunpack.c.l.b16 %v2495
        %v2504 = vpack.c.b16 %v2497, %v2496
        %v2505 = vpack.c.b16 %v2499, %v2498
        %v2506 = vpack.c.b16 %v2501, %v2500
        %v2507 = vpack.c.b16 %v2503, %v2502
        %2508 = vrot.lane.b32.xlu0 %v2504, 96
        %v2509 = vpop.permute.xlu0 %2508
        %2510 = vrot.lane.b32.xlu0 %v2505, 96
        %v2511 = vpop.permute.xlu0 %2510
        %2512 = vrot.lane.b32.xlu0 %v2506, 96
        %v2513 = vpop.permute.xlu0 %2512
        %2514 = vrot.lane.b32.xlu0 %v2507, 96
        %v2515 = vpop.permute.xlu0 %2514
        %2520 = vst.msk [vmem:[#allocation3 + $0x8] sm:$0xff] %vm753, %v2509
        %2521 = vst.msk [vmem:[#allocation3 + $0x20] sm:$0xff] %vm753, %v2511
        %2522 = vst.msk [vmem:[#allocation3 + $0x38] sm:$0xff] %vm753, %v2513
        %2523 = vst.msk [vmem:[#allocation3 + $0x50] sm:$0xff] %vm753, %v2515
        %v2524 = vld [vmem:[%s998] sm:$0xe]
        %v2525 = vld [vmem:[%s998 + $0x4] sm:$0x1]
        %v2526 = vld [vmem:[%s998 + $0x8] sm:$0xe]
        %v2527 = vld [vmem:[%s998 + $0xc] sm:$0x1]
        %v2528 = vld [vmem:[%s998 + $0x10] sm:$0xe]
        %v2529 = vld [vmem:[%s998 + $0x14] sm:$0x1]
        %v2530 = vld [vmem:[%s998 + $0x18] sm:$0xe]
        %v2531 = vld [vmem:[%s998 + $0x1c] sm:$0x1]
        %v2532 = vld [vmem:[%s998 + $0x20] sm:$0xe]
        %v2533 = vld [vmem:[%s998 + $0x24] sm:$0x1]
        %v2534 = vld [vmem:[%s998 + $0x28] sm:$0xe]
        %v2535 = vld [vmem:[%s998 + $0x2c] sm:$0x1]
        %v2536 = vld [vmem:[%s998 + $0x30] sm:$0xe]
        %v2537 = vld [vmem:[%s998 + $0x34] sm:$0x1]
        %v2538 = vld [vmem:[%s998 + $0x38] sm:$0xe]
        %v2539 = vld [vmem:[%s998 + $0x3c] sm:$0x1]
        %v2556 = vrot.slane %v2524, 5
        %v2557 = vrot.slane %v2556, 4
        %v2558 = vrot.slane %v2525, 5
        %v2559 = vsel %vm651, %v2557, %v2558
        %v2560 = vrot.slane %v2526, 5
        %v2561 = vrot.slane %v2560, 4
        %v2562 = vrot.slane %v2527, 5
        %v2563 = vsel %vm651, %v2561, %v2562
        %v2564 = vrot.slane %v2528, 5
        %v2565 = vrot.slane %v2564, 4
        %v2566 = vrot.slane %v2529, 5
        %v2567 = vsel %vm651, %v2565, %v2566
        %v2568 = vrot.slane %v2530, 5
        %v2569 = vrot.slane %v2568, 4
        %v2570 = vrot.slane %v2531, 5
        %v2571 = vsel %vm651, %v2569, %v2570
        %v2572 = vrot.slane %v2532, 5
        %v2573 = vrot.slane %v2572, 4
        %v2574 = vrot.slane %v2533, 5
        %v2575 = vsel %vm651, %v2573, %v2574
        %v2576 = vrot.slane %v2534, 5
        %v2577 = vrot.slane %v2576, 4
        %v2578 = vrot.slane %v2535, 5
        %v2579 = vsel %vm651, %v2577, %v2578
        %v2580 = vrot.slane %v2536, 5
        %v2581 = vrot.slane %v2580, 4
        %v2582 = vrot.slane %v2537, 5
        %v2583 = vsel %vm651, %v2581, %v2582
        %v2584 = vrot.slane %v2538, 5
        %v2585 = vrot.slane %v2584, 4
        %v2586 = vrot.slane %v2539, 5
        %v2587 = vsel %vm651, %v2585, %v2586
        %v2588 = vunpack.c.l.b16 %v2559
        %v2589 = vunpack.c.l.b16 %v2563
        %v2590 = vunpack.c.l.b16 %v2567
        %v2591 = vunpack.c.l.b16 %v2571
        %v2592 = vunpack.c.l.b16 %v2575
        %v2593 = vunpack.c.l.b16 %v2579
        %v2594 = vunpack.c.l.b16 %v2583
        %v2595 = vunpack.c.l.b16 %v2587
        %v2596 = vpack.c.b16 %v2589, %v2588
        %v2597 = vpack.c.b16 %v2591, %v2590
        %v2598 = vpack.c.b16 %v2593, %v2592
        %v2599 = vpack.c.b16 %v2595, %v2594
        %2604 = vst.msk [vmem:[#allocation3 + $0x10] sm:$0xff] %vm452, %v2596
        %2605 = vst.msk [vmem:[#allocation3 + $0x28] sm:$0xff] %vm452, %v2597
        %2606 = vst.msk [vmem:[#allocation3 + $0x40] sm:$0xff] %vm452, %v2598
        %2607 = vst.msk [vmem:[#allocation3 + $0x58] sm:$0xff] %vm452, %v2599
        %v2608 = vld [vmem:[#allocation3] sm:$0xff]
        %v2609 = vld [vmem:[#allocation3 + $0x8] sm:$0xff]
        %v2610 = vld [vmem:[#allocation3 + $0x10] sm:$0xff]
        %v2611 = vld [vmem:[#allocation3 + $0x18] sm:$0xff]
        %v2612 = vld [vmem:[#allocation3 + $0x20] sm:$0xff]
        %v2613 = vld [vmem:[#allocation3 + $0x28] sm:$0xff]
        %v2614 = vld [vmem:[#allocation3 + $0x30] sm:$0xff]
        %v2615 = vld [vmem:[#allocation3 + $0x38] sm:$0xff]
        %v2616 = vld [vmem:[#allocation3 + $0x40] sm:$0xff]
        %v2617 = vld [vmem:[#allocation3 + $0x48] sm:$0xff]
        %v2618 = vld [vmem:[#allocation3 + $0x50] sm:$0xff]
        %v2619 = vld [vmem:[#allocation3 + $0x58] sm:$0xff]
        %v2620 = vld [vmem:[%s3] sm:$0xf]
        %v2621 = vld [vmem:[%s3 + $0x4] sm:$0xf]
        %v2622 = vld [vmem:[%s3 + $0x8] sm:$0xf]
        %v2623 = vld [vmem:[%s3 + $0xc] sm:$0xf]
        %v2624 = vld [vmem:[%s3 + $0x10] sm:$0xf]
        %v2625 = vld [vmem:[%s3 + $0x14] sm:$0xf]
        %v2626 = vld [vmem:[%s3 + $0x18] sm:$0xf]
        %v2627 = vld [vmem:[%s3 + $0x1c] sm:$0xf]
        %v2628 = vld [vmem:[%s3 + $0x20] sm:$0xf]
        %v2629 = vld [vmem:[%s3 + $0x24] sm:$0xf]
        %v2630 = vld [vmem:[%s3 + $0x28] sm:$0xf]
        %v2631 = vld [vmem:[%s3 + $0x2c] sm:$0xf]
        %v2632 = vld [vmem:[%s3 + $0x30] sm:$0xf]
        %v2633 = vld [vmem:[%s3 + $0x34] sm:$0xf]
        %v2634 = vld [vmem:[%s3 + $0x38] sm:$0xf]
        %v2635 = vld [vmem:[%s3 + $0x3c] sm:$0xf]
        %v2636 = vld [vmem:[%s3 + $0x40] sm:$0xf]
        %v2637 = vld [vmem:[%s3 + $0x44] sm:$0xf]
        %v2638 = vld [vmem:[%s3 + $0x48] sm:$0xf]
        %v2639 = vld [vmem:[%s3 + $0x4c] sm:$0xf]
        %v2640 = vld [vmem:[%s3 + $0x50] sm:$0xf]
        %v2641 = vld [vmem:[%s3 + $0x54] sm:$0xf]
        %v2642 = vld [vmem:[%s3 + $0x58] sm:$0xf]
        %v2643 = vld [vmem:[%s3 + $0x5c] sm:$0xf]
        %v2644 = vld [vmem:[%s3 + $0x60] sm:$0xf]
        %v2645 = vld [vmem:[%s3 + $0x64] sm:$0xf]
        %v2646 = vld [vmem:[%s3 + $0x68] sm:$0xf]
        %v2647 = vld [vmem:[%s3 + $0x6c] sm:$0xf]
        %v2648 = vld [vmem:[%s3 + $0x70] sm:$0xf]
        %v2649 = vld [vmem:[%s3 + $0x74] sm:$0xf]
        %v2650 = vld [vmem:[%s3 + $0x78] sm:$0xf]
        %v2651 = vld [vmem:[%s3 + $0x7c] sm:$0xf]
        %v2652 = vld [vmem:[%s3 + $0x80] sm:$0xf]
        %v2653 = vld [vmem:[%s3 + $0x84] sm:$0xf]
        %v2654 = vld [vmem:[%s3 + $0x88] sm:$0xf]
        %v2655 = vld [vmem:[%s3 + $0x8c] sm:$0xf]
        %v2656 = vld [vmem:[%s4] sm:$0x1]
        %v2658 = vlaneseq
        %v2659 = vshrl.u32 %v2658, 7
        %v2660 = vsub.s32 0, %v2659
        %v2661 = vrot.slane %v2656, %v2660
        %v2699 = vunpack.c.l.b16 %v2620
        %v2700 = vunpack.c.l.b16 %v2621
        %v2701 = vunpack.c.l.b16 %v2622
        %v2702 = vunpack.c.l.b16 %v2623
        %v2703 = vunpack.c.l.b16 %v2624
        %v2704 = vunpack.c.l.b16 %v2625
        %v2705 = vunpack.c.l.b16 %v2626
        %v2706 = vunpack.c.l.b16 %v2627
        %v2707 = vunpack.c.l.b16 %v2628
        %v2708 = vunpack.c.l.b16 %v2629
        %v2709 = vunpack.c.l.b16 %v2630
        %v2710 = vunpack.c.l.b16 %v2631
        %v2711 = vunpack.c.l.b16 %v2632
        %v2712 = vunpack.c.l.b16 %v2633
        %v2713 = vunpack.c.l.b16 %v2634
        %v2714 = vunpack.c.l.b16 %v2635
        %v2715 = vunpack.c.l.b16 %v2636
        %v2716 = vunpack.c.l.b16 %v2637
        %v2717 = vunpack.c.l.b16 %v2638
        %v2718 = vunpack.c.l.b16 %v2639
        %v2719 = vunpack.c.l.b16 %v2640
        %v2720 = vunpack.c.l.b16 %v2641
        %v2721 = vunpack.c.l.b16 %v2642
        %v2722 = vunpack.c.l.b16 %v2643
        %v2723 = vunpack.c.l.b16 %v2644
        %v2724 = vunpack.c.l.b16 %v2645
        %v2725 = vunpack.c.l.b16 %v2646
        %v2726 = vunpack.c.l.b16 %v2647
        %v2727 = vunpack.c.l.b16 %v2648
        %v2728 = vunpack.c.l.b16 %v2649
        %v2729 = vunpack.c.l.b16 %v2650
        %v2730 = vunpack.c.l.b16 %v2651
        %v2731 = vunpack.c.l.b16 %v2652
        %v2732 = vunpack.c.l.b16 %v2653
        %v2733 = vunpack.c.l.b16 %v2654
        %v2734 = vunpack.c.l.b16 %v2655
        %v2735 = vpack.c.b16 %v2700, %v2699
        %v2736 = vpack.c.b16 %v2702, %v2701
        %v2737 = vpack.c.b16 %v2704, %v2703
        %v2738 = vpack.c.b16 %v2706, %v2705
        %v2739 = vpack.c.b16 %v2708, %v2707
        %v2740 = vpack.c.b16 %v2710, %v2709
        %v2741 = vpack.c.b16 %v2712, %v2711
        %v2742 = vpack.c.b16 %v2714, %v2713
        %v2743 = vpack.c.b16 %v2716, %v2715
        %v2744 = vpack.c.b16 %v2718, %v2717
        %v2745 = vpack.c.b16 %v2720, %v2719
        %v2746 = vpack.c.b16 %v2722, %v2721
        %v2747 = vpack.c.b16 %v2724, %v2723
        %v2748 = vpack.c.b16 %v2726, %v2725
        %v2749 = vpack.c.b16 %v2728, %v2727
        %v2750 = vpack.c.b16 %v2730, %v2729
        %v2751 = vpack.c.b16 %v2732, %v2731
        %v2752 = vpack.c.b16 %v2734, %v2733
        %v2772 = vsel %vm452, %v2610, 0
        %v2775 = vsel %vm452, %v2613, 0
        %v2778 = vsel %vm452, %v2616, 0
        %v2781 = vsel %vm452, %v2619, 0
        %2783 = vmatprep.subr.bf16.mxu0 0
        %2784 = vmatpush1.bf16.msra.mxu0 %v2735
        %2785 = vmatprep.subr.bf16.mxu0 0
        %2786 = vmatpush1.bf16.msra.mxu0 %v2736
        %2787 = vmatprep.subr.bf16.mxu0 0
        %2788 = vmatpush1.bf16.msra.mxu0 %v2737
        %2789 = vmatprep.subr.bf16.mxu0 0
        %2790 = vmatpush1.bf16.msra.mxu0 %v2738
        %2791 = vmatprep.subr.bf16.mxu0 0
        %2792 = vmatpush1.bf16.msra.mxu0 %v2739
        %2793 = vmatprep.subr.bf16.mxu0 0
        %2794 = vmatpush1.bf16.msra.mxu0 %v2740
        %2795 = vmatprep.subr.bf16.mxu0 0
        %2796 = vmatpush1.bf16.msra.mxu0 %v2741
        %2797 = vmatprep.subr.bf16.mxu0 0
        %2798 = vmatpush1.bf16.msra.mxu0 %v2742
        %2799 = vmatprep.subr.bf16.mxu0 0
        %2800 = vmatpush1.bf16.msra.mxu0 %v2743
        %2801 = vmatprep.subr.bf16.mxu0 0
        %2802 = vmatpush1.bf16.msra.mxu0 %v2744
        %2803 = vmatprep.subr.bf16.mxu0 0
        %2804 = vmatpush1.bf16.msra.mxu0 %v2745
        %2805 = vmatprep.subr.bf16.mxu0 0
        %2806 = vmatpush1.bf16.msra.mxu0 %v2746
        %2807 = vmatprep.subr.bf16.mxu0 0
        %2808 = vmatpush1.bf16.msra.mxu0 %v2747
        %2809 = vmatprep.subr.bf16.mxu0 0
        %2810 = vmatpush1.bf16.msra.mxu0 %v2748
        %2811 = vmatprep.subr.bf16.mxu0 0
        %2812 = vmatpush1.bf16.msra.mxu0 %v2749
        %2813 = vmatprep.subr.bf16.mxu0 0
        %2814 = vmatpush1.bf16.msra.mxu0 %v2750
        %2815 = vmatprep.mubr.bf16.mxu0 %v2609
        %2816 = vmatmul.mubr.bf16.gmra.mrb[0].mxu0 %v2608
        %v2817 = vpop.f32.mrb[0].mxu0
        %v2818 = vadd.f32 %v2661, %v2817
        %v2819 = vpop.f32.mrb[0].mxu0
        %v2820 = vpop.f32.mrb[0].mxu0
        %v2821 = vadd.f32 %v2661, %v2820
        %v2822 = vpop.f32.mrb[0].mxu0
        %2823 = vmatprep.mubr.bf16.mxu0 %v2612
        %2824 = vmatmul.mubr.bf16.gmra.mrb[0].mxu0 %v2611
        %v2825 = vpop.f32.mrb[0].mxu0
        %v2826 = vadd.f32 %v2661, %v2825
        %v2827 = vpop.f32.mrb[0].mxu0
        %v2828 = vpop.f32.mrb[0].mxu0
        %v2829 = vadd.f32 %v2661, %v2828
        %v2830 = vpop.f32.mrb[0].mxu0
        %2831 = vmatprep.mubr.bf16.mxu0 %v2615
        %2832 = vmatmul.mubr.bf16.gmra.mrb[0].mxu0 %v2614
        %v2833 = vpop.f32.mrb[0].mxu0
        %v2834 = vadd.f32 %v2661, %v2833
        %v2835 = vpop.f32.mrb[0].mxu0
        %v2836 = vpop.f32.mrb[0].mxu0
        %v2837 = vadd.f32 %v2661, %v2836
        %v2838 = vpop.f32.mrb[0].mxu0
        %2839 = vmatprep.mubr.bf16.mxu0 %v2618
        %2840 = vmatmul.mubr.bf16.gmra.mrb[0].mxu0 %v2617
        %v2841 = vpop.f32.mrb[0].mxu0
        %v2842 = vadd.f32 %v2661, %v2841
        %v2843 = vpop.f32.mrb[0].mxu0
        %v2844 = vpop.f32.mrb[0].mxu0
        %v2845 = vadd.f32 %v2661, %v2844
        %v2846 = vpop.f32.mrb[0].mxu0
        %2847 = vdwg.mxu0
        %2848 = vmatprep.subr.bf16.mxu0 0
        %2849 = vmatpush1.bf16.msra.mxu0 %v2751
        %2850 = vmatprep.subr.bf16.mxu0 0
        %2851 = vmatpush1.bf16.msra.mxu0 %v2752
        %2852 = vmatprep.subr.bf16.mxu0 0
        %2853 = vmatpush1.bf16.msra.mxu0 0
        %2854 = vmatprep.subr.bf16.mxu0 0
        %2855 = vmatpush1.bf16.msra.mxu0 0
        %2856 = vmatprep.subr.bf16.mxu0 0
        %2857 = vmatpush1.bf16.msra.mxu0 0
        %2858 = vmatprep.subr.bf16.mxu0 0
        %2859 = vmatpush1.bf16.msra.mxu0 0
        %2860 = vmatprep.subr.bf16.mxu0 0
        %2861 = vmatpush1.bf16.msra.mxu0 0
        %2862 = vmatprep.subr.bf16.mxu0 0
        %2863 = vmatpush1.bf16.msra.mxu0 0
        %2864 = vmatprep.subr.bf16.mxu0 0
        %2865 = vmatpush1.bf16.msra.mxu0 0
        %2866 = vmatprep.subr.bf16.mxu0 0
        %2867 = vmatpush1.bf16.msra.mxu0 0
        %2868 = vmatprep.subr.bf16.mxu0 0
        %2869 = vmatpush1.bf16.msra.mxu0 0
        %2870 = vmatprep.subr.bf16.mxu0 0
        %2871 = vmatpush1.bf16.msra.mxu0 0
        %2872 = vmatprep.subr.bf16.mxu0 0
        %2873 = vmatpush1.bf16.msra.mxu0 0
        %2874 = vmatprep.subr.bf16.mxu0 0
        %2875 = vmatpush1.bf16.msra.mxu0 0
        %2876 = vmatprep.subr.bf16.mxu0 0
        %2877 = vmatpush1.bf16.msra.mxu0 0
        %2878 = vmatprep.subr.bf16.mxu0 0
        %2879 = vmatpush1.bf16.msra.mxu0 0
        %2880 = vmatprep.mubr.bf16.mxu0 0
        %2881 = vmatmul.mubr.bf16.gmra.mrb[0].mxu0 %v2772
        %v2882 = vpop.f32.mrb[0].mxu0
        %v2883 = vadd.f32 %v2818, %v2882
        %v2884 = vpop.f32.mrb[0].mxu0
        %v2885 = vpop.f32.mrb[0].mxu0
        %v2886 = vadd.f32 %v2821, %v2885
        %v2887 = vpop.f32.mrb[0].mxu0
        %2888 = vmatprep.mubr.bf16.mxu0 0
        %2889 = vmatmul.mubr.bf16.gmra.mrb[0].mxu0 %v2775
        %v2890 = vpop.f32.mrb[0].mxu0
        %v2891 = vadd.f32 %v2826, %v2890
        %v2892 = vpop.f32.mrb[0].mxu0
        %v2893 = vpop.f32.mrb[0].mxu0
        %v2894 = vadd.f32 %v2829, %v2893
        %v2895 = vpop.f32.mrb[0].mxu0
        %2896 = vmatprep.mubr.bf16.mxu0 0
        %2897 = vmatmul.mubr.bf16.gmra.mrb[0].mxu0 %v2778
        %v2898 = vpop.f32.mrb[0].mxu0
        %v2899 = vadd.f32 %v2834, %v2898
        %v2900 = vpop.f32.mrb[0].mxu0
        %v2901 = vpop.f32.mrb[0].mxu0
        %v2902 = vadd.f32 %v2837, %v2901
        %v2903 = vpop.f32.mrb[0].mxu0
        %2904 = vmatprep.mubr.bf16.mxu0 0
        %2905 = vmatmul.mubr.bf16.gmra.mrb[0].mxu0 %v2781
        %v2906 = vpop.f32.mrb[0].mxu0
        %v2907 = vadd.f32 %v2842, %v2906
        %v2908 = vpop.f32.mrb[0].mxu0
        %v2909 = vpop.f32.mrb[0].mxu0
        %v2910 = vadd.f32 %v2845, %v2909
        %v2911 = vpop.f32.mrb[0].mxu0
        %2912 = vdwg.mxu0
        %v2913 = vadd.f32 %v2883, %v223
        %v2914 = vadd.f32 %v2886, %v224
        %v2915 = vadd.f32 %v2891, %v225
        %v2916 = vadd.f32 %v2894, %v226
        %v2917 = vadd.f32 %v2899, %v227
        %v2918 = vadd.f32 %v2902, %v228
        %v2919 = vadd.f32 %v2907, %v229
        %v2920 = vadd.f32 %v2910, %v230
        %v2921 = vmax.f32 %v2913, 0.0
        %v2922 = vmax.f32 %v2914, 0.0
        %v2923 = vmax.f32 %v2915, 0.0
        %v2924 = vmax.f32 %v2916, 0.0
        %v2925 = vmax.f32 %v2917, 0.0
        %v2926 = vmax.f32 %v2918, 0.0
        %v2927 = vmax.f32 %v2919, 0.0
        %v2928 = vmax.f32 %v2920, 0.0
        %v2929 = vsel %vm452, %v2921, 0.0
        %v2930 = vsel %vm452, %v2922, 0.0
        %v2931 = vadd.f32 %v2929, %v2930
        %v2932 = vsel %vm452, %v2923, 0.0
        %v2933 = vadd.f32 %v2931, %v2932
        %v2934 = vsel %vm452, %v2924, 0.0
        %v2935 = vadd.f32 %v2933, %v2934
        %v2936 = vsel %vm452, %v2925, 0.0
        %v2937 = vadd.f32 %v2935, %v2936
        %v2938 = vsel %vm452, %v2926, 0.0
        %v2939 = vadd.f32 %v2937, %v2938
        %v2940 = vsel %vm452, %v2927, 0.0
        %v2941 = vadd.f32 %v2939, %v2940
        %v2942 = vsel %vm452, %v2928, 0.0
        %v2943 = vadd.f32 %v2941, %v2942
        %v2944 = vrot.slane %v2943, 4
        %v2945 = vadd.f32 %v2943, %v2944
        %v2946 = vrot.slane %v2945, 2
        %v2947 = vadd.f32 %v2945, %v2946
        %v2948 = vrot.slane %v2947, 1
        %v2949 = vadd.f32 %v2947, %v2948
        %v2950 = vrcp.pop 64.0
        %v2951 = vmul.f32 %v2949, %v2950
        %2952 = vst.msk [vmem:[%s216] sm:$0x1] %vm233, %v2951
        %s2953 = sand.u32 %s137, 1
        %s2954 = scalar_lea.sflag [#allocation5], %s2953
        %s2955 = sand.u32 %s137, 1
        %s2956 = scalar_lea.vmem [#allocation4], %s2955
        // Predicated region
        $region41: #{resnet_bottom_forward.3} parent=39 // pred_check
          %p2957 = pneg %p147
        $region42: #{resnet_bottom_forward.3} parent=39 // pred_check_branch
          %2959 = sbr.rel (%p2957) target = $region44
        $region43: #{resnet_bottom_forward.3} parent=39 // pred_region
          %s2961 = ssub.s32 16, 16
          %2962 = vsyncadd %s2954, %s2961
          %s2963 = smul.addr %s19, 16
          %s2964 = scalar_lea.hbm %s5, %s2963
          %s2966 = sshll.u32 %s2956, 4
          %s2967 = int_to_ptr.vmem [resolvable:$true] %s2966
          %2969 = dma.vmem_to_hbm [thread:$0]  %s2967, 16, %s2964, %s2954
        $region44: #{resnet_bottom_forward.3} parent=39 // pred_fallthru
          _
      $region40: #{resnet_bottom_forward.3} parent=5 // pred_fallthru
        _
      %p2970 = scmp.le.s32.totalorder 2, %s14
      // Predicated region
      $region45: #{resnet_bottom_forward.3} parent=5 // pred_check
        %p2971 = pneg %p2970
      $region46: #{resnet_bottom_forward.3} parent=5 // pred_check_branch
        %2973 = sbr.rel (%p2971) target = $region48
      $region47: #{resnet_bottom_forward.3} parent=5 // pred_region
        %s2974 = ssub.s32 %s14, 2
        // Predicated region
        $region49: #{resnet_bottom_forward.3} parent=47 // pred_check
          %p2975 = pneg %p153
        $region50: #{resnet_bottom_forward.3} parent=47 // pred_check_branch
          %2977 = sbr.rel (%p2975) target = $region52
        $region51: #{resnet_bottom_forward.3} parent=47 // pred_region
          %s2978 = sand.u32 %s138, 1
          %s2979 = scalar_lea.sflag [#allocation5], %s2978
          %s2980 = sand.u32 %s138, 1
          %s2981 = scalar_lea.vmem [#allocation4], %s2980
          %2982 = dma.done %s2979, 16
        $region52: #{resnet_bottom_forward.3} parent=47 // pred_fallthru
          _
      $region48: #{resnet_bottom_forward.3} parent=5 // pred_fallthru
        _
    $region6: #{resnet_bottom_forward.3} parent=1 // loop_footer
      %s18 = sadd.s32 1, %s14
    $region7: #{resnet_bottom_forward.3} parent=1 // loop_footer_branch
      %13 = sbr.rel target = $region3
    $region8: #{resnet_bottom_forward.3} parent=1 // loop_exit
      _
    %2983 = vsyncpa [#allocation5], 1
    %s2984 = scalar_lea.sflag [#allocation5], 1
    %2985 = vsyncpa %s2984, 1

// kernel: resnet_bottom_forward.2
$region0: #{resnet_bottom_forward.2}
  #allocation0 [shape = 'u32[]', space=smem, size = 0x4, offset = 0x4, fixed_abs, tag = 'smem constant byte address 0x4 - core index']
  #allocation1 [shape = 'u32[144,128]{1,0:T(1,128)}', space=vmem, size = 0x12000, scoped, tag = 'internal scratch']
  #allocation2 [shape = 'bf16[18,18,4]{2,1,0:T(8,128)(2,1)}', space=vmem, size = 0x1b000, scoped, tag = 'scratch operand']
  #allocation3 [shape = 'bf16[256,36]{1,0:T(16,128)(2,1)}', space=vmem, size = 0x10000, scoped, tag = 'scratch operand']
  %s0 = inlined_call_operand.vmem [shape: f32[2,16,16,4], index: 0, kind: input, shape index: {}]
  %s1 = inlined_call_operand.vmem [shape: bf16[36,32], index: 1, kind: input, shape index: {}]
  %s2 = inlined_call_operand.vmem [shape: f32[1,32], index: 2, kind: input, shape index: {}]
  %s3 = inlined_call_operand.vmem [shape: f32[2,8,8,32], index: 3, kind: output, shape index: {}]
  %s4 = sld [smem:[#allocation0]]
  $region45: #{resnet_bottom_forward.2} parent=0
    _
  %s6 = ssub.s32 1, %s4
  %s7 = scalar_select 0, %s6, %s4
  loop: start=0, step=1, limit=4
  $region2: #{resnet_bottom_forward.2} parent=0 // loop_pre_header
    _
  $region3: #{resnet_bottom_forward.2} parent=0 // loop_header
    %s9 = sphi 0, %s13
    %p10 = scmp.ge.s32.totalorder %s9, 4
    %s19 = sphi 0, %s21
    %s22 = sphi 0, %s19
    %s23 = sphi 0, %s22
    %s39 = sphi 0, %s23
    %s43 = sphi 0, %s43
    %s45 = sphi 0, %s43
    %s46 = sphi 0, %s45
    %s60 = sphi 0, %s46
    %s64 = sphi 0, %s64
    %s66 = sphi 0, %s64
    %s67 = sphi 0, %s66
    %s81 = sphi 0, %s67
    %s87 = sphi 0, %s89
    %s90 = sphi 0, %s87
    %s91 = sphi 0, %s90
    %s107 = sphi 0, %s91
  $region4: #{resnet_bottom_forward.2} parent=0 // loop_header_branch
    %12 = sbr.rel (%p10) target = $region8
  $region5: #{resnet_bottom_forward.2} parent=0 // loop_body
    %s14 = ssub.s32 %s9, 1
    %s15 = ssub.s32 %s9, 2
    %s16 = sadd.s32 %s9, 1
    %s17 = ssub.s32 %s9, %s16
    %p18 = scmp.eq.s32.totalorder %s17, 0
    %s20 = sadd.s32 %s19, 1
    %s21 = scalar_select %p18, %s19, %s20
    %p24 = pneg %p18
    %p25 = scmp.eq.s32.totalorder %s9, 1
    %p26 = por %p24, %p25
    %p27 = scmp.ne.s32.totalorder %s19, %s22
    %p28 = scmp.eq.s32.totalorder %s9, 0
    %p29 = por %p27, %p28
    %p30 = scmp.ne.s32.totalorder %s19, %s22
    %p31 = scmp.eq.s32.totalorder %s14, 1
    %p32 = por %p30, %p31
    %p33 = scmp.ne.s32.totalorder %s22, %s23
    %p34 = scmp.eq.s32.totalorder %s14, 0
    %p35 = por %p33, %p34
    %p36 = scmp.ne.s32.totalorder %s22, %s23
    %p37 = scmp.eq.s32.totalorder %s15, 1
    %p38 = por %p36, %p37
    %p40 = scmp.ne.s32.totalorder %s23, %s39
    %p41 = scmp.eq.s32.totalorder %s15, 0
    %p42 = por %p40, %p41
    %s44 = sadd.s32 %s43, 1
    %p47 = scmp.eq.s32.totalorder %s9, 1
    %p48 = scmp.ne.s32.totalorder %s43, %s45
    %p49 = scmp.eq.s32.totalorder %s9, 0
    %p50 = por %p48, %p49
    %p51 = scmp.ne.s32.totalorder %s43, %s45
    %p52 = scmp.eq.s32.totalorder %s14, 1
    %p53 = por %p51, %p52
    %p54 = scmp.ne.s32.totalorder %s45, %s46
    %p55 = scmp.eq.s32.totalorder %s14, 0
    %p56 = por %p54, %p55
    %p57 = scmp.ne.s32.totalorder %s45, %s46
    %p58 = scmp.eq.s32.totalorder %s15, 1
    %p59 = por %p57, %p58
    %p61 = scmp.ne.s32.totalorder %s46, %s60
    %p62 = scmp.eq.s32.totalorder %s15, 0
    %p63 = por %p61, %p62
    %s65 = sadd.s32 %s64, 1
    %p68 = scmp.eq.s32.totalorder %s9, 1
    %p69 = scmp.ne.s32.totalorder %s64, %s66
    %p70 = scmp.eq.s32.totalorder %s9, 0
    %p71 = por %p69, %p70
    %p72 = scmp.ne.s32.totalorder %s64, %s66
    %p73 = scmp.eq.s32.totalorder %s14, 1
    %p74 = por %p72, %p73
    %p75 = scmp.ne.s32.totalorder %s66, %s67
    %p76 = scmp.eq.s32.totalorder %s14, 0
    %p77 = por %p75, %p76
    %p78 = scmp.ne.s32.totalorder %s66, %s67
    %p79 = scmp.eq.s32.totalorder %s15, 1
    %p80 = por %p78, %p79
    %p82 = scmp.ne.s32.totalorder %s67, %s81
    %p83 = scmp.eq.s32.totalorder %s15, 0
    %p84 = por %p82, %p83
    %s85 = ssub.s32 %s9, %s16
    %p86 = scmp.eq.s32.totalorder %s85, 0
    %s88 = sadd.s32 %s87, 1
    %s89 = scalar_select %p86, %s87, %s88
    %p92 = pneg %p86
    %p93 = scmp.eq.s32.totalorder %s9, 1
    %p94 = por %p92, %p93
    %p95 = scmp.ne.s32.totalorder %s87, %s90
    %p96 = scmp.eq.s32.totalorder %s9, 0
    %p97 = por %p95, %p96
    %p98 = scmp.ne.s32.totalorder %s87, %s90
    %p99 = scmp.eq.s32.totalorder %s14, 1
    %p100 = por %p98, %p99
    %p101 = scmp.ne.s32.totalorder %s90, %s91
    %p102 = scmp.eq.s32.totalorder %s14, 0
    %p103 = por %p101, %p102
    %p104 = scmp.ne.s32.totalorder %s90, %s91
    %p105 = scmp.eq.s32.totalorder %s15, 1
    %p106 = por %p104, %p105
    %p108 = scmp.ne.s32.totalorder %s91, %s107
    %p109 = scmp.eq.s32.totalorder %s15, 0
    %p110 = por %p108, %p109
    %p111 = scmp.le.s32.totalorder 1, %s9
    %p112 = scmp.lt.s32.totalorder %s9, 3
    %p113 = pnand %p111, %p112
    %p114 = pneg %p113
    // Predicated region
    $region9: #{resnet_bottom_forward.2} parent=5 // pred_check
      _
    $region10: #{resnet_bottom_forward.2} parent=5 // pred_check_branch
      %116 = sbr.rel (%p113) target = $region12
    $region11: #{resnet_bottom_forward.2} parent=5 // pred_region
      %s117 = ssub.s32 %s9, 1
      // Predicated region
      $region13: #{resnet_bottom_forward.2} parent=11 // pred_check
        %p118 = pneg %p56
      $region14: #{resnet_bottom_forward.2} parent=11 // pred_check_branch
        %120 = sbr.rel (%p118) target = $region16
      $region15: #{resnet_bottom_forward.2} parent=11 // pred_region
        _
      $region16: #{resnet_bottom_forward.2} parent=11 // pred_fallthru
        _
      // Predicated region
      $region17: #{resnet_bottom_forward.2} parent=11 // pred_check
        %p121 = pneg %p77
      $region18: #{resnet_bottom_forward.2} parent=11 // pred_check_branch
        %123 = sbr.rel (%p121) target = $region20
      $region19: #{resnet_bottom_forward.2} parent=11 // pred_region
        _
      $region20: #{resnet_bottom_forward.2} parent=11 // pred_fallthru
        _
    $region12: #{resnet_bottom_forward.2} parent=5 // pred_fallthru
      _
    %p124 = scmp.lt.s32.totalorder %s9, 2
    // Predicated region
    $region21: #{resnet_bottom_forward.2} parent=5 // pred_check
      %p125 = pneg %p124
    $region22: #{resnet_bottom_forward.2} parent=5 // pred_check_branch
      %127 = sbr.rel (%p125) target = $region24
    $region23: #{resnet_bottom_forward.2} parent=5 // pred_region
      // Predicated region
      $region25: #{resnet_bottom_forward.2} parent=23 // pred_check
        %p128 = pneg %p29
      $region26: #{resnet_bottom_forward.2} parent=23 // pred_check_branch
        %130 = sbr.rel (%p128) target = $region28
      $region27: #{resnet_bottom_forward.2} parent=23 // pred_region
        %p131 = scmp.lt.s32.totalorder %s9, 1
        %s132 = scalar_select %p131, %s9, 1
        %s133 = smul.addr %s132, 32
        %s134 = smul.addr %s133, 8
        %s135 = scalar_lea.vmem %s0, %s134
      $region28: #{resnet_bottom_forward.2} parent=23 // pred_fallthru
        _
    $region24: #{resnet_bottom_forward.2} parent=5 // pred_fallthru
      _
    %p136 = scmp.le.s32.totalorder 1, %s9
    %p137 = scmp.lt.s32.totalorder %s9, 3
    %p138 = pnand %p136, %p137
    %p139 = pneg %p138
    // Predicated region
    $region29: #{resnet_bottom_forward.2} parent=5 // pred_check
      _
    $region30: #{resnet_bottom_forward.2} parent=5 // pred_check_branch
      %141 = sbr.rel (%p138) target = $region32
    $region31: #{resnet_bottom_forward.2} parent=5 // pred_region
      %s142 = ssub.s32 %s9, 1
      %p143 = scmp.lt.s32.totalorder %s14, 1
      %s144 = scalar_select %p143, %s14, 1
      %s145 = smul.addr %s144, 32
      %s146 = smul.addr %s145, 8
      %s147 = scalar_lea.vmem %s0, %s146
      %p148 = pneg %p35
      %p149 = pneg %p32
      %p150 = pneg %p56
      %p151 = pneg %p53
      %p152 = pneg %p77
      %p153 = pneg %p74
      %p154 = pneg %p103
      %p155 = pneg %p100
      %p156 = scmp.lt.s32.totalorder %s14, 1
      %s157 = scalar_select %p156, %s14, 1
      %s158 = smul.addr %s157, 8
      %s159 = smul.addr %s158, 8
      %s160 = scalar_lea.vmem %s3, %s159
      %p161 = scmp.lt.s32.totalorder %s14, 1
      %s162 = scalar_select %p161, %s14, 1
      %s163 = smul.addr %s162, 32
      %s164 = smul.addr %s163, 8
      %s165 = scalar_lea.vmem %s0, %s164
      %p166 = scmp.lt.s32.totalorder %s14, 1
      %s167 = scalar_select %p166, %s14, 1
      %s168 = smul.addr %s167, 8
      %s169 = smul.addr %s168, 8
      %s170 = scalar_lea.vmem %s3, %s169
      %vm172 = vcmask 27648
      %173 = vst.msk [vmem:[#allocation2] sm:$0xf] %vm172, 0
      %174 = vst.msk [vmem:[#allocation2 + $0x4] sm:$0xf] %vm172, 0
      %vm175 = vcmask 24576
      %176 = vst.msk [vmem:[#allocation2 + $0x8] sm:$0x1] %vm175, 0
      %177 = vst.msk [vmem:[#allocation2 + $0xc] sm:$0xf] %vm172, 0
      %178 = vst.msk [vmem:[#allocation2 + $0x10] sm:$0xf] %vm172, 0
      %179 = vst.msk [vmem:[#allocation2 + $0x14] sm:$0x1] %vm175, 0
      %180 = vst.msk [vmem:[#allocation2 + $0x18] sm:$0xf] %vm172, 0
      %181 = vst.msk [vmem:[#allocation2 + $0x1c] sm:$0xf] %vm172, 0
      %182 = vst.msk [vmem:[#allocation2 + $0x20] sm:$0x1] %vm175, 0
      %183 = vst.msk [vmem:[#allocation2 + $0x24] sm:$0xf] %vm172, 0
      %184 = vst.msk [vmem:[#allocation2 + $0x28] sm:$0xf] %vm172, 0
      %185 = vst.msk [vmem:[#allocation2 + $0x2c] sm:$0x1] %vm175, 0
      %186 = vst.msk [vmem:[#allocation2 + $0x30] sm:$0xf] %vm172, 0
      %187 = vst.msk [vmem:[#allocation2 + $0x34] sm:$0xf] %vm172, 0
      %188 = vst.msk [vmem:[#allocation2 + $0x38] sm:$0x1] %vm175, 0
      %189 = vst.msk [vmem:[#allocation2 + $0x3c] sm:$0xf] %vm172, 0
      %190 = vst.msk [vmem:[#allocation2 + $0x40] sm:$0xf] %vm172, 0
      %191 = vst.msk [vmem:[#allocation2 + $0x44] sm:$0x1] %vm175, 0
      %192 = vst.msk [vmem:[#allocation2 + $0x48] sm:$0xf] %vm172, 0
      %193 = vst.msk [vmem:[#allocation2 + $0x4c] sm:$0xf] %vm172, 0
      %194 = vst.msk [vmem:[#allocation2 + $0x50] sm:$0x1] %vm175, 0
      %195 = vst.msk [vmem:[#allocation2 + $0x54] sm:$0xf] %vm172, 0
      %196 = vst.msk [vmem:[#allocation2 + $0x58] sm:$0xf] %vm172, 0
      %197 = vst.msk [vmem:[#allocation2 + $0x5c] sm:$0x1] %vm175, 0
      %198 = vst.msk [vmem:[#allocation2 + $0x60] sm:$0xf] %vm172, 0
      %199 = vst.msk [vmem:[#allocation2 + $0x64] sm:$0xf] %vm172, 0
      %200 = vst.msk [vmem:[#allocation2 + $0x68] sm:$0x1] %vm175, 0
      %201 = vst.msk [vmem:[#allocation2 + $0x6c] sm:$0xf] %vm172, 0
      %202 = vst.msk [vmem:[#allocation2 + $0x70] sm:$0xf] %vm172, 0
      %203 = vst.msk [vmem:[#allocation2 + $0x74] sm:$0x1] %vm175, 0
      %204 = vst.msk [vmem:[#allocation2 + $0x78] sm:$0xf] %vm172, 0
      %205 = vst.msk [vmem:[#allocation2 + $0x7c] sm:$0xf] %vm172, 0
      %206 = vst.msk [vmem:[#allocation2 + $0x80] sm:$0x1] %vm175, 0
      %207 = vst.msk [vmem:[#allocation2 + $0x84] sm:$0xf] %vm172, 0
      %208 = vst.msk [vmem:[#allocation2 + $0x88] sm:$0xf] %vm172, 0
      %209 = vst.msk [vmem:[#allocation2 + $0x8c] sm:$0x1] %vm175, 0
      %210 = vst.msk [vmem:[#allocation2 + $0x90] sm:$0xf] %vm172, 0
      %211 = vst.msk [vmem:[#allocation2 + $0x94] sm:$0xf] %vm172, 0
      %212 = vst.msk [vmem:[#allocation2 + $0x98] sm:$0x1] %vm175, 0
      %213 = vst.msk [vmem:[#allocation2 + $0x9c] sm:$0xf] %vm172, 0
      %214 = vst.msk [vmem:[#allocation2 + $0xa0] sm:$0xf] %vm172, 0
      %215 = vst.msk [vmem:[#allocation2 + $0xa4] sm:$0x1] %vm175, 0
      %216 = vst.msk [vmem:[#allocation2 + $0xa8] sm:$0xf] %vm172, 0
      %217 = vst.msk [vmem:[#allocation2 + $0xac] sm:$0xf] %vm172, 0
      %218 = vst.msk [vmem:[#allocation2 + $0xb0] sm:$0x1] %vm175, 0
      %219 = vst.msk [vmem:[#allocation2 + $0xb4] sm:$0xf] %vm172, 0
      %220 = vst.msk [vmem:[#allocation2 + $0xb8] sm:$0xf] %vm172, 0
      %221 = vst.msk [vmem:[#allocation2 + $0xbc] sm:$0x1] %vm175, 0
      %222 = vst.msk [vmem:[#allocation2 + $0xc0] sm:$0xf] %vm172, 0
      %223 = vst.msk [vmem:[#allocation2 + $0xc4] sm:$0xf] %vm172, 0
      %224 = vst.msk [vmem:[#allocation2 + $0xc8] sm:$0x1] %vm175, 0
      %225 = vst.msk [vmem:[#allocation2 + $0xcc] sm:$0xf] %vm172, 0
      %226 = vst.msk [vmem:[#allocation2 + $0xd0] sm:$0xf] %vm172, 0
      %227 = vst.msk [vmem:[#allocation2 + $0xd4] sm:$0x1] %vm175, 0
      %v228 = vld [vmem:[%s165] sm:$0xff]
      %v229 = vld [vmem:[%s165 + $0x8] sm:$0xff]
      %v230 = vld [vmem:[%s165 + $0x10] sm:$0xff]
      %v231 = vld [vmem:[%s165 + $0x18] sm:$0xff]
      %v232 = vld [vmem:[%s165 + $0x20] sm:$0xff]
      %v233 = vld [vmem:[%s165 + $0x28] sm:$0xff]
      %v234 = vld [vmem:[%s165 + $0x30] sm:$0xff]
      %v235 = vld [vmem:[%s165 + $0x38] sm:$0xff]
      %v236 = vld [vmem:[%s165 + $0x40] sm:$0xff]
      %v237 = vld [vmem:[%s165 + $0x48] sm:$0xff]
      %v238 = vld [vmem:[%s165 + $0x50] sm:$0xff]
      %v239 = vld [vmem:[%s165 + $0x58] sm:$0xff]
      %v240 = vld [vmem:[%s165 + $0x60] sm:$0xff]
      %v241 = vld [vmem:[%s165 + $0x68] sm:$0xff]
      %v242 = vld [vmem:[%s165 + $0x70] sm:$0xff]
      %v243 = vld [vmem:[%s165 + $0x78] sm:$0xff]
      %v244 = vld [vmem:[%s165 + $0x80] sm:$0xff]
      %v245 = vld [vmem:[%s165 + $0x88] sm:$0xff]
      %v246 = vld [vmem:[%s165 + $0x90] sm:$0xff]
      %v247 = vld [vmem:[%s165 + $0x98] sm:$0xff]
      %v248 = vld [vmem:[%s165 + $0xa0] sm:$0xff]
      %v249 = vld [vmem:[%s165 + $0xa8] sm:$0xff]
      %v250 = vld [vmem:[%s165 + $0xb0] sm:$0xff]
      %v251 = vld [vmem:[%s165 + $0xb8] sm:$0xff]
      %v252 = vld [vmem:[%s165 + $0xc0] sm:$0xff]
      %v253 = vld [vmem:[%s165 + $0xc8] sm:$0xff]
      %v254 = vld [vmem:[%s165 + $0xd0] sm:$0xff]
      %v255 = vld [vmem:[%s165 + $0xd8] sm:$0xff]
      %v256 = vld [vmem:[%s165 + $0xe0] sm:$0xff]
      %v257 = vld [vmem:[%s165 + $0xe8] sm:$0xff]
      %v258 = vld [vmem:[%s165 + $0xf0] sm:$0xff]
      %v259 = vld [vmem:[%s165 + $0xf8] sm:$0xff]
      %v260 = vpack.c.bf16 %v229, %v228
      %v261 = vpack.c.bf16 %v231, %v230
      %v262 = vpack.c.bf16 %v233, %v232
      %v263 = vpack.c.bf16 %v235, %v234
      %v264 = vpack.c.bf16 %v237, %v236
      %v265 = vpack.c.bf16 %v239, %v238
      %v266 = vpack.c.bf16 %v241, %v240
      %v267 = vpack.c.bf16 %v243, %v242
      %v268 = vpack.c.bf16 %v245, %v244
      %v269 = vpack.c.bf16 %v247, %v246
      %v270 = vpack.c.bf16 %v249, %v248
      %v271 = vpack.c.bf16 %v251, %v250
      %v272 = vpack.c.bf16 %v253, %v252
      %v273 = vpack.c.bf16 %v255, %v254
      %v274 = vpack.c.bf16 %v257, %v256
      %v275 = vpack.c.bf16 %v259, %v258
      %v292 = vunpack.c.l.b16 %v260
      %v293 = vunpack.c.h.b16 %v260
      %v294 = vunpack.c.l.b16 %v261
      %v295 = vunpack.c.h.b16 %v261
      %v296 = vunpack.c.l.b16 %v262
      %v297 = vunpack.c.h.b16 %v262
      %v298 = vunpack.c.l.b16 %v263
      %v299 = vunpack.c.h.b16 %v263
      %v300 = vunpack.c.l.b16 %v264
      %v301 = vunpack.c.h.b16 %v264
      %v302 = vunpack.c.l.b16 %v265
      %v303 = vunpack.c.h.b16 %v265
      %v304 = vunpack.c.l.b16 %v266
      %v305 = vunpack.c.h.b16 %v266
      %v306 = vunpack.c.l.b16 %v267
      %v307 = vunpack.c.h.b16 %v267
      %v308 = vunpack.c.l.b16 %v268
      %v309 = vunpack.c.h.b16 %v268
      %v310 = vunpack.c.l.b16 %v269
      %v311 = vunpack.c.h.b16 %v269
      %v312 = vunpack.c.l.b16 %v270
      %v313 = vunpack.c.h.b16 %v270
      %v314 = vunpack.c.l.b16 %v271
      %v315 = vunpack.c.h.b16 %v271
      %v316 = vunpack.c.l.b16 %v272
      %v317 = vunpack.c.h.b16 %v272
      %v318 = vunpack.c.l.b16 %v273
      %v319 = vunpack.c.h.b16 %v273
      %v320 = vunpack.c.l.b16 %v274
      %v321 = vunpack.c.h.b16 %v274
      %v322 = vunpack.c.l.b16 %v275
      %v323 = vunpack.c.h.b16 %v275
      %v324 = vpack.c.b16 %v292, %v292
      %v325 = vpack.c.b16 %v293, %v293
      %v326 = vpack.c.b16 %v294, %v294
      %v327 = vpack.c.b16 %v295, %v295
      %v328 = vpack.c.b16 %v296, %v296
      %v329 = vpack.c.b16 %v297, %v297
      %v330 = vpack.c.b16 %v298, %v298
      %v331 = vpack.c.b16 %v299, %v299
      %v332 = vpack.c.b16 %v300, %v300
      %v333 = vpack.c.b16 %v301, %v301
      %v334 = vpack.c.b16 %v302, %v302
      %v335 = vpack.c.b16 %v303, %v303
      %v336 = vpack.c.b16 %v304, %v304
      %v337 = vpack.c.b16 %v305, %v305
      %v338 = vpack.c.b16 %v306, %v306
      %v339 = vpack.c.b16 %v307, %v307
      %v340 = vpack.c.b16 %v308, %v308
      %v341 = vpack.c.b16 %v309, %v309
      %v342 = vpack.c.b16 %v310, %v310
      %v343 = vpack.c.b16 %v311, %v311
      %v344 = vpack.c.b16 %v312, %v312
      %v345 = vpack.c.b16 %v313, %v313
      %v346 = vpack.c.b16 %v314, %v314
      %v347 = vpack.c.b16 %v315, %v315
      %v348 = vpack.c.b16 %v316, %v316
      %v349 = vpack.c.b16 %v317, %v317
      %v350 = vpack.c.b16 %v318, %v318
      %v351 = vpack.c.b16 %v319, %v319
      %v352 = vpack.c.b16 %v320, %v320
      %v353 = vpack.c.b16 %v321, %v321
      %v354 = vpack.c.b16 %v322, %v322
      %v355 = vpack.c.b16 %v323, %v323
      %vm356 = vsmask.f32 256
      %vm357 = vsmask.f32 4368
      %vm358 = vmor %vm356, %vm357
      %v360 = vshrl.u32 %v324, 16
      %v362 = vrot.slane %v360, 7
      %v363 = vshll.u32 %v324, 16
      %v365 = vor.u32 %v362, %v363
      %v366 = vrot.slane %v362, 4
      %v368 = vshrl.u32 %v325, 16
      %v370 = vrot.slane %v368, 7
      %v371 = vshll.u32 %v325, 16
      %v373 = vor.u32 %v370, %v371
      %v374 = vsel %vm358, %v366, %v373
      %v375 = vrot.slane %v370, 4
      %v377 = vshrl.u32 %v326, 16
      %v379 = vrot.slane %v377, 7
      %v380 = vshll.u32 %v326, 16
      %v382 = vor.u32 %v379, %v380
      %v383 = vrot.slane %v379, 4
      %v385 = vshrl.u32 %v327, 16
      %v387 = vrot.slane %v385, 7
      %v388 = vshll.u32 %v327, 16
      %v390 = vor.u32 %v387, %v388
      %v391 = vsel %vm358, %v383, %v390
      %v392 = vrot.slane %v387, 4
      %v394 = vshrl.u32 %v328, 16
      %v396 = vrot.slane %v394, 7
      %v397 = vshll.u32 %v328, 16
      %v399 = vor.u32 %v396, %v397
      %v400 = vrot.slane %v396, 4
      %v402 = vshrl.u32 %v329, 16
      %v404 = vrot.slane %v402, 7
      %v405 = vshll.u32 %v329, 16
      %v407 = vor.u32 %v404, %v405
      %v408 = vsel %vm358, %v400, %v407
      %v409 = vrot.slane %v404, 4
      %v411 = vshrl.u32 %v330, 16
      %v413 = vrot.slane %v411, 7
      %v414 = vshll.u32 %v330, 16
      %v416 = vor.u32 %v413, %v414
      %v417 = vrot.slane %v413, 4
      %v419 = vshrl.u32 %v331, 16
      %v421 = vrot.slane %v419, 7
      %v422 = vshll.u32 %v331, 16
      %v424 = vor.u32 %v421, %v422
      %v425 = vsel %vm358, %v417, %v424
      %v426 = vrot.slane %v421, 4
      %v428 = vshrl.u32 %v332, 16
      %v430 = vrot.slane %v428, 7
      %v431 = vshll.u32 %v332, 16
      %v433 = vor.u32 %v430, %v431
      %v434 = vrot.slane %v430, 4
      %v436 = vshrl.u32 %v333, 16
      %v438 = vrot.slane %v436, 7
      %v439 = vshll.u32 %v333, 16
      %v441 = vor.u32 %v438, %v439
      %v442 = vsel %vm358, %v434, %v441
      %v443 = vrot.slane %v438, 4
      %v445 = vshrl.u32 %v334, 16
      %v447 = vrot.slane %v445, 7
      %v448 = vshll.u32 %v334, 16
      %v450 = vor.u32 %v447, %v448
      %v451 = vrot.slane %v447, 4
      %v453 = vshrl.u32 %v335, 16
      %v455 = vrot.slane %v453, 7
      %v456 = vshll.u32 %v335, 16
      %v458 = vor.u32 %v455, %v456
      %v459 = vsel %vm358, %v451, %v458
      %v460 = vrot.slane %v455, 4
      %v462 = vshrl.u32 %v336, 16
      %v464 = vrot.slane %v462, 7
      %v465 = vshll.u32 %v336, 16
      %v467 = vor.u32 %v464, %v465
      %v468 = vrot.slane %v464, 4
      %v470 = vshrl.u32 %v337, 16
      %v472 = vrot.slane %v470, 7
      %v473 = vshll.u32 %v337, 16
      %v475 = vor.u32 %v472, %v473
      %v476 = vsel %vm358, %v468, %v475
      %v477 = vrot.slane %v472, 4
      %v479 = vshrl.u32 %v338, 16
      %v481 = vrot.slane %v479, 7
      %v482 = vshll.u32 %v338, 16
      %v484 = vor.u32 %v481, %v482
      %v485 = vrot.slane %v481, 4
      %v487 = vshrl.u32 %v339, 16
      %v489 = vrot.slane %v487, 7
      %v490 = vshll.u32 %v339, 16
      %v492 = vor.u32 %v489, %v490
      %v493 = vsel %vm358, %v485, %v492
      %v494 = vrot.slane %v489, 4
      %v496 = vshrl.u32 %v340, 16
      %v498 = vrot.slane %v496, 7
      %v499 = vshll.u32 %v340, 16
      %v501 = vor.u32 %v498, %v499
      %v502 = vrot.slane %v498, 4
      %v504 = vshrl.u32 %v341, 16
      %v506 = vrot.slane %v504, 7
      %v507 = vshll.u32 %v341, 16
      %v509 = vor.u32 %v506, %v507
      %v510 = vsel %vm358, %v502, %v509
      %v511 = vrot.slane %v506, 4
      %v513 = vshrl.u32 %v342, 16
      %v515 = vrot.slane %v513, 7
      %v516 = vshll.u32 %v342, 16
      %v518 = vor.u32 %v515, %v516
      %v519 = vrot.slane %v515, 4
      %v521 = vshrl.u32 %v343, 16
      %v523 = vrot.slane %v521, 7
      %v524 = vshll.u32 %v343, 16
      %v526 = vor.u32 %v523, %v524
      %v527 = vsel %vm358, %v519, %v526
      %v528 = vrot.slane %v523, 4
      %v530 = vshrl.u32 %v344, 16
      %v532 = vrot.slane %v530, 7
      %v533 = vshll.u32 %v344, 16
      %v535 = vor.u32 %v532, %v533
      %v536 = vrot.slane %v532, 4
      %v538 = vshrl.u32 %v345, 16
      %v540 = vrot.slane %v538, 7
      %v541 = vshll.u32 %v345, 16
      %v543 = vor.u32 %v540, %v541
      %v544 = vsel %vm358, %v536, %v543
      %v545 = vrot.slane %v540, 4
      %v547 = vshrl.u32 %v346, 16
      %v549 = vrot.slane %v547, 7
      %v550 = vshll.u32 %v346, 16
      %v552 = vor.u32 %v549, %v550
      %v553 = vrot.slane %v549, 4
      %v555 = vshrl.u32 %v347, 16
      %v557 = vrot.slane %v555, 7
      %v558 = vshll.u32 %v347, 16
      %v560 = vor.u32 %v557, %v558
      %v561 = vsel %vm358, %v553, %v560
      %v562 = vrot.slane %v557, 4
      %v564 = vshrl.u32 %v348, 16
      %v566 = vrot.slane %v564, 7
      %v567 = vshll.u32 %v348, 16
      %v569 = vor.u32 %v566, %v567
      %v570 = vrot.slane %v566, 4
      %v572 = vshrl.u32 %v349, 16
      %v574 = vrot.slane %v572, 7
      %v575 = vshll.u32 %v349, 16
      %v577 = vor.u32 %v574, %v575
      %v578 = vsel %vm358, %v570, %v577
      %v579 = vrot.slane %v574, 4
      %v581 = vshrl.u32 %v350, 16
      %v583 = vrot.slane %v581, 7
      %v584 = vshll.u32 %v350, 16
      %v586 = vor.u32 %v583, %v584
      %v587 = vrot.slane %v583, 4
      %v589 = vshrl.u32 %v351, 16
      %v591 = vrot.slane %v589, 7
      %v592 = vshll.u32 %v351, 16
      %v594 = vor.u32 %v591, %v592
      %v595 = vsel %vm358, %v587, %v594
      %v596 = vrot.slane %v591, 4
      %v598 = vshrl.u32 %v352, 16
      %v600 = vrot.slane %v598, 7
      %v601 = vshll.u32 %v352, 16
      %v603 = vor.u32 %v600, %v601
      %v604 = vrot.slane %v600, 4
      %v606 = vshrl.u32 %v353, 16
      %v608 = vrot.slane %v606, 7
      %v609 = vshll.u32 %v353, 16
      %v611 = vor.u32 %v608, %v609
      %v612 = vsel %vm358, %v604, %v611
      %v613 = vrot.slane %v608, 4
      %v615 = vshrl.u32 %v354, 16
      %v617 = vrot.slane %v615, 7
      %v618 = vshll.u32 %v354, 16
      %v620 = vor.u32 %v617, %v618
      %v621 = vrot.slane %v617, 4
      %v623 = vshrl.u32 %v355, 16
      %v625 = vrot.slane %v623, 7
      %v626 = vshll.u32 %v355, 16
      %v628 = vor.u32 %v625, %v626
      %v629 = vsel %vm358, %v621, %v628
      %v630 = vrot.slane %v625, 4
      %s679 = scalar_lea.vmem [#allocation2], 12
      %vm680 = vcmask 27648
      %vm681 = vsmask.f32 7938
      %vm682 = vmand %vm680, %vm681
      %v683 = vld [vmem:[%s679] sm:$0xf]
      %v684 = vsel %vm682, %v365, %v683
      %685 = vst [vmem:[%s679] sm:$0xf] %v684
      %686 = vst.msk [vmem:[%s679 + $0x4] sm:$0xf] %vm172, %v374
      %vm687 = vcmask 24576
      %vm688 = vmand %vm687, %vm356
      %v689 = vld [vmem:[%s679 + $0x8] sm:$0x1]
      %v690 = vsel %vm688, %v375, %v689
      %691 = vst [vmem:[%s679 + $0x8] sm:$0x1] %v690
      %v692 = vld [vmem:[%s679 + $0xc] sm:$0xf]
      %v693 = vsel %vm682, %v382, %v692
      %694 = vst [vmem:[%s679 + $0xc] sm:$0xf] %v693
      %695 = vst.msk [vmem:[%s679 + $0x10] sm:$0xf] %vm172, %v391
      %v696 = vld [vmem:[%s679 + $0x14] sm:$0x1]
      %v697 = vsel %vm688, %v392, %v696
      %698 = vst [vmem:[%s679 + $0x14] sm:$0x1] %v697
      %v699 = vld [vmem:[%s679 + $0x18] sm:$0xf]
      %v700 = vsel %vm682, %v399, %v699
      %701 = vst [vmem:[%s679 + $0x18] sm:$0xf] %v700
      %702 = vst.msk [vmem:[%s679 + $0x1c] sm:$0xf] %vm172, %v408
      %v703 = vld [vmem:[%s679 + $0x20] sm:$0x1]
      %v704 = vsel %vm688, %v409, %v703
      %705 = vst [vmem:[%s679 + $0x20] sm:$0x1] %v704
      %v706 = vld [vmem:[%s679 + $0x24] sm:$0xf]
      %v707 = vsel %vm682, %v416, %v706
      %708 = vst [vmem:[%s679 + $0x24] sm:$0xf] %v707
      %709 = vst.msk [vmem:[%s679 + $0x28] sm:$0xf] %vm172, %v425
      %v710 = vld [vmem:[%s679 + $0x2c] sm:$0x1]
      %v711 = vsel %vm688, %v426, %v710
      %712 = vst [vmem:[%s679 + $0x2c] sm:$0x1] %v711
      %v713 = vld [vmem:[%s679 + $0x30] sm:$0xf]
      %v714 = vsel %vm682, %v433, %v713
      %715 = vst [vmem:[%s679 + $0x30] sm:$0xf] %v714
      %716 = vst.msk [vmem:[%s679 + $0x34] sm:$0xf] %vm172, %v442
      %v717 = vld [vmem:[%s679 + $0x38] sm:$0x1]
      %v718 = vsel %vm688, %v443, %v717
      %719 = vst [vmem:[%s679 + $0x38] sm:$0x1] %v718
      %v720 = vld [vmem:[%s679 + $0x3c] sm:$0xf]
      %v721 = vsel %vm682, %v450, %v720
      %722 = vst [vmem:[%s679 + $0x3c] sm:$0xf] %v721
      %723 = vst.msk [vmem:[%s679 + $0x40] sm:$0xf] %vm172, %v459
      %v724 = vld [vmem:[%s679 + $0x44] sm:$0x1]
      %v725 = vsel %vm688, %v460, %v724
      %726 = vst [vmem:[%s679 + $0x44] sm:$0x1] %v725
      %v727 = vld [vmem:[%s679 + $0x48] sm:$0xf]
      %v728 = vsel %vm682, %v467, %v727
      %729 = vst [vmem:[%s679 + $0x48] sm:$0xf] %v728
      %730 = vst.msk [vmem:[%s679 + $0x4c] sm:$0xf] %vm172, %v476
      %v731 = vld [vmem:[%s679 + $0x50] sm:$0x1]
      %v732 = vsel %vm688, %v477, %v731
      %733 = vst [vmem:[%s679 + $0x50] sm:$0x1] %v732
      %v734 = vld [vmem:[%s679 + $0x54] sm:$0xf]
      %v735 = vsel %vm682, %v484, %v734
      %736 = vst [vmem:[%s679 + $0x54] sm:$0xf] %v735
      %737 = vst.msk [vmem:[%s679 + $0x58] sm:$0xf] %vm172, %v493
      %v738 = vld [vmem:[%s679 + $0x5c] sm:$0x1]
      %v739 = vsel %vm688, %v494, %v738
      %740 = vst [vmem:[%s679 + $0x5c] sm:$0x1] %v739
      %v741 = vld [vmem:[%s679 + $0x60] sm:$0xf]
      %v742 = vsel %vm682, %v501, %v741
      %743 = vst [vmem:[%s679 + $0x60] sm:$0xf] %v742
      %744 = vst.msk [vmem:[%s679 + $0x64] sm:$0xf] %vm172, %v510
      %v745 = vld [vmem:[%s679 + $0x68] sm:$0x1]
      %v746 = vsel %vm688, %v511, %v745
      %747 = vst [vmem:[%s679 + $0x68] sm:$0x1] %v746
      %v748 = vld [vmem:[%s679 + $0x6c] sm:$0xf]
      %v749 = vsel %vm682, %v518, %v748
      %750 = vst [vmem:[%s679 + $0x6c] sm:$0xf] %v749
      %751 = vst.msk [vmem:[%s679 + $0x70] sm:$0xf] %vm172, %v527
      %v752 = vld [vmem:[%s679 + $0x74] sm:$0x1]
      %v753 = vsel %vm688, %v528, %v752
      %754 = vst [vmem:[%s679 + $0x74] sm:$0x1] %v753
      %v755 = vld [vmem:[%s679 + $0x78] sm:$0xf]
      %v756 = vsel %vm682, %v535, %v755
      %757 = vst [vmem:[%s679 + $0x78] sm:$0xf] %v756
      %758 = vst.msk [vmem:[%s679 + $0x7c] sm:$0xf] %vm172, %v544
      %v759 = vld [vmem:[%s679 + $0x80] sm:$0x1]
      %v760 = vsel %vm688, %v545, %v759
      %761 = vst [vmem:[%s679 + $0x80] sm:$0x1] %v760
      %v762 = vld [vmem:[%s679 + $0x84] sm:$0xf]
      %v763 = vsel %vm682, %v552, %v762
      %764 = vst [vmem:[%s679 + $0x84] sm:$0xf] %v763
      %765 = vst.msk [vmem:[%s679 + $0x88] sm:$0xf] %vm172, %v561
      %v766 = vld [vmem:[%s679 + $0x8c] sm:$0x1]
      %v767 = vsel %vm688, %v562, %v766
      %768 = vst [vmem:[%s679 + $0x8c] sm:$0x1] %v767
      %v769 = vld [vmem:[%s679 + $0x90] sm:$0xf]
      %v770 = vsel %vm682, %v569, %v769
      %771 = vst [vmem:[%s679 + $0x90] sm:$0xf] %v770
      %772 = vst.msk [vmem:[%s679 + $0x94] sm:$0xf] %vm172, %v578
      %v773 = vld [vmem:[%s679 + $0x98] sm:$0x1]
      %v774 = vsel %vm688, %v579, %v773
      %775 = vst [vmem:[%s679 + $0x98] sm:$0x1] %v774
      %v776 = vld [vmem:[%s679 + $0x9c] sm:$0xf]
      %v777 = vsel %vm682, %v586, %v776
      %778 = vst [vmem:[%s679 + $0x9c] sm:$0xf] %v777
      %779 = vst.msk [vmem:[%s679 + $0xa0] sm:$0xf] %vm172, %v595
      %v780 = vld [vmem:[%s679 + $0xa4] sm:$0x1]
      %v781 = vsel %vm688, %v596, %v780
      %782 = vst [vmem:[%s679 + $0xa4] sm:$0x1] %v781
      %v783 = vld [vmem:[%s679 + $0xa8] sm:$0xf]
      %v784 = vsel %vm682, %v603, %v783
      %785 = vst [vmem:[%s679 + $0xa8] sm:$0xf] %v784
      %786 = vst.msk [vmem:[%s679 + $0xac] sm:$0xf] %vm172, %v612
      %v787 = vld [vmem:[%s679 + $0xb0] sm:$0x1]
      %v788 = vsel %vm688, %v613, %v787
      %789 = vst [vmem:[%s679 + $0xb0] sm:$0x1] %v788
      %v790 = vld [vmem:[%s679 + $0xb4] sm:$0xf]
      %v791 = vsel %vm682, %v620, %v790
      %792 = vst [vmem:[%s679 + $0xb4] sm:$0xf] %v791
      %793 = vst.msk [vmem:[%s679 + $0xb8] sm:$0xf] %vm172, %v629
      %v794 = vld [vmem:[%s679 + $0xbc] sm:$0x1]
      %v795 = vsel %vm688, %v630, %v794
      %796 = vst [vmem:[%s679 + $0xbc] sm:$0x1] %v795
      %v797 = vld [vmem:[#allocation2] sm:$0xf]
      %v798 = vld [vmem:[#allocation2 + $0x4] sm:$0xf]
      %v799 = vld [vmem:[#allocation2 + $0xc] sm:$0xf]
      %v800 = vld [vmem:[#allocation2 + $0x10] sm:$0xf]
      %v801 = vld [vmem:[#allocation2 + $0x18] sm:$0xf]
      %v802 = vld [vmem:[#allocation2 + $0x1c] sm:$0xf]
      %v803 = vld [vmem:[#allocation2 + $0x24] sm:$0xf]
      %v804 = vld [vmem:[#allocation2 + $0x28] sm:$0xf]
      %v805 = vld [vmem:[#allocation2 + $0x30] sm:$0xf]
      %v806 = vld [vmem:[#allocation2 + $0x34] sm:$0xf]
      %v807 = vld [vmem:[#allocation2 + $0x3c] sm:$0xf]
      %v808 = vld [vmem:[#allocation2 + $0x40] sm:$0xf]
      %v809 = vld [vmem:[#allocation2 + $0x48] sm:$0xf]
      %v810 = vld [vmem:[#allocation2 + $0x4c] sm:$0xf]
      %v811 = vld [vmem:[#allocation2 + $0x54] sm:$0xf]
      %v812 = vld [vmem:[#allocation2 + $0x58] sm:$0xf]
      %v813 = vld [vmem:[#allocation2 + $0x60] sm:$0xf]
      %v814 = vld [vmem:[#allocation2 + $0x64] sm:$0xf]
      %v815 = vld [vmem:[#allocation2 + $0x6c] sm:$0xf]
      %v816 = vld [vmem:[#allocation2 + $0x70] sm:$0xf]
      %v817 = vld [vmem:[#allocation2 + $0x78] sm:$0xf]
      %v818 = vld [vmem:[#allocation2 + $0x7c] sm:$0xf]
      %v819 = vld [vmem:[#allocation2 + $0x84] sm:$0xf]
      %v820 = vld [vmem:[#allocation2 + $0x88] sm:$0xf]
      %v821 = vld [vmem:[#allocation2 + $0x90] sm:$0xf]
      %v822 = vld [vmem:[#allocation2 + $0x94] sm:$0xf]
      %v823 = vld [vmem:[#allocation2 + $0x9c] sm:$0xf]
      %v824 = vld [vmem:[#allocation2 + $0xa0] sm:$0xf]
      %v825 = vld [vmem:[#allocation2 + $0xa8] sm:$0xf]
      %v826 = vld [vmem:[#allocation2 + $0xac] sm:$0xf]
      %v827 = vld [vmem:[#allocation2 + $0xb4] sm:$0xf]
      %v828 = vld [vmem:[#allocation2 + $0xb8] sm:$0xf]
      %v861 = vunpack.c.l.b16 %v797
      %v862 = vunpack.c.l.b16 %v798
      %v863 = vunpack.c.l.b16 %v799
      %v864 = vunpack.c.l.b16 %v800
      %v865 = vunpack.c.l.b16 %v801
      %v866 = vunpack.c.l.b16 %v802
      %v867 = vunpack.c.l.b16 %v803
      %v868 = vunpack.c.l.b16 %v804
      %v869 = vunpack.c.l.b16 %v805
      %v870 = vunpack.c.l.b16 %v806
      %v871 = vunpack.c.l.b16 %v807
      %v872 = vunpack.c.l.b16 %v808
      %v873 = vunpack.c.l.b16 %v809
      %v874 = vunpack.c.l.b16 %v810
      %v875 = vunpack.c.l.b16 %v811
      %v876 = vunpack.c.l.b16 %v812
      %v877 = vunpack.c.l.b16 %v813
      %v878 = vunpack.c.l.b16 %v814
      %v879 = vunpack.c.l.b16 %v815
      %v880 = vunpack.c.l.b16 %v816
      %v881 = vunpack.c.l.b16 %v817
      %v882 = vunpack.c.l.b16 %v818
      %v883 = vunpack.c.l.b16 %v819
      %v884 = vunpack.c.l.b16 %v820
      %v885 = vunpack.c.l.b16 %v821
      %v886 = vunpack.c.l.b16 %v822
      %v887 = vunpack.c.l.b16 %v823
      %v888 = vunpack.c.l.b16 %v824
      %v889 = vunpack.c.l.b16 %v825
      %v890 = vunpack.c.l.b16 %v826
      %v891 = vunpack.c.l.b16 %v827
      %v892 = vunpack.c.l.b16 %v828
      %v893 = vpack.c.b16 %v862, %v861
      %v894 = vpack.c.b16 %v864, %v863
      %v895 = vpack.c.b16 %v866, %v865
      %v896 = vpack.c.b16 %v868, %v867
      %v897 = vpack.c.b16 %v870, %v869
      %v898 = vpack.c.b16 %v872, %v871
      %v899 = vpack.c.b16 %v874, %v873
      %v900 = vpack.c.b16 %v876, %v875
      %v901 = vpack.c.b16 %v878, %v877
      %v902 = vpack.c.b16 %v880, %v879
      %v903 = vpack.c.b16 %v882, %v881
      %v904 = vpack.c.b16 %v884, %v883
      %v905 = vpack.c.b16 %v886, %v885
      %v906 = vpack.c.b16 %v888, %v887
      %v907 = vpack.c.b16 %v890, %v889
      %v908 = vpack.c.b16 %v892, %v891
      %vm925 = vcmask 31744
      %926 = vst.msk [vmem:[#allocation3] sm:$0xff] %vm925, %v893
      %927 = vst.msk [vmem:[#allocation3 + $0x8] sm:$0xff] %vm925, %v894
      %928 = vst.msk [vmem:[#allocation3 + $0x10] sm:$0xff] %vm925, %v895
      %929 = vst.msk [vmem:[#allocation3 + $0x18] sm:$0xff] %vm925, %v896
      %930 = vst.msk [vmem:[#allocation3 + $0x20] sm:$0xff] %vm925, %v897
      %931 = vst.msk [vmem:[#allocation3 + $0x28] sm:$0xff] %vm925, %v898
      %932 = vst.msk [vmem:[#allocation3 + $0x30] sm:$0xff] %vm925, %v899
      %933 = vst.msk [vmem:[#allocation3 + $0x38] sm:$0xff] %vm925, %v900
      %934 = vst.msk [vmem:[#allocation3 + $0x40] sm:$0xff] %vm925, %v901
      %935 = vst.msk [vmem:[#allocation3 + $0x48] sm:$0xff] %vm925, %v902
      %936 = vst.msk [vmem:[#allocation3 + $0x50] sm:$0xff] %vm925, %v903
      %937 = vst.msk [vmem:[#allocation3 + $0x58] sm:$0xff] %vm925, %v904
      %938 = vst.msk [vmem:[#allocation3 + $0x60] sm:$0xff] %vm925, %v905
      %939 = vst.msk [vmem:[#allocation3 + $0x68] sm:$0xff] %vm925, %v906
      %940 = vst.msk [vmem:[#allocation3 + $0x70] sm:$0xff] %vm925, %v907
      %941 = vst.msk [vmem:[#allocation3 + $0x78] sm:$0xff] %vm925, %v908
      %v942 = vld [vmem:[#allocation2] sm:$0xf]
      %v943 = vld [vmem:[#allocation2 + $0x4] sm:$0xf]
      %v944 = vld [vmem:[#allocation2 + $0x8] sm:$0x1]
      %v945 = vld [vmem:[#allocation2 + $0xc] sm:$0xf]
      %v946 = vld [vmem:[#allocation2 + $0x10] sm:$0xf]
      %v947 = vld [vmem:[#allocation2 + $0x14] sm:$0x1]
      %v948 = vld [vmem:[#allocation2 + $0x18] sm:$0xf]
      %v949 = vld [vmem:[#allocation2 + $0x1c] sm:$0xf]
      %v950 = vld [vmem:[#allocation2 + $0x20] sm:$0x1]
      %v951 = vld [vmem:[#allocation2 + $0x24] sm:$0xf]
      %v952 = vld [vmem:[#allocation2 + $0x28] sm:$0xf]
      %v953 = vld [vmem:[#allocation2 + $0x2c] sm:$0x1]
      %v954 = vld [vmem:[#allocation2 + $0x30] sm:$0xf]
      %v955 = vld [vmem:[#allocation2 + $0x34] sm:$0xf]
      %v956 = vld [vmem:[#allocation2 + $0x38] sm:$0x1]
      %v957 = vld [vmem:[#allocation2 + $0x3c] sm:$0xf]
      %v958 = vld [vmem:[#allocation2 + $0x40] sm:$0xf]
      %v959 = vld [vmem:[#allocation2 + $0x44] sm:$0x1]
      %v960 = vld [vmem:[#allocation2 + $0x48] sm:$0xf]
      %v961 = vld [vmem:[#allocation2 + $0x4c] sm:$0xf]
      %v962 = vld [vmem:[#allocation2 + $0x50] sm:$0x1]
      %v963 = vld [vmem:[#allocation2 + $0x54] sm:$0xf]
      %v964 = vld [vmem:[#allocation2 + $0x58] sm:$0xf]
      %v965 = vld [vmem:[#allocation2 + $0x5c] sm:$0x1]
      %v966 = vld [vmem:[#allocation2 + $0x60] sm:$0xf]
      %v967 = vld [vmem:[#allocation2 + $0x64] sm:$0xf]
      %v968 = vld [vmem:[#allocation2 + $0x68] sm:$0x1]
      %v969 = vld [vmem:[#allocation2 + $0x6c] sm:$0xf]
      %v970 = vld [vmem:[#allocation2 + $0x70] sm:$0xf]
      %v971 = vld [vmem:[#allocation2 + $0x74] sm:$0x1]
      %v972 = vld [vmem:[#allocation2 + $0x78] sm:$0xf]
      %v973 = vld [vmem:[#allocation2 + $0x7c] sm:$0xf]
      %v974 = vld [vmem:[#allocation2 + $0x80] sm:$0x1]
      %v975 = vld [vmem:[#allocation2 + $0x84] sm:$0xf]
      %v976 = vld [vmem:[#allocation2 + $0x88] sm:$0xf]
      %v977 = vld [vmem:[#allocation2 + $0x8c] sm:$0x1]
      %v978 = vld [vmem:[#allocation2 + $0x90] sm:$0xf]
      %v979 = vld [vmem:[#allocation2 + $0x94] sm:$0xf]
      %v980 = vld [vmem:[#allocation2 + $0x98] sm:$0x1]
      %v981 = vld [vmem:[#allocation2 + $0x9c] sm:$0xf]
      %v982 = vld [vmem:[#allocation2 + $0xa0] sm:$0xf]
      %v983 = vld [vmem:[#allocation2 + $0xa4] sm:$0x1]
      %v984 = vld [vmem:[#allocation2 + $0xa8] sm:$0xf]
      %v985 = vld [vmem:[#allocation2 + $0xac] sm:$0xf]
      %v986 = vld [vmem:[#allocation2 + $0xb0] sm:$0x1]
      %v987 = vld [vmem:[#allocation2 + $0xb4] sm:$0xf]
      %v988 = vld [vmem:[#allocation2 + $0xb8] sm:$0xf]
      %v989 = vld [vmem:[#allocation2 + $0xbc] sm:$0x1]
      %vm990 = vsmask.f32 3328
      %vm991 = vsmask.f32 7440
      %vm992 = vmor %vm990, %vm991
      %v994 = vshrl.u32 %v942, 16
      %v996 = vrot.slane %v994, 4
      %v997 = vshll.u32 %v942, 16
      %v999 = vrot.slane %v997, 5
      %v1000 = vor.u32 %v996, %v999
      %v1001 = vrot.slane %v1000, 4
      %v1003 = vshll.u32 %v943, 16
      %v1005 = vrot.slane %v1003, 5
      %v1006 = vsel %vm992, %v1001, %v1005
      %v1007 = vshrl.u32 %v943, 16
      %v1009 = vrot.slane %v1007, 4
      %v1010 = vor.u32 %v1009, %v1005
      %v1011 = vrot.slane %v1010, 4
      %v1013 = vshll.u32 %v944, 16
      %v1015 = vrot.slane %v1013, 5
      %v1016 = vsel %vm992, %v1011, %v1015
      %v1018 = vshrl.u32 %v945, 16
      %v1020 = vrot.slane %v1018, 4
      %v1021 = vshll.u32 %v945, 16
      %v1023 = vrot.slane %v1021, 5
      %v1024 = vor.u32 %v1020, %v1023
      %v1025 = vrot.slane %v1024, 4
      %v1027 = vshll.u32 %v946, 16
      %v1029 = vrot.slane %v1027, 5
      %v1030 = vsel %vm992, %v1025, %v1029
      %v1031 = vshrl.u32 %v946, 16
      %v1033 = vrot.slane %v1031, 4
      %v1034 = vor.u32 %v1033, %v1029
      %v1035 = vrot.slane %v1034, 4
      %v1037 = vshll.u32 %v947, 16
      %v1039 = vrot.slane %v1037, 5
      %v1040 = vsel %vm992, %v1035, %v1039
      %v1042 = vshrl.u32 %v948, 16
      %v1044 = vrot.slane %v1042, 4
      %v1045 = vshll.u32 %v948, 16
      %v1047 = vrot.slane %v1045, 5
      %v1048 = vor.u32 %v1044, %v1047
      %v1049 = vrot.slane %v1048, 4
      %v1051 = vshll.u32 %v949, 16
      %v1053 = vrot.slane %v1051, 5
      %v1054 = vsel %vm992, %v1049, %v1053
      %v1055 = vshrl.u32 %v949, 16
      %v1057 = vrot.slane %v1055, 4
      %v1058 = vor.u32 %v1057, %v1053
      %v1059 = vrot.slane %v1058, 4
      %v1061 = vshll.u32 %v950, 16
      %v1063 = vrot.slane %v1061, 5
      %v1064 = vsel %vm992, %v1059, %v1063
      %v1066 = vshrl.u32 %v951, 16
      %v1068 = vrot.slane %v1066, 4
      %v1069 = vshll.u32 %v951, 16
      %v1071 = vrot.slane %v1069, 5
      %v1072 = vor.u32 %v1068, %v1071
      %v1073 = vrot.slane %v1072, 4
      %v1075 = vshll.u32 %v952, 16
      %v1077 = vrot.slane %v1075, 5
      %v1078 = vsel %vm992, %v1073, %v1077
      %v1079 = vshrl.u32 %v952, 16
      %v1081 = vrot.slane %v1079, 4
      %v1082 = vor.u32 %v1081, %v1077
      %v1083 = vrot.slane %v1082, 4
      %v1085 = vshll.u32 %v953, 16
      %v1087 = vrot.slane %v1085, 5
      %v1088 = vsel %vm992, %v1083, %v1087
      %v1090 = vshrl.u32 %v954, 16
      %v1092 = vrot.slane %v1090, 4
      %v1093 = vshll.u32 %v954, 16
      %v1095 = vrot.slane %v1093, 5
      %v1096 = vor.u32 %v1092, %v1095
      %v1097 = vrot.slane %v1096, 4
      %v1099 = vshll.u32 %v955, 16
      %v1101 = vrot.slane %v1099, 5
      %v1102 = vsel %vm992, %v1097, %v1101
      %v1103 = vshrl.u32 %v955, 16
      %v1105 = vrot.slane %v1103, 4
      %v1106 = vor.u32 %v1105, %v1101
      %v1107 = vrot.slane %v1106, 4
      %v1109 = vshll.u32 %v956, 16
      %v1111 = vrot.slane %v1109, 5
      %v1112 = vsel %vm992, %v1107, %v1111
      %v1114 = vshrl.u32 %v957, 16
      %v1116 = vrot.slane %v1114, 4
      %v1117 = vshll.u32 %v957, 16
      %v1119 = vrot.slane %v1117, 5
      %v1120 = vor.u32 %v1116, %v1119
      %v1121 = vrot.slane %v1120, 4
      %v1123 = vshll.u32 %v958, 16
      %v1125 = vrot.slane %v1123, 5
      %v1126 = vsel %vm992, %v1121, %v1125
      %v1127 = vshrl.u32 %v958, 16
      %v1129 = vrot.slane %v1127, 4
      %v1130 = vor.u32 %v1129, %v1125
      %v1131 = vrot.slane %v1130, 4
      %v1133 = vshll.u32 %v959, 16
      %v1135 = vrot.slane %v1133, 5
      %v1136 = vsel %vm992, %v1131, %v1135
      %v1138 = vshrl.u32 %v960, 16
      %v1140 = vrot.slane %v1138, 4
      %v1141 = vshll.u32 %v960, 16
      %v1143 = vrot.slane %v1141, 5
      %v1144 = vor.u32 %v1140, %v1143
      %v1145 = vrot.slane %v1144, 4
      %v1147 = vshll.u32 %v961, 16
      %v1149 = vrot.slane %v1147, 5
      %v1150 = vsel %vm992, %v1145, %v1149
      %v1151 = vshrl.u32 %v961, 16
      %v1153 = vrot.slane %v1151, 4
      %v1154 = vor.u32 %v1153, %v1149
      %v1155 = vrot.slane %v1154, 4
      %v1157 = vshll.u32 %v962, 16
      %v1159 = vrot.slane %v1157, 5
      %v1160 = vsel %vm992, %v1155, %v1159
      %v1162 = vshrl.u32 %v963, 16
      %v1164 = vrot.slane %v1162, 4
      %v1165 = vshll.u32 %v963, 16
      %v1167 = vrot.slane %v1165, 5
      %v1168 = vor.u32 %v1164, %v1167
      %v1169 = vrot.slane %v1168, 4
      %v1171 = vshll.u32 %v964, 16
      %v1173 = vrot.slane %v1171, 5
      %v1174 = vsel %vm992, %v1169, %v1173
      %v1175 = vshrl.u32 %v964, 16
      %v1177 = vrot.slane %v1175, 4
      %v1178 = vor.u32 %v1177, %v1173
      %v1179 = vrot.slane %v1178, 4
      %v1181 = vshll.u32 %v965, 16
      %v1183 = vrot.slane %v1181, 5
      %v1184 = vsel %vm992, %v1179, %v1183
      %v1186 = vshrl.u32 %v966, 16
      %v1188 = vrot.slane %v1186, 4
      %v1189 = vshll.u32 %v966, 16
      %v1191 = vrot.slane %v1189, 5
      %v1192 = vor.u32 %v1188, %v1191
      %v1193 = vrot.slane %v1192, 4
      %v1195 = vshll.u32 %v967, 16
      %v1197 = vrot.slane %v1195, 5
      %v1198 = vsel %vm992, %v1193, %v1197
      %v1199 = vshrl.u32 %v967, 16
      %v1201 = vrot.slane %v1199, 4
      %v1202 = vor.u32 %v1201, %v1197
      %v1203 = vrot.slane %v1202, 4
      %v1205 = vshll.u32 %v968, 16
      %v1207 = vrot.slane %v1205, 5
      %v1208 = vsel %vm992, %v1203, %v1207
      %v1210 = vshrl.u32 %v969, 16
      %v1212 = vrot.slane %v1210, 4
      %v1213 = vshll.u32 %v969, 16
      %v1215 = vrot.slane %v1213, 5
      %v1216 = vor.u32 %v1212, %v1215
      %v1217 = vrot.slane %v1216, 4
      %v1219 = vshll.u32 %v970, 16
      %v1221 = vrot.slane %v1219, 5
      %v1222 = vsel %vm992, %v1217, %v1221
      %v1223 = vshrl.u32 %v970, 16
      %v1225 = vrot.slane %v1223, 4
      %v1226 = vor.u32 %v1225, %v1221
      %v1227 = vrot.slane %v1226, 4
      %v1229 = vshll.u32 %v971, 16
      %v1231 = vrot.slane %v1229, 5
      %v1232 = vsel %vm992, %v1227, %v1231
      %v1234 = vshrl.u32 %v972, 16
      %v1236 = vrot.slane %v1234, 4
      %v1237 = vshll.u32 %v972, 16
      %v1239 = vrot.slane %v1237, 5
      %v1240 = vor.u32 %v1236, %v1239
      %v1241 = vrot.slane %v1240, 4
      %v1243 = vshll.u32 %v973, 16
      %v1245 = vrot.slane %v1243, 5
      %v1246 = vsel %vm992, %v1241, %v1245
      %v1247 = vshrl.u32 %v973, 16
      %v1249 = vrot.slane %v1247, 4
      %v1250 = vor.u32 %v1249, %v1245
      %v1251 = vrot.slane %v1250, 4
      %v1253 = vshll.u32 %v974, 16
      %v1255 = vrot.slane %v1253, 5
      %v1256 = vsel %vm992, %v1251, %v1255
      %v1258 = vshrl.u32 %v975, 16
      %v1260 = vrot.slane %v1258, 4
      %v1261 = vshll.u32 %v975, 16
      %v1263 = vrot.slane %v1261, 5
      %v1264 = vor.u32 %v1260, %v1263
      %v1265 = vrot.slane %v1264, 4
      %v1267 = vshll.u32 %v976, 16
      %v1269 = vrot.slane %v1267, 5
      %v1270 = vsel %vm992, %v1265, %v1269
      %v1271 = vshrl.u32 %v976, 16
      %v1273 = vrot.slane %v1271, 4
      %v1274 = vor.u32 %v1273, %v1269
      %v1275 = vrot.slane %v1274, 4
      %v1277 = vshll.u32 %v977, 16
      %v1279 = vrot.slane %v1277, 5
      %v1280 = vsel %vm992, %v1275, %v1279
      %v1282 = vshrl.u32 %v978, 16
      %v1284 = vrot.slane %v1282, 4
      %v1285 = vshll.u32 %v978, 16
      %v1287 = vrot.slane %v1285, 5
      %v1288 = vor.u32 %v1284, %v1287
      %v1289 = vrot.slane %v1288, 4
      %v1291 = vshll.u32 %v979, 16
      %v1293 = vrot.slane %v1291, 5
      %v1294 = vsel %vm992, %v1289, %v1293
      %v1295 = vshrl.u32 %v979, 16
      %v1297 = vrot.slane %v1295, 4
      %v1298 = vor.u32 %v1297, %v1293
      %v1299 = vrot.slane %v1298, 4
      %v1301 = vshll.u32 %v980, 16
      %v1303 = vrot.slane %v1301, 5
      %v1304 = vsel %vm992, %v1299, %v1303
      %v1306 = vshrl.u32 %v981, 16
      %v1308 = vrot.slane %v1306, 4
      %v1309 = vshll.u32 %v981, 16
      %v1311 = vrot.slane %v1309, 5
      %v1312 = vor.u32 %v1308, %v1311
      %v1313 = vrot.slane %v1312, 4
      %v1315 = vshll.u32 %v982, 16
      %v1317 = vrot.slane %v1315, 5
      %v1318 = vsel %vm992, %v1313, %v1317
      %v1319 = vshrl.u32 %v982, 16
      %v1321 = vrot.slane %v1319, 4
      %v1322 = vor.u32 %v1321, %v1317
      %v1323 = vrot.slane %v1322, 4
      %v1325 = vshll.u32 %v983, 16
      %v1327 = vrot.slane %v1325, 5
      %v1328 = vsel %vm992, %v1323, %v1327
      %v1330 = vshrl.u32 %v984, 16
      %v1332 = vrot.slane %v1330, 4
      %v1333 = vshll.u32 %v984, 16
      %v1335 = vrot.slane %v1333, 5
      %v1336 = vor.u32 %v1332, %v1335
      %v1337 = vrot.slane %v1336, 4
      %v1339 = vshll.u32 %v985, 16
      %v1341 = vrot.slane %v1339, 5
      %v1342 = vsel %vm992, %v1337, %v1341
      %v1343 = vshrl.u32 %v985, 16
      %v1345 = vrot.slane %v1343, 4
      %v1346 = vor.u32 %v1345, %v1341
      %v1347 = vrot.slane %v1346, 4
      %v1349 = vshll.u32 %v986, 16
      %v1351 = vrot.slane %v1349, 5
      %v1352 = vsel %vm992, %v1347, %v1351
      %v1354 = vshrl.u32 %v987, 16
      %v1356 = vrot.slane %v1354, 4
      %v1357 = vshll.u32 %v987, 16
      %v1359 = vrot.slane %v1357, 5
      %v1360 = vor.u32 %v1356, %v1359
      %v1361 = vrot.slane %v1360, 4
      %v1363 = vshll.u32 %v988, 16
      %v1365 = vrot.slane %v1363, 5
      %v1366 = vsel %vm992, %v1361, %v1365
      %v1367 = vshrl.u32 %v988, 16
      %v1369 = vrot.slane %v1367, 4
      %v1370 = vor.u32 %v1369, %v1365
      %v1371 = vrot.slane %v1370, 4
      %v1373 = vshll.u32 %v989, 16
      %v1375 = vrot.slane %v1373, 5
      %v1376 = vsel %vm992, %v1371, %v1375
      %v1377 = vunpack.c.l.b16 %v1006
      %v1378 = vunpack.c.l.b16 %v1016
      %v1379 = vunpack.c.l.b16 %v1030
      %v1380 = vunpack.c.l.b16 %v1040
      %v1381 = vunpack.c.l.b16 %v1054
      %v1382 = vunpack.c.l.b16 %v1064
      %v1383 = vunpack.c.l.b16 %v1078
      %v1384 = vunpack.c.l.b16 %v1088
      %v1385 = vunpack.c.l.b16 %v1102
      %v1386 = vunpack.c.l.b16 %v1112
      %v1387 = vunpack.c.l.b16 %v1126
      %v1388 = vunpack.c.l.b16 %v1136
      %v1389 = vunpack.c.l.b16 %v1150
      %v1390 = vunpack.c.l.b16 %v1160
      %v1391 = vunpack.c.l.b16 %v1174
      %v1392 = vunpack.c.l.b16 %v1184
      %v1393 = vunpack.c.l.b16 %v1198
      %v1394 = vunpack.c.l.b16 %v1208
      %v1395 = vunpack.c.l.b16 %v1222
      %v1396 = vunpack.c.l.b16 %v1232
      %v1397 = vunpack.c.l.b16 %v1246
      %v1398 = vunpack.c.l.b16 %v1256
      %v1399 = vunpack.c.l.b16 %v1270
      %v1400 = vunpack.c.l.b16 %v1280
      %v1401 = vunpack.c.l.b16 %v1294
      %v1402 = vunpack.c.l.b16 %v1304
      %v1403 = vunpack.c.l.b16 %v1318
      %v1404 = vunpack.c.l.b16 %v1328
      %v1405 = vunpack.c.l.b16 %v1342
      %v1406 = vunpack.c.l.b16 %v1352
      %v1407 = vunpack.c.l.b16 %v1366
      %v1408 = vunpack.c.l.b16 %v1376
      %v1409 = vpack.c.b16 %v1378, %v1377
      %v1410 = vpack.c.b16 %v1380, %v1379
      %v1411 = vpack.c.b16 %v1382, %v1381
      %v1412 = vpack.c.b16 %v1384, %v1383
      %v1413 = vpack.c.b16 %v1386, %v1385
      %v1414 = vpack.c.b16 %v1388, %v1387
      %v1415 = vpack.c.b16 %v1390, %v1389
      %v1416 = vpack.c.b16 %v1392, %v1391
      %v1417 = vpack.c.b16 %v1394, %v1393
      %v1418 = vpack.c.b16 %v1396, %v1395
      %v1419 = vpack.c.b16 %v1398, %v1397
      %v1420 = vpack.c.b16 %v1400, %v1399
      %v1421 = vpack.c.b16 %v1402, %v1401
      %v1422 = vpack.c.b16 %v1404, %v1403
      %v1423 = vpack.c.b16 %v1406, %v1405
      %v1424 = vpack.c.b16 %v1408, %v1407
      %1425 = vrot.lane.b32.xlu0 %v1409, 4
      %v1426 = vpop.permute.xlu0 %1425
      %1427 = vrot.lane.b32.xlu0 %v1410, 4
      %v1428 = vpop.permute.xlu0 %1427
      %1429 = vrot.lane.b32.xlu0 %v1411, 4
      %v1430 = vpop.permute.xlu0 %1429
      %1431 = vrot.lane.b32.xlu0 %v1412, 4
      %v1432 = vpop.permute.xlu0 %1431
      %1433 = vrot.lane.b32.xlu0 %v1413, 4
      %v1434 = vpop.permute.xlu0 %1433
      %1435 = vrot.lane.b32.xlu0 %v1414, 4
      %v1436 = vpop.permute.xlu0 %1435
      %1437 = vrot.lane.b32.xlu0 %v1415, 4
      %v1438 = vpop.permute.xlu0 %1437
      %1439 = vrot.lane.b32.xlu0 %v1416, 4
      %v1440 = vpop.permute.xlu0 %1439
      %1441 = vrot.lane.b32.xlu0 %v1417, 4
      %v1442 = vpop.permute.xlu0 %1441
      %1443 = vrot.lane.b32.xlu0 %v1418, 4
      %v1444 = vpop.permute.xlu0 %1443
      %1445 = vrot.lane.b32.xlu0 %v1419, 4
      %v1446 = vpop.permute.xlu0 %1445
      %1447 = vrot.lane.b32.xlu0 %v1420, 4
      %v1448 = vpop.permute.xlu0 %1447
      %1449 = vrot.lane.b32.xlu0 %v1421, 4
      %v1450 = vpop.permute.xlu0 %1449
      %1451 = vrot.lane.b32.xlu0 %v1422, 4
      %v1452 = vpop.permute.xlu0 %1451
      %1453 = vrot.lane.b32.xlu0 %v1423, 4
      %v1454 = vpop.permute.xlu0 %1453
      %1455 = vrot.lane.b32.xlu0 %v1424, 4
      %v1456 = vpop.permute.xlu0 %1455
      %vm1473 = vcmask 64544
      %1474 = vst.msk [vmem:[#allocation3] sm:$0xff] %vm1473, %v1426
      %1475 = vst.msk [vmem:[#allocation3 + $0x8] sm:$0xff] %vm1473, %v1428
      %1476 = vst.msk [vmem:[#allocation3 + $0x10] sm:$0xff] %vm1473, %v1430
      %1477 = vst.msk [vmem:[#allocation3 + $0x18] sm:$0xff] %vm1473, %v1432
      %1478 = vst.msk [vmem:[#allocation3 + $0x20] sm:$0xff] %vm1473, %v1434
      %1479 = vst.msk [vmem:[#allocation3 + $0x28] sm:$0xff] %vm1473, %v1436
      %1480 = vst.msk [vmem:[#allocation3 + $0x30] sm:$0xff] %vm1473, %v1438
      %1481 = vst.msk [vmem:[#allocation3 + $0x38] sm:$0xff] %vm1473, %v1440
      %1482 = vst.msk [vmem:[#allocation3 + $0x40] sm:$0xff] %vm1473, %v1442
      %1483 = vst.msk [vmem:[#allocation3 + $0x48] sm:$0xff] %vm1473, %v1444
      %1484 = vst.msk [vmem:[#allocation3 + $0x50] sm:$0xff] %vm1473, %v1446
      %1485 = vst.msk [vmem:[#allocation3 + $0x58] sm:$0xff] %vm1473, %v1448
      %1486 = vst.msk [vmem:[#allocation3 + $0x60] sm:$0xff] %vm1473, %v1450
      %1487 = vst.msk [vmem:[#allocation3 + $0x68] sm:$0xff] %vm1473, %v1452
      %1488 = vst.msk [vmem:[#allocation3 + $0x70] sm:$0xff] %vm1473, %v1454
      %1489 = vst.msk [vmem:[#allocation3 + $0x78] sm:$0xff] %vm1473, %v1456
      %v1490 = vld [vmem:[#allocation2] sm:$0xe]
      %v1491 = vld [vmem:[#allocation2 + $0x4] sm:$0xf]
      %v1492 = vld [vmem:[#allocation2 + $0x8] sm:$0x1]
      %v1493 = vld [vmem:[#allocation2 + $0xc] sm:$0xe]
      %v1494 = vld [vmem:[#allocation2 + $0x10] sm:$0xf]
      %v1495 = vld [vmem:[#allocation2 + $0x14] sm:$0x1]
      %v1496 = vld [vmem:[#allocation2 + $0x18] sm:$0xe]
      %v1497 = vld [vmem:[#allocation2 + $0x1c] sm:$0xf]
      %v1498 = vld [vmem:[#allocation2 + $0x20] sm:$0x1]
      %v1499 = vld [vmem:[#allocation2 + $0x24] sm:$0xe]
      %v1500 = vld [vmem:[#allocation2 + $0x28] sm:$0xf]
      %v1501 = vld [vmem:[#allocation2 + $0x2c] sm:$0x1]
      %v1502 = vld [vmem:[#allocation2 + $0x30] sm:$0xe]
      %v1503 = vld [vmem:[#allocation2 + $0x34] sm:$0xf]
      %v1504 = vld [vmem:[#allocation2 + $0x38] sm:$0x1]
      %v1505 = vld [vmem:[#allocation2 + $0x3c] sm:$0xe]
      %v1506 = vld [vmem:[#allocation2 + $0x40] sm:$0xf]
      %v1507 = vld [vmem:[#allocation2 + $0x44] sm:$0x1]
      %v1508 = vld [vmem:[#allocation2 + $0x48] sm:$0xe]
      %v1509 = vld [vmem:[#allocation2 + $0x4c] sm:$0xf]
      %v1510 = vld [vmem:[#allocation2 + $0x50] sm:$0x1]
      %v1511 = vld [vmem:[#allocation2 + $0x54] sm:$0xe]
      %v1512 = vld [vmem:[#allocation2 + $0x58] sm:$0xf]
      %v1513 = vld [vmem:[#allocation2 + $0x5c] sm:$0x1]
      %v1514 = vld [vmem:[#allocation2 + $0x60] sm:$0xe]
      %v1515 = vld [vmem:[#allocation2 + $0x64] sm:$0xf]
      %v1516 = vld [vmem:[#allocation2 + $0x68] sm:$0x1]
      %v1517 = vld [vmem:[#allocation2 + $0x6c] sm:$0xe]
      %v1518 = vld [vmem:[#allocation2 + $0x70] sm:$0xf]
      %v1519 = vld [vmem:[#allocation2 + $0x74] sm:$0x1]
      %v1520 = vld [vmem:[#allocation2 + $0x78] sm:$0xe]
      %v1521 = vld [vmem:[#allocation2 + $0x7c] sm:$0xf]
      %v1522 = vld [vmem:[#allocation2 + $0x80] sm:$0x1]
      %v1523 = vld [vmem:[#allocation2 + $0x84] sm:$0xe]
      %v1524 = vld [vmem:[#allocation2 + $0x88] sm:$0xf]
      %v1525 = vld [vmem:[#allocation2 + $0x8c] sm:$0x1]
      %v1526 = vld [vmem:[#allocation2 + $0x90] sm:$0xe]
      %v1527 = vld [vmem:[#allocation2 + $0x94] sm:$0xf]
      %v1528 = vld [vmem:[#allocation2 + $0x98] sm:$0x1]
      %v1529 = vld [vmem:[#allocation2 + $0x9c] sm:$0xe]
      %v1530 = vld [vmem:[#allocation2 + $0xa0] sm:$0xf]
      %v1531 = vld [vmem:[#allocation2 + $0xa4] sm:$0x1]
      %v1532 = vld [vmem:[#allocation2 + $0xa8] sm:$0xe]
      %v1533 = vld [vmem:[#allocation2 + $0xac] sm:$0xf]
      %v1534 = vld [vmem:[#allocation2 + $0xb0] sm:$0x1]
      %v1535 = vld [vmem:[#allocation2 + $0xb4] sm:$0xe]
      %v1536 = vld [vmem:[#allocation2 + $0xb8] sm:$0xf]
      %v1537 = vld [vmem:[#allocation2 + $0xbc] sm:$0x1]
      %vm1586 = vcmask 1042432
      %vm1587 = vcmask 1046532
      %vm1588 = vmor %vm1586, %vm1587
      %v1589 = vrot.slane %v1490, 5
      %v1590 = vrot.slane %v1589, 4
      %v1591 = vrot.slane %v1491, 5
      %v1592 = vsel %vm1588, %v1590, %v1591
      %v1593 = vrot.slane %v1591, 4
      %v1594 = vrot.slane %v1492, 5
      %v1595 = vsel %vm1588, %v1593, %v1594
      %v1596 = vrot.slane %v1493, 5
      %v1597 = vrot.slane %v1596, 4
      %v1598 = vrot.slane %v1494, 5
      %v1599 = vsel %vm1588, %v1597, %v1598
      %v1600 = vrot.slane %v1598, 4
      %v1601 = vrot.slane %v1495, 5
      %v1602 = vsel %vm1588, %v1600, %v1601
      %v1603 = vrot.slane %v1496, 5
      %v1604 = vrot.slane %v1603, 4
      %v1605 = vrot.slane %v1497, 5
      %v1606 = vsel %vm1588, %v1604, %v1605
      %v1607 = vrot.slane %v1605, 4
      %v1608 = vrot.slane %v1498, 5
      %v1609 = vsel %vm1588, %v1607, %v1608
      %v1610 = vrot.slane %v1499, 5
      %v1611 = vrot.slane %v1610, 4
      %v1612 = vrot.slane %v1500, 5
      %v1613 = vsel %vm1588, %v1611, %v1612
      %v1614 = vrot.slane %v1612, 4
      %v1615 = vrot.slane %v1501, 5
      %v1616 = vsel %vm1588, %v1614, %v1615
      %v1617 = vrot.slane %v1502, 5
      %v1618 = vrot.slane %v1617, 4
      %v1619 = vrot.slane %v1503, 5
      %v1620 = vsel %vm1588, %v1618, %v1619
      %v1621 = vrot.slane %v1619, 4
      %v1622 = vrot.slane %v1504, 5
      %v1623 = vsel %vm1588, %v1621, %v1622
      %v1624 = vrot.slane %v1505, 5
      %v1625 = vrot.slane %v1624, 4
      %v1626 = vrot.slane %v1506, 5
      %v1627 = vsel %vm1588, %v1625, %v1626
      %v1628 = vrot.slane %v1626, 4
      %v1629 = vrot.slane %v1507, 5
      %v1630 = vsel %vm1588, %v1628, %v1629
      %v1631 = vrot.slane %v1508, 5
      %v1632 = vrot.slane %v1631, 4
      %v1633 = vrot.slane %v1509, 5
      %v1634 = vsel %vm1588, %v1632, %v1633
      %v1635 = vrot.slane %v1633, 4
      %v1636 = vrot.slane %v1510, 5
      %v1637 = vsel %vm1588, %v1635, %v1636
      %v1638 = vrot.slane %v1511, 5
      %v1639 = vrot.slane %v1638, 4
      %v1640 = vrot.slane %v1512, 5
      %v1641 = vsel %vm1588, %v1639, %v1640
      %v1642 = vrot.slane %v1640, 4
      %v1643 = vrot.slane %v1513, 5
      %v1644 = vsel %vm1588, %v1642, %v1643
      %v1645 = vrot.slane %v1514, 5
      %v1646 = vrot.slane %v1645, 4
      %v1647 = vrot.slane %v1515, 5
      %v1648 = vsel %vm1588, %v1646, %v1647
      %v1649 = vrot.slane %v1647, 4
      %v1650 = vrot.slane %v1516, 5
      %v1651 = vsel %vm1588, %v1649, %v1650
      %v1652 = vrot.slane %v1517, 5
      %v1653 = vrot.slane %v1652, 4
      %v1654 = vrot.slane %v1518, 5
      %v1655 = vsel %vm1588, %v1653, %v1654
      %v1656 = vrot.slane %v1654, 4
      %v1657 = vrot.slane %v1519, 5
      %v1658 = vsel %vm1588, %v1656, %v1657
      %v1659 = vrot.slane %v1520, 5
      %v1660 = vrot.slane %v1659, 4
      %v1661 = vrot.slane %v1521, 5
      %v1662 = vsel %vm1588, %v1660, %v1661
      %v1663 = vrot.slane %v1661, 4
      %v1664 = vrot.slane %v1522, 5
      %v1665 = vsel %vm1588, %v1663, %v1664
      %v1666 = vrot.slane %v1523, 5
      %v1667 = vrot.slane %v1666, 4
      %v1668 = vrot.slane %v1524, 5
      %v1669 = vsel %vm1588, %v1667, %v1668
      %v1670 = vrot.slane %v1668, 4
      %v1671 = vrot.slane %v1525, 5
      %v1672 = vsel %vm1588, %v1670, %v1671
      %v1673 = vrot.slane %v1526, 5
      %v1674 = vrot.slane %v1673, 4
      %v1675 = vrot.slane %v1527, 5
      %v1676 = vsel %vm1588, %v1674, %v1675
      %v1677 = vrot.slane %v1675, 4
      %v1678 = vrot.slane %v1528, 5
      %v1679 = vsel %vm1588, %v1677, %v1678
      %v1680 = vrot.slane %v1529, 5
      %v1681 = vrot.slane %v1680, 4
      %v1682 = vrot.slane %v1530, 5
      %v1683 = vsel %vm1588, %v1681, %v1682
      %v1684 = vrot.slane %v1682, 4
      %v1685 = vrot.slane %v1531, 5
      %v1686 = vsel %vm1588, %v1684, %v1685
      %v1687 = vrot.slane %v1532, 5
      %v1688 = vrot.slane %v1687, 4
      %v1689 = vrot.slane %v1533, 5
      %v1690 = vsel %vm1588, %v1688, %v1689
      %v1691 = vrot.slane %v1689, 4
      %v1692 = vrot.slane %v1534, 5
      %v1693 = vsel %vm1588, %v1691, %v1692
      %v1694 = vrot.slane %v1535, 5
      %v1695 = vrot.slane %v1694, 4
      %v1696 = vrot.slane %v1536, 5
      %v1697 = vsel %vm1588, %v1695, %v1696
      %v1698 = vrot.slane %v1696, 4
      %v1699 = vrot.slane %v1537, 5
      %v1700 = vsel %vm1588, %v1698, %v1699
      %v1701 = vunpack.c.l.b16 %v1592
      %v1702 = vunpack.c.l.b16 %v1595
      %v1703 = vunpack.c.l.b16 %v1599
      %v1704 = vunpack.c.l.b16 %v1602
      %v1705 = vunpack.c.l.b16 %v1606
      %v1706 = vunpack.c.l.b16 %v1609
      %v1707 = vunpack.c.l.b16 %v1613
      %v1708 = vunpack.c.l.b16 %v1616
      %v1709 = vunpack.c.l.b16 %v1620
      %v1710 = vunpack.c.l.b16 %v1623
      %v1711 = vunpack.c.l.b16 %v1627
      %v1712 = vunpack.c.l.b16 %v1630
      %v1713 = vunpack.c.l.b16 %v1634
      %v1714 = vunpack.c.l.b16 %v1637
      %v1715 = vunpack.c.l.b16 %v1641
      %v1716 = vunpack.c.l.b16 %v1644
      %v1717 = vunpack.c.l.b16 %v1648
      %v1718 = vunpack.c.l.b16 %v1651
      %v1719 = vunpack.c.l.b16 %v1655
      %v1720 = vunpack.c.l.b16 %v1658
      %v1721 = vunpack.c.l.b16 %v1662
      %v1722 = vunpack.c.l.b16 %v1665
      %v1723 = vunpack.c.l.b16 %v1669
      %v1724 = vunpack.c.l.b16 %v1672
      %v1725 = vunpack.c.l.b16 %v1676
      %v1726 = vunpack.c.l.b16 %v1679
      %v1727 = vunpack.c.l.b16 %v1683
      %v1728 = vunpack.c.l.b16 %v1686
      %v1729 = vunpack.c.l.b16 %v1690
      %v1730 = vunpack.c.l.b16 %v1693
      %v1731 = vunpack.c.l.b16 %v1697
      %v1732 = vunpack.c.l.b16 %v1700
      %v1733 = vpack.c.b16 %v1702, %v1701
      %v1734 = vpack.c.b16 %v1704, %v1703
      %v1735 = vpack.c.b16 %v1706, %v1705
      %v1736 = vpack.c.b16 %v1708, %v1707
      %v1737 = vpack.c.b16 %v1710, %v1709
      %v1738 = vpack.c.b16 %v1712, %v1711
      %v1739 = vpack.c.b16 %v1714, %v1713
      %v1740 = vpack.c.b16 %v1716, %v1715
      %v1741 = vpack.c.b16 %v1718, %v1717
      %v1742 = vpack.c.b16 %v1720, %v1719
      %v1743 = vpack.c.b16 %v1722, %v1721
      %v1744 = vpack.c.b16 %v1724, %v1723
      %v1745 = vpack.c.b16 %v1726, %v1725
      %v1746 = vpack.c.b16 %v1728, %v1727
      %v1747 = vpack.c.b16 %v1730, %v1729
      %v1748 = vpack.c.b16 %v1732, %v1731
      %1749 = vrot.lane.b32.xlu0 %v1733, 8
      %v1750 = vpop.permute.xlu0 %1749
      %1751 = vrot.lane.b32.xlu0 %v1734, 8
      %v1752 = vpop.permute.xlu0 %1751
      %1753 = vrot.lane.b32.xlu0 %v1735, 8
      %v1754 = vpop.permute.xlu0 %1753
      %1755 = vrot.lane.b32.xlu0 %v1736, 8
      %v1756 = vpop.permute.xlu0 %1755
      %1757 = vrot.lane.b32.xlu0 %v1737, 8
      %v1758 = vpop.permute.xlu0 %1757
      %1759 = vrot.lane.b32.xlu0 %v1738, 8
      %v1760 = vpop.permute.xlu0 %1759
      %1761 = vrot.lane.b32.xlu0 %v1739, 8
      %v1762 = vpop.permute.xlu0 %1761
      %1763 = vrot.lane.b32.xlu0 %v1740, 8
      %v1764 = vpop.permute.xlu0 %1763
      %1765 = vrot.lane.b32.xlu0 %v1741, 8
      %v1766 = vpop.permute.xlu0 %1765
      %1767 = vrot.lane.b32.xlu0 %v1742, 8
      %v1768 = vpop.permute.xlu0 %1767
      %1769 = vrot.lane.b32.xlu0 %v1743, 8
      %v1770 = vpop.permute.xlu0 %1769
      %1771 = vrot.lane.b32.xlu0 %v1744, 8
      %v1772 = vpop.permute.xlu0 %1771
      %1773 = vrot.lane.b32.xlu0 %v1745, 8
      %v1774 = vpop.permute.xlu0 %1773
      %1775 = vrot.lane.b32.xlu0 %v1746, 8
      %v1776 = vpop.permute.xlu0 %1775
      %1777 = vrot.lane.b32.xlu0 %v1747, 8
      %v1778 = vpop.permute.xlu0 %1777
      %1779 = vrot.lane.b32.xlu0 %v1748, 8
      %v1780 = vpop.permute.xlu0 %1779
      %vm1797 = vcmask 97344
      %1798 = vst.msk [vmem:[#allocation3] sm:$0xff] %vm1797, %v1750
      %1799 = vst.msk [vmem:[#allocation3 + $0x8] sm:$0xff] %vm1797, %v1752
      %1800 = vst.msk [vmem:[#allocation3 + $0x10] sm:$0xff] %vm1797, %v1754
      %1801 = vst.msk [vmem:[#allocation3 + $0x18] sm:$0xff] %vm1797, %v1756
      %1802 = vst.msk [vmem:[#allocation3 + $0x20] sm:$0xff] %vm1797, %v1758
      %1803 = vst.msk [vmem:[#allocation3 + $0x28] sm:$0xff] %vm1797, %v1760
      %1804 = vst.msk [vmem:[#allocation3 + $0x30] sm:$0xff] %vm1797, %v1762
      %1805 = vst.msk [vmem:[#allocation3 + $0x38] sm:$0xff] %vm1797, %v1764
      %1806 = vst.msk [vmem:[#allocation3 + $0x40] sm:$0xff] %vm1797, %v1766
      %1807 = vst.msk [vmem:[#allocation3 + $0x48] sm:$0xff] %vm1797, %v1768
      %1808 = vst.msk [vmem:[#allocation3 + $0x50] sm:$0xff] %vm1797, %v1770
      %1809 = vst.msk [vmem:[#allocation3 + $0x58] sm:$0xff] %vm1797, %v1772
      %1810 = vst.msk [vmem:[#allocation3 + $0x60] sm:$0xff] %vm1797, %v1774
      %1811 = vst.msk [vmem:[#allocation3 + $0x68] sm:$0xff] %vm1797, %v1776
      %1812 = vst.msk [vmem:[#allocation3 + $0x70] sm:$0xff] %vm1797, %v1778
      %1813 = vst.msk [vmem:[#allocation3 + $0x78] sm:$0xff] %vm1797, %v1780
      %v1814 = vld [vmem:[%s679] sm:$0xf]
      %v1815 = vld [vmem:[%s679 + $0x4] sm:$0xf]
      %v1816 = vld [vmem:[%s679 + $0xc] sm:$0xf]
      %v1817 = vld [vmem:[%s679 + $0x10] sm:$0xf]
      %v1818 = vld [vmem:[%s679 + $0x18] sm:$0xf]
      %v1819 = vld [vmem:[%s679 + $0x1c] sm:$0xf]
      %v1820 = vld [vmem:[%s679 + $0x24] sm:$0xf]
      %v1821 = vld [vmem:[%s679 + $0x28] sm:$0xf]
      %v1822 = vld [vmem:[%s679 + $0x30] sm:$0xf]
      %v1823 = vld [vmem:[%s679 + $0x34] sm:$0xf]
      %v1824 = vld [vmem:[%s679 + $0x3c] sm:$0xf]
      %v1825 = vld [vmem:[%s679 + $0x40] sm:$0xf]
      %v1826 = vld [vmem:[%s679 + $0x48] sm:$0xf]
      %v1827 = vld [vmem:[%s679 + $0x4c] sm:$0xf]
      %v1828 = vld [vmem:[%s679 + $0x54] sm:$0xf]
      %v1829 = vld [vmem:[%s679 + $0x58] sm:$0xf]
      %v1830 = vld [vmem:[%s679 + $0x60] sm:$0xf]
      %v1831 = vld [vmem:[%s679 + $0x64] sm:$0xf]
      %v1832 = vld [vmem:[%s679 + $0x6c] sm:$0xf]
      %v1833 = vld [vmem:[%s679 + $0x70] sm:$0xf]
      %v1834 = vld [vmem:[%s679 + $0x78] sm:$0xf]
      %v1835 = vld [vmem:[%s679 + $0x7c] sm:$0xf]
      %v1836 = vld [vmem:[%s679 + $0x84] sm:$0xf]
      %v1837 = vld [vmem:[%s679 + $0x88] sm:$0xf]
      %v1838 = vld [vmem:[%s679 + $0x90] sm:$0xf]
      %v1839 = vld [vmem:[%s679 + $0x94] sm:$0xf]
      %v1840 = vld [vmem:[%s679 + $0x9c] sm:$0xf]
      %v1841 = vld [vmem:[%s679 + $0xa0] sm:$0xf]
      %v1842 = vld [vmem:[%s679 + $0xa8] sm:$0xf]
      %v1843 = vld [vmem:[%s679 + $0xac] sm:$0xf]
      %v1844 = vld [vmem:[%s679 + $0xb4] sm:$0xf]
      %v1845 = vld [vmem:[%s679 + $0xb8] sm:$0xf]
      %v1878 = vunpack.c.l.b16 %v1814
      %v1879 = vunpack.c.l.b16 %v1815
      %v1880 = vunpack.c.l.b16 %v1816
      %v1881 = vunpack.c.l.b16 %v1817
      %v1882 = vunpack.c.l.b16 %v1818
      %v1883 = vunpack.c.l.b16 %v1819
      %v1884 = vunpack.c.l.b16 %v1820
      %v1885 = vunpack.c.l.b16 %v1821
      %v1886 = vunpack.c.l.b16 %v1822
      %v1887 = vunpack.c.l.b16 %v1823
      %v1888 = vunpack.c.l.b16 %v1824
      %v1889 = vunpack.c.l.b16 %v1825
      %v1890 = vunpack.c.l.b16 %v1826
      %v1891 = vunpack.c.l.b16 %v1827
      %v1892 = vunpack.c.l.b16 %v1828
      %v1893 = vunpack.c.l.b16 %v1829
      %v1894 = vunpack.c.l.b16 %v1830
      %v1895 = vunpack.c.l.b16 %v1831
      %v1896 = vunpack.c.l.b16 %v1832
      %v1897 = vunpack.c.l.b16 %v1833
      %v1898 = vunpack.c.l.b16 %v1834
      %v1899 = vunpack.c.l.b16 %v1835
      %v1900 = vunpack.c.l.b16 %v1836
      %v1901 = vunpack.c.l.b16 %v1837
      %v1902 = vunpack.c.l.b16 %v1838
      %v1903 = vunpack.c.l.b16 %v1839
      %v1904 = vunpack.c.l.b16 %v1840
      %v1905 = vunpack.c.l.b16 %v1841
      %v1906 = vunpack.c.l.b16 %v1842
      %v1907 = vunpack.c.l.b16 %v1843
      %v1908 = vunpack.c.l.b16 %v1844
      %v1909 = vunpack.c.l.b16 %v1845
      %v1910 = vpack.c.b16 %v1879, %v1878
      %v1911 = vpack.c.b16 %v1881, %v1880
      %v1912 = vpack.c.b16 %v1883, %v1882
      %v1913 = vpack.c.b16 %v1885, %v1884
      %v1914 = vpack.c.b16 %v1887, %v1886
      %v1915 = vpack.c.b16 %v1889, %v1888
      %v1916 = vpack.c.b16 %v1891, %v1890
      %v1917 = vpack.c.b16 %v1893, %v1892
      %v1918 = vpack.c.b16 %v1895, %v1894
      %v1919 = vpack.c.b16 %v1897, %v1896
      %v1920 = vpack.c.b16 %v1899, %v1898
      %v1921 = vpack.c.b16 %v1901, %v1900
      %v1922 = vpack.c.b16 %v1903, %v1902
      %v1923 = vpack.c.b16 %v1905, %v1904
      %v1924 = vpack.c.b16 %v1907, %v1906
      %v1925 = vpack.c.b16 %v1909, %v1908
      %1926 = vrot.lane.b32.xlu0 %v1910, 12
      %v1927 = vpop.permute.xlu0 %1926
      %1928 = vrot.lane.b32.xlu0 %v1911, 12
      %v1929 = vpop.permute.xlu0 %1928
      %1930 = vrot.lane.b32.xlu0 %v1912, 12
      %v1931 = vpop.permute.xlu0 %1930
      %1932 = vrot.lane.b32.xlu0 %v1913, 12
      %v1933 = vpop.permute.xlu0 %1932
      %1934 = vrot.lane.b32.xlu0 %v1914, 12
      %v1935 = vpop.permute.xlu0 %1934
      %1936 = vrot.lane.b32.xlu0 %v1915, 12
      %v1937 = vpop.permute.xlu0 %1936
      %1938 = vrot.lane.b32.xlu0 %v1916, 12
      %v1939 = vpop.permute.xlu0 %1938
      %1940 = vrot.lane.b32.xlu0 %v1917, 12
      %v1941 = vpop.permute.xlu0 %1940
      %1942 = vrot.lane.b32.xlu0 %v1918, 12
      %v1943 = vpop.permute.xlu0 %1942
      %1944 = vrot.lane.b32.xlu0 %v1919, 12
      %v1945 = vpop.permute.xlu0 %1944
      %1946 = vrot.lane.b32.xlu0 %v1920, 12
      %v1947 = vpop.permute.xlu0 %1946
      %1948 = vrot.lane.b32.xlu0 %v1921, 12
      %v1949 = vpop.permute.xlu0 %1948
      %1950 = vrot.lane.b32.xlu0 %v1922, 12
      %v1951 = vpop.permute.xlu0 %1950
      %1952 = vrot.lane.b32.xlu0 %v1923, 12
      %v1953 = vpop.permute.xlu0 %1952
      %1954 = vrot.lane.b32.xlu0 %v1924, 12
      %v1955 = vpop.permute.xlu0 %1954
      %1956 = vrot.lane.b32.xlu0 %v1925, 12
      %v1957 = vpop.permute.xlu0 %1956
      %vm1974 = vcmask 130144
      %1975 = vst.msk [vmem:[#allocation3] sm:$0xff] %vm1974, %v1927
      %1976 = vst.msk [vmem:[#allocation3 + $0x8] sm:$0xff] %vm1974, %v1929
      %1977 = vst.msk [vmem:[#allocation3 + $0x10] sm:$0xff] %vm1974, %v1931
      %1978 = vst.msk [vmem:[#allocation3 + $0x18] sm:$0xff] %vm1974, %v1933
      %1979 = vst.msk [vmem:[#allocation3 + $0x20] sm:$0xff] %vm1974, %v1935
      %1980 = vst.msk [vmem:[#allocation3 + $0x28] sm:$0xff] %vm1974, %v1937
      %1981 = vst.msk [vmem:[#allocation3 + $0x30] sm:$0xff] %vm1974, %v1939
      %1982 = vst.msk [vmem:[#allocation3 + $0x38] sm:$0xff] %vm1974, %v1941
      %1983 = vst.msk [vmem:[#allocation3 + $0x40] sm:$0xff] %vm1974, %v1943
      %1984 = vst.msk [vmem:[#allocation3 + $0x48] sm:$0xff] %vm1974, %v1945
      %1985 = vst.msk [vmem:[#allocation3 + $0x50] sm:$0xff] %vm1974, %v1947
      %1986 = vst.msk [vmem:[#allocation3 + $0x58] sm:$0xff] %vm1974, %v1949
      %1987 = vst.msk [vmem:[#allocation3 + $0x60] sm:$0xff] %vm1974, %v1951
      %1988 = vst.msk [vmem:[#allocation3 + $0x68] sm:$0xff] %vm1974, %v1953
      %1989 = vst.msk [vmem:[#allocation3 + $0x70] sm:$0xff] %vm1974, %v1955
      %1990 = vst.msk [vmem:[#allocation3 + $0x78] sm:$0xff] %vm1974, %v1957
      %v1991 = vld [vmem:[%s679] sm:$0xf]
      %v1992 = vld [vmem:[%s679 + $0x4] sm:$0xf]
      %v1993 = vld [vmem:[%s679 + $0x8] sm:$0x1]
      %v1994 = vld [vmem:[%s679 + $0xc] sm:$0xf]
      %v1995 = vld [vmem:[%s679 + $0x10] sm:$0xf]
      %v1996 = vld [vmem:[%s679 + $0x14] sm:$0x1]
      %v1997 = vld [vmem:[%s679 + $0x18] sm:$0xf]
      %v1998 = vld [vmem:[%s679 + $0x1c] sm:$0xf]
      %v1999 = vld [vmem:[%s679 + $0x20] sm:$0x1]
      %v2000 = vld [vmem:[%s679 + $0x24] sm:$0xf]
      %v2001 = vld [vmem:[%s679 + $0x28] sm:$0xf]
      %v2002 = vld [vmem:[%s679 + $0x2c] sm:$0x1]
      %v2003 = vld [vmem:[%s679 + $0x30] sm:$0xf]
      %v2004 = vld [vmem:[%s679 + $0x34] sm:$0xf]
      %v2005 = vld [vmem:[%s679 + $0x38] sm:$0x1]
      %v2006 = vld [vmem:[%s679 + $0x3c] sm:$0xf]
      %v2007 = vld [vmem:[%s679 + $0x40] sm:$0xf]
      %v2008 = vld [vmem:[%s679 + $0x44] sm:$0x1]
      %v2009 = vld [vmem:[%s679 + $0x48] sm:$0xf]
      %v2010 = vld [vmem:[%s679 + $0x4c] sm:$0xf]
      %v2011 = vld [vmem:[%s679 + $0x50] sm:$0x1]
      %v2012 = vld [vmem:[%s679 + $0x54] sm:$0xf]
      %v2013 = vld [vmem:[%s679 + $0x58] sm:$0xf]
      %v2014 = vld [vmem:[%s679 + $0x5c] sm:$0x1]
      %v2015 = vld [vmem:[%s679 + $0x60] sm:$0xf]
      %v2016 = vld [vmem:[%s679 + $0x64] sm:$0xf]
      %v2017 = vld [vmem:[%s679 + $0x68] sm:$0x1]
      %v2018 = vld [vmem:[%s679 + $0x6c] sm:$0xf]
      %v2019 = vld [vmem:[%s679 + $0x70] sm:$0xf]
      %v2020 = vld [vmem:[%s679 + $0x74] sm:$0x1]
      %v2021 = vld [vmem:[%s679 + $0x78] sm:$0xf]
      %v2022 = vld [vmem:[%s679 + $0x7c] sm:$0xf]
      %v2023 = vld [vmem:[%s679 + $0x80] sm:$0x1]
      %v2024 = vld [vmem:[%s679 + $0x84] sm:$0xf]
      %v2025 = vld [vmem:[%s679 + $0x88] sm:$0xf]
      %v2026 = vld [vmem:[%s679 + $0x8c] sm:$0x1]
      %v2027 = vld [vmem:[%s679 + $0x90] sm:$0xf]
      %v2028 = vld [vmem:[%s679 + $0x94] sm:$0xf]
      %v2029 = vld [vmem:[%s679 + $0x98] sm:$0x1]
      %v2030 = vld [vmem:[%s679 + $0x9c] sm:$0xf]
      %v2031 = vld [vmem:[%s679 + $0xa0] sm:$0xf]
      %v2032 = vld [vmem:[%s679 + $0xa4] sm:$0x1]
      %v2033 = vld [vmem:[%s679 + $0xa8] sm:$0xf]
      %v2034 = vld [vmem:[%s679 + $0xac] sm:$0xf]
      %v2035 = vld [vmem:[%s679 + $0xb0] sm:$0x1]
      %v2036 = vld [vmem:[%s679 + $0xb4] sm:$0xf]
      %v2037 = vld [vmem:[%s679 + $0xb8] sm:$0xf]
      %v2038 = vld [vmem:[%s679 + $0xbc] sm:$0x1]
      %v2040 = vshrl.u32 %v1991, 16
      %v2042 = vrot.slane %v2040, 4
      %v2043 = vshll.u32 %v1991, 16
      %v2045 = vrot.slane %v2043, 5
      %v2046 = vor.u32 %v2042, %v2045
      %v2047 = vrot.slane %v2046, 4
      %v2049 = vshll.u32 %v1992, 16
      %v2051 = vrot.slane %v2049, 5
      %v2052 = vsel %vm992, %v2047, %v2051
      %v2053 = vshrl.u32 %v1992, 16
      %v2055 = vrot.slane %v2053, 4
      %v2056 = vor.u32 %v2055, %v2051
      %v2057 = vrot.slane %v2056, 4
      %v2059 = vshll.u32 %v1993, 16
      %v2061 = vrot.slane %v2059, 5
      %v2062 = vsel %vm992, %v2057, %v2061
      %v2064 = vshrl.u32 %v1994, 16
      %v2066 = vrot.slane %v2064, 4
      %v2067 = vshll.u32 %v1994, 16
      %v2069 = vrot.slane %v2067, 5
      %v2070 = vor.u32 %v2066, %v2069
      %v2071 = vrot.slane %v2070, 4
      %v2073 = vshll.u32 %v1995, 16
      %v2075 = vrot.slane %v2073, 5
      %v2076 = vsel %vm992, %v2071, %v2075
      %v2077 = vshrl.u32 %v1995, 16
      %v2079 = vrot.slane %v2077, 4
      %v2080 = vor.u32 %v2079, %v2075
      %v2081 = vrot.slane %v2080, 4
      %v2083 = vshll.u32 %v1996, 16
      %v2085 = vrot.slane %v2083, 5
      %v2086 = vsel %vm992, %v2081, %v2085
      %v2088 = vshrl.u32 %v1997, 16
      %v2090 = vrot.slane %v2088, 4
      %v2091 = vshll.u32 %v1997, 16
      %v2093 = vrot.slane %v2091, 5
      %v2094 = vor.u32 %v2090, %v2093
      %v2095 = vrot.slane %v2094, 4
      %v2097 = vshll.u32 %v1998, 16
      %v2099 = vrot.slane %v2097, 5
      %v2100 = vsel %vm992, %v2095, %v2099
      %v2101 = vshrl.u32 %v1998, 16
      %v2103 = vrot.slane %v2101, 4
      %v2104 = vor.u32 %v2103, %v2099
      %v2105 = vrot.slane %v2104, 4
      %v2107 = vshll.u32 %v1999, 16
      %v2109 = vrot.slane %v2107, 5
      %v2110 = vsel %vm992, %v2105, %v2109
      %v2112 = vshrl.u32 %v2000, 16
      %v2114 = vrot.slane %v2112, 4
      %v2115 = vshll.u32 %v2000, 16
      %v2117 = vrot.slane %v2115, 5
      %v2118 = vor.u32 %v2114, %v2117
      %v2119 = vrot.slane %v2118, 4
      %v2121 = vshll.u32 %v2001, 16
      %v2123 = vrot.slane %v2121, 5
      %v2124 = vsel %vm992, %v2119, %v2123
      %v2125 = vshrl.u32 %v2001, 16
      %v2127 = vrot.slane %v2125, 4
      %v2128 = vor.u32 %v2127, %v2123
      %v2129 = vrot.slane %v2128, 4
      %v2131 = vshll.u32 %v2002, 16
      %v2133 = vrot.slane %v2131, 5
      %v2134 = vsel %vm992, %v2129, %v2133
      %v2136 = vshrl.u32 %v2003, 16
      %v2138 = vrot.slane %v2136, 4
      %v2139 = vshll.u32 %v2003, 16
      %v2141 = vrot.slane %v2139, 5
      %v2142 = vor.u32 %v2138, %v2141
      %v2143 = vrot.slane %v2142, 4
      %v2145 = vshll.u32 %v2004, 16
      %v2147 = vrot.slane %v2145, 5
      %v2148 = vsel %vm992, %v2143, %v2147
      %v2149 = vshrl.u32 %v2004, 16
      %v2151 = vrot.slane %v2149, 4
      %v2152 = vor.u32 %v2151, %v2147
      %v2153 = vrot.slane %v2152, 4
      %v2155 = vshll.u32 %v2005, 16
      %v2157 = vrot.slane %v2155, 5
      %v2158 = vsel %vm992, %v2153, %v2157
      %v2160 = vshrl.u32 %v2006, 16
      %v2162 = vrot.slane %v2160, 4
      %v2163 = vshll.u32 %v2006, 16
      %v2165 = vrot.slane %v2163, 5
      %v2166 = vor.u32 %v2162, %v2165
      %v2167 = vrot.slane %v2166, 4
      %v2169 = vshll.u32 %v2007, 16
      %v2171 = vrot.slane %v2169, 5
      %v2172 = vsel %vm992, %v2167, %v2171
      %v2173 = vshrl.u32 %v2007, 16
      %v2175 = vrot.slane %v2173, 4
      %v2176 = vor.u32 %v2175, %v2171
      %v2177 = vrot.slane %v2176, 4
      %v2179 = vshll.u32 %v2008, 16
      %v2181 = vrot.slane %v2179, 5
      %v2182 = vsel %vm992, %v2177, %v2181
      %v2184 = vshrl.u32 %v2009, 16
      %v2186 = vrot.slane %v2184, 4
      %v2187 = vshll.u32 %v2009, 16
      %v2189 = vrot.slane %v2187, 5
      %v2190 = vor.u32 %v2186, %v2189
      %v2191 = vrot.slane %v2190, 4
      %v2193 = vshll.u32 %v2010, 16
      %v2195 = vrot.slane %v2193, 5
      %v2196 = vsel %vm992, %v2191, %v2195
      %v2197 = vshrl.u32 %v2010, 16
      %v2199 = vrot.slane %v2197, 4
      %v2200 = vor.u32 %v2199, %v2195
      %v2201 = vrot.slane %v2200, 4
      %v2203 = vshll.u32 %v2011, 16
      %v2205 = vrot.slane %v2203, 5
      %v2206 = vsel %vm992, %v2201, %v2205
      %v2208 = vshrl.u32 %v2012, 16
      %v2210 = vrot.slane %v2208, 4
      %v2211 = vshll.u32 %v2012, 16
      %v2213 = vrot.slane %v2211, 5
      %v2214 = vor.u32 %v2210, %v2213
      %v2215 = vrot.slane %v2214, 4
      %v2217 = vshll.u32 %v2013, 16
      %v2219 = vrot.slane %v2217, 5
      %v2220 = vsel %vm992, %v2215, %v2219
      %v2221 = vshrl.u32 %v2013, 16
      %v2223 = vrot.slane %v2221, 4
      %v2224 = vor.u32 %v2223, %v2219
      %v2225 = vrot.slane %v2224, 4
      %v2227 = vshll.u32 %v2014, 16
      %v2229 = vrot.slane %v2227, 5
      %v2230 = vsel %vm992, %v2225, %v2229
      %v2232 = vshrl.u32 %v2015, 16
      %v2234 = vrot.slane %v2232, 4
      %v2235 = vshll.u32 %v2015, 16
      %v2237 = vrot.slane %v2235, 5
      %v2238 = vor.u32 %v2234, %v2237
      %v2239 = vrot.slane %v2238, 4
      %v2241 = vshll.u32 %v2016, 16
      %v2243 = vrot.slane %v2241, 5
      %v2244 = vsel %vm992, %v2239, %v2243
      %v2245 = vshrl.u32 %v2016, 16
      %v2247 = vrot.slane %v2245, 4
      %v2248 = vor.u32 %v2247, %v2243
      %v2249 = vrot.slane %v2248, 4
      %v2251 = vshll.u32 %v2017, 16
      %v2253 = vrot.slane %v2251, 5
      %v2254 = vsel %vm992, %v2249, %v2253
      %v2256 = vshrl.u32 %v2018, 16
      %v2258 = vrot.slane %v2256, 4
      %v2259 = vshll.u32 %v2018, 16
      %v2261 = vrot.slane %v2259, 5
      %v2262 = vor.u32 %v2258, %v2261
      %v2263 = vrot.slane %v2262, 4
      %v2265 = vshll.u32 %v2019, 16
      %v2267 = vrot.slane %v2265, 5
      %v2268 = vsel %vm992, %v2263, %v2267
      %v2269 = vshrl.u32 %v2019, 16
      %v2271 = vrot.slane %v2269, 4
      %v2272 = vor.u32 %v2271, %v2267
      %v2273 = vrot.slane %v2272, 4
      %v2275 = vshll.u32 %v2020, 16
      %v2277 = vrot.slane %v2275, 5
      %v2278 = vsel %vm992, %v2273, %v2277
      %v2280 = vshrl.u32 %v2021, 16
      %v2282 = vrot.slane %v2280, 4
      %v2283 = vshll.u32 %v2021, 16
      %v2285 = vrot.slane %v2283, 5
      %v2286 = vor.u32 %v2282, %v2285
      %v2287 = vrot.slane %v2286, 4
      %v2289 = vshll.u32 %v2022, 16
      %v2291 = vrot.slane %v2289, 5
      %v2292 = vsel %vm992, %v2287, %v2291
      %v2293 = vshrl.u32 %v2022, 16
      %v2295 = vrot.slane %v2293, 4
      %v2296 = vor.u32 %v2295, %v2291
      %v2297 = vrot.slane %v2296, 4
      %v2299 = vshll.u32 %v2023, 16
      %v2301 = vrot.slane %v2299, 5
      %v2302 = vsel %vm992, %v2297, %v2301
      %v2304 = vshrl.u32 %v2024, 16
      %v2306 = vrot.slane %v2304, 4
      %v2307 = vshll.u32 %v2024, 16
      %v2309 = vrot.slane %v2307, 5
      %v2310 = vor.u32 %v2306, %v2309
      %v2311 = vrot.slane %v2310, 4
      %v2313 = vshll.u32 %v2025, 16
      %v2315 = vrot.slane %v2313, 5
      %v2316 = vsel %vm992, %v2311, %v2315
      %v2317 = vshrl.u32 %v2025, 16
      %v2319 = vrot.slane %v2317, 4
      %v2320 = vor.u32 %v2319, %v2315
      %v2321 = vrot.slane %v2320, 4
      %v2323 = vshll.u32 %v2026, 16
      %v2325 = vrot.slane %v2323, 5
      %v2326 = vsel %vm992, %v2321, %v2325
      %v2328 = vshrl.u32 %v2027, 16
      %v2330 = vrot.slane %v2328, 4
      %v2331 = vshll.u32 %v2027, 16
      %v2333 = vrot.slane %v2331, 5
      %v2334 = vor.u32 %v2330, %v2333
      %v2335 = vrot.slane %v2334, 4
      %v2337 = vshll.u32 %v2028, 16
      %v2339 = vrot.slane %v2337, 5
      %v2340 = vsel %vm992, %v2335, %v2339
      %v2341 = vshrl.u32 %v2028, 16
      %v2343 = vrot.slane %v2341, 4
      %v2344 = vor.u32 %v2343, %v2339
      %v2345 = vrot.slane %v2344, 4
      %v2347 = vshll.u32 %v2029, 16
      %v2349 = vrot.slane %v2347, 5
      %v2350 = vsel %vm992, %v2345, %v2349
      %v2352 = vshrl.u32 %v2030, 16
      %v2354 = vrot.slane %v2352, 4
      %v2355 = vshll.u32 %v2030, 16
      %v2357 = vrot.slane %v2355, 5
      %v2358 = vor.u32 %v2354, %v2357
      %v2359 = vrot.slane %v2358, 4
      %v2361 = vshll.u32 %v2031, 16
      %v2363 = vrot.slane %v2361, 5
      %v2364 = vsel %vm992, %v2359, %v2363
      %v2365 = vshrl.u32 %v2031, 16
      %v2367 = vrot.slane %v2365, 4
      %v2368 = vor.u32 %v2367, %v2363
      %v2369 = vrot.slane %v2368, 4
      %v2371 = vshll.u32 %v2032, 16
      %v2373 = vrot.slane %v2371, 5
      %v2374 = vsel %vm992, %v2369, %v2373
      %v2376 = vshrl.u32 %v2033, 16
      %v2378 = vrot.slane %v2376, 4
      %v2379 = vshll.u32 %v2033, 16
      %v2381 = vrot.slane %v2379, 5
      %v2382 = vor.u32 %v2378, %v2381
      %v2383 = vrot.slane %v2382, 4
      %v2385 = vshll.u32 %v2034, 16
      %v2387 = vrot.slane %v2385, 5
      %v2388 = vsel %vm992, %v2383, %v2387
      %v2389 = vshrl.u32 %v2034, 16
      %v2391 = vrot.slane %v2389, 4
      %v2392 = vor.u32 %v2391, %v2387
      %v2393 = vrot.slane %v2392, 4
      %v2395 = vshll.u32 %v2035, 16
      %v2397 = vrot.slane %v2395, 5
      %v2398 = vsel %vm992, %v2393, %v2397
      %v2400 = vshrl.u32 %v2036, 16
      %v2402 = vrot.slane %v2400, 4
      %v2403 = vshll.u32 %v2036, 16
      %v2405 = vrot.slane %v2403, 5
      %v2406 = vor.u32 %v2402, %v2405
      %v2407 = vrot.slane %v2406, 4
      %v2409 = vshll.u32 %v2037, 16
      %v2411 = vrot.slane %v2409, 5
      %v2412 = vsel %vm992, %v2407, %v2411
      %v2413 = vshrl.u32 %v2037, 16
      %v2415 = vrot.slane %v2413, 4
      %v2416 = vor.u32 %v2415, %v2411
      %v2417 = vrot.slane %v2416, 4
      %v2419 = vshll.u32 %v2038, 16
      %v2421 = vrot.slane %v2419, 5
      %v2422 = vsel %vm992, %v2417, %v2421
      %v2423 = vunpack.c.l.b16 %v2052
      %v2424 = vunpack.c.l.b16 %v2062
      %v2425 = vunpack.c.l.b16 %v2076
      %v2426 = vunpack.c.l.b16 %v2086
      %v2427 = vunpack.c.l.b16 %v2100
      %v2428 = vunpack.c.l.b16 %v2110
      %v2429 = vunpack.c.l.b16 %v2124
      %v2430 = vunpack.c.l.b16 %v2134
      %v2431 = vunpack.c.l.b16 %v2148
      %v2432 = vunpack.c.l.b16 %v2158
      %v2433 = vunpack.c.l.b16 %v2172
      %v2434 = vunpack.c.l.b16 %v2182
      %v2435 = vunpack.c.l.b16 %v2196
      %v2436 = vunpack.c.l.b16 %v2206
      %v2437 = vunpack.c.l.b16 %v2220
      %v2438 = vunpack.c.l.b16 %v2230
      %v2439 = vunpack.c.l.b16 %v2244
      %v2440 = vunpack.c.l.b16 %v2254
      %v2441 = vunpack.c.l.b16 %v2268
      %v2442 = vunpack.c.l.b16 %v2278
      %v2443 = vunpack.c.l.b16 %v2292
      %v2444 = vunpack.c.l.b16 %v2302
      %v2445 = vunpack.c.l.b16 %v2316
      %v2446 = vunpack.c.l.b16 %v2326
      %v2447 = vunpack.c.l.b16 %v2340
      %v2448 = vunpack.c.l.b16 %v2350
      %v2449 = vunpack.c.l.b16 %v2364
      %v2450 = vunpack.c.l.b16 %v2374
      %v2451 = vunpack.c.l.b16 %v2388
      %v2452 = vunpack.c.l.b16 %v2398
      %v2453 = vunpack.c.l.b16 %v2412
      %v2454 = vunpack.c.l.b16 %v2422
      %v2455 = vpack.c.b16 %v2424, %v2423
      %v2456 = vpack.c.b16 %v2426, %v2425
      %v2457 = vpack.c.b16 %v2428, %v2427
      %v2458 = vpack.c.b16 %v2430, %v2429
      %v2459 = vpack.c.b16 %v2432, %v2431
      %v2460 = vpack.c.b16 %v2434, %v2433
      %v2461 = vpack.c.b16 %v2436, %v2435
      %v2462 = vpack.c.b16 %v2438, %v2437
      %v2463 = vpack.c.b16 %v2440, %v2439
      %v2464 = vpack.c.b16 %v2442, %v2441
      %v2465 = vpack.c.b16 %v2444, %v2443
      %v2466 = vpack.c.b16 %v2446, %v2445
      %v2467 = vpack.c.b16 %v2448, %v2447
      %v2468 = vpack.c.b16 %v2450, %v2449
      %v2469 = vpack.c.b16 %v2452, %v2451
      %v2470 = vpack.c.b16 %v2454, %v2453
      %2471 = vrot.lane.b32.xlu0 %v2455, 16
      %v2472 = vpop.permute.xlu0 %2471
      %2473 = vrot.lane.b32.xlu0 %v2456, 16
      %v2474 = vpop.permute.xlu0 %2473
      %2475 = vrot.lane.b32.xlu0 %v2457, 16
      %v2476 = vpop.permute.xlu0 %2475
      %2477 = vrot.lane.b32.xlu0 %v2458, 16
      %v2478 = vpop.permute.xlu0 %2477
      %2479 = vrot.lane.b32.xlu0 %v2459, 16
      %v2480 = vpop.permute.xlu0 %2479
      %2481 = vrot.lane.b32.xlu0 %v2460, 16
      %v2482 = vpop.permute.xlu0 %2481
      %2483 = vrot.lane.b32.xlu0 %v2461, 16
      %v2484 = vpop.permute.xlu0 %2483
      %2485 = vrot.lane.b32.xlu0 %v2462, 16
      %v2486 = vpop.permute.xlu0 %2485
      %2487 = vrot.lane.b32.xlu0 %v2463, 16
      %v2488 = vpop.permute.xlu0 %2487
      %2489 = vrot.lane.b32.xlu0 %v2464, 16
      %v2490 = vpop.permute.xlu0 %2489
      %2491 = vrot.lane.b32.xlu0 %v2465, 16
      %v2492 = vpop.permute.xlu0 %2491
      %2493 = vrot.lane.b32.xlu0 %v2466, 16
      %v2494 = vpop.permute.xlu0 %2493
      %2495 = vrot.lane.b32.xlu0 %v2467, 16
      %v2496 = vpop.permute.xlu0 %2495
      %2497 = vrot.lane.b32.xlu0 %v2468, 16
      %v2498 = vpop.permute.xlu0 %2497
      %2499 = vrot.lane.b32.xlu0 %v2469, 16
      %v2500 = vpop.permute.xlu0 %2499
      %2501 = vrot.lane.b32.xlu0 %v2470, 16
      %v2502 = vpop.permute.xlu0 %2501
      %vm2519 = vcmask 162944
      %2520 = vst.msk [vmem:[#allocation3] sm:$0xff] %vm2519, %v2472
      %2521 = vst.msk [vmem:[#allocation3 + $0x8] sm:$0xff] %vm2519, %v2474
      %2522 = vst.msk [vmem:[#allocation3 + $0x10] sm:$0xff] %vm2519, %v2476
      %2523 = vst.msk [vmem:[#allocation3 + $0x18] sm:$0xff] %vm2519, %v2478
      %2524 = vst.msk [vmem:[#allocation3 + $0x20] sm:$0xff] %vm2519, %v2480
      %2525 = vst.msk [vmem:[#allocation3 + $0x28] sm:$0xff] %vm2519, %v2482
      %2526 = vst.msk [vmem:[#allocation3 + $0x30] sm:$0xff] %vm2519, %v2484
      %2527 = vst.msk [vmem:[#allocation3 + $0x38] sm:$0xff] %vm2519, %v2486
      %2528 = vst.msk [vmem:[#allocation3 + $0x40] sm:$0xff] %vm2519, %v2488
      %2529 = vst.msk [vmem:[#allocation3 + $0x48] sm:$0xff] %vm2519, %v2490
      %2530 = vst.msk [vmem:[#allocation3 + $0x50] sm:$0xff] %vm2519, %v2492
      %2531 = vst.msk [vmem:[#allocation3 + $0x58] sm:$0xff] %vm2519, %v2494
      %2532 = vst.msk [vmem:[#allocation3 + $0x60] sm:$0xff] %vm2519, %v2496
      %2533 = vst.msk [vmem:[#allocation3 + $0x68] sm:$0xff] %vm2519, %v2498
      %2534 = vst.msk [vmem:[#allocation3 + $0x70] sm:$0xff] %vm2519, %v2500
      %2535 = vst.msk [vmem:[#allocation3 + $0x78] sm:$0xff] %vm2519, %v2502
      %v2536 = vld [vmem:[%s679] sm:$0xe]
      %v2537 = vld [vmem:[%s679 + $0x4] sm:$0xf]
      %v2538 = vld [vmem:[%s679 + $0x8] sm:$0x1]
      %v2539 = vld [vmem:[%s679 + $0xc] sm:$0xe]
      %v2540 = vld [vmem:[%s679 + $0x10] sm:$0xf]
      %v2541 = vld [vmem:[%s679 + $0x14] sm:$0x1]
      %v2542 = vld [vmem:[%s679 + $0x18] sm:$0xe]
      %v2543 = vld [vmem:[%s679 + $0x1c] sm:$0xf]
      %v2544 = vld [vmem:[%s679 + $0x20] sm:$0x1]
      %v2545 = vld [vmem:[%s679 + $0x24] sm:$0xe]
      %v2546 = vld [vmem:[%s679 + $0x28] sm:$0xf]
      %v2547 = vld [vmem:[%s679 + $0x2c] sm:$0x1]
      %v2548 = vld [vmem:[%s679 + $0x30] sm:$0xe]
      %v2549 = vld [vmem:[%s679 + $0x34] sm:$0xf]
      %v2550 = vld [vmem:[%s679 + $0x38] sm:$0x1]
      %v2551 = vld [vmem:[%s679 + $0x3c] sm:$0xe]
      %v2552 = vld [vmem:[%s679 + $0x40] sm:$0xf]
      %v2553 = vld [vmem:[%s679 + $0x44] sm:$0x1]
      %v2554 = vld [vmem:[%s679 + $0x48] sm:$0xe]
      %v2555 = vld [vmem:[%s679 + $0x4c] sm:$0xf]
      %v2556 = vld [vmem:[%s679 + $0x50] sm:$0x1]
      %v2557 = vld [vmem:[%s679 + $0x54] sm:$0xe]
      %v2558 = vld [vmem:[%s679 + $0x58] sm:$0xf]
      %v2559 = vld [vmem:[%s679 + $0x5c] sm:$0x1]
      %v2560 = vld [vmem:[%s679 + $0x60] sm:$0xe]
      %v2561 = vld [vmem:[%s679 + $0x64] sm:$0xf]
      %v2562 = vld [vmem:[%s679 + $0x68] sm:$0x1]
      %v2563 = vld [vmem:[%s679 + $0x6c] sm:$0xe]
      %v2564 = vld [vmem:[%s679 + $0x70] sm:$0xf]
      %v2565 = vld [vmem:[%s679 + $0x74] sm:$0x1]
      %v2566 = vld [vmem:[%s679 + $0x78] sm:$0xe]
      %v2567 = vld [vmem:[%s679 + $0x7c] sm:$0xf]
      %v2568 = vld [vmem:[%s679 + $0x80] sm:$0x1]
      %v2569 = vld [vmem:[%s679 + $0x84] sm:$0xe]
      %v2570 = vld [vmem:[%s679 + $0x88] sm:$0xf]
      %v2571 = vld [vmem:[%s679 + $0x8c] sm:$0x1]
      %v2572 = vld [vmem:[%s679 + $0x90] sm:$0xe]
      %v2573 = vld [vmem:[%s679 + $0x94] sm:$0xf]
      %v2574 = vld [vmem:[%s679 + $0x98] sm:$0x1]
      %v2575 = vld [vmem:[%s679 + $0x9c] sm:$0xe]
      %v2576 = vld [vmem:[%s679 + $0xa0] sm:$0xf]
      %v2577 = vld [vmem:[%s679 + $0xa4] sm:$0x1]
      %v2578 = vld [vmem:[%s679 + $0xa8] sm:$0xe]
      %v2579 = vld [vmem:[%s679 + $0xac] sm:$0xf]
      %v2580 = vld [vmem:[%s679 + $0xb0] sm:$0x1]
      %v2581 = vld [vmem:[%s679 + $0xb4] sm:$0xe]
      %v2582 = vld [vmem:[%s679 + $0xb8] sm:$0xf]
      %v2583 = vld [vmem:[%s679 + $0xbc] sm:$0x1]
      %v2632 = vrot.slane %v2536, 5
      %v2633 = vrot.slane %v2632, 4
      %v2634 = vrot.slane %v2537, 5
      %v2635 = vsel %vm1588, %v2633, %v2634
      %v2636 = vrot.slane %v2634, 4
      %v2637 = vrot.slane %v2538, 5
      %v2638 = vsel %vm1588, %v2636, %v2637
      %v2639 = vrot.slane %v2539, 5
      %v2640 = vrot.slane %v2639, 4
      %v2641 = vrot.slane %v2540, 5
      %v2642 = vsel %vm1588, %v2640, %v2641
      %v2643 = vrot.slane %v2641, 4
      %v2644 = vrot.slane %v2541, 5
      %v2645 = vsel %vm1588, %v2643, %v2644
      %v2646 = vrot.slane %v2542, 5
      %v2647 = vrot.slane %v2646, 4
      %v2648 = vrot.slane %v2543, 5
      %v2649 = vsel %vm1588, %v2647, %v2648
      %v2650 = vrot.slane %v2648, 4
      %v2651 = vrot.slane %v2544, 5
      %v2652 = vsel %vm1588, %v2650, %v2651
      %v2653 = vrot.slane %v2545, 5
      %v2654 = vrot.slane %v2653, 4
      %v2655 = vrot.slane %v2546, 5
      %v2656 = vsel %vm1588, %v2654, %v2655
      %v2657 = vrot.slane %v2655, 4
      %v2658 = vrot.slane %v2547, 5
      %v2659 = vsel %vm1588, %v2657, %v2658
      %v2660 = vrot.slane %v2548, 5
      %v2661 = vrot.slane %v2660, 4
      %v2662 = vrot.slane %v2549, 5
      %v2663 = vsel %vm1588, %v2661, %v2662
      %v2664 = vrot.slane %v2662, 4
      %v2665 = vrot.slane %v2550, 5
      %v2666 = vsel %vm1588, %v2664, %v2665
      %v2667 = vrot.slane %v2551, 5
      %v2668 = vrot.slane %v2667, 4
      %v2669 = vrot.slane %v2552, 5
      %v2670 = vsel %vm1588, %v2668, %v2669
      %v2671 = vrot.slane %v2669, 4
      %v2672 = vrot.slane %v2553, 5
      %v2673 = vsel %vm1588, %v2671, %v2672
      %v2674 = vrot.slane %v2554, 5
      %v2675 = vrot.slane %v2674, 4
      %v2676 = vrot.slane %v2555, 5
      %v2677 = vsel %vm1588, %v2675, %v2676
      %v2678 = vrot.slane %v2676, 4
      %v2679 = vrot.slane %v2556, 5
      %v2680 = vsel %vm1588, %v2678, %v2679
      %v2681 = vrot.slane %v2557, 5
      %v2682 = vrot.slane %v2681, 4
      %v2683 = vrot.slane %v2558, 5
      %v2684 = vsel %vm1588, %v2682, %v2683
      %v2685 = vrot.slane %v2683, 4
      %v2686 = vrot.slane %v2559, 5
      %v2687 = vsel %vm1588, %v2685, %v2686
      %v2688 = vrot.slane %v2560, 5
      %v2689 = vrot.slane %v2688, 4
      %v2690 = vrot.slane %v2561, 5
      %v2691 = vsel %vm1588, %v2689, %v2690
      %v2692 = vrot.slane %v2690, 4
      %v2693 = vrot.slane %v2562, 5
      %v2694 = vsel %vm1588, %v2692, %v2693
      %v2695 = vrot.slane %v2563, 5
      %v2696 = vrot.slane %v2695, 4
      %v2697 = vrot.slane %v2564, 5
      %v2698 = vsel %vm1588, %v2696, %v2697
      %v2699 = vrot.slane %v2697, 4
      %v2700 = vrot.slane %v2565, 5
      %v2701 = vsel %vm1588, %v2699, %v2700
      %v2702 = vrot.slane %v2566, 5
      %v2703 = vrot.slane %v2702, 4
      %v2704 = vrot.slane %v2567, 5
      %v2705 = vsel %vm1588, %v2703, %v2704
      %v2706 = vrot.slane %v2704, 4
      %v2707 = vrot.slane %v2568, 5
      %v2708 = vsel %vm1588, %v2706, %v2707
      %v2709 = vrot.slane %v2569, 5
      %v2710 = vrot.slane %v2709, 4
      %v2711 = vrot.slane %v2570, 5
      %v2712 = vsel %vm1588, %v2710, %v2711
      %v2713 = vrot.slane %v2711, 4
      %v2714 = vrot.slane %v2571, 5
      %v2715 = vsel %vm1588, %v2713, %v2714
      %v2716 = vrot.slane %v2572, 5
      %v2717 = vrot.slane %v2716, 4
      %v2718 = vrot.slane %v2573, 5
      %v2719 = vsel %vm1588, %v2717, %v2718
      %v2720 = vrot.slane %v2718, 4
      %v2721 = vrot.slane %v2574, 5
      %v2722 = vsel %vm1588, %v2720, %v2721
      %v2723 = vrot.slane %v2575, 5
      %v2724 = vrot.slane %v2723, 4
      %v2725 = vrot.slane %v2576, 5
      %v2726 = vsel %vm1588, %v2724, %v2725
      %v2727 = vrot.slane %v2725, 4
      %v2728 = vrot.slane %v2577, 5
      %v2729 = vsel %vm1588, %v2727, %v2728
      %v2730 = vrot.slane %v2578, 5
      %v2731 = vrot.slane %v2730, 4
      %v2732 = vrot.slane %v2579, 5
      %v2733 = vsel %vm1588, %v2731, %v2732
      %v2734 = vrot.slane %v2732, 4
      %v2735 = vrot.slane %v2580, 5
      %v2736 = vsel %vm1588, %v2734, %v2735
      %v2737 = vrot.slane %v2581, 5
      %v2738 = vrot.slane %v2737, 4
      %v2739 = vrot.slane %v2582, 5
      %v2740 = vsel %vm1588, %v2738, %v2739
      %v2741 = vrot.slane %v2739, 4
      %v2742 = vrot.slane %v2583, 5
      %v2743 = vsel %vm1588, %v2741, %v2742
      %v2744 = vunpack.c.l.b16 %v2635
      %v2745 = vunpack.c.l.b16 %v2638
      %v2746 = vunpack.c.l.b16 %v2642
      %v2747 = vunpack.c.l.b16 %v2645
      %v2748 = vunpack.c.l.b16 %v2649
      %v2749 = vunpack.c.l.b16 %v2652
      %v2750 = vunpack.c.l.b16 %v2656
      %v2751 = vunpack.c.l.b16 %v2659
      %v2752 = vunpack.c.l.b16 %v2663
      %v2753 = vunpack.c.l.b16 %v2666
      %v2754 = vunpack.c.l.b16 %v2670
      %v2755 = vunpack.c.l.b16 %v2673
      %v2756 = vunpack.c.l.b16 %v2677
      %v2757 = vunpack.c.l.b16 %v2680
      %v2758 = vunpack.c.l.b16 %v2684
      %v2759 = vunpack.c.l.b16 %v2687
      %v2760 = vunpack.c.l.b16 %v2691
      %v2761 = vunpack.c.l.b16 %v2694
      %v2762 = vunpack.c.l.b16 %v2698
      %v2763 = vunpack.c.l.b16 %v2701
      %v2764 = vunpack.c.l.b16 %v2705
      %v2765 = vunpack.c.l.b16 %v2708
      %v2766 = vunpack.c.l.b16 %v2712
      %v2767 = vunpack.c.l.b16 %v2715
      %v2768 = vunpack.c.l.b16 %v2719
      %v2769 = vunpack.c.l.b16 %v2722
      %v2770 = vunpack.c.l.b16 %v2726
      %v2771 = vunpack.c.l.b16 %v2729
      %v2772 = vunpack.c.l.b16 %v2733
      %v2773 = vunpack.c.l.b16 %v2736
      %v2774 = vunpack.c.l.b16 %v2740
      %v2775 = vunpack.c.l.b16 %v2743
      %v2776 = vpack.c.b16 %v2745, %v2744
      %v2777 = vpack.c.b16 %v2747, %v2746
      %v2778 = vpack.c.b16 %v2749, %v2748
      %v2779 = vpack.c.b16 %v2751, %v2750
      %v2780 = vpack.c.b16 %v2753, %v2752
      %v2781 = vpack.c.b16 %v2755, %v2754
      %v2782 = vpack.c.b16 %v2757, %v2756
      %v2783 = vpack.c.b16 %v2759, %v2758
      %v2784 = vpack.c.b16 %v2761, %v2760
      %v2785 = vpack.c.b16 %v2763, %v2762
      %v2786 = vpack.c.b16 %v2765, %v2764
      %v2787 = vpack.c.b16 %v2767, %v2766
      %v2788 = vpack.c.b16 %v2769, %v2768
      %v2789 = vpack.c.b16 %v2771, %v2770
      %v2790 = vpack.c.b16 %v2773, %v2772
      %v2791 = vpack.c.b16 %v2775, %v2774
      %2792 = vrot.lane.b32.xlu0 %v2776, 20
      %v2793 = vpop.permute.xlu0 %2792
      %2794 = vrot.lane.b32.xlu0 %v2777, 20
      %v2795 = vpop.permute.xlu0 %2794
      %2796 = vrot.lane.b32.xlu0 %v2778, 20
      %v2797 = vpop.permute.xlu0 %2796
      %2798 = vrot.lane.b32.xlu0 %v2779, 20
      %v2799 = vpop.permute.xlu0 %2798
      %2800 = vrot.lane.b32.xlu0 %v2780, 20
      %v2801 = vpop.permute.xlu0 %2800
      %2802 = vrot.lane.b32.xlu0 %v2781, 20
      %v2803 = vpop.permute.xlu0 %2802
      %2804 = vrot.lane.b32.xlu0 %v2782, 20
      %v2805 = vpop.permute.xlu0 %2804
      %2806 = vrot.lane.b32.xlu0 %v2783, 20
      %v2807 = vpop.permute.xlu0 %2806
      %2808 = vrot.lane.b32.xlu0 %v2784, 20
      %v2809 = vpop.permute.xlu0 %2808
      %2810 = vrot.lane.b32.xlu0 %v2785, 20
      %v2811 = vpop.permute.xlu0 %2810
      %2812 = vrot.lane.b32.xlu0 %v2786, 20
      %v2813 = vpop.permute.xlu0 %2812
      %2814 = vrot.lane.b32.xlu0 %v2787, 20
      %v2815 = vpop.permute.xlu0 %2814
      %2816 = vrot.lane.b32.xlu0 %v2788, 20
      %v2817 = vpop.permute.xlu0 %2816
      %2818 = vrot.lane.b32.xlu0 %v2789, 20
      %v2819 = vpop.permute.xlu0 %2818
      %2820 = vrot.lane.b32.xlu0 %v2790, 20
      %v2821 = vpop.permute.xlu0 %2820
      %2822 = vrot.lane.b32.xlu0 %v2791, 20
      %v2823 = vpop.permute.xlu0 %2822
      %vm2840 = vcmask 195744
      %2841 = vst.msk [vmem:[#allocation3] sm:$0xff] %vm2840, %v2793
      %2842 = vst.msk [vmem:[#allocation3 + $0x8] sm:$0xff] %vm2840, %v2795
      %2843 = vst.msk [vmem:[#allocation3 + $0x10] sm:$0xff] %vm2840, %v2797
      %2844 = vst.msk [vmem:[#allocation3 + $0x18] sm:$0xff] %vm2840, %v2799
      %2845 = vst.msk [vmem:[#allocation3 + $0x20] sm:$0xff] %vm2840, %v2801
      %2846 = vst.msk [vmem:[#allocation3 + $0x28] sm:$0xff] %vm2840, %v2803
      %2847 = vst.msk [vmem:[#allocation3 + $0x30] sm:$0xff] %vm2840, %v2805
      %2848 = vst.msk [vmem:[#allocation3 + $0x38] sm:$0xff] %vm2840, %v2807
      %2849 = vst.msk [vmem:[#allocation3 + $0x40] sm:$0xff] %vm2840, %v2809
      %2850 = vst.msk [vmem:[#allocation3 + $0x48] sm:$0xff] %vm2840, %v2811
      %2851 = vst.msk [vmem:[#allocation3 + $0x50] sm:$0xff] %vm2840, %v2813
      %2852 = vst.msk [vmem:[#allocation3 + $0x58] sm:$0xff] %vm2840, %v2815
      %2853 = vst.msk [vmem:[#allocation3 + $0x60] sm:$0xff] %vm2840, %v2817
      %2854 = vst.msk [vmem:[#allocation3 + $0x68] sm:$0xff] %vm2840, %v2819
      %2855 = vst.msk [vmem:[#allocation3 + $0x70] sm:$0xff] %vm2840, %v2821
      %2856 = vst.msk [vmem:[#allocation3 + $0x78] sm:$0xff] %vm2840, %v2823
      %s2857 = scalar_lea.vmem [#allocation2], 24
      %v2858 = vld [vmem:[%s2857] sm:$0xf]
      %v2859 = vld [vmem:[%s2857 + $0x4] sm:$0xf]
      %v2860 = vld [vmem:[%s2857 + $0xc] sm:$0xf]
      %v2861 = vld [vmem:[%s2857 + $0x10] sm:$0xf]
      %v2862 = vld [vmem:[%s2857 + $0x18] sm:$0xf]
      %v2863 = vld [vmem:[%s2857 + $0x1c] sm:$0xf]
      %v2864 = vld [vmem:[%s2857 + $0x24] sm:$0xf]
      %v2865 = vld [vmem:[%s2857 + $0x28] sm:$0xf]
      %v2866 = vld [vmem:[%s2857 + $0x30] sm:$0xf]
      %v2867 = vld [vmem:[%s2857 + $0x34] sm:$0xf]
      %v2868 = vld [vmem:[%s2857 + $0x3c] sm:$0xf]
      %v2869 = vld [vmem:[%s2857 + $0x40] sm:$0xf]
      %v2870 = vld [vmem:[%s2857 + $0x48] sm:$0xf]
      %v2871 = vld [vmem:[%s2857 + $0x4c] sm:$0xf]
      %v2872 = vld [vmem:[%s2857 + $0x54] sm:$0xf]
      %v2873 = vld [vmem:[%s2857 + $0x58] sm:$0xf]
      %v2874 = vld [vmem:[%s2857 + $0x60] sm:$0xf]
      %v2875 = vld [vmem:[%s2857 + $0x64] sm:$0xf]
      %v2876 = vld [vmem:[%s2857 + $0x6c] sm:$0xf]
      %v2877 = vld [vmem:[%s2857 + $0x70] sm:$0xf]
      %v2878 = vld [vmem:[%s2857 + $0x78] sm:$0xf]
      %v2879 = vld [vmem:[%s2857 + $0x7c] sm:$0xf]
      %v2880 = vld [vmem:[%s2857 + $0x84] sm:$0xf]
      %v2881 = vld [vmem:[%s2857 + $0x88] sm:$0xf]
      %v2882 = vld [vmem:[%s2857 + $0x90] sm:$0xf]
      %v2883 = vld [vmem:[%s2857 + $0x94] sm:$0xf]
      %v2884 = vld [vmem:[%s2857 + $0x9c] sm:$0xf]
      %v2885 = vld [vmem:[%s2857 + $0xa0] sm:$0xf]
      %v2886 = vld [vmem:[%s2857 + $0xa8] sm:$0xf]
      %v2887 = vld [vmem:[%s2857 + $0xac] sm:$0xf]
      %v2888 = vld [vmem:[%s2857 + $0xb4] sm:$0xf]
      %v2889 = vld [vmem:[%s2857 + $0xb8] sm:$0xf]
      %v2922 = vunpack.c.l.b16 %v2858
      %v2923 = vunpack.c.l.b16 %v2859
      %v2924 = vunpack.c.l.b16 %v2860
      %v2925 = vunpack.c.l.b16 %v2861
      %v2926 = vunpack.c.l.b16 %v2862
      %v2927 = vunpack.c.l.b16 %v2863
      %v2928 = vunpack.c.l.b16 %v2864
      %v2929 = vunpack.c.l.b16 %v2865
      %v2930 = vunpack.c.l.b16 %v2866
      %v2931 = vunpack.c.l.b16 %v2867
      %v2932 = vunpack.c.l.b16 %v2868
      %v2933 = vunpack.c.l.b16 %v2869
      %v2934 = vunpack.c.l.b16 %v2870
      %v2935 = vunpack.c.l.b16 %v2871
      %v2936 = vunpack.c.l.b16 %v2872
      %v2937 = vunpack.c.l.b16 %v2873
      %v2938 = vunpack.c.l.b16 %v2874
      %v2939 = vunpack.c.l.b16 %v2875
      %v2940 = vunpack.c.l.b16 %v2876
      %v2941 = vunpack.c.l.b16 %v2877
      %v2942 = vunpack.c.l.b16 %v2878
      %v2943 = vunpack.c.l.b16 %v2879
      %v2944 = vunpack.c.l.b16 %v2880
      %v2945 = vunpack.c.l.b16 %v2881
      %v2946 = vunpack.c.l.b16 %v2882
      %v2947 = vunpack.c.l.b16 %v2883
      %v2948 = vunpack.c.l.b16 %v2884
      %v2949 = vunpack.c.l.b16 %v2885
      %v2950 = vunpack.c.l.b16 %v2886
      %v2951 = vunpack.c.l.b16 %v2887
      %v2952 = vunpack.c.l.b16 %v2888
      %v2953 = vunpack.c.l.b16 %v2889
      %v2954 = vpack.c.b16 %v2923, %v2922
      %v2955 = vpack.c.b16 %v2925, %v2924
      %v2956 = vpack.c.b16 %v2927, %v2926
      %v2957 = vpack.c.b16 %v2929, %v2928
      %v2958 = vpack.c.b16 %v2931, %v2930
      %v2959 = vpack.c.b16 %v2933, %v2932
      %v2960 = vpack.c.b16 %v2935, %v2934
      %v2961 = vpack.c.b16 %v2937, %v2936
      %v2962 = vpack.c.b16 %v2939, %v2938
      %v2963 = vpack.c.b16 %v2941, %v2940
      %v2964 = vpack.c.b16 %v2943, %v2942
      %v2965 = vpack.c.b16 %v2945, %v2944
      %v2966 = vpack.c.b16 %v2947, %v2946
      %v2967 = vpack.c.b16 %v2949, %v2948
      %v2968 = vpack.c.b16 %v2951, %v2950
      %v2969 = vpack.c.b16 %v2953, %v2952
      %2970 = vrot.lane.b32.xlu0 %v2954, 24
      %v2971 = vpop.permute.xlu0 %2970
      %2972 = vrot.lane.b32.xlu0 %v2955, 24
      %v2973 = vpop.permute.xlu0 %2972
      %2974 = vrot.lane.b32.xlu0 %v2956, 24
      %v2975 = vpop.permute.xlu0 %2974
      %2976 = vrot.lane.b32.xlu0 %v2957, 24
      %v2977 = vpop.permute.xlu0 %2976
      %2978 = vrot.lane.b32.xlu0 %v2958, 24
      %v2979 = vpop.permute.xlu0 %2978
      %2980 = vrot.lane.b32.xlu0 %v2959, 24
      %v2981 = vpop.permute.xlu0 %2980
      %2982 = vrot.lane.b32.xlu0 %v2960, 24
      %v2983 = vpop.permute.xlu0 %2982
      %2984 = vrot.lane.b32.xlu0 %v2961, 24
      %v2985 = vpop.permute.xlu0 %2984
      %2986 = vrot.lane.b32.xlu0 %v2962, 24
      %v2987 = vpop.permute.xlu0 %2986
      %2988 = vrot.lane.b32.xlu0 %v2963, 24
      %v2989 = vpop.permute.xlu0 %2988
      %2990 = vrot.lane.b32.xlu0 %v2964, 24
      %v2991 = vpop.permute.xlu0 %2990
      %2992 = vrot.lane.b32.xlu0 %v2965, 24
      %v2993 = vpop.permute.xlu0 %2992
      %2994 = vrot.lane.b32.xlu0 %v2966, 24
      %v2995 = vpop.permute.xlu0 %2994
      %2996 = vrot.lane.b32.xlu0 %v2967, 24
      %v2997 = vpop.permute.xlu0 %2996
      %2998 = vrot.lane.b32.xlu0 %v2968, 24
      %v2999 = vpop.permute.xlu0 %2998
      %3000 = vrot.lane.b32.xlu0 %v2969, 24
      %v3001 = vpop.permute.xlu0 %3000
      %vm3018 = vcmask 228544
      %3019 = vst.msk [vmem:[#allocation3] sm:$0xff] %vm3018, %v2971
      %3020 = vst.msk [vmem:[#allocation3 + $0x8] sm:$0xff] %vm3018, %v2973
      %3021 = vst.msk [vmem:[#allocation3 + $0x10] sm:$0xff] %vm3018, %v2975
      %3022 = vst.msk [vmem:[#allocation3 + $0x18] sm:$0xff] %vm3018, %v2977
      %3023 = vst.msk [vmem:[#allocation3 + $0x20] sm:$0xff] %vm3018, %v2979
      %3024 = vst.msk [vmem:[#allocation3 + $0x28] sm:$0xff] %vm3018, %v2981
      %3025 = vst.msk [vmem:[#allocation3 + $0x30] sm:$0xff] %vm3018, %v2983
      %3026 = vst.msk [vmem:[#allocation3 + $0x38] sm:$0xff] %vm3018, %v2985
      %3027 = vst.msk [vmem:[#allocation3 + $0x40] sm:$0xff] %vm3018, %v2987
      %3028 = vst.msk [vmem:[#allocation3 + $0x48] sm:$0xff] %vm3018, %v2989
      %3029 = vst.msk [vmem:[#allocation3 + $0x50] sm:$0xff] %vm3018, %v2991
      %3030 = vst.msk [vmem:[#allocation3 + $0x58] sm:$0xff] %vm3018, %v2993
      %3031 = vst.msk [vmem:[#allocation3 + $0x60] sm:$0xff] %vm3018, %v2995
      %3032 = vst.msk [vmem:[#allocation3 + $0x68] sm:$0xff] %vm3018, %v2997
      %3033 = vst.msk [vmem:[#allocation3 + $0x70] sm:$0xff] %vm3018, %v2999
      %3034 = vst.msk [vmem:[#allocation3 + $0x78] sm:$0xff] %vm3018, %v3001
      %v3035 = vld [vmem:[%s2857] sm:$0xf]
      %v3036 = vld [vmem:[%s2857 + $0x4] sm:$0xf]
      %v3037 = vld [vmem:[%s2857 + $0x8] sm:$0x1]
      %v3038 = vld [vmem:[%s2857 + $0xc] sm:$0xf]
      %v3039 = vld [vmem:[%s2857 + $0x10] sm:$0xf]
      %v3040 = vld [vmem:[%s2857 + $0x14] sm:$0x1]
      %v3041 = vld [vmem:[%s2857 + $0x18] sm:$0xf]
      %v3042 = vld [vmem:[%s2857 + $0x1c] sm:$0xf]
      %v3043 = vld [vmem:[%s2857 + $0x20] sm:$0x1]
      %v3044 = vld [vmem:[%s2857 + $0x24] sm:$0xf]
      %v3045 = vld [vmem:[%s2857 + $0x28] sm:$0xf]
      %v3046 = vld [vmem:[%s2857 + $0x2c] sm:$0x1]
      %v3047 = vld [vmem:[%s2857 + $0x30] sm:$0xf]
      %v3048 = vld [vmem:[%s2857 + $0x34] sm:$0xf]
      %v3049 = vld [vmem:[%s2857 + $0x38] sm:$0x1]
      %v3050 = vld [vmem:[%s2857 + $0x3c] sm:$0xf]
      %v3051 = vld [vmem:[%s2857 + $0x40] sm:$0xf]
      %v3052 = vld [vmem:[%s2857 + $0x44] sm:$0x1]
      %v3053 = vld [vmem:[%s2857 + $0x48] sm:$0xf]
      %v3054 = vld [vmem:[%s2857 + $0x4c] sm:$0xf]
      %v3055 = vld [vmem:[%s2857 + $0x50] sm:$0x1]
      %v3056 = vld [vmem:[%s2857 + $0x54] sm:$0xf]
      %v3057 = vld [vmem:[%s2857 + $0x58] sm:$0xf]
      %v3058 = vld [vmem:[%s2857 + $0x5c] sm:$0x1]
      %v3059 = vld [vmem:[%s2857 + $0x60] sm:$0xf]
      %v3060 = vld [vmem:[%s2857 + $0x64] sm:$0xf]
      %v3061 = vld [vmem:[%s2857 + $0x68] sm:$0x1]
      %v3062 = vld [vmem:[%s2857 + $0x6c] sm:$0xf]
      %v3063 = vld [vmem:[%s2857 + $0x70] sm:$0xf]
      %v3064 = vld [vmem:[%s2857 + $0x74] sm:$0x1]
      %v3065 = vld [vmem:[%s2857 + $0x78] sm:$0xf]
      %v3066 = vld [vmem:[%s2857 + $0x7c] sm:$0xf]
      %v3067 = vld [vmem:[%s2857 + $0x80] sm:$0x1]
      %v3068 = vld [vmem:[%s2857 + $0x84] sm:$0xf]
      %v3069 = vld [vmem:[%s2857 + $0x88] sm:$0xf]
      %v3070 = vld [vmem:[%s2857 + $0x8c] sm:$0x1]
      %v3071 = vld [vmem:[%s2857 + $0x90] sm:$0xf]
      %v3072 = vld [vmem:[%s2857 + $0x94] sm:$0xf]
      %v3073 = vld [vmem:[%s2857 + $0x98] sm:$0x1]
      %v3074 = vld [vmem:[%s2857 + $0x9c] sm:$0xf]
      %v3075 = vld [vmem:[%s2857 + $0xa0] sm:$0xf]
      %v3076 = vld [vmem:[%s2857 + $0xa4] sm:$0x1]
      %v3077 = vld [vmem:[%s2857 + $0xa8] sm:$0xf]
      %v3078 = vld [vmem:[%s2857 + $0xac] sm:$0xf]
      %v3079 = vld [vmem:[%s2857 + $0xb0] sm:$0x1]
      %v3080 = vld [vmem:[%s2857 + $0xb4] sm:$0xf]
      %v3081 = vld [vmem:[%s2857 + $0xb8] sm:$0xf]
      %v3082 = vld [vmem:[%s2857 + $0xbc] sm:$0x1]
      %v3084 = vshrl.u32 %v3035, 16
      %v3086 = vrot.slane %v3084, 4
      %v3087 = vshll.u32 %v3035, 16
      %v3089 = vrot.slane %v3087, 5
      %v3090 = vor.u32 %v3086, %v3089
      %v3091 = vrot.slane %v3090, 4
      %v3093 = vshll.u32 %v3036, 16
      %v3095 = vrot.slane %v3093, 5
      %v3096 = vsel %vm992, %v3091, %v3095
      %v3097 = vshrl.u32 %v3036, 16
      %v3099 = vrot.slane %v3097, 4
      %v3100 = vor.u32 %v3099, %v3095
      %v3101 = vrot.slane %v3100, 4
      %v3103 = vshll.u32 %v3037, 16
      %v3105 = vrot.slane %v3103, 5
      %v3106 = vsel %vm992, %v3101, %v3105
      %v3108 = vshrl.u32 %v3038, 16
      %v3110 = vrot.slane %v3108, 4
      %v3111 = vshll.u32 %v3038, 16
      %v3113 = vrot.slane %v3111, 5
      %v3114 = vor.u32 %v3110, %v3113
      %v3115 = vrot.slane %v3114, 4
      %v3117 = vshll.u32 %v3039, 16
      %v3119 = vrot.slane %v3117, 5
      %v3120 = vsel %vm992, %v3115, %v3119
      %v3121 = vshrl.u32 %v3039, 16
      %v3123 = vrot.slane %v3121, 4
      %v3124 = vor.u32 %v3123, %v3119
      %v3125 = vrot.slane %v3124, 4
      %v3127 = vshll.u32 %v3040, 16
      %v3129 = vrot.slane %v3127, 5
      %v3130 = vsel %vm992, %v3125, %v3129
      %v3132 = vshrl.u32 %v3041, 16
      %v3134 = vrot.slane %v3132, 4
      %v3135 = vshll.u32 %v3041, 16
      %v3137 = vrot.slane %v3135, 5
      %v3138 = vor.u32 %v3134, %v3137
      %v3139 = vrot.slane %v3138, 4
      %v3141 = vshll.u32 %v3042, 16
      %v3143 = vrot.slane %v3141, 5
      %v3144 = vsel %vm992, %v3139, %v3143
      %v3145 = vshrl.u32 %v3042, 16
      %v3147 = vrot.slane %v3145, 4
      %v3148 = vor.u32 %v3147, %v3143
      %v3149 = vrot.slane %v3148, 4
      %v3151 = vshll.u32 %v3043, 16
      %v3153 = vrot.slane %v3151, 5
      %v3154 = vsel %vm992, %v3149, %v3153
      %v3156 = vshrl.u32 %v3044, 16
      %v3158 = vrot.slane %v3156, 4
      %v3159 = vshll.u32 %v3044, 16
      %v3161 = vrot.slane %v3159, 5
      %v3162 = vor.u32 %v3158, %v3161
      %v3163 = vrot.slane %v3162, 4
      %v3165 = vshll.u32 %v3045, 16
      %v3167 = vrot.slane %v3165, 5
      %v3168 = vsel %vm992, %v3163, %v3167
      %v3169 = vshrl.u32 %v3045, 16
      %v3171 = vrot.slane %v3169, 4
      %v3172 = vor.u32 %v3171, %v3167
      %v3173 = vrot.slane %v3172, 4
      %v3175 = vshll.u32 %v3046, 16
      %v3177 = vrot.slane %v3175, 5
      %v3178 = vsel %vm992, %v3173, %v3177
      %v3180 = vshrl.u32 %v3047, 16
      %v3182 = vrot.slane %v3180, 4
      %v3183 = vshll.u32 %v3047, 16
      %v3185 = vrot.slane %v3183, 5
      %v3186 = vor.u32 %v3182, %v3185
      %v3187 = vrot.slane %v3186, 4
      %v3189 = vshll.u32 %v3048, 16
      %v3191 = vrot.slane %v3189, 5
      %v3192 = vsel %vm992, %v3187, %v3191
      %v3193 = vshrl.u32 %v3048, 16
      %v3195 = vrot.slane %v3193, 4
      %v3196 = vor.u32 %v3195, %v3191
      %v3197 = vrot.slane %v3196, 4
      %v3199 = vshll.u32 %v3049, 16
      %v3201 = vrot.slane %v3199, 5
      %v3202 = vsel %vm992, %v3197, %v3201
      %v3204 = vshrl.u32 %v3050, 16
      %v3206 = vrot.slane %v3204, 4
      %v3207 = vshll.u32 %v3050, 16
      %v3209 = vrot.slane %v3207, 5
      %v3210 = vor.u32 %v3206, %v3209
      %v3211 = vrot.slane %v3210, 4
      %v3213 = vshll.u32 %v3051, 16
      %v3215 = vrot.slane %v3213, 5
      %v3216 = vsel %vm992, %v3211, %v3215
      %v3217 = vshrl.u32 %v3051, 16
      %v3219 = vrot.slane %v3217, 4
      %v3220 = vor.u32 %v3219, %v3215
      %v3221 = vrot.slane %v3220, 4
      %v3223 = vshll.u32 %v3052, 16
      %v3225 = vrot.slane %v3223, 5
      %v3226 = vsel %vm992, %v3221, %v3225
      %v3228 = vshrl.u32 %v3053, 16
      %v3230 = vrot.slane %v3228, 4
      %v3231 = vshll.u32 %v3053, 16
      %v3233 = vrot.slane %v3231, 5
      %v3234 = vor.u32 %v3230, %v3233
      %v3235 = vrot.slane %v3234, 4
      %v3237 = vshll.u32 %v3054, 16
      %v3239 = vrot.slane %v3237, 5
      %v3240 = vsel %vm992, %v3235, %v3239
      %v3241 = vshrl.u32 %v3054, 16
      %v3243 = vrot.slane %v3241, 4
      %v3244 = vor.u32 %v3243, %v3239
      %v3245 = vrot.slane %v3244, 4
      %v3247 = vshll.u32 %v3055, 16
      %v3249 = vrot.slane %v3247, 5
      %v3250 = vsel %vm992, %v3245, %v3249
      %v3252 = vshrl.u32 %v3056, 16
      %v3254 = vrot.slane %v3252, 4
      %v3255 = vshll.u32 %v3056, 16
      %v3257 = vrot.slane %v3255, 5
      %v3258 = vor.u32 %v3254, %v3257
      %v3259 = vrot.slane %v3258, 4
      %v3261 = vshll.u32 %v3057, 16
      %v3263 = vrot.slane %v3261, 5
      %v3264 = vsel %vm992, %v3259, %v3263
      %v3265 = vshrl.u32 %v3057, 16
      %v3267 = vrot.slane %v3265, 4
      %v3268 = vor.u32 %v3267, %v3263
      %v3269 = vrot.slane %v3268, 4
      %v3271 = vshll.u32 %v3058, 16
      %v3273 = vrot.slane %v3271, 5
      %v3274 = vsel %vm992, %v3269, %v3273
      %v3276 = vshrl.u32 %v3059, 16
      %v3278 = vrot.slane %v3276, 4
      %v3279 = vshll.u32 %v3059, 16
      %v3281 = vrot.slane %v3279, 5
      %v3282 = vor.u32 %v3278, %v3281
      %v3283 = vrot.slane %v3282, 4
      %v3285 = vshll.u32 %v3060, 16
      %v3287 = vrot.slane %v3285, 5
      %v3288 = vsel %vm992, %v3283, %v3287
      %v3289 = vshrl.u32 %v3060, 16
      %v3291 = vrot.slane %v3289, 4
      %v3292 = vor.u32 %v3291, %v3287
      %v3293 = vrot.slane %v3292, 4
      %v3295 = vshll.u32 %v3061, 16
      %v3297 = vrot.slane %v3295, 5
      %v3298 = vsel %vm992, %v3293, %v3297
      %v3300 = vshrl.u32 %v3062, 16
      %v3302 = vrot.slane %v3300, 4
      %v3303 = vshll.u32 %v3062, 16
      %v3305 = vrot.slane %v3303, 5
      %v3306 = vor.u32 %v3302, %v3305
      %v3307 = vrot.slane %v3306, 4
      %v3309 = vshll.u32 %v3063, 16
      %v3311 = vrot.slane %v3309, 5
      %v3312 = vsel %vm992, %v3307, %v3311
      %v3313 = vshrl.u32 %v3063, 16
      %v3315 = vrot.slane %v3313, 4
      %v3316 = vor.u32 %v3315, %v3311
      %v3317 = vrot.slane %v3316, 4
      %v3319 = vshll.u32 %v3064, 16
      %v3321 = vrot.slane %v3319, 5
      %v3322 = vsel %vm992, %v3317, %v3321
      %v3324 = vshrl.u32 %v3065, 16
      %v3326 = vrot.slane %v3324, 4
      %v3327 = vshll.u32 %v3065, 16
      %v3329 = vrot.slane %v3327, 5
      %v3330 = vor.u32 %v3326, %v3329
      %v3331 = vrot.slane %v3330, 4
      %v3333 = vshll.u32 %v3066, 16
      %v3335 = vrot.slane %v3333, 5
      %v3336 = vsel %vm992, %v3331, %v3335
      %v3337 = vshrl.u32 %v3066, 16
      %v3339 = vrot.slane %v3337, 4
      %v3340 = vor.u32 %v3339, %v3335
      %v3341 = vrot.slane %v3340, 4
      %v3343 = vshll.u32 %v3067, 16
      %v3345 = vrot.slane %v3343, 5
      %v3346 = vsel %vm992, %v3341, %v3345
      %v3348 = vshrl.u32 %v3068, 16
      %v3350 = vrot.slane %v3348, 4
      %v3351 = vshll.u32 %v3068, 16
      %v3353 = vrot.slane %v3351, 5
      %v3354 = vor.u32 %v3350, %v3353
      %v3355 = vrot.slane %v3354, 4
      %v3357 = vshll.u32 %v3069, 16
      %v3359 = vrot.slane %v3357, 5
      %v3360 = vsel %vm992, %v3355, %v3359
      %v3361 = vshrl.u32 %v3069, 16
      %v3363 = vrot.slane %v3361, 4
      %v3364 = vor.u32 %v3363, %v3359
      %v3365 = vrot.slane %v3364, 4
      %v3367 = vshll.u32 %v3070, 16
      %v3369 = vrot.slane %v3367, 5
      %v3370 = vsel %vm992, %v3365, %v3369
      %v3372 = vshrl.u32 %v3071, 16
      %v3374 = vrot.slane %v3372, 4
      %v3375 = vshll.u32 %v3071, 16
      %v3377 = vrot.slane %v3375, 5
      %v3378 = vor.u32 %v3374, %v3377
      %v3379 = vrot.slane %v3378, 4
      %v3381 = vshll.u32 %v3072, 16
      %v3383 = vrot.slane %v3381, 5
      %v3384 = vsel %vm992, %v3379, %v3383
      %v3385 = vshrl.u32 %v3072, 16
      %v3387 = vrot.slane %v3385, 4
      %v3388 = vor.u32 %v3387, %v3383
      %v3389 = vrot.slane %v3388, 4
      %v3391 = vshll.u32 %v3073, 16
      %v3393 = vrot.slane %v3391, 5
      %v3394 = vsel %vm992, %v3389, %v3393
      %v3396 = vshrl.u32 %v3074, 16
      %v3398 = vrot.slane %v3396, 4
      %v3399 = vshll.u32 %v3074, 16
      %v3401 = vrot.slane %v3399, 5
      %v3402 = vor.u32 %v3398, %v3401
      %v3403 = vrot.slane %v3402, 4
      %v3405 = vshll.u32 %v3075, 16
      %v3407 = vrot.slane %v3405, 5
      %v3408 = vsel %vm992, %v3403, %v3407
      %v3409 = vshrl.u32 %v3075, 16
      %v3411 = vrot.slane %v3409, 4
      %v3412 = vor.u32 %v3411, %v3407
      %v3413 = vrot.slane %v3412, 4
      %v3415 = vshll.u32 %v3076, 16
      %v3417 = vrot.slane %v3415, 5
      %v3418 = vsel %vm992, %v3413, %v3417
      %v3420 = vshrl.u32 %v3077, 16
      %v3422 = vrot.slane %v3420, 4
      %v3423 = vshll.u32 %v3077, 16
      %v3425 = vrot.slane %v3423, 5
      %v3426 = vor.u32 %v3422, %v3425
      %v3427 = vrot.slane %v3426, 4
      %v3429 = vshll.u32 %v3078, 16
      %v3431 = vrot.slane %v3429, 5
      %v3432 = vsel %vm992, %v3427, %v3431
      %v3433 = vshrl.u32 %v3078, 16
      %v3435 = vrot.slane %v3433, 4
      %v3436 = vor.u32 %v3435, %v3431
      %v3437 = vrot.slane %v3436, 4
      %v3439 = vshll.u32 %v3079, 16
      %v3441 = vrot.slane %v3439, 5
      %v3442 = vsel %vm992, %v3437, %v3441
      %v3444 = vshrl.u32 %v3080, 16
      %v3446 = vrot.slane %v3444, 4
      %v3447 = vshll.u32 %v3080, 16
      %v3449 = vrot.slane %v3447, 5
      %v3450 = vor.u32 %v3446, %v3449
      %v3451 = vrot.slane %v3450, 4
      %v3453 = vshll.u32 %v3081, 16
      %v3455 = vrot.slane %v3453, 5
      %v3456 = vsel %vm992, %v3451, %v3455
      %v3457 = vshrl.u32 %v3081, 16
      %v3459 = vrot.slane %v3457, 4
      %v3460 = vor.u32 %v3459, %v3455
      %v3461 = vrot.slane %v3460, 4
      %v3463 = vshll.u32 %v3082, 16
      %v3465 = vrot.slane %v3463, 5
      %v3466 = vsel %vm992, %v3461, %v3465
      %v3467 = vunpack.c.l.b16 %v3096
      %v3468 = vunpack.c.l.b16 %v3106
      %v3469 = vunpack.c.l.b16 %v3120
      %v3470 = vunpack.c.l.b16 %v3130
      %v3471 = vunpack.c.l.b16 %v3144
      %v3472 = vunpack.c.l.b16 %v3154
      %v3473 = vunpack.c.l.b16 %v3168
      %v3474 = vunpack.c.l.b16 %v3178
      %v3475 = vunpack.c.l.b16 %v3192
      %v3476 = vunpack.c.l.b16 %v3202
      %v3477 = vunpack.c.l.b16 %v3216
      %v3478 = vunpack.c.l.b16 %v3226
      %v3479 = vunpack.c.l.b16 %v3240
      %v3480 = vunpack.c.l.b16 %v3250
      %v3481 = vunpack.c.l.b16 %v3264
      %v3482 = vunpack.c.l.b16 %v3274
      %v3483 = vunpack.c.l.b16 %v3288
      %v3484 = vunpack.c.l.b16 %v3298
      %v3485 = vunpack.c.l.b16 %v3312
      %v3486 = vunpack.c.l.b16 %v3322
      %v3487 = vunpack.c.l.b16 %v3336
      %v3488 = vunpack.c.l.b16 %v3346
      %v3489 = vunpack.c.l.b16 %v3360
      %v3490 = vunpack.c.l.b16 %v3370
      %v3491 = vunpack.c.l.b16 %v3384
      %v3492 = vunpack.c.l.b16 %v3394
      %v3493 = vunpack.c.l.b16 %v3408
      %v3494 = vunpack.c.l.b16 %v3418
      %v3495 = vunpack.c.l.b16 %v3432
      %v3496 = vunpack.c.l.b16 %v3442
      %v3497 = vunpack.c.l.b16 %v3456
      %v3498 = vunpack.c.l.b16 %v3466
      %v3499 = vpack.c.b16 %v3468, %v3467
      %v3500 = vpack.c.b16 %v3470, %v3469
      %v3501 = vpack.c.b16 %v3472, %v3471
      %v3502 = vpack.c.b16 %v3474, %v3473
      %v3503 = vpack.c.b16 %v3476, %v3475
      %v3504 = vpack.c.b16 %v3478, %v3477
      %v3505 = vpack.c.b16 %v3480, %v3479
      %v3506 = vpack.c.b16 %v3482, %v3481
      %v3507 = vpack.c.b16 %v3484, %v3483
      %v3508 = vpack.c.b16 %v3486, %v3485
      %v3509 = vpack.c.b16 %v3488, %v3487
      %v3510 = vpack.c.b16 %v3490, %v3489
      %v3511 = vpack.c.b16 %v3492, %v3491
      %v3512 = vpack.c.b16 %v3494, %v3493
      %v3513 = vpack.c.b16 %v3496, %v3495
      %v3514 = vpack.c.b16 %v3498, %v3497
      %3515 = vrot.lane.b32.xlu0 %v3499, 28
      %v3516 = vpop.permute.xlu0 %3515
      %3517 = vrot.lane.b32.xlu0 %v3500, 28
      %v3518 = vpop.permute.xlu0 %3517
      %3519 = vrot.lane.b32.xlu0 %v3501, 28
      %v3520 = vpop.permute.xlu0 %3519
      %3521 = vrot.lane.b32.xlu0 %v3502, 28
      %v3522 = vpop.permute.xlu0 %3521
      %3523 = vrot.lane.b32.xlu0 %v3503, 28
      %v3524 = vpop.permute.xlu0 %3523
      %3525 = vrot.lane.b32.xlu0 %v3504, 28
      %v3526 = vpop.permute.xlu0 %3525
      %3527 = vrot.lane.b32.xlu0 %v3505, 28
      %v3528 = vpop.permute.xlu0 %3527
      %3529 = vrot.lane.b32.xlu0 %v3506, 28
      %v3530 = vpop.permute.xlu0 %3529
      %3531 = vrot.lane.b32.xlu0 %v3507, 28
      %v3532 = vpop.permute.xlu0 %3531
      %3533 = vrot.lane.b32.xlu0 %v3508, 28
      %v3534 = vpop.permute.xlu0 %3533
      %3535 = vrot.lane.b32.xlu0 %v3509, 28
      %v3536 = vpop.permute.xlu0 %3535
      %3537 = vrot.lane.b32.xlu0 %v3510, 28
      %v3538 = vpop.permute.xlu0 %3537
      %3539 = vrot.lane.b32.xlu0 %v3511, 28
      %v3540 = vpop.permute.xlu0 %3539
      %3541 = vrot.lane.b32.xlu0 %v3512, 28
      %v3542 = vpop.permute.xlu0 %3541
      %3543 = vrot.lane.b32.xlu0 %v3513, 28
      %v3544 = vpop.permute.xlu0 %3543
      %3545 = vrot.lane.b32.xlu0 %v3514, 28
      %v3546 = vpop.permute.xlu0 %3545
      %vm3563 = vcmask 261344
      %3564 = vst.msk [vmem:[#allocation3] sm:$0xff] %vm3563, %v3516
      %3565 = vst.msk [vmem:[#allocation3 + $0x8] sm:$0xff] %vm3563, %v3518
      %3566 = vst.msk [vmem:[#allocation3 + $0x10] sm:$0xff] %vm3563, %v3520
      %3567 = vst.msk [vmem:[#allocation3 + $0x18] sm:$0xff] %vm3563, %v3522
      %3568 = vst.msk [vmem:[#allocation3 + $0x20] sm:$0xff] %vm3563, %v3524
      %3569 = vst.msk [vmem:[#allocation3 + $0x28] sm:$0xff] %vm3563, %v3526
      %3570 = vst.msk [vmem:[#allocation3 + $0x30] sm:$0xff] %vm3563, %v3528
      %3571 = vst.msk [vmem:[#allocation3 + $0x38] sm:$0xff] %vm3563, %v3530
      %3572 = vst.msk [vmem:[#allocation3 + $0x40] sm:$0xff] %vm3563, %v3532
      %3573 = vst.msk [vmem:[#allocation3 + $0x48] sm:$0xff] %vm3563, %v3534
      %3574 = vst.msk [vmem:[#allocation3 + $0x50] sm:$0xff] %vm3563, %v3536
      %3575 = vst.msk [vmem:[#allocation3 + $0x58] sm:$0xff] %vm3563, %v3538
      %3576 = vst.msk [vmem:[#allocation3 + $0x60] sm:$0xff] %vm3563, %v3540
      %3577 = vst.msk [vmem:[#allocation3 + $0x68] sm:$0xff] %vm3563, %v3542
      %3578 = vst.msk [vmem:[#allocation3 + $0x70] sm:$0xff] %vm3563, %v3544
      %3579 = vst.msk [vmem:[#allocation3 + $0x78] sm:$0xff] %vm3563, %v3546
      %v3580 = vld [vmem:[%s2857] sm:$0xe]
      %v3581 = vld [vmem:[%s2857 + $0x4] sm:$0xf]
      %v3582 = vld [vmem:[%s2857 + $0x8] sm:$0x1]
      %v3583 = vld [vmem:[%s2857 + $0xc] sm:$0xe]
      %v3584 = vld [vmem:[%s2857 + $0x10] sm:$0xf]
      %v3585 = vld [vmem:[%s2857 + $0x14] sm:$0x1]
      %v3586 = vld [vmem:[%s2857 + $0x18] sm:$0xe]
      %v3587 = vld [vmem:[%s2857 + $0x1c] sm:$0xf]
      %v3588 = vld [vmem:[%s2857 + $0x20] sm:$0x1]
      %v3589 = vld [vmem:[%s2857 + $0x24] sm:$0xe]
      %v3590 = vld [vmem:[%s2857 + $0x28] sm:$0xf]
      %v3591 = vld [vmem:[%s2857 + $0x2c] sm:$0x1]
      %v3592 = vld [vmem:[%s2857 + $0x30] sm:$0xe]
      %v3593 = vld [vmem:[%s2857 + $0x34] sm:$0xf]
      %v3594 = vld [vmem:[%s2857 + $0x38] sm:$0x1]
      %v3595 = vld [vmem:[%s2857 + $0x3c] sm:$0xe]
      %v3596 = vld [vmem:[%s2857 + $0x40] sm:$0xf]
      %v3597 = vld [vmem:[%s2857 + $0x44] sm:$0x1]
      %v3598 = vld [vmem:[%s2857 + $0x48] sm:$0xe]
      %v3599 = vld [vmem:[%s2857 + $0x4c] sm:$0xf]
      %v3600 = vld [vmem:[%s2857 + $0x50] sm:$0x1]
      %v3601 = vld [vmem:[%s2857 + $0x54] sm:$0xe]
      %v3602 = vld [vmem:[%s2857 + $0x58] sm:$0xf]
      %v3603 = vld [vmem:[%s2857 + $0x5c] sm:$0x1]
      %v3604 = vld [vmem:[%s2857 + $0x60] sm:$0xe]
      %v3605 = vld [vmem:[%s2857 + $0x64] sm:$0xf]
      %v3606 = vld [vmem:[%s2857 + $0x68] sm:$0x1]
      %v3607 = vld [vmem:[%s2857 + $0x6c] sm:$0xe]
      %v3608 = vld [vmem:[%s2857 + $0x70] sm:$0xf]
      %v3609 = vld [vmem:[%s2857 + $0x74] sm:$0x1]
      %v3610 = vld [vmem:[%s2857 + $0x78] sm:$0xe]
      %v3611 = vld [vmem:[%s2857 + $0x7c] sm:$0xf]
      %v3612 = vld [vmem:[%s2857 + $0x80] sm:$0x1]
      %v3613 = vld [vmem:[%s2857 + $0x84] sm:$0xe]
      %v3614 = vld [vmem:[%s2857 + $0x88] sm:$0xf]
      %v3615 = vld [vmem:[%s2857 + $0x8c] sm:$0x1]
      %v3616 = vld [vmem:[%s2857 + $0x90] sm:$0xe]
      %v3617 = vld [vmem:[%s2857 + $0x94] sm:$0xf]
      %v3618 = vld [vmem:[%s2857 + $0x98] sm:$0x1]
      %v3619 = vld [vmem:[%s2857 + $0x9c] sm:$0xe]
      %v3620 = vld [vmem:[%s2857 + $0xa0] sm:$0xf]
      %v3621 = vld [vmem:[%s2857 + $0xa4] sm:$0x1]
      %v3622 = vld [vmem:[%s2857 + $0xa8] sm:$0xe]
      %v3623 = vld [vmem:[%s2857 + $0xac] sm:$0xf]
      %v3624 = vld [vmem:[%s2857 + $0xb0] sm:$0x1]
      %v3625 = vld [vmem:[%s2857 + $0xb4] sm:$0xe]
      %v3626 = vld [vmem:[%s2857 + $0xb8] sm:$0xf]
      %v3627 = vld [vmem:[%s2857 + $0xbc] sm:$0x1]
      %v3676 = vrot.slane %v3580, 5
      %v3677 = vrot.slane %v3676, 4
      %v3678 = vrot.slane %v3581, 5
      %v3679 = vsel %vm1588, %v3677, %v3678
      %v3680 = vrot.slane %v3678, 4
      %v3681 = vrot.slane %v3582, 5
      %v3682 = vsel %vm1588, %v3680, %v3681
      %v3683 = vrot.slane %v3583, 5
      %v3684 = vrot.slane %v3683, 4
      %v3685 = vrot.slane %v3584, 5
      %v3686 = vsel %vm1588, %v3684, %v3685
      %v3687 = vrot.slane %v3685, 4
      %v3688 = vrot.slane %v3585, 5
      %v3689 = vsel %vm1588, %v3687, %v3688
      %v3690 = vrot.slane %v3586, 5
      %v3691 = vrot.slane %v3690, 4
      %v3692 = vrot.slane %v3587, 5
      %v3693 = vsel %vm1588, %v3691, %v3692
      %v3694 = vrot.slane %v3692, 4
      %v3695 = vrot.slane %v3588, 5
      %v3696 = vsel %vm1588, %v3694, %v3695
      %v3697 = vrot.slane %v3589, 5
      %v3698 = vrot.slane %v3697, 4
      %v3699 = vrot.slane %v3590, 5
      %v3700 = vsel %vm1588, %v3698, %v3699
      %v3701 = vrot.slane %v3699, 4
      %v3702 = vrot.slane %v3591, 5
      %v3703 = vsel %vm1588, %v3701, %v3702
      %v3704 = vrot.slane %v3592, 5
      %v3705 = vrot.slane %v3704, 4
      %v3706 = vrot.slane %v3593, 5
      %v3707 = vsel %vm1588, %v3705, %v3706
      %v3708 = vrot.slane %v3706, 4
      %v3709 = vrot.slane %v3594, 5
      %v3710 = vsel %vm1588, %v3708, %v3709
      %v3711 = vrot.slane %v3595, 5
      %v3712 = vrot.slane %v3711, 4
      %v3713 = vrot.slane %v3596, 5
      %v3714 = vsel %vm1588, %v3712, %v3713
      %v3715 = vrot.slane %v3713, 4
      %v3716 = vrot.slane %v3597, 5
      %v3717 = vsel %vm1588, %v3715, %v3716
      %v3718 = vrot.slane %v3598, 5
      %v3719 = vrot.slane %v3718, 4
      %v3720 = vrot.slane %v3599, 5
      %v3721 = vsel %vm1588, %v3719, %v3720
      %v3722 = vrot.slane %v3720, 4
      %v3723 = vrot.slane %v3600, 5
      %v3724 = vsel %vm1588, %v3722, %v3723
      %v3725 = vrot.slane %v3601, 5
      %v3726 = vrot.slane %v3725, 4
      %v3727 = vrot.slane %v3602, 5
      %v3728 = vsel %vm1588, %v3726, %v3727
      %v3729 = vrot.slane %v3727, 4
      %v3730 = vrot.slane %v3603, 5
      %v3731 = vsel %vm1588, %v3729, %v3730
      %v3732 = vrot.slane %v3604, 5
      %v3733 = vrot.slane %v3732, 4
      %v3734 = vrot.slane %v3605, 5
      %v3735 = vsel %vm1588, %v3733, %v3734
      %v3736 = vrot.slane %v3734, 4
      %v3737 = vrot.slane %v3606, 5
      %v3738 = vsel %vm1588, %v3736, %v3737
      %v3739 = vrot.slane %v3607, 5
      %v3740 = vrot.slane %v3739, 4
      %v3741 = vrot.slane %v3608, 5
      %v3742 = vsel %vm1588, %v3740, %v3741
      %v3743 = vrot.slane %v3741, 4
      %v3744 = vrot.slane %v3609, 5
      %v3745 = vsel %vm1588, %v3743, %v3744
      %v3746 = vrot.slane %v3610, 5
      %v3747 = vrot.slane %v3746, 4
      %v3748 = vrot.slane %v3611, 5
      %v3749 = vsel %vm1588, %v3747, %v3748
      %v3750 = vrot.slane %v3748, 4
      %v3751 = vrot.slane %v3612, 5
      %v3752 = vsel %vm1588, %v3750, %v3751
      %v3753 = vrot.slane %v3613, 5
      %v3754 = vrot.slane %v3753, 4
      %v3755 = vrot.slane %v3614, 5
      %v3756 = vsel %vm1588, %v3754, %v3755
      %v3757 = vrot.slane %v3755, 4
      %v3758 = vrot.slane %v3615, 5
      %v3759 = vsel %vm1588, %v3757, %v3758
      %v3760 = vrot.slane %v3616, 5
      %v3761 = vrot.slane %v3760, 4
      %v3762 = vrot.slane %v3617, 5
      %v3763 = vsel %vm1588, %v3761, %v3762
      %v3764 = vrot.slane %v3762, 4
      %v3765 = vrot.slane %v3618, 5
      %v3766 = vsel %vm1588, %v3764, %v3765
      %v3767 = vrot.slane %v3619, 5
      %v3768 = vrot.slane %v3767, 4
      %v3769 = vrot.slane %v3620, 5
      %v3770 = vsel %vm1588, %v3768, %v3769
      %v3771 = vrot.slane %v3769, 4
      %v3772 = vrot.slane %v3621, 5
      %v3773 = vsel %vm1588, %v3771, %v3772
      %v3774 = vrot.slane %v3622, 5
      %v3775 = vrot.slane %v3774, 4
      %v3776 = vrot.slane %v3623, 5
      %v3777 = vsel %vm1588, %v3775, %v3776
      %v3778 = vrot.slane %v3776, 4
      %v3779 = vrot.slane %v3624, 5
      %v3780 = vsel %vm1588, %v3778, %v3779
      %v3781 = vrot.slane %v3625, 5
      %v3782 = vrot.slane %v3781, 4
      %v3783 = vrot.slane %v3626, 5
      %v3784 = vsel %vm1588, %v3782, %v3783
      %v3785 = vrot.slane %v3783, 4
      %v3786 = vrot.slane %v3627, 5
      %v3787 = vsel %vm1588, %v3785, %v3786
      %v3788 = vunpack.c.l.b16 %v3679
      %v3789 = vunpack.c.l.b16 %v3682
      %v3790 = vunpack.c.l.b16 %v3686
      %v3791 = vunpack.c.l.b16 %v3689
      %v3792 = vunpack.c.l.b16 %v3693
      %v3793 = vunpack.c.l.b16 %v3696
      %v3794 = vunpack.c.l.b16 %v3700
      %v3795 = vunpack.c.l.b16 %v3703
      %v3796 = vunpack.c.l.b16 %v3707
      %v3797 = vunpack.c.l.b16 %v3710
      %v3798 = vunpack.c.l.b16 %v3714
      %v3799 = vunpack.c.l.b16 %v3717
      %v3800 = vunpack.c.l.b16 %v3721
      %v3801 = vunpack.c.l.b16 %v3724
      %v3802 = vunpack.c.l.b16 %v3728
      %v3803 = vunpack.c.l.b16 %v3731
      %v3804 = vunpack.c.l.b16 %v3735
      %v3805 = vunpack.c.l.b16 %v3738
      %v3806 = vunpack.c.l.b16 %v3742
      %v3807 = vunpack.c.l.b16 %v3745
      %v3808 = vunpack.c.l.b16 %v3749
      %v3809 = vunpack.c.l.b16 %v3752
      %v3810 = vunpack.c.l.b16 %v3756
      %v3811 = vunpack.c.l.b16 %v3759
      %v3812 = vunpack.c.l.b16 %v3763
      %v3813 = vunpack.c.l.b16 %v3766
      %v3814 = vunpack.c.l.b16 %v3770
      %v3815 = vunpack.c.l.b16 %v3773
      %v3816 = vunpack.c.l.b16 %v3777
      %v3817 = vunpack.c.l.b16 %v3780
      %v3818 = vunpack.c.l.b16 %v3784
      %v3819 = vunpack.c.l.b16 %v3787
      %v3820 = vpack.c.b16 %v3789, %v3788
      %v3821 = vpack.c.b16 %v3791, %v3790
      %v3822 = vpack.c.b16 %v3793, %v3792
      %v3823 = vpack.c.b16 %v3795, %v3794
      %v3824 = vpack.c.b16 %v3797, %v3796
      %v3825 = vpack.c.b16 %v3799, %v3798
      %v3826 = vpack.c.b16 %v3801, %v3800
      %v3827 = vpack.c.b16 %v3803, %v3802
      %v3828 = vpack.c.b16 %v3805, %v3804
      %v3829 = vpack.c.b16 %v3807, %v3806
      %v3830 = vpack.c.b16 %v3809, %v3808
      %v3831 = vpack.c.b16 %v3811, %v3810
      %v3832 = vpack.c.b16 %v3813, %v3812
      %v3833 = vpack.c.b16 %v3815, %v3814
      %v3834 = vpack.c.b16 %v3817, %v3816
      %v3835 = vpack.c.b16 %v3819, %v3818
      %3836 = vrot.lane.b32.xlu0 %v3820, 32
      %v3837 = vpop.permute.xlu0 %3836
      %3838 = vrot.lane.b32.xlu0 %v3821, 32
      %v3839 = vpop.permute.xlu0 %3838
      %3840 = vrot.lane.b32.xlu0 %v3822, 32
      %v3841 = vpop.permute.xlu0 %3840
      %3842 = vrot.lane.b32.xlu0 %v3823, 32
      %v3843 = vpop.permute.xlu0 %3842
      %3844 = vrot.lane.b32.xlu0 %v3824, 32
      %v3845 = vpop.permute.xlu0 %3844
      %3846 = vrot.lane.b32.xlu0 %v3825, 32
      %v3847 = vpop.permute.xlu0 %3846
      %3848 = vrot.lane.b32.xlu0 %v3826, 32
      %v3849 = vpop.permute.xlu0 %3848
      %3850 = vrot.lane.b32.xlu0 %v3827, 32
      %v3851 = vpop.permute.xlu0 %3850
      %3852 = vrot.lane.b32.xlu0 %v3828, 32
      %v3853 = vpop.permute.xlu0 %3852
      %3854 = vrot.lane.b32.xlu0 %v3829, 32
      %v3855 = vpop.permute.xlu0 %3854
      %3856 = vrot.lane.b32.xlu0 %v3830, 32
      %v3857 = vpop.permute.xlu0 %3856
      %3858 = vrot.lane.b32.xlu0 %v3831, 32
      %v3859 = vpop.permute.xlu0 %3858
      %3860 = vrot.lane.b32.xlu0 %v3832, 32
      %v3861 = vpop.permute.xlu0 %3860
      %3862 = vrot.lane.b32.xlu0 %v3833, 32
      %v3863 = vpop.permute.xlu0 %3862
      %3864 = vrot.lane.b32.xlu0 %v3834, 32
      %v3865 = vpop.permute.xlu0 %3864
      %3866 = vrot.lane.b32.xlu0 %v3835, 32
      %v3867 = vpop.permute.xlu0 %3866
      %vm3884 = vcmask 294144
      %3885 = vst.msk [vmem:[#allocation3] sm:$0xff] %vm3884, %v3837
      %3886 = vst.msk [vmem:[#allocation3 + $0x8] sm:$0xff] %vm3884, %v3839
      %3887 = vst.msk [vmem:[#allocation3 + $0x10] sm:$0xff] %vm3884, %v3841
      %3888 = vst.msk [vmem:[#allocation3 + $0x18] sm:$0xff] %vm3884, %v3843
      %3889 = vst.msk [vmem:[#allocation3 + $0x20] sm:$0xff] %vm3884, %v3845
      %3890 = vst.msk [vmem:[#allocation3 + $0x28] sm:$0xff] %vm3884, %v3847
      %3891 = vst.msk [vmem:[#allocation3 + $0x30] sm:$0xff] %vm3884, %v3849
      %3892 = vst.msk [vmem:[#allocation3 + $0x38] sm:$0xff] %vm3884, %v3851
      %3893 = vst.msk [vmem:[#allocation3 + $0x40] sm:$0xff] %vm3884, %v3853
      %3894 = vst.msk [vmem:[#allocation3 + $0x48] sm:$0xff] %vm3884, %v3855
      %3895 = vst.msk [vmem:[#allocation3 + $0x50] sm:$0xff] %vm3884, %v3857
      %3896 = vst.msk [vmem:[#allocation3 + $0x58] sm:$0xff] %vm3884, %v3859
      %3897 = vst.msk [vmem:[#allocation3 + $0x60] sm:$0xff] %vm3884, %v3861
      %3898 = vst.msk [vmem:[#allocation3 + $0x68] sm:$0xff] %vm3884, %v3863
      %3899 = vst.msk [vmem:[#allocation3 + $0x70] sm:$0xff] %vm3884, %v3865
      %3900 = vst.msk [vmem:[#allocation3 + $0x78] sm:$0xff] %vm3884, %v3867
      %v3901 = vld [vmem:[#allocation3] sm:$0xff]
      %v3902 = vld [vmem:[#allocation3 + $0x8] sm:$0xff]
      %v3903 = vld [vmem:[#allocation3 + $0x10] sm:$0xff]
      %v3904 = vld [vmem:[#allocation3 + $0x18] sm:$0xff]
      %v3905 = vld [vmem:[#allocation3 + $0x20] sm:$0xff]
      %v3906 = vld [vmem:[#allocation3 + $0x28] sm:$0xff]
      %v3907 = vld [vmem:[#allocation3 + $0x30] sm:$0xff]
      %v3908 = vld [vmem:[#allocation3 + $0x38] sm:$0xff]
      %v3909 = vld [vmem:[#allocation3 + $0x40] sm:$0xff]
      %v3910 = vld [vmem:[#allocation3 + $0x48] sm:$0xff]
      %v3911 = vld [vmem:[#allocation3 + $0x50] sm:$0xff]
      %v3912 = vld [vmem:[#allocation3 + $0x58] sm:$0xff]
      %v3913 = vld [vmem:[#allocation3 + $0x60] sm:$0xff]
      %v3914 = vld [vmem:[#allocation3 + $0x68] sm:$0xff]
      %v3915 = vld [vmem:[#allocation3 + $0x70] sm:$0xff]
      %v3916 = vld [vmem:[#allocation3 + $0x78] sm:$0xff]
      %v3917 = vld [vmem:[%s1] sm:$0xf]
      %v3918 = vld [vmem:[%s1 + $0x4] sm:$0xf]
      %v3919 = vld [vmem:[%s1 + $0x8] sm:$0xf]
      %v3920 = vld [vmem:[%s1 + $0xc] sm:$0xf]
      %v3921 = vld [vmem:[%s1 + $0x10] sm:$0x3]
      %v3922 = vld [vmem:[%s2] sm:$0x1]
      %v3924 = vlaneseq
      %v3925 = vshrl.u32 %v3924, 7
      %v3926 = vsub.s32 0, %v3925
      %v3927 = vrot.slane %v3922, %v3926
      %v3934 = vunpack.c.l.b16 %v3917
      %v3935 = vunpack.c.l.b16 %v3918
      %v3936 = vunpack.c.l.b16 %v3919
      %v3937 = vunpack.c.l.b16 %v3920
      %v3938 = vunpack.c.l.b16 %v3921
      %v3939 = vpack.c.b16 %v3935, %v3934
      %v3940 = vpack.c.b16 %v3937, %v3936
      %v3941 = vpack.c.b16 %v3938, %v3938
      %vm3944 = vcmask 293888
      %v3946 = vsel %vm3944, %v3901, 0
      %v3949 = vsel %vm3944, %v3902, 0
      %v3952 = vsel %vm3944, %v3903, 0
      %v3955 = vsel %vm3944, %v3904, 0
      %v3958 = vsel %vm3944, %v3905, 0
      %v3961 = vsel %vm3944, %v3906, 0
      %v3964 = vsel %vm3944, %v3907, 0
      %v3967 = vsel %vm3944, %v3908, 0
      %v3970 = vsel %vm3944, %v3909, 0
      %v3973 = vsel %vm3944, %v3910, 0
      %v3976 = vsel %vm3944, %v3911, 0
      %v3979 = vsel %vm3944, %v3912, 0
      %v3982 = vsel %vm3944, %v3913, 0
      %v3985 = vsel %vm3944, %v3914, 0
      %v3988 = vsel %vm3944, %v3915, 0
      %v3991 = vsel %vm3944, %v3916, 0
      %vm3993 = vcmask 1041408
      %v3995 = vsel %vm3993, %v3941, 0
      %3997 = vmatprep.subr.bf16.mxu0 0
      %3998 = vmatpush1.bf16.msra.mxu0 %v3939
      %3999 = vmatprep.subr.bf16.mxu0 0
      %4000 = vmatpush1.bf16.msra.mxu0 %v3940
      %4001 = vmatprep.subr.bf16.mxu0 0
      %4002 = vmatpush1.bf16.msra.mxu0 %v3995
      %4003 = vmatprep.subr.bf16.mxu0 0
      %4004 = vmatpush1.bf16.msra.mxu0 0
      %4005 = vmatprep.subr.bf16.mxu0 0
      %4006 = vmatpush1.bf16.msra.mxu0 0
      %4007 = vmatprep.subr.bf16.mxu0 0
      %4008 = vmatpush1.bf16.msra.mxu0 0
      %4009 = vmatprep.subr.bf16.mxu0 0
      %4010 = vmatpush1.bf16.msra.mxu0 0
      %4011 = vmatprep.subr.bf16.mxu0 0
      %4012 = vmatpush1.bf16.msra.mxu0 0
      %4013 = vmatprep.subr.bf16.mxu0 0
      %4014 = vmatpush1.bf16.msra.mxu0 0
      %4015 = vmatprep.subr.bf16.mxu0 0
      %4016 = vmatpush1.bf16.msra.mxu0 0
      %4017 = vmatprep.subr.bf16.mxu0 0
      %4018 = vmatpush1.bf16.msra.mxu0 0
      %4019 = vmatprep.subr.bf16.mxu0 0
      %4020 = vmatpush1.bf16.msra.mxu0 0
      %4021 = vmatprep.subr.bf16.mxu0 0
      %4022 = vmatpush1.bf16.msra.mxu0 0
      %4023 = vmatprep.subr.bf16.mxu0 0
      %4024 = vmatpush1.bf16.msra.mxu0 0
      %4025 = vmatprep.subr.bf16.mxu0 0
      %4026 = vmatpush1.bf16.msra.mxu0 0
      %4027 = vmatprep.subr.bf16.mxu0 0
      %4028 = vmatpush1.bf16.msra.mxu0 0
      %4029 = vmatprep.mubr.bf16.mxu0 0
      %4030 = vmatmul.mubr.bf16.gmra.mrb[0].mxu0 %v3946
      %v4031 = vpop.f32.mrb[0].mxu0
      %v4032 = vadd.f32 %v3927, %v4031
      %v4033 = vpop.f32.mrb[0].mxu0
      %v4034 = vpop.f32.mrb[0].mxu0
      %v4035 = vadd.f32 %v3927, %v4034
      %v4036 = vpop.f32.mrb[0].mxu0
      %4037 = vmatprep.mubr.bf16.mxu0 0
      %4038 = vmatmul.mubr.bf16.gmra.mrb[0].mxu0 %v3949
      %v4039 = vpop.f32.mrb[0].mxu0
      %v4040 = vadd.f32 %v3927, %v4039
      %v4041 = vpop.f32.mrb[0].mxu0
      %v4042 = vpop.f32.mrb[0].mxu0
      %v4043 = vadd.f32 %v3927, %v4042
      %v4044 = vpop.f32.mrb[0].mxu0
      %4045 = vmatprep.mubr.bf16.mxu0 0
      %4046 = vmatmul.mubr.bf16.gmra.mrb[0].mxu0 %v3952
      %v4047 = vpop.f32.mrb[0].mxu0
      %v4048 = vadd.f32 %v3927, %v4047
      %v4049 = vpop.f32.mrb[0].mxu0
      %v4050 = vpop.f32.mrb[0].mxu0
      %v4051 = vadd.f32 %v3927, %v4050
      %v4052 = vpop.f32.mrb[0].mxu0
      %4053 = vmatprep.mubr.bf16.mxu0 0
      %4054 = vmatmul.mubr.bf16.gmra.mrb[0].mxu0 %v3955
      %v4055 = vpop.f32.mrb[0].mxu0
      %v4056 = vadd.f32 %v3927, %v4055
      %v4057 = vpop.f32.mrb[0].mxu0
      %v4058 = vpop.f32.mrb[0].mxu0
      %v4059 = vadd.f32 %v3927, %v4058
      %v4060 = vpop.f32.mrb[0].mxu0
      %4061 = vmatprep.mubr.bf16.mxu0 0
      %4062 = vmatmul.mubr.bf16.gmra.mrb[0].mxu0 %v3958
      %v4063 = vpop.f32.mrb[0].mxu0
      %v4064 = vadd.f32 %v3927, %v4063
      %v4065 = vpop.f32.mrb[0].mxu0
      %v4066 = vpop.f32.mrb[0].mxu0
      %v4067 = vadd.f32 %v3927, %v4066
      %v4068 = vpop.f32.mrb[0].mxu0
      %4069 = vmatprep.mubr.bf16.mxu0 0
      %4070 = vmatmul.mubr.bf16.gmra.mrb[0].mxu0 %v3961
      %v4071 = vpop.f32.mrb[0].mxu0
      %v4072 = vadd.f32 %v3927, %v4071
      %v4073 = vpop.f32.mrb[0].mxu0
      %v4074 = vpop.f32.mrb[0].mxu0
      %v4075 = vadd.f32 %v3927, %v4074
      %v4076 = vpop.f32.mrb[0].mxu0
      %4077 = vmatprep.mubr.bf16.mxu0 0
      %4078 = vmatmul.mubr.bf16.gmra.mrb[0].mxu0 %v3964
      %v4079 = vpop.f32.mrb[0].mxu0
      %v4080 = vadd.f32 %v3927, %v4079
      %v4081 = vpop.f32.mrb[0].mxu0
      %v4082 = vpop.f32.mrb[0].mxu0
      %v4083 = vadd.f32 %v3927, %v4082
      %v4084 = vpop.f32.mrb[0].mxu0
      %4085 = vmatprep.mubr.bf16.mxu0 0
      %4086 = vmatmul.mubr.bf16.gmra.mrb[0].mxu0 %v3967
      %v4087 = vpop.f32.mrb[0].mxu0
      %v4088 = vadd.f32 %v3927, %v4087
      %v4089 = vpop.f32.mrb[0].mxu0
      %v4090 = vpop.f32.mrb[0].mxu0
      %v4091 = vadd.f32 %v3927, %v4090
      %v4092 = vpop.f32.mrb[0].mxu0
      %4093 = vmatprep.mubr.bf16.mxu0 0
      %4094 = vmatmul.mubr.bf16.gmra.mrb[0].mxu0 %v3970
      %v4095 = vpop.f32.mrb[0].mxu0
      %v4096 = vadd.f32 %v3927, %v4095
      %v4097 = vpop.f32.mrb[0].mxu0
      %v4098 = vpop.f32.mrb[0].mxu0
      %v4099 = vadd.f32 %v3927, %v4098
      %v4100 = vpop.f32.mrb[0].mxu0
      %4101 = vmatprep.mubr.bf16.mxu0 0
      %4102 = vmatmul.mubr.bf16.gmra.mrb[0].mxu0 %v3973
      %v4103 = vpop.f32.mrb[0].mxu0
      %v4104 = vadd.f32 %v3927, %v4103
      %v4105 = vpop.f32.mrb[0].mxu0
      %v4106 = vpop.f32.mrb[0].mxu0
      %v4107 = vadd.f32 %v3927, %v4106
      %v4108 = vpop.f32.mrb[0].mxu0
      %4109 = vmatprep.mubr.bf16.mxu0 0
      %4110 = vmatmul.mubr.bf16.gmra.mrb[0].mxu0 %v3976
      %v4111 = vpop.f32.mrb[0].mxu0
      %v4112 = vadd.f32 %v3927, %v4111
      %v4113 = vpop.f32.mrb[0].mxu0
      %v4114 = vpop.f32.mrb[0].mxu0
      %v4115 = vadd.f32 %v3927, %v4114
      %v4116 = vpop.f32.mrb[0].mxu0
      %4117 = vmatprep.mubr.bf16.mxu0 0
      %4118 = vmatmul.mubr.bf16.gmra.mrb[0].mxu0 %v3979
      %v4119 = vpop.f32.mrb[0].mxu0
      %v4120 = vadd.f32 %v3927, %v4119
      %v4121 = vpop.f32.mrb[0].mxu0
      %v4122 = vpop.f32.mrb[0].mxu0
      %v4123 = vadd.f32 %v3927, %v4122
      %v4124 = vpop.f32.mrb[0].mxu0
      %4125 = vmatprep.mubr.bf16.mxu0 0
      %4126 = vmatmul.mubr.bf16.gmra.mrb[0].mxu0 %v3982
      %v4127 = vpop.f32.mrb[0].mxu0
      %v4128 = vadd.f32 %v3927, %v4127
      %v4129 = vpop.f32.mrb[0].mxu0
      %v4130 = vpop.f32.mrb[0].mxu0
      %v4131 = vadd.f32 %v3927, %v4130
      %v4132 = vpop.f32.mrb[0].mxu0
      %4133 = vmatprep.mubr.bf16.mxu0 0
      %4134 = vmatmul.mubr.bf16.gmra.mrb[0].mxu0 %v3985
      %v4135 = vpop.f32.mrb[0].mxu0
      %v4136 = vadd.f32 %v3927, %v4135
      %v4137 = vpop.f32.mrb[0].mxu0
      %v4138 = vpop.f32.mrb[0].mxu0
      %v4139 = vadd.f32 %v3927, %v4138
      %v4140 = vpop.f32.mrb[0].mxu0
      %4141 = vmatprep.mubr.bf16.mxu0 0
      %4142 = vmatmul.mubr.bf16.gmra.mrb[0].mxu0 %v3988
      %v4143 = vpop.f32.mrb[0].mxu0
      %v4144 = vadd.f32 %v3927, %v4143
      %v4145 = vpop.f32.mrb[0].mxu0
      %v4146 = vpop.f32.mrb[0].mxu0
      %v4147 = vadd.f32 %v3927, %v4146
      %v4148 = vpop.f32.mrb[0].mxu0
      %4149 = vmatprep.mubr.bf16.mxu0 0
      %4150 = vmatmul.mubr.bf16.gmra.mrb[0].mxu0 %v3991
      %v4151 = vpop.f32.mrb[0].mxu0
      %v4152 = vadd.f32 %v3927, %v4151
      %v4153 = vpop.f32.mrb[0].mxu0
      %v4154 = vpop.f32.mrb[0].mxu0
      %v4155 = vadd.f32 %v3927, %v4154
      %v4156 = vpop.f32.mrb[0].mxu0
      %4157 = vdwg.mxu0
      %v4158 = vmax.f32 %v4032, 0.0
      %v4159 = vmax.f32 %v4035, 0.0
      %v4160 = vmax.f32 %v4040, 0.0
      %v4161 = vmax.f32 %v4043, 0.0
      %v4162 = vmax.f32 %v4048, 0.0
      %v4163 = vmax.f32 %v4051, 0.0
      %v4164 = vmax.f32 %v4056, 0.0
      %v4165 = vmax.f32 %v4059, 0.0
      %v4166 = vmax.f32 %v4064, 0.0
      %v4167 = vmax.f32 %v4067, 0.0
      %v4168 = vmax.f32 %v4072, 0.0
      %v4169 = vmax.f32 %v4075, 0.0
      %v4170 = vmax.f32 %v4080, 0.0
      %v4171 = vmax.f32 %v4083, 0.0
      %v4172 = vmax.f32 %v4088, 0.0
      %v4173 = vmax.f32 %v4091, 0.0
      %v4174 = vmax.f32 %v4096, 0.0
      %v4175 = vmax.f32 %v4099, 0.0
      %v4176 = vmax.f32 %v4104, 0.0
      %v4177 = vmax.f32 %v4107, 0.0
      %v4178 = vmax.f32 %v4112, 0.0
      %v4179 = vmax.f32 %v4115, 0.0
      %v4180 = vmax.f32 %v4120, 0.0
      %v4181 = vmax.f32 %v4123, 0.0
      %v4182 = vmax.f32 %v4128, 0.0
      %v4183 = vmax.f32 %v4131, 0.0
      %v4184 = vmax.f32 %v4136, 0.0
      %v4185 = vmax.f32 %v4139, 0.0
      %v4186 = vmax.f32 %v4144, 0.0
      %v4187 = vmax.f32 %v4147, 0.0
      %v4188 = vmax.f32 %v4152, 0.0
      %v4189 = vmax.f32 %v4155, 0.0
      %vm4190 = vcmask 261120
      %v4191 = vsel %vm4190, %v4158, -inf
      %v4192 = vsel %vm4190, %v4160, -inf
      %v4193 = vmax.f32 %v4191, %v4192
      %v4194 = vsel %vm4190, %v4159, -inf
      %v4195 = vsel %vm4190, %v4161, -inf
      %v4196 = vmax.f32 %v4194, %v4195
      %v4197 = vsel %vm4190, %v4162, -inf
      %v4198 = vsel %vm4190, %v4164, -inf
      %v4199 = vmax.f32 %v4197, %v4198
      %v4200 = vsel %vm4190, %v4163, -inf
      %v4201 = vsel %vm4190, %v4165, -inf
      %v4202 = vmax.f32 %v4200, %v4201
      %v4203 = vsel %vm4190, %v4166, -inf
      %v4204 = vsel %vm4190, %v4168, -inf
      %v4205 = vmax.f32 %v4203, %v4204
      %v4206 = vsel %vm4190, %v4167, -inf
      %v4207 = vsel %vm4190, %v4169, -inf
      %v4208 = vmax.f32 %v4206, %v4207
      %v4209 = vsel %vm4190, %v4170, -inf
      %v4210 = vsel %vm4190, %v4172, -inf
      %v4211 = vmax.f32 %v4209, %v4210
      %v4212 = vsel %vm4190, %v4171, -inf
      %v4213 = vsel %vm4190, %v4173, -inf
      %v4214 = vmax.f32 %v4212, %v4213
      %v4215 = vsel %vm4190, %v4174, -inf
      %v4216 = vsel %vm4190, %v4176, -inf
      %v4217 = vmax.f32 %v4215, %v4216
      %v4218 = vsel %vm4190, %v4175, -inf
      %v4219 = vsel %vm4190, %v4177, -inf
      %v4220 = vmax.f32 %v4218, %v4219
      %v4221 = vsel %vm4190, %v4178, -inf
      %v4222 = vsel %vm4190, %v4180, -inf
      %v4223 = vmax.f32 %v4221, %v4222
      %v4224 = vsel %vm4190, %v4179, -inf
      %v4225 = vsel %vm4190, %v4181, -inf
      %v4226 = vmax.f32 %v4224, %v4225
      %v4227 = vsel %vm4190, %v4182, -inf
      %v4228 = vsel %vm4190, %v4184, -inf
      %v4229 = vmax.f32 %v4227, %v4228
      %v4230 = vsel %vm4190, %v4183, -inf
      %v4231 = vsel %vm4190, %v4185, -inf
      %v4232 = vmax.f32 %v4230, %v4231
      %v4233 = vsel %vm4190, %v4186, -inf
      %v4234 = vsel %vm4190, %v4188, -inf
      %v4235 = vmax.f32 %v4233, %v4234
      %v4236 = vsel %vm4190, %v4187, -inf
      %v4237 = vsel %vm4190, %v4189, -inf
      %v4238 = vmax.f32 %v4236, %v4237
      %v4255 = vcombine.high %v4193, %v4193
      %v4257 = vunpack.c.l.s4 1983009808
      %v4258 = vunpack.c.0.s8 %v4257
      %v4259 = vlaneseq
      %v4260 = vshrl.u32 %v4259, 7
      %v4261 = vsub.s32 %v4258, %v4260
      %v4262 = vrot.slane %v4193, %v4261
      %v4264 = vunpack.c.l.s4 1983009808
      %v4265 = vunpack.c.0.s8 %v4264
      %v4266 = vlaneseq
      %v4267 = vshrl.u32 %v4266, 7
      %v4268 = vsub.s32 %v4265, %v4267
      %v4269 = vrot.slane %v4255, %v4268
      %v4270 = vcombine.high %v4262, %v4262
      %v4271 = vcombine.high %v4269, %v4269
      %v4272 = vcombine.high %v4196, %v4196
      %v4274 = vunpack.c.l.s4 1983009808
      %v4275 = vunpack.c.0.s8 %v4274
      %v4276 = vlaneseq
      %v4277 = vshrl.u32 %v4276, 7
      %v4278 = vsub.s32 %v4275, %v4277
      %v4279 = vrot.slane %v4196, %v4278
      %v4281 = vunpack.c.l.s4 1983009808
      %v4282 = vunpack.c.0.s8 %v4281
      %v4283 = vlaneseq
      %v4284 = vshrl.u32 %v4283, 7
      %v4285 = vsub.s32 %v4282, %v4284
      %v4286 = vrot.slane %v4272, %v4285
      %v4287 = vcombine.high %v4279, %v4279
      %v4288 = vcombine.high %v4286, %v4286
      %v4289 = vcombine.high %v4199, %v4199
      %v4291 = vunpack.c.l.s4 1983009808
      %v4292 = vunpack.c.0.s8 %v4291
      %v4293 = vlaneseq
      %v4294 = vshrl.u32 %v4293, 7
      %v4295 = vsub.s32 %v4292, %v4294
      %v4296 = vrot.slane %v4199, %v4295
      %v4298 = vunpack.c.l.s4 1983009808
      %v4299 = vunpack.c.0.s8 %v4298
      %v4300 = vlaneseq
      %v4301 = vshrl.u32 %v4300, 7
      %v4302 = vsub.s32 %v4299, %v4301
      %v4303 = vrot.slane %v4289, %v4302
      %v4304 = vcombine.high %v4296, %v4296
      %v4305 = vcombine.high %v4303, %v4303
      %v4306 = vcombine.high %v4202, %v4202
      %v4308 = vunpack.c.l.s4 1983009808
      %v4309 = vunpack.c.0.s8 %v4308
      %v4310 = vlaneseq
      %v4311 = vshrl.u32 %v4310, 7
      %v4312 = vsub.s32 %v4309, %v4311
      %v4313 = vrot.slane %v4202, %v4312
      %v4315 = vunpack.c.l.s4 1983009808
      %v4316 = vunpack.c.0.s8 %v4315
      %v4317 = vlaneseq
      %v4318 = vshrl.u32 %v4317, 7
      %v4319 = vsub.s32 %v4316, %v4318
      %v4320 = vrot.slane %v4306, %v4319
      %v4321 = vcombine.high %v4313, %v4313
      %v4322 = vcombine.high %v4320, %v4320
      %v4323 = vcombine.high %v4205, %v4205
      %v4325 = vunpack.c.l.s4 1983009808
      %v4326 = vunpack.c.0.s8 %v4325
      %v4327 = vlaneseq
      %v4328 = vshrl.u32 %v4327, 7
      %v4329 = vsub.s32 %v4326, %v4328
      %v4330 = vrot.slane %v4205, %v4329
      %v4332 = vunpack.c.l.s4 1983009808
      %v4333 = vunpack.c.0.s8 %v4332
      %v4334 = vlaneseq
      %v4335 = vshrl.u32 %v4334, 7
      %v4336 = vsub.s32 %v4333, %v4335
      %v4337 = vrot.slane %v4323, %v4336
      %v4338 = vcombine.high %v4330, %v4330
      %v4339 = vcombine.high %v4337, %v4337
      %v4340 = vcombine.high %v4208, %v4208
      %v4342 = vunpack.c.l.s4 1983009808
      %v4343 = vunpack.c.0.s8 %v4342
      %v4344 = vlaneseq
      %v4345 = vshrl.u32 %v4344, 7
      %v4346 = vsub.s32 %v4343, %v4345
      %v4347 = vrot.slane %v4208, %v4346
      %v4349 = vunpack.c.l.s4 1983009808
      %v4350 = vunpack.c.0.s8 %v4349
      %v4351 = vlaneseq
      %v4352 = vshrl.u32 %v4351, 7
      %v4353 = vsub.s32 %v4350, %v4352
      %v4354 = vrot.slane %v4340, %v4353
      %v4355 = vcombine.high %v4347, %v4347
      %v4356 = vcombine.high %v4354, %v4354
      %v4357 = vcombine.high %v4211, %v4211
      %v4359 = vunpack.c.l.s4 1983009808
      %v4360 = vunpack.c.0.s8 %v4359
      %v4361 = vlaneseq
      %v4362 = vshrl.u32 %v4361, 7
      %v4363 = vsub.s32 %v4360, %v4362
      %v4364 = vrot.slane %v4211, %v4363
      %v4366 = vunpack.c.l.s4 1983009808
      %v4367 = vunpack.c.0.s8 %v4366
      %v4368 = vlaneseq
      %v4369 = vshrl.u32 %v4368, 7
      %v4370 = vsub.s32 %v4367, %v4369
      %v4371 = vrot.slane %v4357, %v4370
      %v4372 = vcombine.high %v4364, %v4364
      %v4373 = vcombine.high %v4371, %v4371
      %v4374 = vcombine.high %v4214, %v4214
      %v4376 = vunpack.c.l.s4 1983009808
      %v4377 = vunpack.c.0.s8 %v4376
      %v4378 = vlaneseq
      %v4379 = vshrl.u32 %v4378, 7
      %v4380 = vsub.s32 %v4377, %v4379
      %v4381 = vrot.slane %v4214, %v4380
      %v4383 = vunpack.c.l.s4 1983009808
      %v4384 = vunpack.c.0.s8 %v4383
      %v4385 = vlaneseq
      %v4386 = vshrl.u32 %v4385, 7
      %v4387 = vsub.s32 %v4384, %v4386
      %v4388 = vrot.slane %v4374, %v4387
      %v4389 = vcombine.high %v4381, %v4381
      %v4390 = vcombine.high %v4388, %v4388
      %v4391 = vcombine.high %v4217, %v4217
      %v4393 = vunpack.c.l.s4 1983009808
      %v4394 = vunpack.c.0.s8 %v4393
      %v4395 = vlaneseq
      %v4396 = vshrl.u32 %v4395, 7
      %v4397 = vsub.s32 %v4394, %v4396
      %v4398 = vrot.slane %v4217, %v4397
      %v4400 = vunpack.c.l.s4 1983009808
      %v4401 = vunpack.c.0.s8 %v4400
      %v4402 = vlaneseq
      %v4403 = vshrl.u32 %v4402, 7
      %v4404 = vsub.s32 %v4401, %v4403
      %v4405 = vrot.slane %v4391, %v4404
      %v4406 = vcombine.high %v4398, %v4398
      %v4407 = vcombine.high %v4405, %v4405
      %v4408 = vcombine.high %v4220, %v4220
      %v4410 = vunpack.c.l.s4 1983009808
      %v4411 = vunpack.c.0.s8 %v4410
      %v4412 = vlaneseq
      %v4413 = vshrl.u32 %v4412, 7
      %v4414 = vsub.s32 %v4411, %v4413
      %v4415 = vrot.slane %v4220, %v4414
      %v4417 = vunpack.c.l.s4 1983009808
      %v4418 = vunpack.c.0.s8 %v4417
      %v4419 = vlaneseq
      %v4420 = vshrl.u32 %v4419, 7
      %v4421 = vsub.s32 %v4418, %v4420
      %v4422 = vrot.slane %v4408, %v4421
      %v4423 = vcombine.high %v4415, %v4415
      %v4424 = vcombine.high %v4422, %v4422
      %v4425 = vcombine.high %v4223, %v4223
      %v4427 = vunpack.c.l.s4 1983009808
      %v4428 = vunpack.c.0.s8 %v4427
      %v4429 = vlaneseq
      %v4430 = vshrl.u32 %v4429, 7
      %v4431 = vsub.s32 %v4428, %v4430
      %v4432 = vrot.slane %v4223, %v4431
      %v4434 = vunpack.c.l.s4 1983009808
      %v4435 = vunpack.c.0.s8 %v4434
      %v4436 = vlaneseq
      %v4437 = vshrl.u32 %v4436, 7
      %v4438 = vsub.s32 %v4435, %v4437
      %v4439 = vrot.slane %v4425, %v4438
      %v4440 = vcombine.high %v4432, %v4432
      %v4441 = vcombine.high %v4439, %v4439
      %v4442 = vcombine.high %v4226, %v4226
      %v4444 = vunpack.c.l.s4 1983009808
      %v4445 = vunpack.c.0.s8 %v4444
      %v4446 = vlaneseq
      %v4447 = vshrl.u32 %v4446, 7
      %v4448 = vsub.s32 %v4445, %v4447
      %v4449 = vrot.slane %v4226, %v4448
      %v4451 = vunpack.c.l.s4 1983009808
      %v4452 = vunpack.c.0.s8 %v4451
      %v4453 = vlaneseq
      %v4454 = vshrl.u32 %v4453, 7
      %v4455 = vsub.s32 %v4452, %v4454
      %v4456 = vrot.slane %v4442, %v4455
      %v4457 = vcombine.high %v4449, %v4449
      %v4458 = vcombine.high %v4456, %v4456
      %v4459 = vcombine.high %v4229, %v4229
      %v4461 = vunpack.c.l.s4 1983009808
      %v4462 = vunpack.c.0.s8 %v4461
      %v4463 = vlaneseq
      %v4464 = vshrl.u32 %v4463, 7
      %v4465 = vsub.s32 %v4462, %v4464
      %v4466 = vrot.slane %v4229, %v4465
      %v4468 = vunpack.c.l.s4 1983009808
      %v4469 = vunpack.c.0.s8 %v4468
      %v4470 = vlaneseq
      %v4471 = vshrl.u32 %v4470, 7
      %v4472 = vsub.s32 %v4469, %v4471
      %v4473 = vrot.slane %v4459, %v4472
      %v4474 = vcombine.high %v4466, %v4466
      %v4475 = vcombine.high %v4473, %v4473
      %v4476 = vcombine.high %v4232, %v4232
      %v4478 = vunpack.c.l.s4 1983009808
      %v4479 = vunpack.c.0.s8 %v4478
      %v4480 = vlaneseq
      %v4481 = vshrl.u32 %v4480, 7
      %v4482 = vsub.s32 %v4479, %v4481
      %v4483 = vrot.slane %v4232, %v4482
      %v4485 = vunpack.c.l.s4 1983009808
      %v4486 = vunpack.c.0.s8 %v4485
      %v4487 = vlaneseq
      %v4488 = vshrl.u32 %v4487, 7
      %v4489 = vsub.s32 %v4486, %v4488
      %v4490 = vrot.slane %v4476, %v4489
      %v4491 = vcombine.high %v4483, %v4483
      %v4492 = vcombine.high %v4490, %v4490
      %v4493 = vcombine.high %v4235, %v4235
      %v4495 = vunpack.c.l.s4 1983009808
      %v4496 = vunpack.c.0.s8 %v4495
      %v4497 = vlaneseq
      %v4498 = vshrl.u32 %v4497, 7
      %v4499 = vsub.s32 %v4496, %v4498
      %v4500 = vrot.slane %v4235, %v4499
      %v4502 = vunpack.c.l.s4 1983009808
      %v4503 = vunpack.c.0.s8 %v4502
      %v4504 = vlaneseq
      %v4505 = vshrl.u32 %v4504, 7
      %v4506 = vsub.s32 %v4503, %v4505
      %v4507 = vrot.slane %v4493, %v4506
      %v4508 = vcombine.high %v4500, %v4500
      %v4509 = vcombine.high %v4507, %v4507
      %v4510 = vcombine.high %v4238, %v4238
      %v4512 = vunpack.c.l.s4 1983009808
      %v4513 = vunpack.c.0.s8 %v4512
      %v4514 = vlaneseq
      %v4515 = vshrl.u32 %v4514, 7
      %v4516 = vsub.s32 %v4513, %v4515
      %v4517 = vrot.slane %v4238, %v4516
      %v4519 = vunpack.c.l.s4 1983009808
      %v4520 = vunpack.c.0.s8 %v4519
      %v4521 = vlaneseq
      %v4522 = vshrl.u32 %v4521, 7
      %v4523 = vsub.s32 %v4520, %v4522
      %v4524 = vrot.slane %v4510, %v4523
      %v4525 = vcombine.high %v4517, %v4517
      %v4526 = vcombine.high %v4524, %v4524
      %vm4591 = vcmask 254976
      %v4592 = vsel %vm4591, %v4262, -inf
      %v4593 = vrot.slane %v4592, 4
      %v4594 = vmax.f32 %v4592, %v4593
      %v4595 = vrot.slane %v4594, 2
      %v4596 = vmax.f32 %v4594, %v4595
      %v4597 = vrot.slane %v4596, 1
      %v4598 = vmax.f32 %v4596, %v4597
      %v4599 = vsel %vm4591, %v4270, -inf
      %v4600 = vrot.slane %v4599, 4
      %v4601 = vmax.f32 %v4599, %v4600
      %v4602 = vrot.slane %v4601, 2
      %v4603 = vmax.f32 %v4601, %v4602
      %v4604 = vrot.slane %v4603, 1
      %v4605 = vmax.f32 %v4603, %v4604
      %v4606 = vsel %vm4591, %v4269, -inf
      %v4607 = vrot.slane %v4606, 4
      %v4608 = vmax.f32 %v4606, %v4607
      %v4609 = vrot.slane %v4608, 2
      %v4610 = vmax.f32 %v4608, %v4609
      %v4611 = vrot.slane %v4610, 1
      %v4612 = vmax.f32 %v4610, %v4611
      %v4613 = vsel %vm4591, %v4271, -inf
      %v4614 = vrot.slane %v4613, 4
      %v4615 = vmax.f32 %v4613, %v4614
      %v4616 = vrot.slane %v4615, 2
      %v4617 = vmax.f32 %v4615, %v4616
      %v4618 = vrot.slane %v4617, 1
      %v4619 = vmax.f32 %v4617, %v4618
      %v4620 = vsel %vm4591, %v4279, -inf
      %v4621 = vrot.slane %v4620, 4
      %v4622 = vmax.f32 %v4620, %v4621
      %v4623 = vrot.slane %v4622, 2
      %v4624 = vmax.f32 %v4622, %v4623
      %v4625 = vrot.slane %v4624, 1
      %v4626 = vmax.f32 %v4624, %v4625
      %v4627 = vsel %vm4591, %v4287, -inf
      %v4628 = vrot.slane %v4627, 4
      %v4629 = vmax.f32 %v4627, %v4628
      %v4630 = vrot.slane %v4629, 2
      %v4631 = vmax.f32 %v4629, %v4630
      %v4632 = vrot.slane %v4631, 1
      %v4633 = vmax.f32 %v4631, %v4632
      %v4634 = vsel %vm4591, %v4286, -inf
      %v4635 = vrot.slane %v4634, 4
      %v4636 = vmax.f32 %v4634, %v4635
      %v4637 = vrot.slane %v4636, 2
      %v4638 = vmax.f32 %v4636, %v4637
      %v4639 = vrot.slane %v4638, 1
      %v4640 = vmax.f32 %v4638, %v4639
      %v4641 = vsel %vm4591, %v4288, -inf
      %v4642 = vrot.slane %v4641, 4
      %v4643 = vmax.f32 %v4641, %v4642
      %v4644 = vrot.slane %v4643, 2
      %v4645 = vmax.f32 %v4643, %v4644
      %v4646 = vrot.slane %v4645, 1
      %v4647 = vmax.f32 %v4645, %v4646
      %v4648 = vsel %vm4591, %v4296, -inf
      %v4649 = vrot.slane %v4648, 4
      %v4650 = vmax.f32 %v4648, %v4649
      %v4651 = vrot.slane %v4650, 2
      %v4652 = vmax.f32 %v4650, %v4651
      %v4653 = vrot.slane %v4652, 1
      %v4654 = vmax.f32 %v4652, %v4653
      %v4655 = vsel %vm4591, %v4304, -inf
      %v4656 = vrot.slane %v4655, 4
      %v4657 = vmax.f32 %v4655, %v4656
      %v4658 = vrot.slane %v4657, 2
      %v4659 = vmax.f32 %v4657, %v4658
      %v4660 = vrot.slane %v4659, 1
      %v4661 = vmax.f32 %v4659, %v4660
      %v4662 = vsel %vm4591, %v4303, -inf
      %v4663 = vrot.slane %v4662, 4
      %v4664 = vmax.f32 %v4662, %v4663
      %v4665 = vrot.slane %v4664, 2
      %v4666 = vmax.f32 %v4664, %v4665
      %v4667 = vrot.slane %v4666, 1
      %v4668 = vmax.f32 %v4666, %v4667
      %v4669 = vsel %vm4591, %v4305, -inf
      %v4670 = vrot.slane %v4669, 4
      %v4671 = vmax.f32 %v4669, %v4670
      %v4672 = vrot.slane %v4671, 2
      %v4673 = vmax.f32 %v4671, %v4672
      %v4674 = vrot.slane %v4673, 1
      %v4675 = vmax.f32 %v4673, %v4674
      %v4676 = vsel %vm4591, %v4313, -inf
      %v4677 = vrot.slane %v4676, 4
      %v4678 = vmax.f32 %v4676, %v4677
      %v4679 = vrot.slane %v4678, 2
      %v4680 = vmax.f32 %v4678, %v4679
      %v4681 = vrot.slane %v4680, 1
      %v4682 = vmax.f32 %v4680, %v4681
      %v4683 = vsel %vm4591, %v4321, -inf
      %v4684 = vrot.slane %v4683, 4
      %v4685 = vmax.f32 %v4683, %v4684
      %v4686 = vrot.slane %v4685, 2
      %v4687 = vmax.f32 %v4685, %v4686
      %v4688 = vrot.slane %v4687, 1
      %v4689 = vmax.f32 %v4687, %v4688
      %v4690 = vsel %vm4591, %v4320, -inf
      %v4691 = vrot.slane %v4690, 4
      %v4692 = vmax.f32 %v4690, %v4691
      %v4693 = vrot.slane %v4692, 2
      %v4694 = vmax.f32 %v4692, %v4693
      %v4695 = vrot.slane %v4694, 1
      %v4696 = vmax.f32 %v4694, %v4695
      %v4697 = vsel %vm4591, %v4322, -inf
      %v4698 = vrot.slane %v4697, 4
      %v4699 = vmax.f32 %v4697, %v4698
      %v4700 = vrot.slane %v4699, 2
      %v4701 = vmax.f32 %v4699, %v4700
      %v4702 = vrot.slane %v4701, 1
      %v4703 = vmax.f32 %v4701, %v4702
      %v4704 = vsel %vm4591, %v4330, -inf
      %v4705 = vrot.slane %v4704, 4
      %v4706 = vmax.f32 %v4704, %v4705
      %v4707 = vrot.slane %v4706, 2
      %v4708 = vmax.f32 %v4706, %v4707
      %v4709 = vrot.slane %v4708, 1
      %v4710 = vmax.f32 %v4708, %v4709
      %v4711 = vsel %vm4591, %v4338, -inf
      %v4712 = vrot.slane %v4711, 4
      %v4713 = vmax.f32 %v4711, %v4712
      %v4714 = vrot.slane %v4713, 2
      %v4715 = vmax.f32 %v4713, %v4714
      %v4716 = vrot.slane %v4715, 1
      %v4717 = vmax.f32 %v4715, %v4716
      %v4718 = vsel %vm4591, %v4337, -inf
      %v4719 = vrot.slane %v4718, 4
      %v4720 = vmax.f32 %v4718, %v4719
      %v4721 = vrot.slane %v4720, 2
      %v4722 = vmax.f32 %v4720, %v4721
      %v4723 = vrot.slane %v4722, 1
      %v4724 = vmax.f32 %v4722, %v4723
      %v4725 = vsel %vm4591, %v4339, -inf
      %v4726 = vrot.slane %v4725, 4
      %v4727 = vmax.f32 %v4725, %v4726
      %v4728 = vrot.slane %v4727, 2
      %v4729 = vmax.f32 %v4727, %v4728
      %v4730 = vrot.slane %v4729, 1
      %v4731 = vmax.f32 %v4729, %v4730
      %v4732 = vsel %vm4591, %v4347, -inf
      %v4733 = vrot.slane %v4732, 4
      %v4734 = vmax.f32 %v4732, %v4733
      %v4735 = vrot.slane %v4734, 2
      %v4736 = vmax.f32 %v4734, %v4735
      %v4737 = vrot.slane %v4736, 1
      %v4738 = vmax.f32 %v4736, %v4737
      %v4739 = vsel %vm4591, %v4355, -inf
      %v4740 = vrot.slane %v4739, 4
      %v4741 = vmax.f32 %v4739, %v4740
      %v4742 = vrot.slane %v4741, 2
      %v4743 = vmax.f32 %v4741, %v4742
      %v4744 = vrot.slane %v4743, 1
      %v4745 = vmax.f32 %v4743, %v4744
      %v4746 = vsel %vm4591, %v4354, -inf
      %v4747 = vrot.slane %v4746, 4
      %v4748 = vmax.f32 %v4746, %v4747
      %v4749 = vrot.slane %v4748, 2
      %v4750 = vmax.f32 %v4748, %v4749
      %v4751 = vrot.slane %v4750, 1
      %v4752 = vmax.f32 %v4750, %v4751
      %v4753 = vsel %vm4591, %v4356, -inf
      %v4754 = vrot.slane %v4753, 4
      %v4755 = vmax.f32 %v4753, %v4754
      %v4756 = vrot.slane %v4755, 2
      %v4757 = vmax.f32 %v4755, %v4756
      %v4758 = vrot.slane %v4757, 1
      %v4759 = vmax.f32 %v4757, %v4758
      %v4760 = vsel %vm4591, %v4364, -inf
      %v4761 = vrot.slane %v4760, 4
      %v4762 = vmax.f32 %v4760, %v4761
      %v4763 = vrot.slane %v4762, 2
      %v4764 = vmax.f32 %v4762, %v4763
      %v4765 = vrot.slane %v4764, 1
      %v4766 = vmax.f32 %v4764, %v4765
      %v4767 = vsel %vm4591, %v4372, -inf
      %v4768 = vrot.slane %v4767, 4
      %v4769 = vmax.f32 %v4767, %v4768
      %v4770 = vrot.slane %v4769, 2
      %v4771 = vmax.f32 %v4769, %v4770
      %v4772 = vrot.slane %v4771, 1
      %v4773 = vmax.f32 %v4771, %v4772
      %v4774 = vsel %vm4591, %v4371, -inf
      %v4775 = vrot.slane %v4774, 4
      %v4776 = vmax.f32 %v4774, %v4775
      %v4777 = vrot.slane %v4776, 2
      %v4778 = vmax.f32 %v4776, %v4777
      %v4779 = vrot.slane %v4778, 1
      %v4780 = vmax.f32 %v4778, %v4779
      %v4781 = vsel %vm4591, %v4373, -inf
      %v4782 = vrot.slane %v4781, 4
      %v4783 = vmax.f32 %v4781, %v4782
      %v4784 = vrot.slane %v4783, 2
      %v4785 = vmax.f32 %v4783, %v4784
      %v4786 = vrot.slane %v4785, 1
      %v4787 = vmax.f32 %v4785, %v4786
      %v4788 = vsel %vm4591, %v4381, -inf
      %v4789 = vrot.slane %v4788, 4
      %v4790 = vmax.f32 %v4788, %v4789
      %v4791 = vrot.slane %v4790, 2
      %v4792 = vmax.f32 %v4790, %v4791
      %v4793 = vrot.slane %v4792, 1
      %v4794 = vmax.f32 %v4792, %v4793
      %v4795 = vsel %vm4591, %v4389, -inf
      %v4796 = vrot.slane %v4795, 4
      %v4797 = vmax.f32 %v4795, %v4796
      %v4798 = vrot.slane %v4797, 2
      %v4799 = vmax.f32 %v4797, %v4798
      %v4800 = vrot.slane %v4799, 1
      %v4801 = vmax.f32 %v4799, %v4800
      %v4802 = vsel %vm4591, %v4388, -inf
      %v4803 = vrot.slane %v4802, 4
      %v4804 = vmax.f32 %v4802, %v4803
      %v4805 = vrot.slane %v4804, 2
      %v4806 = vmax.f32 %v4804, %v4805
      %v4807 = vrot.slane %v4806, 1
      %v4808 = vmax.f32 %v4806, %v4807
      %v4809 = vsel %vm4591, %v4390, -inf
      %v4810 = vrot.slane %v4809, 4
      %v4811 = vmax.f32 %v4809, %v4810
      %v4812 = vrot.slane %v4811, 2
      %v4813 = vmax.f32 %v4811, %v4812
      %v4814 = vrot.slane %v4813, 1
      %v4815 = vmax.f32 %v4813, %v4814
      %v4816 = vsel %vm4591, %v4398, -inf
      %v4817 = vrot.slane %v4816, 4
      %v4818 = vmax.f32 %v4816, %v4817
      %v4819 = vrot.slane %v4818, 2
      %v4820 = vmax.f32 %v4818, %v4819
      %v4821 = vrot.slane %v4820, 1
      %v4822 = vmax.f32 %v4820, %v4821
      %v4823 = vsel %vm4591, %v4406, -inf
      %v4824 = vrot.slane %v4823, 4
      %v4825 = vmax.f32 %v4823, %v4824
      %v4826 = vrot.slane %v4825, 2
      %v4827 = vmax.f32 %v4825, %v4826
      %v4828 = vrot.slane %v4827, 1
      %v4829 = vmax.f32 %v4827, %v4828
      %v4830 = vsel %vm4591, %v4405, -inf
      %v4831 = vrot.slane %v4830, 4
      %v4832 = vmax.f32 %v4830, %v4831
      %v4833 = vrot.slane %v4832, 2
      %v4834 = vmax.f32 %v4832, %v4833
      %v4835 = vrot.slane %v4834, 1
      %v4836 = vmax.f32 %v4834, %v4835
      %v4837 = vsel %vm4591, %v4407, -inf
      %v4838 = vrot.slane %v4837, 4
      %v4839 = vmax.f32 %v4837, %v4838
      %v4840 = vrot.slane %v4839, 2
      %v4841 = vmax.f32 %v4839, %v4840
      %v4842 = vrot.slane %v4841, 1
      %v4843 = vmax.f32 %v4841, %v4842
      %v4844 = vsel %vm4591, %v4415, -inf
      %v4845 = vrot.slane %v4844, 4
      %v4846 = vmax.f32 %v4844, %v4845
      %v4847 = vrot.slane %v4846, 2
      %v4848 = vmax.f32 %v4846, %v4847
      %v4849 = vrot.slane %v4848, 1
      %v4850 = vmax.f32 %v4848, %v4849
      %v4851 = vsel %vm4591, %v4423, -inf
      %v4852 = vrot.slane %v4851, 4
      %v4853 = vmax.f32 %v4851, %v4852
      %v4854 = vrot.slane %v4853, 2
      %v4855 = vmax.f32 %v4853, %v4854
      %v4856 = vrot.slane %v4855, 1
      %v4857 = vmax.f32 %v4855, %v4856
      %v4858 = vsel %vm4591, %v4422, -inf
      %v4859 = vrot.slane %v4858, 4
      %v4860 = vmax.f32 %v4858, %v4859
      %v4861 = vrot.slane %v4860, 2
      %v4862 = vmax.f32 %v4860, %v4861
      %v4863 = vrot.slane %v4862, 1
      %v4864 = vmax.f32 %v4862, %v4863
      %v4865 = vsel %vm4591, %v4424, -inf
      %v4866 = vrot.slane %v4865, 4
      %v4867 = vmax.f32 %v4865, %v4866
      %v4868 = vrot.slane %v4867, 2
      %v4869 = vmax.f32 %v4867, %v4868
      %v4870 = vrot.slane %v4869, 1
      %v4871 = vmax.f32 %v4869, %v4870
      %v4872 = vsel %vm4591, %v4432, -inf
      %v4873 = vrot.slane %v4872, 4
      %v4874 = vmax.f32 %v4872, %v4873
      %v4875 = vrot.slane %v4874, 2
      %v4876 = vmax.f32 %v4874, %v4875
      %v4877 = vrot.slane %v4876, 1
      %v4878 = vmax.f32 %v4876, %v4877
      %v4879 = vsel %vm4591, %v4440, -inf
      %v4880 = vrot.slane %v4879, 4
      %v4881 = vmax.f32 %v4879, %v4880
      %v4882 = vrot.slane %v4881, 2
      %v4883 = vmax.f32 %v4881, %v4882
      %v4884 = vrot.slane %v4883, 1
      %v4885 = vmax.f32 %v4883, %v4884
      %v4886 = vsel %vm4591, %v4439, -inf
      %v4887 = vrot.slane %v4886, 4
      %v4888 = vmax.f32 %v4886, %v4887
      %v4889 = vrot.slane %v4888, 2
      %v4890 = vmax.f32 %v4888, %v4889
      %v4891 = vrot.slane %v4890, 1
      %v4892 = vmax.f32 %v4890, %v4891
      %v4893 = vsel %vm4591, %v4441, -inf
      %v4894 = vrot.slane %v4893, 4
      %v4895 = vmax.f32 %v4893, %v4894
      %v4896 = vrot.slane %v4895, 2
      %v4897 = vmax.f32 %v4895, %v4896
      %v4898 = vrot.slane %v4897, 1
      %v4899 = vmax.f32 %v4897, %v4898
      %v4900 = vsel %vm4591, %v4449, -inf
      %v4901 = vrot.slane %v4900, 4
      %v4902 = vmax.f32 %v4900, %v4901
      %v4903 = vrot.slane %v4902, 2
      %v4904 = vmax.f32 %v4902, %v4903
      %v4905 = vrot.slane %v4904, 1
      %v4906 = vmax.f32 %v4904, %v4905
      %v4907 = vsel %vm4591, %v4457, -inf
      %v4908 = vrot.slane %v4907, 4
      %v4909 = vmax.f32 %v4907, %v4908
      %v4910 = vrot.slane %v4909, 2
      %v4911 = vmax.f32 %v4909, %v4910
      %v4912 = vrot.slane %v4911, 1
      %v4913 = vmax.f32 %v4911, %v4912
      %v4914 = vsel %vm4591, %v4456, -inf
      %v4915 = vrot.slane %v4914, 4
      %v4916 = vmax.f32 %v4914, %v4915
      %v4917 = vrot.slane %v4916, 2
      %v4918 = vmax.f32 %v4916, %v4917
      %v4919 = vrot.slane %v4918, 1
      %v4920 = vmax.f32 %v4918, %v4919
      %v4921 = vsel %vm4591, %v4458, -inf
      %v4922 = vrot.slane %v4921, 4
      %v4923 = vmax.f32 %v4921, %v4922
      %v4924 = vrot.slane %v4923, 2
      %v4925 = vmax.f32 %v4923, %v4924
      %v4926 = vrot.slane %v4925, 1
      %v4927 = vmax.f32 %v4925, %v4926
      %v4928 = vsel %vm4591, %v4466, -inf
      %v4929 = vrot.slane %v4928, 4
      %v4930 = vmax.f32 %v4928, %v4929
      %v4931 = vrot.slane %v4930, 2
      %v4932 = vmax.f32 %v4930, %v4931
      %v4933 = vrot.slane %v4932, 1
      %v4934 = vmax.f32 %v4932, %v4933
      %v4935 = vsel %vm4591, %v4474, -inf
      %v4936 = vrot.slane %v4935, 4
      %v4937 = vmax.f32 %v4935, %v4936
      %v4938 = vrot.slane %v4937, 2
      %v4939 = vmax.f32 %v4937, %v4938
      %v4940 = vrot.slane %v4939, 1
      %v4941 = vmax.f32 %v4939, %v4940
      %v4942 = vsel %vm4591, %v4473, -inf
      %v4943 = vrot.slane %v4942, 4
      %v4944 = vmax.f32 %v4942, %v4943
      %v4945 = vrot.slane %v4944, 2
      %v4946 = vmax.f32 %v4944, %v4945
      %v4947 = vrot.slane %v4946, 1
      %v4948 = vmax.f32 %v4946, %v4947
      %v4949 = vsel %vm4591, %v4475, -inf
      %v4950 = vrot.slane %v4949, 4
      %v4951 = vmax.f32 %v4949, %v4950
      %v4952 = vrot.slane %v4951, 2
      %v4953 = vmax.f32 %v4951, %v4952
      %v4954 = vrot.slane %v4953, 1
      %v4955 = vmax.f32 %v4953, %v4954
      %v4956 = vsel %vm4591, %v4483, -inf
      %v4957 = vrot.slane %v4956, 4
      %v4958 = vmax.f32 %v4956, %v4957
      %v4959 = vrot.slane %v4958, 2
      %v4960 = vmax.f32 %v4958, %v4959
      %v4961 = vrot.slane %v4960, 1
      %v4962 = vmax.f32 %v4960, %v4961
      %v4963 = vsel %vm4591, %v4491, -inf
      %v4964 = vrot.slane %v4963, 4
      %v4965 = vmax.f32 %v4963, %v4964
      %v4966 = vrot.slane %v4965, 2
      %v4967 = vmax.f32 %v4965, %v4966
      %v4968 = vrot.slane %v4967, 1
      %v4969 = vmax.f32 %v4967, %v4968
      %v4970 = vsel %vm4591, %v4490, -inf
      %v4971 = vrot.slane %v4970, 4
      %v4972 = vmax.f32 %v4970, %v4971
      %v4973 = vrot.slane %v4972, 2
      %v4974 = vmax.f32 %v4972, %v4973
      %v4975 = vrot.slane %v4974, 1
      %v4976 = vmax.f32 %v4974, %v4975
      %v4977 = vsel %vm4591, %v4492, -inf
      %v4978 = vrot.slane %v4977, 4
      %v4979 = vmax.f32 %v4977, %v4978
      %v4980 = vrot.slane %v4979, 2
      %v4981 = vmax.f32 %v4979, %v4980
      %v4982 = vrot.slane %v4981, 1
      %v4983 = vmax.f32 %v4981, %v4982
      %v4984 = vsel %vm4591, %v4500, -inf
      %v4985 = vrot.slane %v4984, 4
      %v4986 = vmax.f32 %v4984, %v4985
      %v4987 = vrot.slane %v4986, 2
      %v4988 = vmax.f32 %v4986, %v4987
      %v4989 = vrot.slane %v4988, 1
      %v4990 = vmax.f32 %v4988, %v4989
      %v4991 = vsel %vm4591, %v4508, -inf
      %v4992 = vrot.slane %v4991, 4
      %v4993 = vmax.f32 %v4991, %v4992
      %v4994 = vrot.slane %v4993, 2
      %v4995 = vmax.f32 %v4993, %v4994
      %v4996 = vrot.slane %v4995, 1
      %v4997 = vmax.f32 %v4995, %v4996
      %v4998 = vsel %vm4591, %v4507, -inf
      %v4999 = vrot.slane %v4998, 4
      %v5000 = vmax.f32 %v4998, %v4999
      %v5001 = vrot.slane %v5000, 2
      %v5002 = vmax.f32 %v5000, %v5001
      %v5003 = vrot.slane %v5002, 1
      %v5004 = vmax.f32 %v5002, %v5003
      %v5005 = vsel %vm4591, %v4509, -inf
      %v5006 = vrot.slane %v5005, 4
      %v5007 = vmax.f32 %v5005, %v5006
      %v5008 = vrot.slane %v5007, 2
      %v5009 = vmax.f32 %v5007, %v5008
      %v5010 = vrot.slane %v5009, 1
      %v5011 = vmax.f32 %v5009, %v5010
      %v5012 = vsel %vm4591, %v4517, -inf
      %v5013 = vrot.slane %v5012, 4
      %v5014 = vmax.f32 %v5012, %v5013
      %v5015 = vrot.slane %v5014, 2
      %v5016 = vmax.f32 %v5014, %v5015
      %v5017 = vrot.slane %v5016, 1
      %v5018 = vmax.f32 %v5016, %v5017
      %v5019 = vsel %vm4591, %v4525, -inf
      %v5020 = vrot.slane %v5019, 4
      %v5021 = vmax.f32 %v5019, %v5020
      %v5022 = vrot.slane %v5021, 2
      %v5023 = vmax.f32 %v5021, %v5022
      %v5024 = vrot.slane %v5023, 1
      %v5025 = vmax.f32 %v5023, %v5024
      %v5026 = vsel %vm4591, %v4524, -inf
      %v5027 = vrot.slane %v5026, 4
      %v5028 = vmax.f32 %v5026, %v5027
      %v5029 = vrot.slane %v5028, 2
      %v5030 = vmax.f32 %v5028, %v5029
      %v5031 = vrot.slane %v5030, 1
      %v5032 = vmax.f32 %v5030, %v5031
      %v5033 = vsel %vm4591, %v4526, -inf
      %v5034 = vrot.slane %v5033, 4
      %v5035 = vmax.f32 %v5033, %v5034
      %v5036 = vrot.slane %v5035, 2
      %v5037 = vmax.f32 %v5035, %v5036
      %v5038 = vrot.slane %v5037, 1
      %v5039 = vmax.f32 %v5037, %v5038
      %vm5104 = vcmask 1041409
      %v5105 = vsel %vm5104, %v4605, %v4598
      %vm5106 = vcmask 1042434
      %v5107 = vsel %vm5106, %v4612, %v5105
      %vm5108 = vcmask 1043459
      %v5109 = vsel %vm5108, %v4619, %v5107
      %vm5110 = vcmask 1044484
      %v5111 = vsel %vm5110, %v4626, %v5109
      %vm5112 = vcmask 1045509
      %v5113 = vsel %vm5112, %v4633, %v5111
      %vm5114 = vcmask 1046534
      %v5115 = vsel %vm5114, %v4640, %v5113
      %vm5116 = vcmask 1047559
      %v5117 = vsel %vm5116, %v4647, %v5115
      %v5118 = vsel %vm5104, %v4661, %v4654
      %v5119 = vsel %vm5106, %v4668, %v5118
      %v5120 = vsel %vm5108, %v4675, %v5119
      %v5121 = vsel %vm5110, %v4682, %v5120
      %v5122 = vsel %vm5112, %v4689, %v5121
      %v5123 = vsel %vm5114, %v4696, %v5122
      %v5124 = vsel %vm5116, %v4703, %v5123
      %v5125 = vsel %vm5104, %v4717, %v4710
      %v5126 = vsel %vm5106, %v4724, %v5125
      %v5127 = vsel %vm5108, %v4731, %v5126
      %v5128 = vsel %vm5110, %v4738, %v5127
      %v5129 = vsel %vm5112, %v4745, %v5128
      %v5130 = vsel %vm5114, %v4752, %v5129
      %v5131 = vsel %vm5116, %v4759, %v5130
      %v5132 = vsel %vm5104, %v4773, %v4766
      %v5133 = vsel %vm5106, %v4780, %v5132
      %v5134 = vsel %vm5108, %v4787, %v5133
      %v5135 = vsel %vm5110, %v4794, %v5134
      %v5136 = vsel %vm5112, %v4801, %v5135
      %v5137 = vsel %vm5114, %v4808, %v5136
      %v5138 = vsel %vm5116, %v4815, %v5137
      %v5139 = vsel %vm5104, %v4829, %v4822
      %v5140 = vsel %vm5106, %v4836, %v5139
      %v5141 = vsel %vm5108, %v4843, %v5140
      %v5142 = vsel %vm5110, %v4850, %v5141
      %v5143 = vsel %vm5112, %v4857, %v5142
      %v5144 = vsel %vm5114, %v4864, %v5143
      %v5145 = vsel %vm5116, %v4871, %v5144
      %v5146 = vsel %vm5104, %v4885, %v4878
      %v5147 = vsel %vm5106, %v4892, %v5146
      %v5148 = vsel %vm5108, %v4899, %v5147
      %v5149 = vsel %vm5110, %v4906, %v5148
      %v5150 = vsel %vm5112, %v4913, %v5149
      %v5151 = vsel %vm5114, %v4920, %v5150
      %v5152 = vsel %vm5116, %v4927, %v5151
      %v5153 = vsel %vm5104, %v4941, %v4934
      %v5154 = vsel %vm5106, %v4948, %v5153
      %v5155 = vsel %vm5108, %v4955, %v5154
      %v5156 = vsel %vm5110, %v4962, %v5155
      %v5157 = vsel %vm5112, %v4969, %v5156
      %v5158 = vsel %vm5114, %v4976, %v5157
      %v5159 = vsel %vm5116, %v4983, %v5158
      %v5160 = vsel %vm5104, %v4997, %v4990
      %v5161 = vsel %vm5106, %v5004, %v5160
      %v5162 = vsel %vm5108, %v5011, %v5161
      %v5163 = vsel %vm5110, %v5018, %v5162
      %v5164 = vsel %vm5112, %v5025, %v5163
      %v5165 = vsel %vm5114, %v5032, %v5164
      %v5166 = vsel %vm5116, %v5039, %v5165
      %5175 = vst.msk [vmem:[%s170] sm:$0xff] %vm4190, %v5117
      %5176 = vst.msk [vmem:[%s170 + $0x8] sm:$0xff] %vm4190, %v5124
      %5177 = vst.msk [vmem:[%s170 + $0x10] sm:$0xff] %vm4190, %v5131
      %5178 = vst.msk [vmem:[%s170 + $0x18] sm:$0xff] %vm4190, %v5138
      %5179 = vst.msk [vmem:[%s170 + $0x20] sm:$0xff] %vm4190, %v5145
      %5180 = vst.msk [vmem:[%s170 + $0x28] sm:$0xff] %vm4190, %v5152
      %5181 = vst.msk [vmem:[%s170 + $0x30] sm:$0xff] %vm4190, %v5159
      %5182 = vst.msk [vmem:[%s170 + $0x38] sm:$0xff] %vm4190, %v5166
      %p5183 = scmp.lt.s32.totalorder %s14, 1
      %s5184 = scalar_select %p5183, %s14, 1
      %s5185 = smul.addr %s5184, 8
      %s5186 = smul.addr %s5185, 8
      %s5187 = scalar_lea.vmem %s3, %s5186
      // Predicated region
      $region33: #{resnet_bottom_forward.2} parent=31 // pred_check
        %p5188 = pneg %p100
      $region34: #{resnet_bottom_forward.2} parent=31 // pred_check_branch
        %5190 = sbr.rel (%p5188) target = $region36
      $region35: #{resnet_bottom_forward.2} parent=31 // pred_region
        _
      $region36: #{resnet_bottom_forward.2} parent=31 // pred_fallthru
        _
    $region32: #{resnet_bottom_forward.2} parent=5 // pred_fallthru
      _
    %p5191 = scmp.le.s32.totalorder 2, %s9
    // Predicated region
    $region37: #{resnet_bottom_forward.2} parent=5 // pred_check
      %p5192 = pneg %p5191
    $region38: #{resnet_bottom_forward.2} parent=5 // pred_check_branch
      %5194 = sbr.rel (%p5192) target = $region40
    $region39: #{resnet_bottom_forward.2} parent=5 // pred_region
      %s5195 = ssub.s32 %s9, 2
      // Predicated region
      $region41: #{resnet_bottom_forward.2} parent=39 // pred_check
        %p5196 = pneg %p106
      $region42: #{resnet_bottom_forward.2} parent=39 // pred_check_branch
        %5198 = sbr.rel (%p5196) target = $region44
      $region43: #{resnet_bottom_forward.2} parent=39 // pred_region
        %p5199 = scmp.lt.s32.totalorder %s15, 1
        %s5200 = scalar_select %p5199, %s15, 1
        %s5201 = smul.addr %s5200, 8
        %s5202 = smul.addr %s5201, 8
        %s5203 = scalar_lea.vmem %s3, %s5202
      $region44: #{resnet_bottom_forward.2} parent=39 // pred_fallthru
        _
    $region40: #{resnet_bottom_forward.2} parent=5 // pred_fallthru
      _
  $region6: #{resnet_bottom_forward.2} parent=0 // loop_footer
    %s13 = sadd.s32 1, %s9
  $region7: #{resnet_bottom_forward.2} parent=0 // loop_footer_branch
    %8 = sbr.rel target = $region3
  $region8: #{resnet_bottom_forward.2} parent=0 // loop_exit
    _

</llo_original>
